<compile_context>
chip_gen: v5e
topology: v5e:2x2
jax: 0.10.0
libtpu: 0.0.40
codegen_flags: <defaults>
</compile_context>

<pallas_src>
import functools

import jax
import jax.numpy as jnp
from jax.experimental import pallas as pl
from jax.experimental.pallas import tpu as pltpu

BN_EPS = 1e-5
EXPANSION = 4
LANE = 128                      # channel padding target (vreg lane width)


def _round_up(x, m):
    return ((x + m - 1) // m) * m


def _tpu_defaults():
    """Generation-aware scoped-VMEM budget and row-tile target."""
    try:
        vmem_phys = int(pltpu.get_tpu_info().vmem_capacity_bytes)
    except Exception:
        return 40 * 1024 * 1024, 512           # conservative (v7x-safe) fallback
    if vmem_phys <= 64 * 1024 * 1024:
        return 40 * 1024 * 1024, 512           # v7x: 64 MiB physical VMEM
    return 64 * 1024 * 1024, 1024              # v5e / v6e: 128 MiB physical VMEM


VMEM_LIMIT, TM_DEFAULT = _tpu_defaults()


def _pick_tm(m, target=None):
    """Row tile ~ m / ceil(m / target): avoids padding up to a full dead tile."""
    if target is None:
        target = TM_DEFAULT
    m8 = _round_up(m, 8)
    if m8 <= target:
        return m8
    ntiles = -(-m8 // target)
    return _round_up(-(-m8 // ntiles), 8)


def _compiler_params(sem):
    return pltpu.CompilerParams(dimension_semantics=sem, vmem_limit_bytes=VMEM_LIMIT)


# ----------------------------------------------------------------------------
# In-kernel helpers
# ----------------------------------------------------------------------------
def _bn_norm(y, s_ref, q_ref, g_ref, b_ref, inv_count):
    mean = s_ref[...] * inv_count
    var = jnp.maximum(q_ref[...] * inv_count - mean * mean, 0.0)
    scale = jax.lax.rsqrt(var + BN_EPS) * g_ref[...]
    return (y - mean) * scale + b_ref[...]


def _partial_stats(y_f32, cout):
    # Row 0: per-channel sum, row 1: per-channel sum of squares (rest zero).
    s = jnp.sum(y_f32, axis=0, keepdims=True)
    q = jnp.sum(y_f32 * y_f32, axis=0, keepdims=True)
    return jnp.concatenate([s, q, jnp.zeros((6, cout), jnp.float32)], axis=0)


# ----------------------------------------------------------------------------
# Pallas kernels
# ----------------------------------------------------------------------------
def _matmul_stats_kernel(x_ref, w_ref, y_ref, stat_ref, *, m_real):
    """y = x @ w (bf16 operands, f32 accum, bf16 out) + per-tile partial BN stats."""
    i = pl.program_id(0)
    tm = x_ref.shape[0]
    y = jnp.dot(x_ref[...], w_ref[...], preferred_element_type=jnp.float32)
    y_ref[...] = y.astype(y_ref.dtype)
    rows = i * tm + jax.lax.broadcasted_iota(jnp.int32, (tm, 1), 0)
    ym = y * (rows < m_real).astype(jnp.float32)        # mask padding rows out of stats
    stat_ref[0] = _partial_stats(ym, y.shape[1])


def _bn_relu_matmul_stats_kernel(x_ref, s_ref, q_ref, g_ref, b_ref, w_ref,
                                 y_ref, stat_ref, *, m_real, inv_count_in):
    """Fused: BN(input) + ReLU -> bf16 -> matmul -> per-tile partial stats of y."""
    i = pl.program_id(0)
    tm = x_ref.shape[0]
    a = _bn_norm(x_ref[...].astype(jnp.float32), s_ref, q_ref, g_ref, b_ref, inv_count_in)
    a = jnp.maximum(a, 0.0).astype(jnp.bfloat16)
    y = jnp.dot(a, w_ref[...], preferred_element_type=jnp.float32)
    y_ref[...] = y.astype(y_ref.dtype)
    rows = i * tm + jax.lax.broadcasted_iota(jnp.int32, (tm, 1), 0)
    ym = y * (rows < m_real).astype(jnp.float32)
    stat_ref[0] = _partial_stats(ym, y.shape[1])


def _conv3x3_bn_stats_kernel(x_ref, s_ref, q_ref, g_ref, b_ref, w_ref,
                             y_ref, stat_ref, acc_ref, *, stride, ho, wo, inv_count_in):
    """Per-image 3x3 conv (pad=1, stride in {1,2}).  grid = (N,).
    BN1+ReLU is applied to the raw conv1 output in VMEM, padding is built via
    concatenation in VMEM, the 9 taps run as M = Ho*Wo matmuls accumulated in
    an f32 VMEM scratch.  Strided selection is done on values, never refs."""
    h, wdim, cp = x_ref.shape[1], x_ref.shape[2], x_ref.shape[3]
    cout = w_ref.shape[3]

    a = _bn_norm(x_ref[0].astype(jnp.float32), s_ref, q_ref, g_ref, b_ref, inv_count_in)
    a = jnp.maximum(a, 0.0).astype(jnp.bfloat16)                      # (H, W, Cp)

    zc = jnp.zeros((h, 1, cp), jnp.bfloat16)
    zr = jnp.zeros((1, wdim + 2, cp), jnp.bfloat16)
    ap = jnp.concatenate([zc, a, zc], axis=1)
    ap = jnp.concatenate([zr, ap, zr], axis=0)                        # (H+2, W+2, Cp)

    acc_ref[...] = jnp.zeros_like(acc_ref)
    hr = (ho - 1) * stride + 1
    wr = (wo - 1) * stride + 1
    for dy in range(3):
        for dx in range(3):
            if stride == 1:
                tap = ap[dy:dy + ho, dx:dx + wo, :]
            else:
                tap = ap[dy:dy + hr:stride, dx:dx + wr:stride, :]
            acc_ref[...] += jnp.dot(tap.reshape(ho * wo, cp), w_ref[dy, dx],
                                    preferred_element_type=jnp.float32)

    acc = acc_ref[...]
    y_ref[0] = acc.reshape(ho, wo, cout).astype(y_ref.dtype)
    stat_ref[0] = _partial_stats(acc, cout)


def _bn_add_relu_kernel(y_ref, s_ref, q_ref, g_ref, b_ref, r_ref, o_ref, *, inv_count):
    out = _bn_norm(y_ref[...].astype(jnp.float32), s_ref, q_ref, g_ref, b_ref, inv_count)
    out = out + r_ref[...].astype(jnp.float32)
    o_ref[...] = jnp.maximum(out, 0.0).astype(o_ref.dtype)


def _bn_dual_add_relu_kernel(y_ref, s_ref, q_ref, g_ref, b_ref,
                             yd_ref, sd_ref, qd_ref, gd_ref, bd_ref, o_ref, *, inv_count):
    a = _bn_norm(y_ref[...].astype(jnp.float32), s_ref, q_ref, g_ref, b_ref, inv_count)
    d = _bn_norm(yd_ref[...].astype(jnp.float32), sd_ref, qd_ref, gd_ref, bd_ref, inv_count)
    o_ref[...] = jnp.maximum(a + d, 0.0).astype(o_ref.dtype)


# ----------------------------------------------------------------------------
# Pallas wrappers
# ----------------------------------------------------------------------------
def _reduce_stats(stat):
    s = jnp.sum(stat[:, 0, :], axis=0, keepdims=True)
    q = jnp.sum(stat[:, 1, :], axis=0, keepdims=True)
    return s, q


def matmul_stats(x, w, m_real, tm):
    mp, k = x.shape
    n = w.shape[1]
    nt = mp // tm
    kernel = functools.partial(_matmul_stats_kernel, m_real=m_real)
    y, stat = pl.pallas_call(
        kernel,
        out_shape=(jax.ShapeDtypeStruct((mp, n), jnp.bfloat16),
                   jax.ShapeDtypeStruct((nt, 8, n), jnp.float32)),
        grid=(nt,),
        in_specs=[pl.BlockSpec((tm, k), lambda i: (i, 0)),
                  pl.BlockSpec((k, n), lambda i: (0, 0))],
        out_specs=(pl.BlockSpec((tm, n), lambda i: (i, 0)),
                   pl.BlockSpec((1, 8, n), lambda i: (i, 0, 0))),
        compiler_params=_compiler_params(("parallel",)),
    )(x, w)
    s, q = _reduce_stats(stat)
    return y, s, q


def bn_relu_matmul_stats(x, s_in, q_in, g_in, b_in, w, m_real, inv_count_in, tm):
    mp, k = x.shape
    n = w.shape[1]
    nt = mp // tm
    kernel = functools.partial(_bn_relu_matmul_stats_kernel,
                               m_real=m_real, inv_count_in=inv_count_in)
    vec = pl.BlockSpec((1, k), lambda i: (0, 0))
    y, stat = pl.pallas_call(
        kernel,
        out_shape=(jax.ShapeDtypeStruct((mp, n), jnp.bfloat16),
                   jax.ShapeDtypeStruct((nt, 8, n), jnp.float32)),
        grid=(nt,),
        in_specs=[pl.BlockSpec((tm, k), lambda i: (i, 0)),
                  vec, vec, vec, vec,
                  pl.BlockSpec((k, n), lambda i: (0, 0))],
        out_specs=(pl.BlockSpec((tm, n), lambda i: (i, 0)),
                   pl.BlockSpec((1, 8, n), lambda i: (i, 0, 0))),
        compiler_params=_compiler_params(("parallel",)),
    )(x, s_in, q_in, g_in, b_in, w)
    s, q = _reduce_stats(stat)
    return y, s, q


def conv3x3_bn_stats(x_img, s_in, q_in, g_in, b_in, w_taps, stride, inv_count_in):
    nb, h, wdim, cp = x_img.shape
    cout = w_taps.shape[-1]
    ho = (h - 1) // stride + 1
    wo = (wdim - 1) // stride + 1
    kernel = functools.partial(_conv3x3_bn_stats_kernel, stride=stride, ho=ho, wo=wo,
                               inv_count_in=inv_count_in)
    vec = pl.BlockSpec((1, cp), lambda n: (0, 0))
    y, stat = pl.pallas_call(
        kernel,
        out_shape=(jax.ShapeDtypeStruct((nb, ho, wo, cout), jnp.bfloat16),
                   jax.ShapeDtypeStruct((nb, 8, cout), jnp.float32)),
        grid=(nb,),
        in_specs=[pl.BlockSpec((1, h, wdim, cp), lambda n: (n, 0, 0, 0)),
                  vec, vec, vec, vec,
                  pl.BlockSpec((3, 3, cp, cout), lambda n: (0, 0, 0, 0))],
        out_specs=(pl.BlockSpec((1, ho, wo, cout), lambda n: (n, 0, 0, 0)),
                   pl.BlockSpec((1, 8, cout), lambda n: (n, 0, 0))),
        scratch_shapes=[pltpu.VMEM((ho * wo, cout), jnp.float32)],
        compiler_params=_compiler_params(("parallel",)),
    )(x_img, s_in, q_in, g_in, b_in, w_taps)
    s, q = _reduce_stats(stat)
    return y, s, q


def bn_add_relu(y, s, q, g, b, res, *, inv_count, out_dtype, tm):
    mp, c = y.shape
    kernel = functools.partial(_bn_add_relu_kernel, inv_count=inv_count)
    row = pl.BlockSpec((tm, c), lambda i: (i, 0))
    vec = pl.BlockSpec((1, c), lambda i: (0, 0))
    return pl.pallas_call(
        kernel,
        out_shape=jax.ShapeDtypeStruct((mp, c), out_dtype),
        grid=(mp // tm,),
        in_specs=[row, vec, vec, vec, vec, row],
        out_specs=row,
        compiler_params=_compiler_params(("parallel",)),
    )(y, s, q, g, b, res)


def bn_dual_add_relu(y, s, q, g, b, yd, sd, qd, gd, bd, *, inv_count, out_dtype, tm):
    mp, c = y.shape
    kernel = functools.partial(_bn_dual_add_relu_kernel, inv_count=inv_count)
    row = pl.BlockSpec((tm, c), lambda i: (i, 0))
    vec = pl.BlockSpec((1, c), lambda i: (0, 0))
    return pl.pallas_call(
        kernel,
        out_shape=jax.ShapeDtypeStruct((mp, c), out_dtype),
        grid=(mp // tm,),
        in_specs=[row, vec, vec, vec, vec, row, vec, vec, vec, vec],
        out_specs=row,
        compiler_params=_compiler_params(("parallel",)),
    )(y, s, q, g, b, yd, sd, qd, gd, bd)


# ----------------------------------------------------------------------------
# Parameter construction (PyTorch layouts, shapes from Bottleneck.__init__)
# ----------------------------------------------------------------------------
def init_bottleneck_params(key, in_planes, planes, stride):
    out_planes = EXPANSION * planes
    ks = jax.random.split(key, 12)

    def conv_w(k, cout, cin, kh, kw):
        fan_in = cin * kh * kw
        return jax.random.normal(k, (cout, cin, kh, kw), jnp.float32) * (2.0 / fan_in) ** 0.5

    def bn(kg, kb, c):
        g = 1.0 + 0.1 * jax.random.normal(kg, (c,), jnp.float32)
        b = 0.1 * jax.random.normal(kb, (c,), jnp.float32)
        return g, b

    p = {}
    p["w1"] = conv_w(ks[0], planes, in_planes, 1, 1)
    p["g1"], p["b1"] = bn(ks[1], ks[2], planes)
    p["w2"] = conv_w(ks[3], planes, planes, 3, 3)
    p["g2"], p["b2"] = bn(ks[4], ks[5], planes)
    p["w3"] = conv_w(ks[6], out_planes, planes, 1, 1)
    p["g3"], p["b3"] = bn(ks[7], ks[8], out_planes)
    if stride != 1 or in_planes != out_planes:
        p["wd"] = conv_w(ks[9], out_planes, in_planes, 1, 1)
        p["gd"], p["bd"] = bn(ks[10], ks[11], out_planes)
    return p


# ----------------------------------------------------------------------------
# Glue helpers (pure data movement / layout prep)
# ----------------------------------------------------------------------------
def _pad_mat(w, rows, cols):
    return jnp.pad(w, ((0, rows - w.shape[0]), (0, cols - w.shape[1])))


def _pad_vec(v, c, fill):
    return jnp.pad(v, (0, c - v.shape[0]), constant_values=fill).reshape(1, c).astype(jnp.float32)


def _pad_rows(a, mp):
    return jnp.pad(a, ((0, mp - a.shape[0]), (0, 0)))


# ----------------------------------------------------------------------------
# Forward pass
# ----------------------------------------------------------------------------
def bottleneck_forward(params, x_nchw, stride):
    n, cin, h, w = x_nchw.shape
    planes = params["w1"].shape[0]
    out_planes = params["w3"].shape[0]
    cin_p = _round_up(cin, LANE)
    p_p = _round_up(planes, LANE)
    o_p = _round_up(out_planes, LANE)

    # --- weight / BN-param layout prep: lane-pad channels, bf16 matmul operands
    w1p = _pad_mat(params["w1"][:, :, 0, 0].T, cin_p, p_p).astype(jnp.bfloat16)
    w2t = jnp.transpose(params["w2"], (2, 3, 1, 0))                      # (3,3,cin,cout)
    w2p = jnp.pad(w2t, ((0, 0), (0, 0), (0, p_p - planes), (0, p_p - planes))).astype(jnp.bfloat16)
    w3p = _pad_mat(params["w3"][:, :, 0, 0].T, p_p, o_p).astype(jnp.bfloat16)
    g1p, b1p = _pad_vec(params["g1"], p_p, 1.0), _pad_vec(params["b1"], p_p, 0.0)
    g2p, b2p = _pad_vec(params["g2"], p_p, 1.0), _pad_vec(params["b2"], p_p, 0.0)
    g3p, b3p = _pad_vec(params["g3"], o_p, 1.0), _pad_vec(params["b3"], o_p, 0.0)

    # --- input: NCHW -> NHWC -> (M, C) rows, lane-padded channels, tile-padded rows
    x_nhwc = jnp.transpose(x_nchw, (0, 2, 3, 1))
    m1 = n * h * w
    tm1 = _pick_tm(m1)
    m1p = _round_up(m1, tm1)
    x_rows_f32 = _pad_rows(jnp.pad(x_nhwc.reshape(m1, cin), ((0, 0), (0, cin_p - cin))), m1p)
    x_bf = x_rows_f32.astype(jnp.bfloat16)

    # --- conv1 (1x1): matmul + batch stats; BN1+ReLU is applied inside conv2
    y1, s1, q1 = matmul_stats(x_bf, w1p, m1, tm1)                        # bf16 (m1p, p_p)

    # --- conv2 (3x3, pad=1, stride): per-image grid, fused BN1+ReLU, in-VMEM pad
    y1_img = y1[:m1].reshape(n, h, w, p_p)
    y2, s2, q2 = conv3x3_bn_stats(y1_img, s1, q1, g1p, b1p, w2p, stride, 1.0 / m1)
    ho, wo = y2.shape[1], y2.shape[2]
    m2 = n * ho * wo
    tm2 = _pick_tm(m2)
    m2p = _round_up(m2, tm2)
    y2_rows = _pad_rows(y2.reshape(m2, p_p), m2p)                        # bf16 rows

    # --- conv3 (1x1): BN2+ReLU fused onto the input tile, matmul + batch stats
    y3, s3, q3 = bn_relu_matmul_stats(y2_rows, s2, q2, g2p, b2p, w3p, m2, 1.0 / m2, tm2)

    # --- residual branch + fused BN3 / add / ReLU epilogue
    if "wd" in params:
        wdp = _pad_mat(params["wd"][:, :, 0, 0].T, cin_p, o_p).astype(jnp.bfloat16)
        gdp, bdp = _pad_vec(params["gd"], o_p, 1.0), _pad_vec(params["bd"], o_p, 0.0)
        xd = x_nhwc[:, ::stride, ::stride, :].reshape(m2, cin)
        xd_rows = _pad_rows(jnp.pad(xd, ((0, 0), (0, cin_p - cin))), m2p).astype(jnp.bfloat16)
        yd, sd, qd = matmul_stats(xd_rows, wdp, m2, tm2)
        out = bn_dual_add_relu(y3, s3, q3, g3p, b3p, yd, sd, qd, gdp, bdp,
                               inv_count=1.0 / m2, out_dtype=jnp.float32, tm=tm2)
    else:
        assert stride == 1 and cin == out_planes, \
            "identity residual requires stride == 1 and in_planes == 4 * planes"
        out = bn_add_relu(y3, s3, q3, g3p, b3p, x_rows_f32,
                          inv_count=1.0 / m2, out_dtype=jnp.float32, tm=tm2)

    out_nhwc = out[:m2].reshape(n, ho, wo, o_p)[..., :out_planes]
    return jnp.transpose(out_nhwc, (0, 3, 1, 2))                         # back to NCHW


# ----------------------------------------------------------------------------
# Pure-JAX reference (training-mode BN, matches the PyTorch module semantics)
# ----------------------------------------------------------------------------
def _reference_forward(params, x, stride):
    def bn(y, g, b):
        mean = y.mean(axis=(0, 2, 3), keepdims=True)
        var = ((y - mean) ** 2).mean(axis=(0, 2, 3), keepdims=True)
        return (y - mean) * jax.lax.rsqrt(var + BN_EPS) * g.reshape(1, -1, 1, 1) \
            + b.reshape(1, -1, 1, 1)

    def conv(y, wt, s=1, padding="VALID"):
        return jax.lax.conv_general_dilated(y, wt, (s, s), padding,
                                            dimension_numbers=("NCHW", "OIHW", "NCHW"))

    out = jax.nn.relu(bn(conv(x, params["w1"]), params["g1"], params["b1"]))
    out = jax.nn.relu(bn(conv(out, params["w2"], stride, [(1, 1), (1, 1)]),
                         params["g2"], params["b2"]))
    out = bn(conv(out, params["w3"]), params["g3"], params["b3"])
    if "wd" in params:
        sc = bn(conv(x, params["wd"], stride), params["gd"], params["bd"])
    else:
        sc = x
    return jax.nn.relu(out + sc)


def _max_rel_err(a, b):
    return float(jnp.max(jnp.abs(a - b)) / (jnp.max(jnp.abs(b)) + 1e-6))


# ----------------------------------------------------------------------------
if __name__ == "__main__":
    key = jax.random.PRNGKey(0)
    k_x, k_p1, k_p2, k_p3, k_x3 = jax.random.split(key, 5)

    fwd = jax.jit(bottleneck_forward, static_argnums=2)

    n, in_planes, planes, h, w = 2, 4, 4, 16, 16
    x = jax.random.normal(k_x, (n, in_planes, h, w), jnp.float32)

    # stride = 1, projection shortcut (in_planes != 4*planes)
    p1 = init_bottleneck_params(k_p1, in_planes, planes, stride=1)
    o1 = jax.block_until_ready(fwd(p1, x, 1))
    assert o1.shape == (n, EXPANSION * planes, h, w)
    assert bool(jnp.all(jnp.isfinite(o1)))
    assert _max_rel_err(o1, _reference_forward(p1, x, 1)) < 0.1

    # stride = 2, spatial downsampling (strided 3x3 + strided 1x1 shortcut)
    p2 = init_bottleneck_params(k_p2, in_planes, planes, stride=2)
    o2 = jax.block_until_ready(fwd(p2, x, 2))
    assert o2.shape == (n, EXPANSION * planes, h // 2, w // 2)
    assert bool(jnp.all(jnp.isfinite(o2)))
    assert _max_rel_err(o2, _reference_forward(p2, x, 2)) < 0.1

    # identity shortcut (in_planes == 4*planes, stride = 1)
    x3 = jax.random.normal(k_x3, (n, EXPANSION * planes, h, w), jnp.float32)
    p3 = init_bottleneck_params(k_p3, EXPANSION * planes, planes, stride=1)
    o3 = jax.block_until_ready(fwd(p3, x3, 1))
    assert o3.shape == (n, EXPANSION * planes, h, w)
    assert bool(jnp.all(jnp.isfinite(o3)))
    assert _max_rel_err(o3, _reference_forward(p3, x3, 1)) < 0.1

    print("KERNEL_OK")
</pallas_src>

<mosaic_0001>
module attributes {stable_mosaic.version = 11 : i64} {
  func.func @_matmul_stats_kernel(%arg0: i32, %arg1: memref<512x128xbf16, #tpu.memory_space<vmem>>, %arg2: memref<128x128xbf16, #tpu.memory_space<vmem>>, %arg3: memref<512x128xbf16, #tpu.memory_space<vmem>>, %arg4: memref<1x8x128xf32, #tpu.memory_space<vmem>>) attributes {dimension_semantics = [#tpu.dimension_semantics<parallel>], iteration_bounds = array<i64: 1>, scalar_prefetch = 0 : i64, scratch_operands = 0 : i64, tpu.core_type = #tpu.core_type<tc>, window_params = [{transform_indices = @transform_0, window_bounds = array<i64: 512, 128>}, {pipeline_mode = #tpu.pipeline_mode<synchronous>, transform_indices = @transform_1, window_bounds = array<i64: 128, 128>}, {transform_indices = @transform_2, window_bounds = array<i64: 512, 128>}, {transform_indices = @transform_3, window_bounds = array<i64: 1, 8, 128>}]} {
    %c0 = arith.constant 0 : index
    %c0_0 = arith.constant 0 : index
    %0 = vector.load %arg1[%c0, %c0_0] : memref<512x128xbf16, #tpu.memory_space<vmem>>, vector<512x128xbf16>
    %c0_1 = arith.constant 0 : index
    %c0_2 = arith.constant 0 : index
    %1 = vector.load %arg2[%c0_1, %c0_2] : memref<128x128xbf16, #tpu.memory_space<vmem>>, vector<128x128xbf16>
    %cst = arith.constant dense<0.000000e+00> : vector<512x128xf32>
    %2 = tpu.matmul %0, %1, %cst {dimension_numbers = #tpu.dot_dimension_numbers<[1], [0], [0], [1], [0, 0, 1, 1], [], []>} : vector<512x128xbf16>, vector<128x128xbf16>, vector<512x128xf32> -> vector<512x128xf32>
    %3 = arith.truncf %2 : vector<512x128xf32> to vector<512x128xbf16>
    %c0_3 = arith.constant 0 : index
    %c0_4 = arith.constant 0 : index
    %4 = vector.load %arg3[%c0_3, %c0_4] : memref<512x128xbf16, #tpu.memory_space<vmem>>, vector<512x128xbf16>
    tpu.vector_store %arg3[%c0_3, %c0_4], %3 {strides = array<i32>} : memref<512x128xbf16, #tpu.memory_space<vmem>>, vector<512x128xbf16>,
    %c512_i32 = arith.constant 512 : i32
    %5 = arith.muli %arg0, %c512_i32 : i32
    %6 = tpu.iota {dimensions = array<i32: 0>} : vector<512x1xi32>
    %7 = vector.broadcast %5 : i32 to vector<512x1xi32>
    %8 = arith.addi %7, %6 : vector<512x1xi32>
    %c512_i32_5 = arith.constant 512 : i32
    %9 = vector.broadcast %c512_i32_5 : i32 to vector<512x1xi32>
    %10 = arith.cmpi slt, %8, %9 : vector<512x1xi32>
    %11 = arith.extui %10 : vector<512x1xi1> to vector<512x1xi32>
    %12 = arith.sitofp %11 : vector<512x1xi32> to vector<512x1xf32>
    %13 = vector.broadcast %12 : vector<512x1xf32> to vector<512x128xf32>
    %14 = arith.mulf %2, %13 : vector<512x128xf32>
    %cst_6 = arith.constant dense<0.000000e+00> : vector<128xf32>
    %15 = vector.multi_reduction <add>, %14, %cst_6 [0] : vector<512x128xf32> to vector<128xf32>
    %16 = vector.shape_cast %15 : vector<128xf32> to vector<1x128xf32>
    %17 = arith.mulf %14, %14 : vector<512x128xf32>
    %cst_7 = arith.constant dense<0.000000e+00> : vector<128xf32>
    %18 = vector.multi_reduction <add>, %17, %cst_7 [0] : vector<512x128xf32> to vector<128xf32>
    %19 = vector.shape_cast %18 : vector<128xf32> to vector<1x128xf32>
    %cst_8 = arith.constant 0.000000e+00 : f32
    %20 = vector.broadcast %cst_8 : f32 to vector<6x128xf32>
    %21 = tpu.concatenate %16, %19, %20 in 0 : vector<1x128xf32>, vector<1x128xf32>, vector<6x128xf32> -> vector<8x128xf32>
    %c0_9 = arith.constant 0 : index
    %c0_10 = arith.constant 0 : index
    %c0_11 = arith.constant 0 : index
    %22 = vector.load %arg4[%c0_9, %c0_10, %c0_11] : memref<1x8x128xf32, #tpu.memory_space<vmem>>, vector<1x8x128xf32>
    %23 = vector.shape_cast %22 : vector<1x8x128xf32> to vector<8x128xf32>
    %24 = vector.shape_cast %21 : vector<8x128xf32> to vector<1x8x128xf32>
    tpu.vector_store %arg4[%c0_9, %c0_10, %c0_11], %24 {strides = array<i32>} : memref<1x8x128xf32, #tpu.memory_space<vmem>>, vector<1x8x128xf32>,
    return
  }
  func.func @transform_0(%arg0: i32) -> (i32, i32) {
    %c0_i32 = arith.constant 0 : i32
    %c0_i32_0 = arith.constant 0 : i32
    return %arg0, %c0_i32 : i32, i32
  }
  func.func @transform_1(%arg0: i32) -> (i32, i32) {
    %c0_i32 = arith.constant 0 : i32
    %c0_i32_0 = arith.constant 0 : i32
    %c0_i32_1 = arith.constant 0 : i32
    return %c0_i32, %c0_i32_0 : i32, i32
  }
  func.func @transform_2(%arg0: i32) -> (i32, i32) {
    %c0_i32 = arith.constant 0 : i32
    %c0_i32_0 = arith.constant 0 : i32
    return %arg0, %c0_i32 : i32, i32
  }
  func.func @transform_3(%arg0: i32) -> (i32, i32, i32) {
    %c0_i32 = arith.constant 0 : i32
    %c0_i32_0 = arith.constant 0 : i32
    %c0_i32_1 = arith.constant 0 : i32
    return %arg0, %c0_i32, %c0_i32_0 : i32, i32, i32
  }
}

module attributes {stable_mosaic.version = 11 : i64} {
  func.func @_conv3x3_bn_stats_kernel(%arg0: i32, %arg1: memref<1x16x16x128xbf16, #tpu.memory_space<vmem>>, %arg2: memref<1x128xf32, #tpu.memory_space<vmem>>, %arg3: memref<1x128xf32, #tpu.memory_space<vmem>>, %arg4: memref<1x128xf32, #tpu.memory_space<vmem>>, %arg5: memref<1x128xf32, #tpu.memory_space<vmem>>, %arg6: memref<3x3x128x128xbf16, #tpu.memory_space<vmem>>, %arg7: memref<1x16x16x128xbf16, #tpu.memory_space<vmem>>, %arg8: memref<1x8x128xf32, #tpu.memory_space<vmem>>, %arg9: memref<256x128xf32, #tpu.memory_space<vmem>>) attributes {dimension_semantics = [#tpu.dimension_semantics<parallel>], iteration_bounds = array<i64: 2>, scalar_prefetch = 0 : i64, scratch_operands = 1 : i64, tpu.core_type = #tpu.core_type<tc>, window_params = [{transform_indices = @transform_0, window_bounds = array<i64: 1, 16, 16, 128>}, {pipeline_mode = #tpu.pipeline_mode<synchronous>, transform_indices = @transform_1, window_bounds = array<i64: 1, 128>}, {pipeline_mode = #tpu.pipeline_mode<synchronous>, transform_indices = @transform_2, window_bounds = array<i64: 1, 128>}, {pipeline_mode = #tpu.pipeline_mode<synchronous>, transform_indices = @transform_3, window_bounds = array<i64: 1, 128>}, {pipeline_mode = #tpu.pipeline_mode<synchronous>, transform_indices = @transform_4, window_bounds = array<i64: 1, 128>}, {pipeline_mode = #tpu.pipeline_mode<synchronous>, transform_indices = @transform_5, window_bounds = array<i64: 3, 3, 128, 128>}, {transform_indices = @transform_6, window_bounds = array<i64: 1, 16, 16, 128>}, {transform_indices = @transform_7, window_bounds = array<i64: 1, 8, 128>}]} {
    %c0 = arith.constant 0 : index
    %c0_0 = arith.constant 0 : index
    %c0_1 = arith.constant 0 : index
    %c0_2 = arith.constant 0 : index
    %0 = vector.load %arg1[%c0, %c0_0, %c0_1, %c0_2] : memref<1x16x16x128xbf16, #tpu.memory_space<vmem>>, vector<1x16x16x128xbf16>
    %1 = vector.shape_cast %0 : vector<1x16x16x128xbf16> to vector<16x16x128xbf16>
    %2 = arith.extf %1 : vector<16x16x128xbf16> to vector<16x16x128xf32>
    %c0_3 = arith.constant 0 : index
    %c0_4 = arith.constant 0 : index
    %3 = vector.load %arg2[%c0_3, %c0_4] : memref<1x128xf32, #tpu.memory_space<vmem>>, vector<1x128xf32>
    %cst = arith.constant 0.001953125 : f32
    %4 = vector.broadcast %cst : f32 to vector<1x128xf32>
    %5 = arith.mulf %3, %4 : vector<1x128xf32>
    %c0_5 = arith.constant 0 : index
    %c0_6 = arith.constant 0 : index
    %6 = vector.load %arg3[%c0_5, %c0_6] : memref<1x128xf32, #tpu.memory_space<vmem>>, vector<1x128xf32>
    %cst_7 = arith.constant 0.001953125 : f32
    %7 = vector.broadcast %cst_7 : f32 to vector<1x128xf32>
    %8 = arith.mulf %6, %7 : vector<1x128xf32>
    %9 = arith.mulf %5, %5 : vector<1x128xf32>
    %10 = arith.subf %8, %9 : vector<1x128xf32>
    %cst_8 = arith.constant 0.000000e+00 : f32
    %11 = vector.broadcast %cst_8 : f32 to vector<1x128xf32>
    %12 = arith.maximumf %10, %11 : vector<1x128xf32>
    %cst_9 = arith.constant 9.99999974E-6 : f32
    %13 = vector.broadcast %cst_9 : f32 to vector<1x128xf32>
    %14 = arith.addf %12, %13 : vector<1x128xf32>
    %15 = math.rsqrt %14 : vector<1x128xf32>
    %c0_10 = arith.constant 0 : index
    %c0_11 = arith.constant 0 : index
    %16 = vector.load %arg4[%c0_10, %c0_11] : memref<1x128xf32, #tpu.memory_space<vmem>>, vector<1x128xf32>
    %17 = arith.mulf %15, %16 : vector<1x128xf32>
    %18 = vector.shape_cast %5 : vector<1x128xf32> to vector<1x1x128xf32>
    %19 = vector.broadcast %18 : vector<1x1x128xf32> to vector<16x16x128xf32>
    %20 = arith.subf %2, %19 : vector<16x16x128xf32>
    %21 = vector.shape_cast %17 : vector<1x128xf32> to vector<1x1x128xf32>
    %22 = vector.broadcast %21 : vector<1x1x128xf32> to vector<16x16x128xf32>
    %23 = arith.mulf %20, %22 : vector<16x16x128xf32>
    %c0_12 = arith.constant 0 : index
    %c0_13 = arith.constant 0 : index
    %24 = vector.load %arg5[%c0_12, %c0_13] : memref<1x128xf32, #tpu.memory_space<vmem>>, vector<1x128xf32>
    %25 = vector.shape_cast %24 : vector<1x128xf32> to vector<1x1x128xf32>
    %26 = vector.broadcast %25 : vector<1x1x128xf32> to vector<16x16x128xf32>
    %27 = arith.addf %23, %26 : vector<16x16x128xf32>
    %cst_14 = arith.constant 0.000000e+00 : f32
    %28 = vector.broadcast %cst_14 : f32 to vector<16x16x128xf32>
    %29 = arith.maximumf %27, %28 : vector<16x16x128xf32>
    %30 = arith.truncf %29 : vector<16x16x128xf32> to vector<16x16x128xbf16>
    %cst_15 = arith.constant 0.000000e+00 : bf16
    %31 = vector.broadcast %cst_15 : bf16 to vector<16x1x128xbf16>
    %cst_16 = arith.constant 0.000000e+00 : bf16
    %32 = vector.broadcast %cst_16 : bf16 to vector<1x18x128xbf16>
    %33 = tpu.concatenate %31, %30, %31 in 1 : vector<16x1x128xbf16>, vector<16x16x128xbf16>, vector<16x1x128xbf16> -> vector<16x18x128xbf16>
    %34 = tpu.concatenate %32, %33, %32 in 0 : vector<1x18x128xbf16>, vector<16x18x128xbf16>, vector<1x18x128xbf16> -> vector<18x18x128xbf16>
    %cst_17 = arith.constant 0.000000e+00 : f32
    %35 = vector.broadcast %cst_17 : f32 to vector<256x128xf32>
    %c0_18 = arith.constant 0 : index
    %c0_19 = arith.constant 0 : index
    %36 = vector.load %arg9[%c0_18, %c0_19] : memref<256x128xf32, #tpu.memory_space<vmem>>, vector<256x128xf32>
    tpu.vector_store %arg9[%c0_18, %c0_19], %35 {strides = array<i32>} : memref<256x128xf32, #tpu.memory_space<vmem>>, vector<256x128xf32>,
    %37 = vector.extract_strided_slice %34 {offsets = [0, 0, 0], sizes = [16, 16, 128], strides = [1, 1, 1]} : vector<18x18x128xbf16> to vector<16x16x128xbf16>
    %c0_20 = arith.constant 0 : index
    %c0_21 = arith.constant 0 : index
    %38 = vector.load %arg9[%c0_20, %c0_21] : memref<256x128xf32, #tpu.memory_space<vmem>>, vector<256x128xf32>
    %39 = vector.shape_cast %37 : vector<16x16x128xbf16> to vector<256x128xbf16>
    %c0_22 = arith.constant 0 : index
    %c0_23 = arith.constant 0 : index
    %c0_24 = arith.constant 0 : index
    %c0_25 = arith.constant 0 : index
    %40 = vector.load %arg6[%c0_22, %c0_23, %c0_24, %c0_25] : memref<3x3x128x128xbf16, #tpu.memory_space<vmem>>, vector<1x1x128x128xbf16>
    %41 = vector.shape_cast %40 : vector<1x1x128x128xbf16> to vector<128x128xbf16>
    %cst_26 = arith.constant dense<0.000000e+00> : vector<256x128xf32>
    %42 = tpu.matmul %39, %41, %cst_26 {dimension_numbers = #tpu.dot_dimension_numbers<[1], [0], [0], [1], [0, 0, 1, 1], [], []>} : vector<256x128xbf16>, vector<128x128xbf16>, vector<256x128xf32> -> vector<256x128xf32>
    %43 = arith.addf %38, %42 : vector<256x128xf32>
    %c0_27 = arith.constant 0 : index
    %c0_28 = arith.constant 0 : index
    %44 = vector.load %arg9[%c0_27, %c0_28] : memref<256x128xf32, #tpu.memory_space<vmem>>, vector<256x128xf32>
    tpu.vector_store %arg9[%c0_27, %c0_28], %43 {strides = array<i32>} : memref<256x128xf32, #tpu.memory_space<vmem>>, vector<256x128xf32>,
    %45 = vector.extract_strided_slice %34 {offsets = [0, 1, 0], sizes = [16, 16, 128], strides = [1, 1, 1]} : vector<18x18x128xbf16> to vector<16x16x128xbf16>
    %c0_29 = arith.constant 0 : index
    %c0_30 = arith.constant 0 : index
    %46 = vector.load %arg9[%c0_29, %c0_30] : memref<256x128xf32, #tpu.memory_space<vmem>>, vector<256x128xf32>
    %47 = vector.shape_cast %45 : vector<16x16x128xbf16> to vector<256x128xbf16>
    %c0_31 = arith.constant 0 : index
    %c1 = arith.constant 1 : index
    %c0_32 = arith.constant 0 : index
    %c0_33 = arith.constant 0 : index
    %48 = vector.load %arg6[%c0_31, %c1, %c0_32, %c0_33] : memref<3x3x128x128xbf16, #tpu.memory_space<vmem>>, vector<1x1x128x128xbf16>
    %49 = vector.shape_cast %48 : vector<1x1x128x128xbf16> to vector<128x128xbf16>
    %cst_34 = arith.constant dense<0.000000e+00> : vector<256x128xf32>
    %50 = tpu.matmul %47, %49, %cst_34 {dimension_numbers = #tpu.dot_dimension_numbers<[1], [0], [0], [1], [0, 0, 1, 1], [], []>} : vector<256x128xbf16>, vector<128x128xbf16>, vector<256x128xf32> -> vector<256x128xf32>
    %51 = arith.addf %46, %50 : vector<256x128xf32>
    %c0_35 = arith.constant 0 : index
    %c0_36 = arith.constant 0 : index
    %52 = vector.load %arg9[%c0_35, %c0_36] : memref<256x128xf32, #tpu.memory_space<vmem>>, vector<256x128xf32>
    tpu.vector_store %arg9[%c0_35, %c0_36], %51 {strides = array<i32>} : memref<256x128xf32, #tpu.memory_space<vmem>>, vector<256x128xf32>,
    %53 = vector.extract_strided_slice %34 {offsets = [0, 2, 0], sizes = [16, 16, 128], strides = [1, 1, 1]} : vector<18x18x128xbf16> to vector<16x16x128xbf16>
    %c0_37 = arith.constant 0 : index
    %c0_38 = arith.constant 0 : index
    %54 = vector.load %arg9[%c0_37, %c0_38] : memref<256x128xf32, #tpu.memory_space<vmem>>, vector<256x128xf32>
    %55 = vector.shape_cast %53 : vector<16x16x128xbf16> to vector<256x128xbf16>
    %c0_39 = arith.constant 0 : index
    %c2 = arith.constant 2 : index
    %c0_40 = arith.constant 0 : index
    %c0_41 = arith.constant 0 : index
    %56 = vector.load %arg6[%c0_39, %c2, %c0_40, %c0_41] : memref<3x3x128x128xbf16, #tpu.memory_space<vmem>>, vector<1x1x128x128xbf16>
    %57 = vector.shape_cast %56 : vector<1x1x128x128xbf16> to vector<128x128xbf16>
    %cst_42 = arith.constant dense<0.000000e+00> : vector<256x128xf32>
    %58 = tpu.matmul %55, %57, %cst_42 {dimension_numbers = #tpu.dot_dimension_numbers<[1], [0], [0], [1], [0, 0, 1, 1], [], []>} : vector<256x128xbf16>, vector<128x128xbf16>, vector<256x128xf32> -> vector<256x128xf32>
    %59 = arith.addf %54, %58 : vector<256x128xf32>
    %c0_43 = arith.constant 0 : index
    %c0_44 = arith.constant 0 : index
    %60 = vector.load %arg9[%c0_43, %c0_44] : memref<256x128xf32, #tpu.memory_space<vmem>>, vector<256x128xf32>
    tpu.vector_store %arg9[%c0_43, %c0_44], %59 {strides = array<i32>} : memref<256x128xf32, #tpu.memory_space<vmem>>, vector<256x128xf32>,
    %61 = vector.extract_strided_slice %34 {offsets = [1, 0, 0], sizes = [16, 16, 128], strides = [1, 1, 1]} : vector<18x18x128xbf16> to vector<16x16x128xbf16>
    %c0_45 = arith.constant 0 : index
    %c0_46 = arith.constant 0 : index
    %62 = vector.load %arg9[%c0_45, %c0_46] : memref<256x128xf32, #tpu.memory_space<vmem>>, vector<256x128xf32>
    %63 = vector.shape_cast %61 : vector<16x16x128xbf16> to vector<256x128xbf16>
    %c1_47 = arith.constant 1 : index
    %c0_48 = arith.constant 0 : index
    %c0_49 = arith.constant 0 : index
    %c0_50 = arith.constant 0 : index
    %64 = vector.load %arg6[%c1_47, %c0_48, %c0_49, %c0_50] : memref<3x3x128x128xbf16, #tpu.memory_space<vmem>>, vector<1x1x128x128xbf16>
    %65 = vector.shape_cast %64 : vector<1x1x128x128xbf16> to vector<128x128xbf16>
    %cst_51 = arith.constant dense<0.000000e+00> : vector<256x128xf32>
    %66 = tpu.matmul %63, %65, %cst_51 {dimension_numbers = #tpu.dot_dimension_numbers<[1], [0], [0], [1], [0, 0, 1, 1], [], []>} : vector<256x128xbf16>, vector<128x128xbf16>, vector<256x128xf32> -> vector<256x128xf32>
    %67 = arith.addf %62, %66 : vector<256x128xf32>
    %c0_52 = arith.constant 0 : index
    %c0_53 = arith.constant 0 : index
    %68 = vector.load %arg9[%c0_52, %c0_53] : memref<256x128xf32, #tpu.memory_space<vmem>>, vector<256x128xf32>
    tpu.vector_store %arg9[%c0_52, %c0_53], %67 {strides = array<i32>} : memref<256x128xf32, #tpu.memory_space<vmem>>, vector<256x128xf32>,
    %69 = vector.extract_strided_slice %34 {offsets = [1, 1, 0], sizes = [16, 16, 128], strides = [1, 1, 1]} : vector<18x18x128xbf16> to vector<16x16x128xbf16>
    %c0_54 = arith.constant 0 : index
    %c0_55 = arith.constant 0 : index
    %70 = vector.load %arg9[%c0_54, %c0_55] : memref<256x128xf32, #tpu.memory_space<vmem>>, vector<256x128xf32>
    %71 = vector.shape_cast %69 : vector<16x16x128xbf16> to vector<256x128xbf16>
    %c1_56 = arith.constant 1 : index
    %c1_57 = arith.constant 1 : index
    %c0_58 = arith.constant 0 : index
    %c0_59 = arith.constant 0 : index
    %72 = vector.load %arg6[%c1_56, %c1_57, %c0_58, %c0_59] : memref<3x3x128x128xbf16, #tpu.memory_space<vmem>>, vector<1x1x128x128xbf16>
    %73 = vector.shape_cast %72 : vector<1x1x128x128xbf16> to vector<128x128xbf16>
    %cst_60 = arith.constant dense<0.000000e+00> : vector<256x128xf32>
    %74 = tpu.matmul %71, %73, %cst_60 {dimension_numbers = #tpu.dot_dimension_numbers<[1], [0], [0], [1], [0, 0, 1, 1], [], []>} : vector<256x128xbf16>, vector<128x128xbf16>, vector<256x128xf32> -> vector<256x128xf32>
    %75 = arith.addf %70, %74 : vector<256x128xf32>
    %c0_61 = arith.constant 0 : index
    %c0_62 = arith.constant 0 : index
    %76 = vector.load %arg9[%c0_61, %c0_62] : memref<256x128xf32, #tpu.memory_space<vmem>>, vector<256x128xf32>
    tpu.vector_store %arg9[%c0_61, %c0_62], %75 {strides = array<i32>} : memref<256x128xf32, #tpu.memory_space<vmem>>, vector<256x128xf32>,
    %77 = vector.extract_strided_slice %34 {offsets = [1, 2, 0], sizes = [16, 16, 128], strides = [1, 1, 1]} : vector<18x18x128xbf16> to vector<16x16x128xbf16>
    %c0_63 = arith.constant 0 : index
    %c0_64 = arith.constant 0 : index
    %78 = vector.load %arg9[%c0_63, %c0_64] : memref<256x128xf32, #tpu.memory_space<vmem>>, vector<256x128xf32>
    %79 = vector.shape_cast %77 : vector<16x16x128xbf16> to vector<256x128xbf16>
    %c1_65 = arith.constant 1 : index
    %c2_66 = arith.constant 2 : index
    %c0_67 = arith.constant 0 : index
    %c0_68 = arith.constant 0 : index
    %80 = vector.load %arg6[%c1_65, %c2_66, %c0_67, %c0_68] : memref<3x3x128x128xbf16, #tpu.memory_space<vmem>>, vector<1x1x128x128xbf16>
    %81 = vector.shape_cast %80 : vector<1x1x128x128xbf16> to vector<128x128xbf16>
    %cst_69 = arith.constant dense<0.000000e+00> : vector<256x128xf32>
    %82 = tpu.matmul %79, %81, %cst_69 {dimension_numbers = #tpu.dot_dimension_numbers<[1], [0], [0], [1], [0, 0, 1, 1], [], []>} : vector<256x128xbf16>, vector<128x128xbf16>, vector<256x128xf32> -> vector<256x128xf32>
    %83 = arith.addf %78, %82 : vector<256x128xf32>
    %c0_70 = arith.constant 0 : index
    %c0_71 = arith.constant 0 : index
    %84 = vector.load %arg9[%c0_70, %c0_71] : memref<256x128xf32, #tpu.memory_space<vmem>>, vector<256x128xf32>
    tpu.vector_store %arg9[%c0_70, %c0_71], %83 {strides = array<i32>} : memref<256x128xf32, #tpu.memory_space<vmem>>, vector<256x128xf32>,
    %85 = vector.extract_strided_slice %34 {offsets = [2, 0, 0], sizes = [16, 16, 128], strides = [1, 1, 1]} : vector<18x18x128xbf16> to vector<16x16x128xbf16>
    %c0_72 = arith.constant 0 : index
    %c0_73 = arith.constant 0 : index
    %86 = vector.load %arg9[%c0_72, %c0_73] : memref<256x128xf32, #tpu.memory_space<vmem>>, vector<256x128xf32>
    %87 = vector.shape_cast %85 : vector<16x16x128xbf16> to vector<256x128xbf16>
    %c2_74 = arith.constant 2 : index
    %c0_75 = arith.constant 0 : index
    %c0_76 = arith.constant 0 : index
    %c0_77 = arith.constant 0 : index
    %88 = vector.load %arg6[%c2_74, %c0_75, %c0_76, %c0_77] : memref<3x3x128x128xbf16, #tpu.memory_space<vmem>>, vector<1x1x128x128xbf16>
    %89 = vector.shape_cast %88 : vector<1x1x128x128xbf16> to vector<128x128xbf16>
    %cst_78 = arith.constant dense<0.000000e+00> : vector<256x128xf32>
    %90 = tpu.matmul %87, %89, %cst_78 {dimension_numbers = #tpu.dot_dimension_numbers<[1], [0], [0], [1], [0, 0, 1, 1], [], []>} : vector<256x128xbf16>, vector<128x128xbf16>, vector<256x128xf32> -> vector<256x128xf32>
    %91 = arith.addf %86, %90 : vector<256x128xf32>
    %c0_79 = arith.constant 0 : index
    %c0_80 = arith.constant 0 : index
    %92 = vector.load %arg9[%c0_79, %c0_80] : memref<256x128xf32, #tpu.memory_space<vmem>>, vector<256x128xf32>
    tpu.vector_store %arg9[%c0_79, %c0_80], %91 {strides = array<i32>} : memref<256x128xf32, #tpu.memory_space<vmem>>, vector<256x128xf32>,
    %93 = vector.extract_strided_slice %34 {offsets = [2, 1, 0], sizes = [16, 16, 128], strides = [1, 1, 1]} : vector<18x18x128xbf16> to vector<16x16x128xbf16>
    %c0_81 = arith.constant 0 : index
    %c0_82 = arith.constant 0 : index
    %94 = vector.load %arg9[%c0_81, %c0_82] : memref<256x128xf32, #tpu.memory_space<vmem>>, vector<256x128xf32>
    %95 = vector.shape_cast %93 : vector<16x16x128xbf16> to vector<256x128xbf16>
    %c2_83 = arith.constant 2 : index
    %c1_84 = arith.constant 1 : index
    %c0_85 = arith.constant 0 : index
    %c0_86 = arith.constant 0 : index
    %96 = vector.load %arg6[%c2_83, %c1_84, %c0_85, %c0_86] : memref<3x3x128x128xbf16, #tpu.memory_space<vmem>>, vector<1x1x128x128xbf16>
    %97 = vector.shape_cast %96 : vector<1x1x128x128xbf16> to vector<128x128xbf16>
    %cst_87 = arith.constant dense<0.000000e+00> : vector<256x128xf32>
    %98 = tpu.matmul %95, %97, %cst_87 {dimension_numbers = #tpu.dot_dimension_numbers<[1], [0], [0], [1], [0, 0, 1, 1], [], []>} : vector<256x128xbf16>, vector<128x128xbf16>, vector<256x128xf32> -> vector<256x128xf32>
    %99 = arith.addf %94, %98 : vector<256x128xf32>
    %c0_88 = arith.constant 0 : index
    %c0_89 = arith.constant 0 : index
    %100 = vector.load %arg9[%c0_88, %c0_89] : memref<256x128xf32, #tpu.memory_space<vmem>>, vector<256x128xf32>
    tpu.vector_store %arg9[%c0_88, %c0_89], %99 {strides = array<i32>} : memref<256x128xf32, #tpu.memory_space<vmem>>, vector<256x128xf32>,
    %101 = vector.extract_strided_slice %34 {offsets = [2, 2, 0], sizes = [16, 16, 128], strides = [1, 1, 1]} : vector<18x18x128xbf16> to vector<16x16x128xbf16>
    %c0_90 = arith.constant 0 : index
    %c0_91 = arith.constant 0 : index
    %102 = vector.load %arg9[%c0_90, %c0_91] : memref<256x128xf32, #tpu.memory_space<vmem>>, vector<256x128xf32>
    %103 = vector.shape_cast %101 : vector<16x16x128xbf16> to vector<256x128xbf16>
    %c2_92 = arith.constant 2 : index
    %c2_93 = arith.constant 2 : index
    %c0_94 = arith.constant 0 : index
    %c0_95 = arith.constant 0 : index
    %104 = vector.load %arg6[%c2_92, %c2_93, %c0_94, %c0_95] : memref<3x3x128x128xbf16, #tpu.memory_space<vmem>>, vector<1x1x128x128xbf16>
    %105 = vector.shape_cast %104 : vector<1x1x128x128xbf16> to vector<128x128xbf16>
    %cst_96 = arith.constant dense<0.000000e+00> : vector<256x128xf32>
    %106 = tpu.matmul %103, %105, %cst_96 {dimension_numbers = #tpu.dot_dimension_numbers<[1], [0], [0], [1], [0, 0, 1, 1], [], []>} : vector<256x128xbf16>, vector<128x128xbf16>, vector<256x128xf32> -> vector<256x128xf32>
    %107 = arith.addf %102, %106 : vector<256x128xf32>
    %c0_97 = arith.constant 0 : index
    %c0_98 = arith.constant 0 : index
    %108 = vector.load %arg9[%c0_97, %c0_98] : memref<256x128xf32, #tpu.memory_space<vmem>>, vector<256x128xf32>
    tpu.vector_store %arg9[%c0_97, %c0_98], %107 {strides = array<i32>} : memref<256x128xf32, #tpu.memory_space<vmem>>, vector<256x128xf32>,
    %c0_99 = arith.constant 0 : index
    %c0_100 = arith.constant 0 : index
    %109 = vector.load %arg9[%c0_99, %c0_100] : memref<256x128xf32, #tpu.memory_space<vmem>>, vector<256x128xf32>
    %110 = vector.shape_cast %109 : vector<256x128xf32> to vector<16x16x128xf32>
    %111 = arith.truncf %110 : vector<16x16x128xf32> to vector<16x16x128xbf16>
    %c0_101 = arith.constant 0 : index
    %c0_102 = arith.constant 0 : index
    %c0_103 = arith.constant 0 : index
    %c0_104 = arith.constant 0 : index
    %112 = vector.load %arg7[%c0_101, %c0_102, %c0_103, %c0_104] : memref<1x16x16x128xbf16, #tpu.memory_space<vmem>>, vector<1x16x16x128xbf16>
    %113 = vector.shape_cast %112 : vector<1x16x16x128xbf16> to vector<16x16x128xbf16>
    %114 = vector.shape_cast %111 : vector<16x16x128xbf16> to vector<1x16x16x128xbf16>
    tpu.vector_store %arg7[%c0_101, %c0_102, %c0_103, %c0_104], %114 {strides = array<i32>} : memref<1x16x16x128xbf16, #tpu.memory_space<vmem>>, vector<1x16x16x128xbf16>,
    %cst_105 = arith.constant dense<0.000000e+00> : vector<128xf32>
    %115 = vector.multi_reduction <add>, %109, %cst_105 [0] : vector<256x128xf32> to vector<128xf32>
    %116 = vector.shape_cast %115 : vector<128xf32> to vector<1x128xf32>
    %117 = arith.mulf %109, %109 : vector<256x128xf32>
    %cst_106 = arith.constant dense<0.000000e+00> : vector<128xf32>
    %118 = vector.multi_reduction <add>, %117, %cst_106 [0] : vector<256x128xf32> to vector<128xf32>
    %119 = vector.shape_cast %118 : vector<128xf32> to vector<1x128xf32>
    %cst_107 = arith.constant 0.000000e+00 : f32
    %120 = vector.broadcast %cst_107 : f32 to vector<6x128xf32>
    %121 = tpu.concatenate %116, %119, %120 in 0 : vector<1x128xf32>, vector<1x128xf32>, vector<6x128xf32> -> vector<8x128xf32>
    %c0_108 = arith.constant 0 : index
    %c0_109 = arith.constant 0 : index
    %c0_110 = arith.constant 0 : index
    %122 = vector.load %arg8[%c0_108, %c0_109, %c0_110] : memref<1x8x128xf32, #tpu.memory_space<vmem>>, vector<1x8x128xf32>
    %123 = vector.shape_cast %122 : vector<1x8x128xf32> to vector<8x128xf32>
    %124 = vector.shape_cast %121 : vector<8x128xf32> to vector<1x8x128xf32>
    tpu.vector_store %arg8[%c0_108, %c0_109, %c0_110], %124 {strides = array<i32>} : memref<1x8x128xf32, #tpu.memory_space<vmem>>, vector<1x8x128xf32>,
    return
  }
  func.func @transform_0(%arg0: i32) -> (i32, i32, i32, i32) {
    %c0_i32 = arith.constant 0 : i32
    %c0_i32_0 = arith.constant 0 : i32
    %c0_i32_1 = arith.constant 0 : i32
    %c0_i32_2 = arith.constant 0 : i32
    return %arg0, %c0_i32, %c0_i32_0, %c0_i32_1 : i32, i32, i32, i32
  }
  func.func @transform_1(%arg0: i32) -> (i32, i32) {
    %c0_i32 = arith.constant 0 : i32
    %c0_i32_0 = arith.constant 0 : i32
    %c0_i32_1 = arith.constant 0 : i32
    return %c0_i32, %c0_i32_0 : i32, i32
  }
  func.func @transform_2(%arg0: i32) -> (i32, i32) {
    %c0_i32 = arith.constant 0 : i32
    %c0_i32_0 = arith.constant 0 : i32
    %c0_i32_1 = arith.constant 0 : i32
    return %c0_i32, %c0_i32_0 : i32, i32
  }
  func.func @transform_3(%arg0: i32) -> (i32, i32) {
    %c0_i32 = arith.constant 0 : i32
    %c0_i32_0 = arith.constant 0 : i32
    %c0_i32_1 = arith.constant 0 : i32
    return %c0_i32, %c0_i32_0 : i32, i32
  }
  func.func @transform_4(%arg0: i32) -> (i32, i32) {
    %c0_i32 = arith.constant 0 : i32
    %c0_i32_0 = arith.constant 0 : i32
    %c0_i32_1 = arith.constant 0 : i32
    return %c0_i32, %c0_i32_0 : i32, i32
  }
  func.func @transform_5(%arg0: i32) -> (i32, i32, i32, i32) {
    %c0_i32 = arith.constant 0 : i32
    %c0_i32_0 = arith.constant 0 : i32
    %c0_i32_1 = arith.constant 0 : i32
    %c0_i32_2 = arith.constant 0 : i32
    %c0_i32_3 = arith.constant 0 : i32
    return %c0_i32, %c0_i32_0, %c0_i32_1, %c0_i32_2 : i32, i32, i32, i32
  }
  func.func @transform_6(%arg0: i32) -> (i32, i32, i32, i32) {
    %c0_i32 = arith.constant 0 : i32
    %c0_i32_0 = arith.constant 0 : i32
    %c0_i32_1 = arith.constant 0 : i32
    %c0_i32_2 = arith.constant 0 : i32
    return %arg0, %c0_i32, %c0_i32_0, %c0_i32_1 : i32, i32, i32, i32
  }
  func.func @transform_7(%arg0: i32) -> (i32, i32, i32) {
    %c0_i32 = arith.constant 0 : i32
    %c0_i32_0 = arith.constant 0 : i32
    %c0_i32_1 = arith.constant 0 : i32
    return %arg0, %c0_i32, %c0_i32_0 : i32, i32, i32
  }
}

module attributes {stable_mosaic.version = 11 : i64} {
  func.func @_bn_relu_matmul_stats_kernel(%arg0: i32, %arg1: memref<512x128xbf16, #tpu.memory_space<vmem>>, %arg2: memref<1x128xf32, #tpu.memory_space<vmem>>, %arg3: memref<1x128xf32, #tpu.memory_space<vmem>>, %arg4: memref<1x128xf32, #tpu.memory_space<vmem>>, %arg5: memref<1x128xf32, #tpu.memory_space<vmem>>, %arg6: memref<128x128xbf16, #tpu.memory_space<vmem>>, %arg7: memref<512x128xbf16, #tpu.memory_space<vmem>>, %arg8: memref<1x8x128xf32, #tpu.memory_space<vmem>>) attributes {dimension_semantics = [#tpu.dimension_semantics<parallel>], iteration_bounds = array<i64: 1>, scalar_prefetch = 0 : i64, scratch_operands = 0 : i64, tpu.core_type = #tpu.core_type<tc>, window_params = [{transform_indices = @transform_0, window_bounds = array<i64: 512, 128>}, {pipeline_mode = #tpu.pipeline_mode<synchronous>, transform_indices = @transform_1, window_bounds = array<i64: 1, 128>}, {pipeline_mode = #tpu.pipeline_mode<synchronous>, transform_indices = @transform_2, window_bounds = array<i64: 1, 128>}, {pipeline_mode = #tpu.pipeline_mode<synchronous>, transform_indices = @transform_3, window_bounds = array<i64: 1, 128>}, {pipeline_mode = #tpu.pipeline_mode<synchronous>, transform_indices = @transform_4, window_bounds = array<i64: 1, 128>}, {pipeline_mode = #tpu.pipeline_mode<synchronous>, transform_indices = @transform_5, window_bounds = array<i64: 128, 128>}, {transform_indices = @transform_6, window_bounds = array<i64: 512, 128>}, {transform_indices = @transform_7, window_bounds = array<i64: 1, 8, 128>}]} {
    %c0 = arith.constant 0 : index
    %c0_0 = arith.constant 0 : index
    %0 = vector.load %arg1[%c0, %c0_0] : memref<512x128xbf16, #tpu.memory_space<vmem>>, vector<512x128xbf16>
    %1 = arith.extf %0 : vector<512x128xbf16> to vector<512x128xf32>
    %c0_1 = arith.constant 0 : index
    %c0_2 = arith.constant 0 : index
    %2 = vector.load %arg2[%c0_1, %c0_2] : memref<1x128xf32, #tpu.memory_space<vmem>>, vector<1x128xf32>
    %cst = arith.constant 0.001953125 : f32
    %3 = vector.broadcast %cst : f32 to vector<1x128xf32>
    %4 = arith.mulf %2, %3 : vector<1x128xf32>
    %c0_3 = arith.constant 0 : index
    %c0_4 = arith.constant 0 : index
    %5 = vector.load %arg3[%c0_3, %c0_4] : memref<1x128xf32, #tpu.memory_space<vmem>>, vector<1x128xf32>
    %cst_5 = arith.constant 0.001953125 : f32
    %6 = vector.broadcast %cst_5 : f32 to vector<1x128xf32>
    %7 = arith.mulf %5, %6 : vector<1x128xf32>
    %8 = arith.mulf %4, %4 : vector<1x128xf32>
    %9 = arith.subf %7, %8 : vector<1x128xf32>
    %cst_6 = arith.constant 0.000000e+00 : f32
    %10 = vector.broadcast %cst_6 : f32 to vector<1x128xf32>
    %11 = arith.maximumf %9, %10 : vector<1x128xf32>
    %cst_7 = arith.constant 9.99999974E-6 : f32
    %12 = vector.broadcast %cst_7 : f32 to vector<1x128xf32>
    %13 = arith.addf %11, %12 : vector<1x128xf32>
    %14 = math.rsqrt %13 : vector<1x128xf32>
    %c0_8 = arith.constant 0 : index
    %c0_9 = arith.constant 0 : index
    %15 = vector.load %arg4[%c0_8, %c0_9] : memref<1x128xf32, #tpu.memory_space<vmem>>, vector<1x128xf32>
    %16 = arith.mulf %14, %15 : vector<1x128xf32>
    %17 = vector.broadcast %4 : vector<1x128xf32> to vector<512x128xf32>
    %18 = arith.subf %1, %17 : vector<512x128xf32>
    %19 = vector.broadcast %16 : vector<1x128xf32> to vector<512x128xf32>
    %20 = arith.mulf %18, %19 : vector<512x128xf32>
    %c0_10 = arith.constant 0 : index
    %c0_11 = arith.constant 0 : index
    %21 = vector.load %arg5[%c0_10, %c0_11] : memref<1x128xf32, #tpu.memory_space<vmem>>, vector<1x128xf32>
    %22 = vector.broadcast %21 : vector<1x128xf32> to vector<512x128xf32>
    %23 = arith.addf %20, %22 : vector<512x128xf32>
    %cst_12 = arith.constant 0.000000e+00 : f32
    %24 = vector.broadcast %cst_12 : f32 to vector<512x128xf32>
    %25 = arith.maximumf %23, %24 : vector<512x128xf32>
    %26 = arith.truncf %25 : vector<512x128xf32> to vector<512x128xbf16>
    %c0_13 = arith.constant 0 : index
    %c0_14 = arith.constant 0 : index
    %27 = vector.load %arg6[%c0_13, %c0_14] : memref<128x128xbf16, #tpu.memory_space<vmem>>, vector<128x128xbf16>
    %cst_15 = arith.constant dense<0.000000e+00> : vector<512x128xf32>
    %28 = tpu.matmul %26, %27, %cst_15 {dimension_numbers = #tpu.dot_dimension_numbers<[1], [0], [0], [1], [0, 0, 1, 1], [], []>} : vector<512x128xbf16>, vector<128x128xbf16>, vector<512x128xf32> -> vector<512x128xf32>
    %29 = arith.truncf %28 : vector<512x128xf32> to vector<512x128xbf16>
    %c0_16 = arith.constant 0 : index
    %c0_17 = arith.constant 0 : index
    %30 = vector.load %arg7[%c0_16, %c0_17] : memref<512x128xbf16, #tpu.memory_space<vmem>>, vector<512x128xbf16>
    tpu.vector_store %arg7[%c0_16, %c0_17], %29 {strides = array<i32>} : memref<512x128xbf16, #tpu.memory_space<vmem>>, vector<512x128xbf16>,
    %c512_i32 = arith.constant 512 : i32
    %31 = arith.muli %arg0, %c512_i32 : i32
    %32 = tpu.iota {dimensions = array<i32: 0>} : vector<512x1xi32>
    %33 = vector.broadcast %31 : i32 to vector<512x1xi32>
    %34 = arith.addi %33, %32 : vector<512x1xi32>
    %c512_i32_18 = arith.constant 512 : i32
    %35 = vector.broadcast %c512_i32_18 : i32 to vector<512x1xi32>
    %36 = arith.cmpi slt, %34, %35 : vector<512x1xi32>
    %37 = arith.extui %36 : vector<512x1xi1> to vector<512x1xi32>
    %38 = arith.sitofp %37 : vector<512x1xi32> to vector<512x1xf32>
    %39 = vector.broadcast %38 : vector<512x1xf32> to vector<512x128xf32>
    %40 = arith.mulf %28, %39 : vector<512x128xf32>
    %cst_19 = arith.constant dense<0.000000e+00> : vector<128xf32>
    %41 = vector.multi_reduction <add>, %40, %cst_19 [0] : vector<512x128xf32> to vector<128xf32>
    %42 = vector.shape_cast %41 : vector<128xf32> to vector<1x128xf32>
    %43 = arith.mulf %40, %40 : vector<512x128xf32>
    %cst_20 = arith.constant dense<0.000000e+00> : vector<128xf32>
    %44 = vector.multi_reduction <add>, %43, %cst_20 [0] : vector<512x128xf32> to vector<128xf32>
    %45 = vector.shape_cast %44 : vector<128xf32> to vector<1x128xf32>
    %cst_21 = arith.constant 0.000000e+00 : f32
    %46 = vector.broadcast %cst_21 : f32 to vector<6x128xf32>
    %47 = tpu.concatenate %42, %45, %46 in 0 : vector<1x128xf32>, vector<1x128xf32>, vector<6x128xf32> -> vector<8x128xf32>
    %c0_22 = arith.constant 0 : index
    %c0_23 = arith.constant 0 : index
    %c0_24 = arith.constant 0 : index
    %48 = vector.load %arg8[%c0_22, %c0_23, %c0_24] : memref<1x8x128xf32, #tpu.memory_space<vmem>>, vector<1x8x128xf32>
    %49 = vector.shape_cast %48 : vector<1x8x128xf32> to vector<8x128xf32>
    %50 = vector.shape_cast %47 : vector<8x128xf32> to vector<1x8x128xf32>
    tpu.vector_store %arg8[%c0_22, %c0_23, %c0_24], %50 {strides = array<i32>} : memref<1x8x128xf32, #tpu.memory_space<vmem>>, vector<1x8x128xf32>,
    return
  }
  func.func @transform_0(%arg0: i32) -> (i32, i32) {
    %c0_i32 = arith.constant 0 : i32
    %c0_i32_0 = arith.constant 0 : i32
    return %arg0, %c0_i32 : i32, i32
  }
  func.func @transform_1(%arg0: i32) -> (i32, i32) {
    %c0_i32 = arith.constant 0 : i32
    %c0_i32_0 = arith.constant 0 : i32
    %c0_i32_1 = arith.constant 0 : i32
    return %c0_i32, %c0_i32_0 : i32, i32
  }
  func.func @transform_2(%arg0: i32) -> (i32, i32) {
    %c0_i32 = arith.constant 0 : i32
    %c0_i32_0 = arith.constant 0 : i32
    %c0_i32_1 = arith.constant 0 : i32
    return %c0_i32, %c0_i32_0 : i32, i32
  }
  func.func @transform_3(%arg0: i32) -> (i32, i32) {
    %c0_i32 = arith.constant 0 : i32
    %c0_i32_0 = arith.constant 0 : i32
    %c0_i32_1 = arith.constant 0 : i32
    return %c0_i32, %c0_i32_0 : i32, i32
  }
  func.func @transform_4(%arg0: i32) -> (i32, i32) {
    %c0_i32 = arith.constant 0 : i32
    %c0_i32_0 = arith.constant 0 : i32
    %c0_i32_1 = arith.constant 0 : i32
    return %c0_i32, %c0_i32_0 : i32, i32
  }
  func.func @transform_5(%arg0: i32) -> (i32, i32) {
    %c0_i32 = arith.constant 0 : i32
    %c0_i32_0 = arith.constant 0 : i32
    %c0_i32_1 = arith.constant 0 : i32
    return %c0_i32, %c0_i32_0 : i32, i32
  }
  func.func @transform_6(%arg0: i32) -> (i32, i32) {
    %c0_i32 = arith.constant 0 : i32
    %c0_i32_0 = arith.constant 0 : i32
    return %arg0, %c0_i32 : i32, i32
  }
  func.func @transform_7(%arg0: i32) -> (i32, i32, i32) {
    %c0_i32 = arith.constant 0 : i32
    %c0_i32_0 = arith.constant 0 : i32
    %c0_i32_1 = arith.constant 0 : i32
    return %arg0, %c0_i32, %c0_i32_0 : i32, i32, i32
  }
}

module attributes {stable_mosaic.version = 11 : i64} {
  func.func @_bn_dual_add_relu_kernel(%arg0: i32, %arg1: memref<512x128xbf16, #tpu.memory_space<vmem>>, %arg2: memref<1x128xf32, #tpu.memory_space<vmem>>, %arg3: memref<1x128xf32, #tpu.memory_space<vmem>>, %arg4: memref<1x128xf32, #tpu.memory_space<vmem>>, %arg5: memref<1x128xf32, #tpu.memory_space<vmem>>, %arg6: memref<512x128xbf16, #tpu.memory_space<vmem>>, %arg7: memref<1x128xf32, #tpu.memory_space<vmem>>, %arg8: memref<1x128xf32, #tpu.memory_space<vmem>>, %arg9: memref<1x128xf32, #tpu.memory_space<vmem>>, %arg10: memref<1x128xf32, #tpu.memory_space<vmem>>, %arg11: memref<512x128xf32, #tpu.memory_space<vmem>>) attributes {dimension_semantics = [#tpu.dimension_semantics<parallel>], iteration_bounds = array<i64: 1>, scalar_prefetch = 0 : i64, scratch_operands = 0 : i64, tpu.core_type = #tpu.core_type<tc>, window_params = [{transform_indices = @transform_0, window_bounds = array<i64: 512, 128>}, {pipeline_mode = #tpu.pipeline_mode<synchronous>, transform_indices = @transform_1, window_bounds = array<i64: 1, 128>}, {pipeline_mode = #tpu.pipeline_mode<synchronous>, transform_indices = @transform_2, window_bounds = array<i64: 1, 128>}, {pipeline_mode = #tpu.pipeline_mode<synchronous>, transform_indices = @transform_3, window_bounds = array<i64: 1, 128>}, {pipeline_mode = #tpu.pipeline_mode<synchronous>, transform_indices = @transform_4, window_bounds = array<i64: 1, 128>}, {transform_indices = @transform_5, window_bounds = array<i64: 512, 128>}, {pipeline_mode = #tpu.pipeline_mode<synchronous>, transform_indices = @transform_6, window_bounds = array<i64: 1, 128>}, {pipeline_mode = #tpu.pipeline_mode<synchronous>, transform_indices = @transform_7, window_bounds = array<i64: 1, 128>}, {pipeline_mode = #tpu.pipeline_mode<synchronous>, transform_indices = @transform_8, window_bounds = array<i64: 1, 128>}, {pipeline_mode = #tpu.pipeline_mode<synchronous>, transform_indices = @transform_9, window_bounds = array<i64: 1, 128>}, {transform_indices = @transform_10, window_bounds = array<i64: 512, 128>}]} {
    %c0 = arith.constant 0 : index
    %c0_0 = arith.constant 0 : index
    %0 = vector.load %arg1[%c0, %c0_0] : memref<512x128xbf16, #tpu.memory_space<vmem>>, vector<512x128xbf16>
    %1 = arith.extf %0 : vector<512x128xbf16> to vector<512x128xf32>
    %c0_1 = arith.constant 0 : index
    %c0_2 = arith.constant 0 : index
    %2 = vector.load %arg2[%c0_1, %c0_2] : memref<1x128xf32, #tpu.memory_space<vmem>>, vector<1x128xf32>
    %cst = arith.constant 0.001953125 : f32
    %3 = vector.broadcast %cst : f32 to vector<1x128xf32>
    %4 = arith.mulf %2, %3 : vector<1x128xf32>
    %c0_3 = arith.constant 0 : index
    %c0_4 = arith.constant 0 : index
    %5 = vector.load %arg3[%c0_3, %c0_4] : memref<1x128xf32, #tpu.memory_space<vmem>>, vector<1x128xf32>
    %cst_5 = arith.constant 0.001953125 : f32
    %6 = vector.broadcast %cst_5 : f32 to vector<1x128xf32>
    %7 = arith.mulf %5, %6 : vector<1x128xf32>
    %8 = arith.mulf %4, %4 : vector<1x128xf32>
    %9 = arith.subf %7, %8 : vector<1x128xf32>
    %cst_6 = arith.constant 0.000000e+00 : f32
    %10 = vector.broadcast %cst_6 : f32 to vector<1x128xf32>
    %11 = arith.maximumf %9, %10 : vector<1x128xf32>
    %cst_7 = arith.constant 9.99999974E-6 : f32
    %12 = vector.broadcast %cst_7 : f32 to vector<1x128xf32>
    %13 = arith.addf %11, %12 : vector<1x128xf32>
    %14 = math.rsqrt %13 : vector<1x128xf32>
    %c0_8 = arith.constant 0 : index
    %c0_9 = arith.constant 0 : index
    %15 = vector.load %arg4[%c0_8, %c0_9] : memref<1x128xf32, #tpu.memory_space<vmem>>, vector<1x128xf32>
    %16 = arith.mulf %14, %15 : vector<1x128xf32>
    %17 = vector.broadcast %4 : vector<1x128xf32> to vector<512x128xf32>
    %18 = arith.subf %1, %17 : vector<512x128xf32>
    %19 = vector.broadcast %16 : vector<1x128xf32> to vector<512x128xf32>
    %20 = arith.mulf %18, %19 : vector<512x128xf32>
    %c0_10 = arith.constant 0 : index
    %c0_11 = arith.constant 0 : index
    %21 = vector.load %arg5[%c0_10, %c0_11] : memref<1x128xf32, #tpu.memory_space<vmem>>, vector<1x128xf32>
    %22 = vector.broadcast %21 : vector<1x128xf32> to vector<512x128xf32>
    %23 = arith.addf %20, %22 : vector<512x128xf32>
    %c0_12 = arith.constant 0 : index
    %c0_13 = arith.constant 0 : index
    %24 = vector.load %arg6[%c0_12, %c0_13] : memref<512x128xbf16, #tpu.memory_space<vmem>>, vector<512x128xbf16>
    %25 = arith.extf %24 : vector<512x128xbf16> to vector<512x128xf32>
    %c0_14 = arith.constant 0 : index
    %c0_15 = arith.constant 0 : index
    %26 = vector.load %arg7[%c0_14, %c0_15] : memref<1x128xf32, #tpu.memory_space<vmem>>, vector<1x128xf32>
    %cst_16 = arith.constant 0.001953125 : f32
    %27 = vector.broadcast %cst_16 : f32 to vector<1x128xf32>
    %28 = arith.mulf %26, %27 : vector<1x128xf32>
    %c0_17 = arith.constant 0 : index
    %c0_18 = arith.constant 0 : index
    %29 = vector.load %arg8[%c0_17, %c0_18] : memref<1x128xf32, #tpu.memory_space<vmem>>, vector<1x128xf32>
    %cst_19 = arith.constant 0.001953125 : f32
    %30 = vector.broadcast %cst_19 : f32 to vector<1x128xf32>
    %31 = arith.mulf %29, %30 : vector<1x128xf32>
    %32 = arith.mulf %28, %28 : vector<1x128xf32>
    %33 = arith.subf %31, %32 : vector<1x128xf32>
    %cst_20 = arith.constant 0.000000e+00 : f32
    %34 = vector.broadcast %cst_20 : f32 to vector<1x128xf32>
    %35 = arith.maximumf %33, %34 : vector<1x128xf32>
    %cst_21 = arith.constant 9.99999974E-6 : f32
    %36 = vector.broadcast %cst_21 : f32 to vector<1x128xf32>
    %37 = arith.addf %35, %36 : vector<1x128xf32>
    %38 = math.rsqrt %37 : vector<1x128xf32>
    %c0_22 = arith.constant 0 : index
    %c0_23 = arith.constant 0 : index
    %39 = vector.load %arg9[%c0_22, %c0_23] : memref<1x128xf32, #tpu.memory_space<vmem>>, vector<1x128xf32>
    %40 = arith.mulf %38, %39 : vector<1x128xf32>
    %41 = vector.broadcast %28 : vector<1x128xf32> to vector<512x128xf32>
    %42 = arith.subf %25, %41 : vector<512x128xf32>
    %43 = vector.broadcast %40 : vector<1x128xf32> to vector<512x128xf32>
    %44 = arith.mulf %42, %43 : vector<512x128xf32>
    %c0_24 = arith.constant 0 : index
    %c0_25 = arith.constant 0 : index
    %45 = vector.load %arg10[%c0_24, %c0_25] : memref<1x128xf32, #tpu.memory_space<vmem>>, vector<1x128xf32>
    %46 = vector.broadcast %45 : vector<1x128xf32> to vector<512x128xf32>
    %47 = arith.addf %44, %46 : vector<512x128xf32>
    %48 = arith.addf %23, %47 : vector<512x128xf32>
    %cst_26 = arith.constant 0.000000e+00 : f32
    %49 = vector.broadcast %cst_26 : f32 to vector<512x128xf32>
    %50 = arith.maximumf %48, %49 : vector<512x128xf32>
    %c0_27 = arith.constant 0 : index
    %c0_28 = arith.constant 0 : index
    %51 = vector.load %arg11[%c0_27, %c0_28] : memref<512x128xf32, #tpu.memory_space<vmem>>, vector<512x128xf32>
    tpu.vector_store %arg11[%c0_27, %c0_28], %50 {strides = array<i32>} : memref<512x128xf32, #tpu.memory_space<vmem>>, vector<512x128xf32>,
    return
  }
  func.func @transform_0(%arg0: i32) -> (i32, i32) {
    %c0_i32 = arith.constant 0 : i32
    %c0_i32_0 = arith.constant 0 : i32
    return %arg0, %c0_i32 : i32, i32
  }
  func.func @transform_1(%arg0: i32) -> (i32, i32) {
    %c0_i32 = arith.constant 0 : i32
    %c0_i32_0 = arith.constant 0 : i32
    %c0_i32_1 = arith.constant 0 : i32
    return %c0_i32, %c0_i32_0 : i32, i32
  }
  func.func @transform_2(%arg0: i32) -> (i32, i32) {
    %c0_i32 = arith.constant 0 : i32
    %c0_i32_0 = arith.constant 0 : i32
    %c0_i32_1 = arith.constant 0 : i32
    return %c0_i32, %c0_i32_0 : i32, i32
  }
  func.func @transform_3(%arg0: i32) -> (i32, i32) {
    %c0_i32 = arith.constant 0 : i32
    %c0_i32_0 = arith.constant 0 : i32
    %c0_i32_1 = arith.constant 0 : i32
    return %c0_i32, %c0_i32_0 : i32, i32
  }
  func.func @transform_4(%arg0: i32) -> (i32, i32) {
    %c0_i32 = arith.constant 0 : i32
    %c0_i32_0 = arith.constant 0 : i32
    %c0_i32_1 = arith.constant 0 : i32
    return %c0_i32, %c0_i32_0 : i32, i32
  }
  func.func @transform_5(%arg0: i32) -> (i32, i32) {
    %c0_i32 = arith.constant 0 : i32
    %c0_i32_0 = arith.constant 0 : i32
    return %arg0, %c0_i32 : i32, i32
  }
  func.func @transform_6(%arg0: i32) -> (i32, i32) {
    %c0_i32 = arith.constant 0 : i32
    %c0_i32_0 = arith.constant 0 : i32
    %c0_i32_1 = arith.constant 0 : i32
    return %c0_i32, %c0_i32_0 : i32, i32
  }
  func.func @transform_7(%arg0: i32) -> (i32, i32) {
    %c0_i32 = arith.constant 0 : i32
    %c0_i32_0 = arith.constant 0 : i32
    %c0_i32_1 = arith.constant 0 : i32
    return %c0_i32, %c0_i32_0 : i32, i32
  }
  func.func @transform_8(%arg0: i32) -> (i32, i32) {
    %c0_i32 = arith.constant 0 : i32
    %c0_i32_0 = arith.constant 0 : i32
    %c0_i32_1 = arith.constant 0 : i32
    return %c0_i32, %c0_i32_0 : i32, i32
  }
  func.func @transform_9(%arg0: i32) -> (i32, i32) {
    %c0_i32 = arith.constant 0 : i32
    %c0_i32_0 = arith.constant 0 : i32
    %c0_i32_1 = arith.constant 0 : i32
    return %c0_i32, %c0_i32_0 : i32, i32
  }
  func.func @transform_10(%arg0: i32) -> (i32, i32) {
    %c0_i32 = arith.constant 0 : i32
    %c0_i32_0 = arith.constant 0 : i32
    return %arg0, %c0_i32 : i32, i32
  }
}

</mosaic_0001>

<llo_original>
// kernel: bottleneck_forward.5
$region0: #{bottleneck_forward.5}
  #allocation0 [shape = 'u32[]', space=smem, size = 0x4, offset = 0x4, fixed_abs, tag = 'smem constant byte address 0x4 - core index']
  #allocation1 [shape = 'u32[72,128]{1,0:T(1,128)}', space=vmem, size = 0x9000, scoped, tag = 'internal scratch']
  %s0 = inlined_call_operand.vmem [shape: bf16[512,128], index: 0, kind: input, shape index: {}]
  %s1 = inlined_call_operand.vmem [shape: bf16[128,128], index: 1, kind: input, shape index: {}]
  %s2 = inlined_call_operand.vmem [shape: bf16[512,128], index: 2, kind: output, shape index: {0}]
  %s3 = inlined_call_operand.vmem [shape: f32[1,8,128], index: 3, kind: output, shape index: {1}]
  %4 = xla_tuple %s2, %s3
  %s5 = sld [smem:[#allocation0]]
  $region26: #{bottleneck_forward.5} parent=0
    _
  %s7 = ssub.s32 1, %s5
  %s8 = scalar_select 0, %s7, %s5
  // Predicated region
  $region2: #{bottleneck_forward.5} parent=0 // pred_check
    _
  $region3: #{bottleneck_forward.5} parent=0 // pred_check_branch
    %10 = sbr.rel (0) target = $region5
  $region4: #{bottleneck_forward.5} parent=0 // pred_region
    _
  $region5: #{bottleneck_forward.5} parent=0 // pred_fallthru
    _
  // Predicated region
  $region6: #{bottleneck_forward.5} parent=0 // pred_check
    _
  $region7: #{bottleneck_forward.5} parent=0 // pred_check_branch
    %12 = sbr.rel (0) target = $region9
  $region8: #{bottleneck_forward.5} parent=0 // pred_region
    _
  $region9: #{bottleneck_forward.5} parent=0 // pred_fallthru
    _
  %v13 = vld [vmem:[%s0] sm:$0xf]
  %v14 = vld [vmem:[%s0 + $0x4] sm:$0xf]
  %v15 = vld [vmem:[%s0 + $0x8] sm:$0xf]
  %v16 = vld [vmem:[%s0 + $0xc] sm:$0xf]
  %v17 = vld [vmem:[%s0 + $0x10] sm:$0xf]
  %v18 = vld [vmem:[%s0 + $0x14] sm:$0xf]
  %v19 = vld [vmem:[%s0 + $0x18] sm:$0xf]
  %v20 = vld [vmem:[%s0 + $0x1c] sm:$0xf]
  %v21 = vld [vmem:[%s0 + $0x20] sm:$0xf]
  %v22 = vld [vmem:[%s0 + $0x24] sm:$0xf]
  %v23 = vld [vmem:[%s0 + $0x28] sm:$0xf]
  %v24 = vld [vmem:[%s0 + $0x2c] sm:$0xf]
  %v25 = vld [vmem:[%s0 + $0x30] sm:$0xf]
  %v26 = vld [vmem:[%s0 + $0x34] sm:$0xf]
  %v27 = vld [vmem:[%s0 + $0x38] sm:$0xf]
  %v28 = vld [vmem:[%s0 + $0x3c] sm:$0xf]
  %v29 = vld [vmem:[%s0 + $0x40] sm:$0xf]
  %v30 = vld [vmem:[%s0 + $0x44] sm:$0xf]
  %v31 = vld [vmem:[%s0 + $0x48] sm:$0xf]
  %v32 = vld [vmem:[%s0 + $0x4c] sm:$0xf]
  %v33 = vld [vmem:[%s0 + $0x50] sm:$0xf]
  %v34 = vld [vmem:[%s0 + $0x54] sm:$0xf]
  %v35 = vld [vmem:[%s0 + $0x58] sm:$0xf]
  %v36 = vld [vmem:[%s0 + $0x5c] sm:$0xf]
  %v37 = vld [vmem:[%s0 + $0x60] sm:$0xf]
  %v38 = vld [vmem:[%s0 + $0x64] sm:$0xf]
  %v39 = vld [vmem:[%s0 + $0x68] sm:$0xf]
  %v40 = vld [vmem:[%s0 + $0x6c] sm:$0xf]
  %v41 = vld [vmem:[%s0 + $0x70] sm:$0xf]
  %v42 = vld [vmem:[%s0 + $0x74] sm:$0xf]
  %v43 = vld [vmem:[%s0 + $0x78] sm:$0xf]
  %v44 = vld [vmem:[%s0 + $0x7c] sm:$0xf]
  %v45 = vld [vmem:[%s0 + $0x80] sm:$0xf]
  %v46 = vld [vmem:[%s0 + $0x84] sm:$0xf]
  %v47 = vld [vmem:[%s0 + $0x88] sm:$0xf]
  %v48 = vld [vmem:[%s0 + $0x8c] sm:$0xf]
  %v49 = vld [vmem:[%s0 + $0x90] sm:$0xf]
  %v50 = vld [vmem:[%s0 + $0x94] sm:$0xf]
  %v51 = vld [vmem:[%s0 + $0x98] sm:$0xf]
  %v52 = vld [vmem:[%s0 + $0x9c] sm:$0xf]
  %v53 = vld [vmem:[%s0 + $0xa0] sm:$0xf]
  %v54 = vld [vmem:[%s0 + $0xa4] sm:$0xf]
  %v55 = vld [vmem:[%s0 + $0xa8] sm:$0xf]
  %v56 = vld [vmem:[%s0 + $0xac] sm:$0xf]
  %v57 = vld [vmem:[%s0 + $0xb0] sm:$0xf]
  %v58 = vld [vmem:[%s0 + $0xb4] sm:$0xf]
  %v59 = vld [vmem:[%s0 + $0xb8] sm:$0xf]
  %v60 = vld [vmem:[%s0 + $0xbc] sm:$0xf]
  %v61 = vld [vmem:[%s0 + $0xc0] sm:$0xf]
  %v62 = vld [vmem:[%s0 + $0xc4] sm:$0xf]
  %v63 = vld [vmem:[%s0 + $0xc8] sm:$0xf]
  %v64 = vld [vmem:[%s0 + $0xcc] sm:$0xf]
  %v65 = vld [vmem:[%s0 + $0xd0] sm:$0xf]
  %v66 = vld [vmem:[%s0 + $0xd4] sm:$0xf]
  %v67 = vld [vmem:[%s0 + $0xd8] sm:$0xf]
  %v68 = vld [vmem:[%s0 + $0xdc] sm:$0xf]
  %v69 = vld [vmem:[%s0 + $0xe0] sm:$0xf]
  %v70 = vld [vmem:[%s0 + $0xe4] sm:$0xf]
  %v71 = vld [vmem:[%s0 + $0xe8] sm:$0xf]
  %v72 = vld [vmem:[%s0 + $0xec] sm:$0xf]
  %v73 = vld [vmem:[%s0 + $0xf0] sm:$0xf]
  %v74 = vld [vmem:[%s0 + $0xf4] sm:$0xf]
  %v75 = vld [vmem:[%s0 + $0xf8] sm:$0xf]
  %v76 = vld [vmem:[%s0 + $0xfc] sm:$0xf]
  %v77 = vld [vmem:[%s1] sm:$0xf]
  %v78 = vld [vmem:[%s1 + $0x4] sm:$0xf]
  %v79 = vld [vmem:[%s1 + $0x8] sm:$0xf]
  %v80 = vld [vmem:[%s1 + $0xc] sm:$0xf]
  %v81 = vld [vmem:[%s1 + $0x10] sm:$0xf]
  %v82 = vld [vmem:[%s1 + $0x14] sm:$0xf]
  %v83 = vld [vmem:[%s1 + $0x18] sm:$0xf]
  %v84 = vld [vmem:[%s1 + $0x1c] sm:$0xf]
  %v85 = vld [vmem:[%s1 + $0x20] sm:$0xf]
  %v86 = vld [vmem:[%s1 + $0x24] sm:$0xf]
  %v87 = vld [vmem:[%s1 + $0x28] sm:$0xf]
  %v88 = vld [vmem:[%s1 + $0x2c] sm:$0xf]
  %v89 = vld [vmem:[%s1 + $0x30] sm:$0xf]
  %v90 = vld [vmem:[%s1 + $0x34] sm:$0xf]
  %v91 = vld [vmem:[%s1 + $0x38] sm:$0xf]
  %v92 = vld [vmem:[%s1 + $0x3c] sm:$0xf]
  %v157 = vunpack.c.l.b16 %v13
  %v158 = vunpack.c.l.b16 %v14
  %v159 = vunpack.c.l.b16 %v15
  %v160 = vunpack.c.l.b16 %v16
  %v161 = vunpack.c.l.b16 %v17
  %v162 = vunpack.c.l.b16 %v18
  %v163 = vunpack.c.l.b16 %v19
  %v164 = vunpack.c.l.b16 %v20
  %v165 = vunpack.c.l.b16 %v21
  %v166 = vunpack.c.l.b16 %v22
  %v167 = vunpack.c.l.b16 %v23
  %v168 = vunpack.c.l.b16 %v24
  %v169 = vunpack.c.l.b16 %v25
  %v170 = vunpack.c.l.b16 %v26
  %v171 = vunpack.c.l.b16 %v27
  %v172 = vunpack.c.l.b16 %v28
  %v173 = vunpack.c.l.b16 %v29
  %v174 = vunpack.c.l.b16 %v30
  %v175 = vunpack.c.l.b16 %v31
  %v176 = vunpack.c.l.b16 %v32
  %v177 = vunpack.c.l.b16 %v33
  %v178 = vunpack.c.l.b16 %v34
  %v179 = vunpack.c.l.b16 %v35
  %v180 = vunpack.c.l.b16 %v36
  %v181 = vunpack.c.l.b16 %v37
  %v182 = vunpack.c.l.b16 %v38
  %v183 = vunpack.c.l.b16 %v39
  %v184 = vunpack.c.l.b16 %v40
  %v185 = vunpack.c.l.b16 %v41
  %v186 = vunpack.c.l.b16 %v42
  %v187 = vunpack.c.l.b16 %v43
  %v188 = vunpack.c.l.b16 %v44
  %v189 = vunpack.c.l.b16 %v45
  %v190 = vunpack.c.l.b16 %v46
  %v191 = vunpack.c.l.b16 %v47
  %v192 = vunpack.c.l.b16 %v48
  %v193 = vunpack.c.l.b16 %v49
  %v194 = vunpack.c.l.b16 %v50
  %v195 = vunpack.c.l.b16 %v51
  %v196 = vunpack.c.l.b16 %v52
  %v197 = vunpack.c.l.b16 %v53
  %v198 = vunpack.c.l.b16 %v54
  %v199 = vunpack.c.l.b16 %v55
  %v200 = vunpack.c.l.b16 %v56
  %v201 = vunpack.c.l.b16 %v57
  %v202 = vunpack.c.l.b16 %v58
  %v203 = vunpack.c.l.b16 %v59
  %v204 = vunpack.c.l.b16 %v60
  %v205 = vunpack.c.l.b16 %v61
  %v206 = vunpack.c.l.b16 %v62
  %v207 = vunpack.c.l.b16 %v63
  %v208 = vunpack.c.l.b16 %v64
  %v209 = vunpack.c.l.b16 %v65
  %v210 = vunpack.c.l.b16 %v66
  %v211 = vunpack.c.l.b16 %v67
  %v212 = vunpack.c.l.b16 %v68
  %v213 = vunpack.c.l.b16 %v69
  %v214 = vunpack.c.l.b16 %v70
  %v215 = vunpack.c.l.b16 %v71
  %v216 = vunpack.c.l.b16 %v72
  %v217 = vunpack.c.l.b16 %v73
  %v218 = vunpack.c.l.b16 %v74
  %v219 = vunpack.c.l.b16 %v75
  %v220 = vunpack.c.l.b16 %v76
  %v221 = vpack.c.b16 %v158, %v157
  %v222 = vpack.c.b16 %v160, %v159
  %v223 = vpack.c.b16 %v162, %v161
  %v224 = vpack.c.b16 %v164, %v163
  %v225 = vpack.c.b16 %v166, %v165
  %v226 = vpack.c.b16 %v168, %v167
  %v227 = vpack.c.b16 %v170, %v169
  %v228 = vpack.c.b16 %v172, %v171
  %v229 = vpack.c.b16 %v174, %v173
  %v230 = vpack.c.b16 %v176, %v175
  %v231 = vpack.c.b16 %v178, %v177
  %v232 = vpack.c.b16 %v180, %v179
  %v233 = vpack.c.b16 %v182, %v181
  %v234 = vpack.c.b16 %v184, %v183
  %v235 = vpack.c.b16 %v186, %v185
  %v236 = vpack.c.b16 %v188, %v187
  %v237 = vpack.c.b16 %v190, %v189
  %v238 = vpack.c.b16 %v192, %v191
  %v239 = vpack.c.b16 %v194, %v193
  %v240 = vpack.c.b16 %v196, %v195
  %v241 = vpack.c.b16 %v198, %v197
  %v242 = vpack.c.b16 %v200, %v199
  %v243 = vpack.c.b16 %v202, %v201
  %v244 = vpack.c.b16 %v204, %v203
  %v245 = vpack.c.b16 %v206, %v205
  %v246 = vpack.c.b16 %v208, %v207
  %v247 = vpack.c.b16 %v210, %v209
  %v248 = vpack.c.b16 %v212, %v211
  %v249 = vpack.c.b16 %v214, %v213
  %v250 = vpack.c.b16 %v216, %v215
  %v251 = vpack.c.b16 %v218, %v217
  %v252 = vpack.c.b16 %v220, %v219
  %v301 = vunpack.c.l.b16 %v77
  %v302 = vunpack.c.l.b16 %v78
  %v303 = vunpack.c.l.b16 %v79
  %v304 = vunpack.c.l.b16 %v80
  %v305 = vunpack.c.l.b16 %v81
  %v306 = vunpack.c.l.b16 %v82
  %v307 = vunpack.c.l.b16 %v83
  %v308 = vunpack.c.l.b16 %v84
  %v309 = vunpack.c.l.b16 %v85
  %v310 = vunpack.c.l.b16 %v86
  %v311 = vunpack.c.l.b16 %v87
  %v312 = vunpack.c.l.b16 %v88
  %v313 = vunpack.c.l.b16 %v89
  %v314 = vunpack.c.l.b16 %v90
  %v315 = vunpack.c.l.b16 %v91
  %v316 = vunpack.c.l.b16 %v92
  %v317 = vpack.c.b16 %v302, %v301
  %v318 = vpack.c.b16 %v304, %v303
  %v319 = vpack.c.b16 %v306, %v305
  %v320 = vpack.c.b16 %v308, %v307
  %v321 = vpack.c.b16 %v310, %v309
  %v322 = vpack.c.b16 %v312, %v311
  %v323 = vpack.c.b16 %v314, %v313
  %v324 = vpack.c.b16 %v316, %v315
  %333 = vmatpush.bf16.msra.mxu0 %v324
  %334 = vmatpush.bf16.msra.mxu0 %v323
  %335 = vmatpush.bf16.msra.mxu0 %v322
  %336 = vmatpush.bf16.msra.mxu0 %v321
  %337 = vmatpush.bf16.msra.mxu0 %v320
  %338 = vmatpush.bf16.msra.mxu0 %v319
  %339 = vmatpush.bf16.msra.mxu0 %v318
  %340 = vmatpush.bf16.msra.mxu0 %v317
  %341 = vmatmul.bf16.gmra.mxu0 %v221
  %v342 = vpop.f32.mrf.mxu0
  %v343 = vadd.f32 0.0, %v342
  %v344 = vpop.f32.mrf.mxu0
  %v345 = vadd.f32 0.0, %v344
  %346 = vmatmul.bf16.gmra.mxu0 %v222
  %v347 = vpop.f32.mrf.mxu0
  %v348 = vadd.f32 0.0, %v347
  %v349 = vpop.f32.mrf.mxu0
  %v350 = vadd.f32 0.0, %v349
  %351 = vmatmul.bf16.gmra.mxu0 %v223
  %v352 = vpop.f32.mrf.mxu0
  %v353 = vadd.f32 0.0, %v352
  %v354 = vpop.f32.mrf.mxu0
  %v355 = vadd.f32 0.0, %v354
  %356 = vmatmul.bf16.gmra.mxu0 %v224
  %v357 = vpop.f32.mrf.mxu0
  %v358 = vadd.f32 0.0, %v357
  %v359 = vpop.f32.mrf.mxu0
  %v360 = vadd.f32 0.0, %v359
  %361 = vmatmul.bf16.gmra.mxu0 %v225
  %v362 = vpop.f32.mrf.mxu0
  %v363 = vadd.f32 0.0, %v362
  %v364 = vpop.f32.mrf.mxu0
  %v365 = vadd.f32 0.0, %v364
  %366 = vmatmul.bf16.gmra.mxu0 %v226
  %v367 = vpop.f32.mrf.mxu0
  %v368 = vadd.f32 0.0, %v367
  %v369 = vpop.f32.mrf.mxu0
  %v370 = vadd.f32 0.0, %v369
  %371 = vmatmul.bf16.gmra.mxu0 %v227
  %v372 = vpop.f32.mrf.mxu0
  %v373 = vadd.f32 0.0, %v372
  %v374 = vpop.f32.mrf.mxu0
  %v375 = vadd.f32 0.0, %v374
  %376 = vmatmul.bf16.gmra.mxu0 %v228
  %v377 = vpop.f32.mrf.mxu0
  %v378 = vadd.f32 0.0, %v377
  %v379 = vpop.f32.mrf.mxu0
  %v380 = vadd.f32 0.0, %v379
  %381 = vmatmul.bf16.gmra.mxu0 %v229
  %v382 = vpop.f32.mrf.mxu0
  %v383 = vadd.f32 0.0, %v382
  %v384 = vpop.f32.mrf.mxu0
  %v385 = vadd.f32 0.0, %v384
  %386 = vmatmul.bf16.gmra.mxu0 %v230
  %v387 = vpop.f32.mrf.mxu0
  %v388 = vadd.f32 0.0, %v387
  %v389 = vpop.f32.mrf.mxu0
  %v390 = vadd.f32 0.0, %v389
  %391 = vmatmul.bf16.gmra.mxu0 %v231
  %v392 = vpop.f32.mrf.mxu0
  %v393 = vadd.f32 0.0, %v392
  %v394 = vpop.f32.mrf.mxu0
  %v395 = vadd.f32 0.0, %v394
  %396 = vmatmul.bf16.gmra.mxu0 %v232
  %v397 = vpop.f32.mrf.mxu0
  %v398 = vadd.f32 0.0, %v397
  %v399 = vpop.f32.mrf.mxu0
  %v400 = vadd.f32 0.0, %v399
  %401 = vmatmul.bf16.gmra.mxu0 %v233
  %v402 = vpop.f32.mrf.mxu0
  %v403 = vadd.f32 0.0, %v402
  %v404 = vpop.f32.mrf.mxu0
  %v405 = vadd.f32 0.0, %v404
  %406 = vmatmul.bf16.gmra.mxu0 %v234
  %v407 = vpop.f32.mrf.mxu0
  %v408 = vadd.f32 0.0, %v407
  %v409 = vpop.f32.mrf.mxu0
  %v410 = vadd.f32 0.0, %v409
  %411 = vmatmul.bf16.gmra.mxu0 %v235
  %v412 = vpop.f32.mrf.mxu0
  %v413 = vadd.f32 0.0, %v412
  %v414 = vpop.f32.mrf.mxu0
  %v415 = vadd.f32 0.0, %v414
  %416 = vmatmul.bf16.gmra.mxu0 %v236
  %v417 = vpop.f32.mrf.mxu0
  %v418 = vadd.f32 0.0, %v417
  %v419 = vpop.f32.mrf.mxu0
  %v420 = vadd.f32 0.0, %v419
  %421 = vmatmul.bf16.gmra.mxu0 %v237
  %v422 = vpop.f32.mrf.mxu0
  %v423 = vadd.f32 0.0, %v422
  %v424 = vpop.f32.mrf.mxu0
  %v425 = vadd.f32 0.0, %v424
  %426 = vmatmul.bf16.gmra.mxu0 %v238
  %v427 = vpop.f32.mrf.mxu0
  %v428 = vadd.f32 0.0, %v427
  %v429 = vpop.f32.mrf.mxu0
  %v430 = vadd.f32 0.0, %v429
  %431 = vmatmul.bf16.gmra.mxu0 %v239
  %v432 = vpop.f32.mrf.mxu0
  %v433 = vadd.f32 0.0, %v432
  %v434 = vpop.f32.mrf.mxu0
  %v435 = vadd.f32 0.0, %v434
  %436 = vmatmul.bf16.gmra.mxu0 %v240
  %v437 = vpop.f32.mrf.mxu0
  %v438 = vadd.f32 0.0, %v437
  %v439 = vpop.f32.mrf.mxu0
  %v440 = vadd.f32 0.0, %v439
  %441 = vmatmul.bf16.gmra.mxu0 %v241
  %v442 = vpop.f32.mrf.mxu0
  %v443 = vadd.f32 0.0, %v442
  %v444 = vpop.f32.mrf.mxu0
  %v445 = vadd.f32 0.0, %v444
  %446 = vmatmul.bf16.gmra.mxu0 %v242
  %v447 = vpop.f32.mrf.mxu0
  %v448 = vadd.f32 0.0, %v447
  %v449 = vpop.f32.mrf.mxu0
  %v450 = vadd.f32 0.0, %v449
  %451 = vmatmul.bf16.gmra.mxu0 %v243
  %v452 = vpop.f32.mrf.mxu0
  %v453 = vadd.f32 0.0, %v452
  %v454 = vpop.f32.mrf.mxu0
  %v455 = vadd.f32 0.0, %v454
  %456 = vmatmul.bf16.gmra.mxu0 %v244
  %v457 = vpop.f32.mrf.mxu0
  %v458 = vadd.f32 0.0, %v457
  %v459 = vpop.f32.mrf.mxu0
  %v460 = vadd.f32 0.0, %v459
  %461 = vmatmul.bf16.gmra.mxu0 %v245
  %v462 = vpop.f32.mrf.mxu0
  %v463 = vadd.f32 0.0, %v462
  %v464 = vpop.f32.mrf.mxu0
  %v465 = vadd.f32 0.0, %v464
  %466 = vmatmul.bf16.gmra.mxu0 %v246
  %v467 = vpop.f32.mrf.mxu0
  %v468 = vadd.f32 0.0, %v467
  %v469 = vpop.f32.mrf.mxu0
  %v470 = vadd.f32 0.0, %v469
  %471 = vmatmul.bf16.gmra.mxu0 %v247
  %v472 = vpop.f32.mrf.mxu0
  %v473 = vadd.f32 0.0, %v472
  %v474 = vpop.f32.mrf.mxu0
  %v475 = vadd.f32 0.0, %v474
  %476 = vmatmul.bf16.gmra.mxu0 %v248
  %v477 = vpop.f32.mrf.mxu0
  %v478 = vadd.f32 0.0, %v477
  %v479 = vpop.f32.mrf.mxu0
  %v480 = vadd.f32 0.0, %v479
  %481 = vmatmul.bf16.gmra.mxu0 %v249
  %v482 = vpop.f32.mrf.mxu0
  %v483 = vadd.f32 0.0, %v482
  %v484 = vpop.f32.mrf.mxu0
  %v485 = vadd.f32 0.0, %v484
  %486 = vmatmul.bf16.gmra.mxu0 %v250
  %v487 = vpop.f32.mrf.mxu0
  %v488 = vadd.f32 0.0, %v487
  %v489 = vpop.f32.mrf.mxu0
  %v490 = vadd.f32 0.0, %v489
  %491 = vmatmul.bf16.gmra.mxu0 %v251
  %v492 = vpop.f32.mrf.mxu0
  %v493 = vadd.f32 0.0, %v492
  %v494 = vpop.f32.mrf.mxu0
  %v495 = vadd.f32 0.0, %v494
  %496 = vmatmul.bf16.gmra.mxu0 %v252
  %v497 = vpop.f32.mrf.mxu0
  %v498 = vadd.f32 0.0, %v497
  %v499 = vpop.f32.mrf.mxu0
  %v500 = vadd.f32 0.0, %v499
  %501 = vdwg.mxu0
  %v502 = vpack.c.bf16 %v343, %v343
  %v503 = vpack.c.bf16 %v345, %v345
  %v504 = vpack.c.bf16 %v348, %v348
  %v505 = vpack.c.bf16 %v350, %v350
  %v506 = vpack.c.bf16 %v353, %v353
  %v507 = vpack.c.bf16 %v355, %v355
  %v508 = vpack.c.bf16 %v358, %v358
  %v509 = vpack.c.bf16 %v360, %v360
  %v510 = vpack.c.bf16 %v363, %v363
  %v511 = vpack.c.bf16 %v365, %v365
  %v512 = vpack.c.bf16 %v368, %v368
  %v513 = vpack.c.bf16 %v370, %v370
  %v514 = vpack.c.bf16 %v373, %v373
  %v515 = vpack.c.bf16 %v375, %v375
  %v516 = vpack.c.bf16 %v378, %v378
  %v517 = vpack.c.bf16 %v380, %v380
  %v518 = vpack.c.bf16 %v383, %v383
  %v519 = vpack.c.bf16 %v385, %v385
  %v520 = vpack.c.bf16 %v388, %v388
  %v521 = vpack.c.bf16 %v390, %v390
  %v522 = vpack.c.bf16 %v393, %v393
  %v523 = vpack.c.bf16 %v395, %v395
  %v524 = vpack.c.bf16 %v398, %v398
  %v525 = vpack.c.bf16 %v400, %v400
  %v526 = vpack.c.bf16 %v403, %v403
  %v527 = vpack.c.bf16 %v405, %v405
  %v528 = vpack.c.bf16 %v408, %v408
  %v529 = vpack.c.bf16 %v410, %v410
  %v530 = vpack.c.bf16 %v413, %v413
  %v531 = vpack.c.bf16 %v415, %v415
  %v532 = vpack.c.bf16 %v418, %v418
  %v533 = vpack.c.bf16 %v420, %v420
  %v534 = vpack.c.bf16 %v423, %v423
  %v535 = vpack.c.bf16 %v425, %v425
  %v536 = vpack.c.bf16 %v428, %v428
  %v537 = vpack.c.bf16 %v430, %v430
  %v538 = vpack.c.bf16 %v433, %v433
  %v539 = vpack.c.bf16 %v435, %v435
  %v540 = vpack.c.bf16 %v438, %v438
  %v541 = vpack.c.bf16 %v440, %v440
  %v542 = vpack.c.bf16 %v443, %v443
  %v543 = vpack.c.bf16 %v445, %v445
  %v544 = vpack.c.bf16 %v448, %v448
  %v545 = vpack.c.bf16 %v450, %v450
  %v546 = vpack.c.bf16 %v453, %v453
  %v547 = vpack.c.bf16 %v455, %v455
  %v548 = vpack.c.bf16 %v458, %v458
  %v549 = vpack.c.bf16 %v460, %v460
  %v550 = vpack.c.bf16 %v463, %v463
  %v551 = vpack.c.bf16 %v465, %v465
  %v552 = vpack.c.bf16 %v468, %v468
  %v553 = vpack.c.bf16 %v470, %v470
  %v554 = vpack.c.bf16 %v473, %v473
  %v555 = vpack.c.bf16 %v475, %v475
  %v556 = vpack.c.bf16 %v478, %v478
  %v557 = vpack.c.bf16 %v480, %v480
  %v558 = vpack.c.bf16 %v483, %v483
  %v559 = vpack.c.bf16 %v485, %v485
  %v560 = vpack.c.bf16 %v488, %v488
  %v561 = vpack.c.bf16 %v490, %v490
  %v562 = vpack.c.bf16 %v493, %v493
  %v563 = vpack.c.bf16 %v495, %v495
  %v564 = vpack.c.bf16 %v498, %v498
  %v565 = vpack.c.bf16 %v500, %v500
  %566 = vst [vmem:[%s2] sm:$0xf] %v502
  %567 = vst [vmem:[%s2 + $0x4] sm:$0xf] %v503
  %568 = vst [vmem:[%s2 + $0x8] sm:$0xf] %v504
  %569 = vst [vmem:[%s2 + $0xc] sm:$0xf] %v505
  %570 = vst [vmem:[%s2 + $0x10] sm:$0xf] %v506
  %571 = vst [vmem:[%s2 + $0x14] sm:$0xf] %v507
  %572 = vst [vmem:[%s2 + $0x18] sm:$0xf] %v508
  %573 = vst [vmem:[%s2 + $0x1c] sm:$0xf] %v509
  %574 = vst [vmem:[%s2 + $0x20] sm:$0xf] %v510
  %575 = vst [vmem:[%s2 + $0x24] sm:$0xf] %v511
  %576 = vst [vmem:[%s2 + $0x28] sm:$0xf] %v512
  %577 = vst [vmem:[%s2 + $0x2c] sm:$0xf] %v513
  %578 = vst [vmem:[%s2 + $0x30] sm:$0xf] %v514
  %579 = vst [vmem:[%s2 + $0x34] sm:$0xf] %v515
  %580 = vst [vmem:[%s2 + $0x38] sm:$0xf] %v516
  %581 = vst [vmem:[%s2 + $0x3c] sm:$0xf] %v517
  %582 = vst [vmem:[%s2 + $0x40] sm:$0xf] %v518
  %583 = vst [vmem:[%s2 + $0x44] sm:$0xf] %v519
  %584 = vst [vmem:[%s2 + $0x48] sm:$0xf] %v520
  %585 = vst [vmem:[%s2 + $0x4c] sm:$0xf] %v521
  %586 = vst [vmem:[%s2 + $0x50] sm:$0xf] %v522
  %587 = vst [vmem:[%s2 + $0x54] sm:$0xf] %v523
  %588 = vst [vmem:[%s2 + $0x58] sm:$0xf] %v524
  %589 = vst [vmem:[%s2 + $0x5c] sm:$0xf] %v525
  %590 = vst [vmem:[%s2 + $0x60] sm:$0xf] %v526
  %591 = vst [vmem:[%s2 + $0x64] sm:$0xf] %v527
  %592 = vst [vmem:[%s2 + $0x68] sm:$0xf] %v528
  %593 = vst [vmem:[%s2 + $0x6c] sm:$0xf] %v529
  %594 = vst [vmem:[%s2 + $0x70] sm:$0xf] %v530
  %595 = vst [vmem:[%s2 + $0x74] sm:$0xf] %v531
  %596 = vst [vmem:[%s2 + $0x78] sm:$0xf] %v532
  %597 = vst [vmem:[%s2 + $0x7c] sm:$0xf] %v533
  %598 = vst [vmem:[%s2 + $0x80] sm:$0xf] %v534
  %599 = vst [vmem:[%s2 + $0x84] sm:$0xf] %v535
  %600 = vst [vmem:[%s2 + $0x88] sm:$0xf] %v536
  %601 = vst [vmem:[%s2 + $0x8c] sm:$0xf] %v537
  %602 = vst [vmem:[%s2 + $0x90] sm:$0xf] %v538
  %603 = vst [vmem:[%s2 + $0x94] sm:$0xf] %v539
  %604 = vst [vmem:[%s2 + $0x98] sm:$0xf] %v540
  %605 = vst [vmem:[%s2 + $0x9c] sm:$0xf] %v541
  %606 = vst [vmem:[%s2 + $0xa0] sm:$0xf] %v542
  %607 = vst [vmem:[%s2 + $0xa4] sm:$0xf] %v543
  %608 = vst [vmem:[%s2 + $0xa8] sm:$0xf] %v544
  %609 = vst [vmem:[%s2 + $0xac] sm:$0xf] %v545
  %610 = vst [vmem:[%s2 + $0xb0] sm:$0xf] %v546
  %611 = vst [vmem:[%s2 + $0xb4] sm:$0xf] %v547
  %612 = vst [vmem:[%s2 + $0xb8] sm:$0xf] %v548
  %613 = vst [vmem:[%s2 + $0xbc] sm:$0xf] %v549
  %614 = vst [vmem:[%s2 + $0xc0] sm:$0xf] %v550
  %615 = vst [vmem:[%s2 + $0xc4] sm:$0xf] %v551
  %616 = vst [vmem:[%s2 + $0xc8] sm:$0xf] %v552
  %617 = vst [vmem:[%s2 + $0xcc] sm:$0xf] %v553
  %618 = vst [vmem:[%s2 + $0xd0] sm:$0xf] %v554
  %619 = vst [vmem:[%s2 + $0xd4] sm:$0xf] %v555
  %620 = vst [vmem:[%s2 + $0xd8] sm:$0xf] %v556
  %621 = vst [vmem:[%s2 + $0xdc] sm:$0xf] %v557
  %622 = vst [vmem:[%s2 + $0xe0] sm:$0xf] %v558
  %623 = vst [vmem:[%s2 + $0xe4] sm:$0xf] %v559
  %624 = vst [vmem:[%s2 + $0xe8] sm:$0xf] %v560
  %625 = vst [vmem:[%s2 + $0xec] sm:$0xf] %v561
  %626 = vst [vmem:[%s2 + $0xf0] sm:$0xf] %v562
  %627 = vst [vmem:[%s2 + $0xf4] sm:$0xf] %v563
  %628 = vst [vmem:[%s2 + $0xf8] sm:$0xf] %v564
  %629 = vst [vmem:[%s2 + $0xfc] sm:$0xf] %v565
  %s630 = smul.u32 0, 512
  %v631 = vlaneseq
  %v632 = vshrl.u32 %v631, 7
  %v633 = vadd.s32 %v632, 8
  %v634 = vadd.s32 %v632, 16
  %v635 = vadd.s32 %v632, 24
  %v636 = vadd.s32 %v632, 32
  %v637 = vadd.s32 %v632, 40
  %v638 = vadd.s32 %v632, 48
  %v639 = vadd.s32 %v632, 56
  %v640 = vadd.s32 %v632, 64
  %v641 = vadd.s32 %v632, 72
  %v642 = vadd.s32 %v632, 80
  %v643 = vadd.s32 %v632, 88
  %v644 = vadd.s32 %v632, 96
  %v645 = vadd.s32 %v632, 104
  %v646 = vadd.s32 %v632, 112
  %v647 = vadd.s32 %v632, 120
  %v648 = vadd.s32 %v632, 128
  %v649 = vadd.s32 %v632, 136
  %v650 = vadd.s32 %v632, 144
  %v651 = vadd.s32 %v632, 152
  %v652 = vadd.s32 %v632, 160
  %v653 = vadd.s32 %v632, 168
  %v654 = vadd.s32 %v632, 176
  %v655 = vadd.s32 %v632, 184
  %v656 = vadd.s32 %v632, 192
  %v657 = vadd.s32 %v632, 200
  %v658 = vadd.s32 %v632, 208
  %v659 = vadd.s32 %v632, 216
  %v660 = vadd.s32 %v632, 224
  %v661 = vadd.s32 %v632, 232
  %v662 = vadd.s32 %v632, 240
  %v663 = vadd.s32 %v632, 248
  %v664 = vadd.s32 %v632, 256
  %v665 = vadd.s32 %v632, 264
  %v666 = vadd.s32 %v632, 272
  %v667 = vadd.s32 %v632, 280
  %v668 = vadd.s32 %v632, 288
  %v669 = vadd.s32 %v632, 296
  %v670 = vadd.s32 %v632, 304
  %v671 = vadd.s32 %v632, 312
  %v672 = vadd.s32 %v632, 320
  %v673 = vadd.s32 %v632, 328
  %v674 = vadd.s32 %v632, 336
  %v675 = vadd.s32 %v632, 344
  %v676 = vadd.s32 %v632, 352
  %v677 = vadd.s32 %v632, 360
  %v678 = vadd.s32 %v632, 368
  %v679 = vadd.s32 %v632, 376
  %v680 = vadd.s32 %v632, 384
  %v681 = vadd.s32 %v632, 392
  %v682 = vadd.s32 %v632, 400
  %v683 = vadd.s32 %v632, 408
  %v684 = vadd.s32 %v632, 416
  %v685 = vadd.s32 %v632, 424
  %v686 = vadd.s32 %v632, 432
  %v687 = vadd.s32 %v632, 440
  %v688 = vadd.s32 %v632, 448
  %v689 = vadd.s32 %v632, 456
  %v690 = vadd.s32 %v632, 464
  %v691 = vadd.s32 %v632, 472
  %v692 = vadd.s32 %v632, 480
  %v693 = vadd.s32 %v632, 488
  %v694 = vadd.s32 %v632, 496
  %v695 = vadd.s32 %v632, 504
  %v696 = vstv %s630
  %v697 = vadd.s32 %v696, %v632
  %v698 = vadd.s32 %v696, %v633
  %v699 = vadd.s32 %v696, %v634
  %v700 = vadd.s32 %v696, %v635
  %v701 = vadd.s32 %v696, %v636
  %v702 = vadd.s32 %v696, %v637
  %v703 = vadd.s32 %v696, %v638
  %v704 = vadd.s32 %v696, %v639
  %v705 = vadd.s32 %v696, %v640
  %v706 = vadd.s32 %v696, %v641
  %v707 = vadd.s32 %v696, %v642
  %v708 = vadd.s32 %v696, %v643
  %v709 = vadd.s32 %v696, %v644
  %v710 = vadd.s32 %v696, %v645
  %v711 = vadd.s32 %v696, %v646
  %v712 = vadd.s32 %v696, %v647
  %v713 = vadd.s32 %v696, %v648
  %v714 = vadd.s32 %v696, %v649
  %v715 = vadd.s32 %v696, %v650
  %v716 = vadd.s32 %v696, %v651
  %v717 = vadd.s32 %v696, %v652
  %v718 = vadd.s32 %v696, %v653
  %v719 = vadd.s32 %v696, %v654
  %v720 = vadd.s32 %v696, %v655
  %v721 = vadd.s32 %v696, %v656
  %v722 = vadd.s32 %v696, %v657
  %v723 = vadd.s32 %v696, %v658
  %v724 = vadd.s32 %v696, %v659
  %v725 = vadd.s32 %v696, %v660
  %v726 = vadd.s32 %v696, %v661
  %v727 = vadd.s32 %v696, %v662
  %v728 = vadd.s32 %v696, %v663
  %v729 = vadd.s32 %v696, %v664
  %v730 = vadd.s32 %v696, %v665
  %v731 = vadd.s32 %v696, %v666
  %v732 = vadd.s32 %v696, %v667
  %v733 = vadd.s32 %v696, %v668
  %v734 = vadd.s32 %v696, %v669
  %v735 = vadd.s32 %v696, %v670
  %v736 = vadd.s32 %v696, %v671
  %v737 = vadd.s32 %v696, %v672
  %v738 = vadd.s32 %v696, %v673
  %v739 = vadd.s32 %v696, %v674
  %v740 = vadd.s32 %v696, %v675
  %v741 = vadd.s32 %v696, %v676
  %v742 = vadd.s32 %v696, %v677
  %v743 = vadd.s32 %v696, %v678
  %v744 = vadd.s32 %v696, %v679
  %v745 = vadd.s32 %v696, %v680
  %v746 = vadd.s32 %v696, %v681
  %v747 = vadd.s32 %v696, %v682
  %v748 = vadd.s32 %v696, %v683
  %v749 = vadd.s32 %v696, %v684
  %v750 = vadd.s32 %v696, %v685
  %v751 = vadd.s32 %v696, %v686
  %v752 = vadd.s32 %v696, %v687
  %v753 = vadd.s32 %v696, %v688
  %v754 = vadd.s32 %v696, %v689
  %v755 = vadd.s32 %v696, %v690
  %v756 = vadd.s32 %v696, %v691
  %v757 = vadd.s32 %v696, %v692
  %v758 = vadd.s32 %v696, %v693
  %v759 = vadd.s32 %v696, %v694
  %v760 = vadd.s32 %v696, %v695
  %vm761 = vcmp.lt.s32.totalorder %v697, 512
  %vm762 = vcmp.lt.s32.totalorder %v698, 512
  %vm763 = vcmp.lt.s32.totalorder %v699, 512
  %vm764 = vcmp.lt.s32.totalorder %v700, 512
  %vm765 = vcmp.lt.s32.totalorder %v701, 512
  %vm766 = vcmp.lt.s32.totalorder %v702, 512
  %vm767 = vcmp.lt.s32.totalorder %v703, 512
  %vm768 = vcmp.lt.s32.totalorder %v704, 512
  %vm769 = vcmp.lt.s32.totalorder %v705, 512
  %vm770 = vcmp.lt.s32.totalorder %v706, 512
  %vm771 = vcmp.lt.s32.totalorder %v707, 512
  %vm772 = vcmp.lt.s32.totalorder %v708, 512
  %vm773 = vcmp.lt.s32.totalorder %v709, 512
  %vm774 = vcmp.lt.s32.totalorder %v710, 512
  %vm775 = vcmp.lt.s32.totalorder %v711, 512
  %vm776 = vcmp.lt.s32.totalorder %v712, 512
  %vm777 = vcmp.lt.s32.totalorder %v713, 512
  %vm778 = vcmp.lt.s32.totalorder %v714, 512
  %vm779 = vcmp.lt.s32.totalorder %v715, 512
  %vm780 = vcmp.lt.s32.totalorder %v716, 512
  %vm781 = vcmp.lt.s32.totalorder %v717, 512
  %vm782 = vcmp.lt.s32.totalorder %v718, 512
  %vm783 = vcmp.lt.s32.totalorder %v719, 512
  %vm784 = vcmp.lt.s32.totalorder %v720, 512
  %vm785 = vcmp.lt.s32.totalorder %v721, 512
  %vm786 = vcmp.lt.s32.totalorder %v722, 512
  %vm787 = vcmp.lt.s32.totalorder %v723, 512
  %vm788 = vcmp.lt.s32.totalorder %v724, 512
  %vm789 = vcmp.lt.s32.totalorder %v725, 512
  %vm790 = vcmp.lt.s32.totalorder %v726, 512
  %vm791 = vcmp.lt.s32.totalorder %v727, 512
  %vm792 = vcmp.lt.s32.totalorder %v728, 512
  %vm793 = vcmp.lt.s32.totalorder %v729, 512
  %vm794 = vcmp.lt.s32.totalorder %v730, 512
  %vm795 = vcmp.lt.s32.totalorder %v731, 512
  %vm796 = vcmp.lt.s32.totalorder %v732, 512
  %vm797 = vcmp.lt.s32.totalorder %v733, 512
  %vm798 = vcmp.lt.s32.totalorder %v734, 512
  %vm799 = vcmp.lt.s32.totalorder %v735, 512
  %vm800 = vcmp.lt.s32.totalorder %v736, 512
  %vm801 = vcmp.lt.s32.totalorder %v737, 512
  %vm802 = vcmp.lt.s32.totalorder %v738, 512
  %vm803 = vcmp.lt.s32.totalorder %v739, 512
  %vm804 = vcmp.lt.s32.totalorder %v740, 512
  %vm805 = vcmp.lt.s32.totalorder %v741, 512
  %vm806 = vcmp.lt.s32.totalorder %v742, 512
  %vm807 = vcmp.lt.s32.totalorder %v743, 512
  %vm808 = vcmp.lt.s32.totalorder %v744, 512
  %vm809 = vcmp.lt.s32.totalorder %v745, 512
  %vm810 = vcmp.lt.s32.totalorder %v746, 512
  %vm811 = vcmp.lt.s32.totalorder %v747, 512
  %vm812 = vcmp.lt.s32.totalorder %v748, 512
  %vm813 = vcmp.lt.s32.totalorder %v749, 512
  %vm814 = vcmp.lt.s32.totalorder %v750, 512
  %vm815 = vcmp.lt.s32.totalorder %v751, 512
  %vm816 = vcmp.lt.s32.totalorder %v752, 512
  %vm817 = vcmp.lt.s32.totalorder %v753, 512
  %vm818 = vcmp.lt.s32.totalorder %v754, 512
  %vm819 = vcmp.lt.s32.totalorder %v755, 512
  %vm820 = vcmp.lt.s32.totalorder %v756, 512
  %vm821 = vcmp.lt.s32.totalorder %v757, 512
  %vm822 = vcmp.lt.s32.totalorder %v758, 512
  %vm823 = vcmp.lt.s32.totalorder %v759, 512
  %vm824 = vcmp.lt.s32.totalorder %v760, 512
  %v825 = vsel %vm761, 1, 0
  %v826 = vsel %vm762, 1, 0
  %v827 = vsel %vm763, 1, 0
  %v828 = vsel %vm764, 1, 0
  %v829 = vsel %vm765, 1, 0
  %v830 = vsel %vm766, 1, 0
  %v831 = vsel %vm767, 1, 0
  %v832 = vsel %vm768, 1, 0
  %v833 = vsel %vm769, 1, 0
  %v834 = vsel %vm770, 1, 0
  %v835 = vsel %vm771, 1, 0
  %v836 = vsel %vm772, 1, 0
  %v837 = vsel %vm773, 1, 0
  %v838 = vsel %vm774, 1, 0
  %v839 = vsel %vm775, 1, 0
  %v840 = vsel %vm776, 1, 0
  %v841 = vsel %vm777, 1, 0
  %v842 = vsel %vm778, 1, 0
  %v843 = vsel %vm779, 1, 0
  %v844 = vsel %vm780, 1, 0
  %v845 = vsel %vm781, 1, 0
  %v846 = vsel %vm782, 1, 0
  %v847 = vsel %vm783, 1, 0
  %v848 = vsel %vm784, 1, 0
  %v849 = vsel %vm785, 1, 0
  %v850 = vsel %vm786, 1, 0
  %v851 = vsel %vm787, 1, 0
  %v852 = vsel %vm788, 1, 0
  %v853 = vsel %vm789, 1, 0
  %v854 = vsel %vm790, 1, 0
  %v855 = vsel %vm791, 1, 0
  %v856 = vsel %vm792, 1, 0
  %v857 = vsel %vm793, 1, 0
  %v858 = vsel %vm794, 1, 0
  %v859 = vsel %vm795, 1, 0
  %v860 = vsel %vm796, 1, 0
  %v861 = vsel %vm797, 1, 0
  %v862 = vsel %vm798, 1, 0
  %v863 = vsel %vm799, 1, 0
  %v864 = vsel %vm800, 1, 0
  %v865 = vsel %vm801, 1, 0
  %v866 = vsel %vm802, 1, 0
  %v867 = vsel %vm803, 1, 0
  %v868 = vsel %vm804, 1, 0
  %v869 = vsel %vm805, 1, 0
  %v870 = vsel %vm806, 1, 0
  %v871 = vsel %vm807, 1, 0
  %v872 = vsel %vm808, 1, 0
  %v873 = vsel %vm809, 1, 0
  %v874 = vsel %vm810, 1, 0
  %v875 = vsel %vm811, 1, 0
  %v876 = vsel %vm812, 1, 0
  %v877 = vsel %vm813, 1, 0
  %v878 = vsel %vm814, 1, 0
  %v879 = vsel %vm815, 1, 0
  %v880 = vsel %vm816, 1, 0
  %v881 = vsel %vm817, 1, 0
  %v882 = vsel %vm818, 1, 0
  %v883 = vsel %vm819, 1, 0
  %v884 = vsel %vm820, 1, 0
  %v885 = vsel %vm821, 1, 0
  %v886 = vsel %vm822, 1, 0
  %v887 = vsel %vm823, 1, 0
  %v888 = vsel %vm824, 1, 0
  %v889 = vcvt.s32.f32 %v825
  %v890 = vcvt.s32.f32 %v826
  %v891 = vcvt.s32.f32 %v827
  %v892 = vcvt.s32.f32 %v828
  %v893 = vcvt.s32.f32 %v829
  %v894 = vcvt.s32.f32 %v830
  %v895 = vcvt.s32.f32 %v831
  %v896 = vcvt.s32.f32 %v832
  %v897 = vcvt.s32.f32 %v833
  %v898 = vcvt.s32.f32 %v834
  %v899 = vcvt.s32.f32 %v835
  %v900 = vcvt.s32.f32 %v836
  %v901 = vcvt.s32.f32 %v837
  %v902 = vcvt.s32.f32 %v838
  %v903 = vcvt.s32.f32 %v839
  %v904 = vcvt.s32.f32 %v840
  %v905 = vcvt.s32.f32 %v841
  %v906 = vcvt.s32.f32 %v842
  %v907 = vcvt.s32.f32 %v843
  %v908 = vcvt.s32.f32 %v844
  %v909 = vcvt.s32.f32 %v845
  %v910 = vcvt.s32.f32 %v846
  %v911 = vcvt.s32.f32 %v847
  %v912 = vcvt.s32.f32 %v848
  %v913 = vcvt.s32.f32 %v849
  %v914 = vcvt.s32.f32 %v850
  %v915 = vcvt.s32.f32 %v851
  %v916 = vcvt.s32.f32 %v852
  %v917 = vcvt.s32.f32 %v853
  %v918 = vcvt.s32.f32 %v854
  %v919 = vcvt.s32.f32 %v855
  %v920 = vcvt.s32.f32 %v856
  %v921 = vcvt.s32.f32 %v857
  %v922 = vcvt.s32.f32 %v858
  %v923 = vcvt.s32.f32 %v859
  %v924 = vcvt.s32.f32 %v860
  %v925 = vcvt.s32.f32 %v861
  %v926 = vcvt.s32.f32 %v862
  %v927 = vcvt.s32.f32 %v863
  %v928 = vcvt.s32.f32 %v864
  %v929 = vcvt.s32.f32 %v865
  %v930 = vcvt.s32.f32 %v866
  %v931 = vcvt.s32.f32 %v867
  %v932 = vcvt.s32.f32 %v868
  %v933 = vcvt.s32.f32 %v869
  %v934 = vcvt.s32.f32 %v870
  %v935 = vcvt.s32.f32 %v871
  %v936 = vcvt.s32.f32 %v872
  %v937 = vcvt.s32.f32 %v873
  %v938 = vcvt.s32.f32 %v874
  %v939 = vcvt.s32.f32 %v875
  %v940 = vcvt.s32.f32 %v876
  %v941 = vcvt.s32.f32 %v877
  %v942 = vcvt.s32.f32 %v878
  %v943 = vcvt.s32.f32 %v879
  %v944 = vcvt.s32.f32 %v880
  %v945 = vcvt.s32.f32 %v881
  %v946 = vcvt.s32.f32 %v882
  %v947 = vcvt.s32.f32 %v883
  %v948 = vcvt.s32.f32 %v884
  %v949 = vcvt.s32.f32 %v885
  %v950 = vcvt.s32.f32 %v886
  %v951 = vcvt.s32.f32 %v887
  %v952 = vcvt.s32.f32 %v888
  %v953 = vmul.f32 %v343, %v889
  %v954 = vmul.f32 %v345, %v890
  %v955 = vmul.f32 %v348, %v891
  %v956 = vmul.f32 %v350, %v892
  %v957 = vmul.f32 %v353, %v893
  %v958 = vmul.f32 %v355, %v894
  %v959 = vmul.f32 %v358, %v895
  %v960 = vmul.f32 %v360, %v896
  %v961 = vmul.f32 %v363, %v897
  %v962 = vmul.f32 %v365, %v898
  %v963 = vmul.f32 %v368, %v899
  %v964 = vmul.f32 %v370, %v900
  %v965 = vmul.f32 %v373, %v901
  %v966 = vmul.f32 %v375, %v902
  %v967 = vmul.f32 %v378, %v903
  %v968 = vmul.f32 %v380, %v904
  %v969 = vmul.f32 %v383, %v905
  %v970 = vmul.f32 %v385, %v906
  %v971 = vmul.f32 %v388, %v907
  %v972 = vmul.f32 %v390, %v908
  %v973 = vmul.f32 %v393, %v909
  %v974 = vmul.f32 %v395, %v910
  %v975 = vmul.f32 %v398, %v911
  %v976 = vmul.f32 %v400, %v912
  %v977 = vmul.f32 %v403, %v913
  %v978 = vmul.f32 %v405, %v914
  %v979 = vmul.f32 %v408, %v915
  %v980 = vmul.f32 %v410, %v916
  %v981 = vmul.f32 %v413, %v917
  %v982 = vmul.f32 %v415, %v918
  %v983 = vmul.f32 %v418, %v919
  %v984 = vmul.f32 %v420, %v920
  %v985 = vmul.f32 %v423, %v921
  %v986 = vmul.f32 %v425, %v922
  %v987 = vmul.f32 %v428, %v923
  %v988 = vmul.f32 %v430, %v924
  %v989 = vmul.f32 %v433, %v925
  %v990 = vmul.f32 %v435, %v926
  %v991 = vmul.f32 %v438, %v927
  %v992 = vmul.f32 %v440, %v928
  %v993 = vmul.f32 %v443, %v929
  %v994 = vmul.f32 %v445, %v930
  %v995 = vmul.f32 %v448, %v931
  %v996 = vmul.f32 %v450, %v932
  %v997 = vmul.f32 %v453, %v933
  %v998 = vmul.f32 %v455, %v934
  %v999 = vmul.f32 %v458, %v935
  %v1000 = vmul.f32 %v460, %v936
  %v1001 = vmul.f32 %v463, %v937
  %v1002 = vmul.f32 %v465, %v938
  %v1003 = vmul.f32 %v468, %v939
  %v1004 = vmul.f32 %v470, %v940
  %v1005 = vmul.f32 %v473, %v941
  %v1006 = vmul.f32 %v475, %v942
  %v1007 = vmul.f32 %v478, %v943
  %v1008 = vmul.f32 %v480, %v944
  %v1009 = vmul.f32 %v483, %v945
  %v1010 = vmul.f32 %v485, %v946
  %v1011 = vmul.f32 %v488, %v947
  %v1012 = vmul.f32 %v490, %v948
  %v1013 = vmul.f32 %v493, %v949
  %v1014 = vmul.f32 %v495, %v950
  %v1015 = vmul.f32 %v498, %v951
  %v1016 = vmul.f32 %v500, %v952
  %v1017 = vadd.f32 %v953, %v954
  %v1018 = vadd.f32 %v1017, %v955
  %v1019 = vadd.f32 %v1018, %v956
  %v1020 = vadd.f32 %v1019, %v957
  %v1021 = vadd.f32 %v1020, %v958
  %v1022 = vadd.f32 %v1021, %v959
  %v1023 = vadd.f32 %v1022, %v960
  %v1024 = vadd.f32 %v1023, %v961
  %v1025 = vadd.f32 %v1024, %v962
  %v1026 = vadd.f32 %v1025, %v963
  %v1027 = vadd.f32 %v1026, %v964
  %v1028 = vadd.f32 %v1027, %v965
  %v1029 = vadd.f32 %v1028, %v966
  %v1030 = vadd.f32 %v1029, %v967
  %v1031 = vadd.f32 %v1030, %v968
  %v1032 = vadd.f32 %v1031, %v969
  %v1033 = vadd.f32 %v1032, %v970
  %v1034 = vadd.f32 %v1033, %v971
  %v1035 = vadd.f32 %v1034, %v972
  %v1036 = vadd.f32 %v1035, %v973
  %v1037 = vadd.f32 %v1036, %v974
  %v1038 = vadd.f32 %v1037, %v975
  %v1039 = vadd.f32 %v1038, %v976
  %v1040 = vadd.f32 %v1039, %v977
  %v1041 = vadd.f32 %v1040, %v978
  %v1042 = vadd.f32 %v1041, %v979
  %v1043 = vadd.f32 %v1042, %v980
  %v1044 = vadd.f32 %v1043, %v981
  %v1045 = vadd.f32 %v1044, %v982
  %v1046 = vadd.f32 %v1045, %v983
  %v1047 = vadd.f32 %v1046, %v984
  %v1048 = vadd.f32 %v1047, %v985
  %v1049 = vadd.f32 %v1048, %v986
  %v1050 = vadd.f32 %v1049, %v987
  %v1051 = vadd.f32 %v1050, %v988
  %v1052 = vadd.f32 %v1051, %v989
  %v1053 = vadd.f32 %v1052, %v990
  %v1054 = vadd.f32 %v1053, %v991
  %v1055 = vadd.f32 %v1054, %v992
  %v1056 = vadd.f32 %v1055, %v993
  %v1057 = vadd.f32 %v1056, %v994
  %v1058 = vadd.f32 %v1057, %v995
  %v1059 = vadd.f32 %v1058, %v996
  %v1060 = vadd.f32 %v1059, %v997
  %v1061 = vadd.f32 %v1060, %v998
  %v1062 = vadd.f32 %v1061, %v999
  %v1063 = vadd.f32 %v1062, %v1000
  %v1064 = vadd.f32 %v1063, %v1001
  %v1065 = vadd.f32 %v1064, %v1002
  %v1066 = vadd.f32 %v1065, %v1003
  %v1067 = vadd.f32 %v1066, %v1004
  %v1068 = vadd.f32 %v1067, %v1005
  %v1069 = vadd.f32 %v1068, %v1006
  %v1070 = vadd.f32 %v1069, %v1007
  %v1071 = vadd.f32 %v1070, %v1008
  %v1072 = vadd.f32 %v1071, %v1009
  %v1073 = vadd.f32 %v1072, %v1010
  %v1074 = vadd.f32 %v1073, %v1011
  %v1075 = vadd.f32 %v1074, %v1012
  %v1076 = vadd.f32 %v1075, %v1013
  %v1077 = vadd.f32 %v1076, %v1014
  %v1078 = vadd.f32 %v1077, %v1015
  %v1079 = vadd.f32 %v1078, %v1016
  %v1080 = vrot.slane %v1079, 4
  %v1081 = vadd.f32 %v1079, %v1080
  %v1082 = vrot.slane %v1081, 2
  %v1083 = vadd.f32 %v1081, %v1082
  %v1084 = vrot.slane %v1083, 1
  %v1085 = vadd.f32 %v1083, %v1084
  %v1086 = vmul.f32 %v953, %v953
  %v1087 = vmul.f32 %v954, %v954
  %v1088 = vmul.f32 %v955, %v955
  %v1089 = vmul.f32 %v956, %v956
  %v1090 = vmul.f32 %v957, %v957
  %v1091 = vmul.f32 %v958, %v958
  %v1092 = vmul.f32 %v959, %v959
  %v1093 = vmul.f32 %v960, %v960
  %v1094 = vmul.f32 %v961, %v961
  %v1095 = vmul.f32 %v962, %v962
  %v1096 = vmul.f32 %v963, %v963
  %v1097 = vmul.f32 %v964, %v964
  %v1098 = vmul.f32 %v965, %v965
  %v1099 = vmul.f32 %v966, %v966
  %v1100 = vmul.f32 %v967, %v967
  %v1101 = vmul.f32 %v968, %v968
  %v1102 = vmul.f32 %v969, %v969
  %v1103 = vmul.f32 %v970, %v970
  %v1104 = vmul.f32 %v971, %v971
  %v1105 = vmul.f32 %v972, %v972
  %v1106 = vmul.f32 %v973, %v973
  %v1107 = vmul.f32 %v974, %v974
  %v1108 = vmul.f32 %v975, %v975
  %v1109 = vmul.f32 %v976, %v976
  %v1110 = vmul.f32 %v977, %v977
  %v1111 = vmul.f32 %v978, %v978
  %v1112 = vmul.f32 %v979, %v979
  %v1113 = vmul.f32 %v980, %v980
  %v1114 = vmul.f32 %v981, %v981
  %v1115 = vmul.f32 %v982, %v982
  %v1116 = vmul.f32 %v983, %v983
  %v1117 = vmul.f32 %v984, %v984
  %v1118 = vmul.f32 %v985, %v985
  %v1119 = vmul.f32 %v986, %v986
  %v1120 = vmul.f32 %v987, %v987
  %v1121 = vmul.f32 %v988, %v988
  %v1122 = vmul.f32 %v989, %v989
  %v1123 = vmul.f32 %v990, %v990
  %v1124 = vmul.f32 %v991, %v991
  %v1125 = vmul.f32 %v992, %v992
  %v1126 = vmul.f32 %v993, %v993
  %v1127 = vmul.f32 %v994, %v994
  %v1128 = vmul.f32 %v995, %v995
  %v1129 = vmul.f32 %v996, %v996
  %v1130 = vmul.f32 %v997, %v997
  %v1131 = vmul.f32 %v998, %v998
  %v1132 = vmul.f32 %v999, %v999
  %v1133 = vmul.f32 %v1000, %v1000
  %v1134 = vmul.f32 %v1001, %v1001
  %v1135 = vmul.f32 %v1002, %v1002
  %v1136 = vmul.f32 %v1003, %v1003
  %v1137 = vmul.f32 %v1004, %v1004
  %v1138 = vmul.f32 %v1005, %v1005
  %v1139 = vmul.f32 %v1006, %v1006
  %v1140 = vmul.f32 %v1007, %v1007
  %v1141 = vmul.f32 %v1008, %v1008
  %v1142 = vmul.f32 %v1009, %v1009
  %v1143 = vmul.f32 %v1010, %v1010
  %v1144 = vmul.f32 %v1011, %v1011
  %v1145 = vmul.f32 %v1012, %v1012
  %v1146 = vmul.f32 %v1013, %v1013
  %v1147 = vmul.f32 %v1014, %v1014
  %v1148 = vmul.f32 %v1015, %v1015
  %v1149 = vmul.f32 %v1016, %v1016
  %v1150 = vadd.f32 %v1086, %v1087
  %v1151 = vadd.f32 %v1150, %v1088
  %v1152 = vadd.f32 %v1151, %v1089
  %v1153 = vadd.f32 %v1152, %v1090
  %v1154 = vadd.f32 %v1153, %v1091
  %v1155 = vadd.f32 %v1154, %v1092
  %v1156 = vadd.f32 %v1155, %v1093
  %v1157 = vadd.f32 %v1156, %v1094
  %v1158 = vadd.f32 %v1157, %v1095
  %v1159 = vadd.f32 %v1158, %v1096
  %v1160 = vadd.f32 %v1159, %v1097
  %v1161 = vadd.f32 %v1160, %v1098
  %v1162 = vadd.f32 %v1161, %v1099
  %v1163 = vadd.f32 %v1162, %v1100
  %v1164 = vadd.f32 %v1163, %v1101
  %v1165 = vadd.f32 %v1164, %v1102
  %v1166 = vadd.f32 %v1165, %v1103
  %v1167 = vadd.f32 %v1166, %v1104
  %v1168 = vadd.f32 %v1167, %v1105
  %v1169 = vadd.f32 %v1168, %v1106
  %v1170 = vadd.f32 %v1169, %v1107
  %v1171 = vadd.f32 %v1170, %v1108
  %v1172 = vadd.f32 %v1171, %v1109
  %v1173 = vadd.f32 %v1172, %v1110
  %v1174 = vadd.f32 %v1173, %v1111
  %v1175 = vadd.f32 %v1174, %v1112
  %v1176 = vadd.f32 %v1175, %v1113
  %v1177 = vadd.f32 %v1176, %v1114
  %v1178 = vadd.f32 %v1177, %v1115
  %v1179 = vadd.f32 %v1178, %v1116
  %v1180 = vadd.f32 %v1179, %v1117
  %v1181 = vadd.f32 %v1180, %v1118
  %v1182 = vadd.f32 %v1181, %v1119
  %v1183 = vadd.f32 %v1182, %v1120
  %v1184 = vadd.f32 %v1183, %v1121
  %v1185 = vadd.f32 %v1184, %v1122
  %v1186 = vadd.f32 %v1185, %v1123
  %v1187 = vadd.f32 %v1186, %v1124
  %v1188 = vadd.f32 %v1187, %v1125
  %v1189 = vadd.f32 %v1188, %v1126
  %v1190 = vadd.f32 %v1189, %v1127
  %v1191 = vadd.f32 %v1190, %v1128
  %v1192 = vadd.f32 %v1191, %v1129
  %v1193 = vadd.f32 %v1192, %v1130
  %v1194 = vadd.f32 %v1193, %v1131
  %v1195 = vadd.f32 %v1194, %v1132
  %v1196 = vadd.f32 %v1195, %v1133
  %v1197 = vadd.f32 %v1196, %v1134
  %v1198 = vadd.f32 %v1197, %v1135
  %v1199 = vadd.f32 %v1198, %v1136
  %v1200 = vadd.f32 %v1199, %v1137
  %v1201 = vadd.f32 %v1200, %v1138
  %v1202 = vadd.f32 %v1201, %v1139
  %v1203 = vadd.f32 %v1202, %v1140
  %v1204 = vadd.f32 %v1203, %v1141
  %v1205 = vadd.f32 %v1204, %v1142
  %v1206 = vadd.f32 %v1205, %v1143
  %v1207 = vadd.f32 %v1206, %v1144
  %v1208 = vadd.f32 %v1207, %v1145
  %v1209 = vadd.f32 %v1208, %v1146
  %v1210 = vadd.f32 %v1209, %v1147
  %v1211 = vadd.f32 %v1210, %v1148
  %v1212 = vadd.f32 %v1211, %v1149
  %v1213 = vrot.slane %v1212, 4
  %v1214 = vadd.f32 %v1212, %v1213
  %v1215 = vrot.slane %v1214, 2
  %v1216 = vadd.f32 %v1214, %v1215
  %v1217 = vrot.slane %v1216, 1
  %v1218 = vadd.f32 %v1216, %v1217
  %vm1219 = vcmask 1040384
  %v1220 = vsel %vm1219, %v1085, %v1218
  %vm1221 = vcmask 1041408
  %v1222 = vsel %vm1221, %v1220, 0.0
  %1223 = vst [vmem:[%s3] sm:$0xff] %v1222
  // Predicated region
  $region10: #{bottleneck_forward.5} parent=0 // pred_check
    _
  $region11: #{bottleneck_forward.5} parent=0 // pred_check_branch
    %1225 = sbr.rel (0) target = $region13
  $region12: #{bottleneck_forward.5} parent=0 // pred_region
    _
  $region13: #{bottleneck_forward.5} parent=0 // pred_fallthru
    _
  // Predicated region
  $region14: #{bottleneck_forward.5} parent=0 // pred_check
    _
  $region15: #{bottleneck_forward.5} parent=0 // pred_check_branch
    %1227 = sbr.rel (0) target = $region17
  $region16: #{bottleneck_forward.5} parent=0 // pred_region
    _
  $region17: #{bottleneck_forward.5} parent=0 // pred_fallthru
    _
  // Predicated region
  $region18: #{bottleneck_forward.5} parent=0 // pred_check
    _
  $region19: #{bottleneck_forward.5} parent=0 // pred_check_branch
    %1229 = sbr.rel (0) target = $region21
  $region20: #{bottleneck_forward.5} parent=0 // pred_region
    _
  $region21: #{bottleneck_forward.5} parent=0 // pred_fallthru
    _
  // Predicated region
  $region22: #{bottleneck_forward.5} parent=0 // pred_check
    _
  $region23: #{bottleneck_forward.5} parent=0 // pred_check_branch
    %1231 = sbr.rel (0) target = $region25
  $region24: #{bottleneck_forward.5} parent=0 // pred_region
    _
  $region25: #{bottleneck_forward.5} parent=0 // pred_fallthru
    _

// kernel: bottleneck_forward.9
$region0: #{bottleneck_forward.9}
  #allocation0 [shape = 'u32[]', space=smem, size = 0x4, offset = 0x4, fixed_abs, tag = 'smem constant byte address 0x4 - core index']
  #allocation1 [shape = 'u32[72,128]{1,0:T(1,128)}', space=vmem, size = 0x9000, scoped, tag = 'internal scratch']
  %s0 = inlined_call_operand.vmem [shape: bf16[512,128], index: 0, kind: input, shape index: {}]
  %s1 = inlined_call_operand.vmem [shape: f32[1,128], index: 1, kind: input, shape index: {}]
  %s2 = inlined_call_operand.vmem [shape: f32[1,128], index: 2, kind: input, shape index: {}]
  %s3 = inlined_call_operand.vmem [shape: f32[1,128], index: 3, kind: input, shape index: {}]
  %s4 = inlined_call_operand.vmem [shape: f32[1,128], index: 4, kind: input, shape index: {}]
  %s5 = inlined_call_operand.vmem [shape: bf16[512,128], index: 5, kind: input, shape index: {}]
  %s6 = inlined_call_operand.vmem [shape: f32[1,128], index: 6, kind: input, shape index: {}]
  %s7 = inlined_call_operand.vmem [shape: f32[1,128], index: 7, kind: input, shape index: {}]
  %s8 = inlined_call_operand.vmem [shape: f32[1,128], index: 8, kind: input, shape index: {}]
  %s9 = inlined_call_operand.vmem [shape: f32[1,128], index: 9, kind: input, shape index: {}]
  %s10 = inlined_call_operand.vmem [shape: f32[512,128], index: 10, kind: output, shape index: {}]
  %s11 = sld [smem:[#allocation0]]
  $region50: #{bottleneck_forward.9} parent=0
    _
  %s13 = ssub.s32 1, %s11
  %s14 = scalar_select 0, %s13, %s11
  // Predicated region
  $region2: #{bottleneck_forward.9} parent=0 // pred_check
    _
  $region3: #{bottleneck_forward.9} parent=0 // pred_check_branch
    %16 = sbr.rel (0) target = $region5
  $region4: #{bottleneck_forward.9} parent=0 // pred_region
    _
  $region5: #{bottleneck_forward.9} parent=0 // pred_fallthru
    _
  // Predicated region
  $region6: #{bottleneck_forward.9} parent=0 // pred_check
    _
  $region7: #{bottleneck_forward.9} parent=0 // pred_check_branch
    %18 = sbr.rel (0) target = $region9
  $region8: #{bottleneck_forward.9} parent=0 // pred_region
    _
  $region9: #{bottleneck_forward.9} parent=0 // pred_fallthru
    _
  // Predicated region
  $region10: #{bottleneck_forward.9} parent=0 // pred_check
    _
  $region11: #{bottleneck_forward.9} parent=0 // pred_check_branch
    %20 = sbr.rel (0) target = $region13
  $region12: #{bottleneck_forward.9} parent=0 // pred_region
    _
  $region13: #{bottleneck_forward.9} parent=0 // pred_fallthru
    _
  // Predicated region
  $region14: #{bottleneck_forward.9} parent=0 // pred_check
    _
  $region15: #{bottleneck_forward.9} parent=0 // pred_check_branch
    %22 = sbr.rel (0) target = $region17
  $region16: #{bottleneck_forward.9} parent=0 // pred_region
    _
  $region17: #{bottleneck_forward.9} parent=0 // pred_fallthru
    _
  // Predicated region
  $region18: #{bottleneck_forward.9} parent=0 // pred_check
    _
  $region19: #{bottleneck_forward.9} parent=0 // pred_check_branch
    %24 = sbr.rel (0) target = $region21
  $region20: #{bottleneck_forward.9} parent=0 // pred_region
    _
  $region21: #{bottleneck_forward.9} parent=0 // pred_fallthru
    _
  // Predicated region
  $region22: #{bottleneck_forward.9} parent=0 // pred_check
    _
  $region23: #{bottleneck_forward.9} parent=0 // pred_check_branch
    %26 = sbr.rel (0) target = $region25
  $region24: #{bottleneck_forward.9} parent=0 // pred_region
    _
  $region25: #{bottleneck_forward.9} parent=0 // pred_fallthru
    _
  // Predicated region
  $region26: #{bottleneck_forward.9} parent=0 // pred_check
    _
  $region27: #{bottleneck_forward.9} parent=0 // pred_check_branch
    %28 = sbr.rel (0) target = $region29
  $region28: #{bottleneck_forward.9} parent=0 // pred_region
    _
  $region29: #{bottleneck_forward.9} parent=0 // pred_fallthru
    _
  // Predicated region
  $region30: #{bottleneck_forward.9} parent=0 // pred_check
    _
  $region31: #{bottleneck_forward.9} parent=0 // pred_check_branch
    %30 = sbr.rel (0) target = $region33
  $region32: #{bottleneck_forward.9} parent=0 // pred_region
    _
  $region33: #{bottleneck_forward.9} parent=0 // pred_fallthru
    _
  // Predicated region
  $region34: #{bottleneck_forward.9} parent=0 // pred_check
    _
  $region35: #{bottleneck_forward.9} parent=0 // pred_check_branch
    %32 = sbr.rel (0) target = $region37
  $region36: #{bottleneck_forward.9} parent=0 // pred_region
    _
  $region37: #{bottleneck_forward.9} parent=0 // pred_fallthru
    _
  // Predicated region
  $region38: #{bottleneck_forward.9} parent=0 // pred_check
    _
  $region39: #{bottleneck_forward.9} parent=0 // pred_check_branch
    %34 = sbr.rel (0) target = $region41
  $region40: #{bottleneck_forward.9} parent=0 // pred_region
    _
  $region41: #{bottleneck_forward.9} parent=0 // pred_fallthru
    _
  %v35 = vld [vmem:[%s0] sm:$0xf]
  %v36 = vld [vmem:[%s0 + $0x4] sm:$0xf]
  %v37 = vld [vmem:[%s0 + $0x8] sm:$0xf]
  %v38 = vld [vmem:[%s0 + $0xc] sm:$0xf]
  %v39 = vld [vmem:[%s0 + $0x10] sm:$0xf]
  %v40 = vld [vmem:[%s0 + $0x14] sm:$0xf]
  %v41 = vld [vmem:[%s0 + $0x18] sm:$0xf]
  %v42 = vld [vmem:[%s0 + $0x1c] sm:$0xf]
  %v43 = vld [vmem:[%s0 + $0x20] sm:$0xf]
  %v44 = vld [vmem:[%s0 + $0x24] sm:$0xf]
  %v45 = vld [vmem:[%s0 + $0x28] sm:$0xf]
  %v46 = vld [vmem:[%s0 + $0x2c] sm:$0xf]
  %v47 = vld [vmem:[%s0 + $0x30] sm:$0xf]
  %v48 = vld [vmem:[%s0 + $0x34] sm:$0xf]
  %v49 = vld [vmem:[%s0 + $0x38] sm:$0xf]
  %v50 = vld [vmem:[%s0 + $0x3c] sm:$0xf]
  %v51 = vld [vmem:[%s0 + $0x40] sm:$0xf]
  %v52 = vld [vmem:[%s0 + $0x44] sm:$0xf]
  %v53 = vld [vmem:[%s0 + $0x48] sm:$0xf]
  %v54 = vld [vmem:[%s0 + $0x4c] sm:$0xf]
  %v55 = vld [vmem:[%s0 + $0x50] sm:$0xf]
  %v56 = vld [vmem:[%s0 + $0x54] sm:$0xf]
  %v57 = vld [vmem:[%s0 + $0x58] sm:$0xf]
  %v58 = vld [vmem:[%s0 + $0x5c] sm:$0xf]
  %v59 = vld [vmem:[%s0 + $0x60] sm:$0xf]
  %v60 = vld [vmem:[%s0 + $0x64] sm:$0xf]
  %v61 = vld [vmem:[%s0 + $0x68] sm:$0xf]
  %v62 = vld [vmem:[%s0 + $0x6c] sm:$0xf]
  %v63 = vld [vmem:[%s0 + $0x70] sm:$0xf]
  %v64 = vld [vmem:[%s0 + $0x74] sm:$0xf]
  %v65 = vld [vmem:[%s0 + $0x78] sm:$0xf]
  %v66 = vld [vmem:[%s0 + $0x7c] sm:$0xf]
  %v67 = vld [vmem:[%s0 + $0x80] sm:$0xf]
  %v68 = vld [vmem:[%s0 + $0x84] sm:$0xf]
  %v69 = vld [vmem:[%s0 + $0x88] sm:$0xf]
  %v70 = vld [vmem:[%s0 + $0x8c] sm:$0xf]
  %v71 = vld [vmem:[%s0 + $0x90] sm:$0xf]
  %v72 = vld [vmem:[%s0 + $0x94] sm:$0xf]
  %v73 = vld [vmem:[%s0 + $0x98] sm:$0xf]
  %v74 = vld [vmem:[%s0 + $0x9c] sm:$0xf]
  %v75 = vld [vmem:[%s0 + $0xa0] sm:$0xf]
  %v76 = vld [vmem:[%s0 + $0xa4] sm:$0xf]
  %v77 = vld [vmem:[%s0 + $0xa8] sm:$0xf]
  %v78 = vld [vmem:[%s0 + $0xac] sm:$0xf]
  %v79 = vld [vmem:[%s0 + $0xb0] sm:$0xf]
  %v80 = vld [vmem:[%s0 + $0xb4] sm:$0xf]
  %v81 = vld [vmem:[%s0 + $0xb8] sm:$0xf]
  %v82 = vld [vmem:[%s0 + $0xbc] sm:$0xf]
  %v83 = vld [vmem:[%s0 + $0xc0] sm:$0xf]
  %v84 = vld [vmem:[%s0 + $0xc4] sm:$0xf]
  %v85 = vld [vmem:[%s0 + $0xc8] sm:$0xf]
  %v86 = vld [vmem:[%s0 + $0xcc] sm:$0xf]
  %v87 = vld [vmem:[%s0 + $0xd0] sm:$0xf]
  %v88 = vld [vmem:[%s0 + $0xd4] sm:$0xf]
  %v89 = vld [vmem:[%s0 + $0xd8] sm:$0xf]
  %v90 = vld [vmem:[%s0 + $0xdc] sm:$0xf]
  %v91 = vld [vmem:[%s0 + $0xe0] sm:$0xf]
  %v92 = vld [vmem:[%s0 + $0xe4] sm:$0xf]
  %v93 = vld [vmem:[%s0 + $0xe8] sm:$0xf]
  %v94 = vld [vmem:[%s0 + $0xec] sm:$0xf]
  %v95 = vld [vmem:[%s0 + $0xf0] sm:$0xf]
  %v96 = vld [vmem:[%s0 + $0xf4] sm:$0xf]
  %v97 = vld [vmem:[%s0 + $0xf8] sm:$0xf]
  %v98 = vld [vmem:[%s0 + $0xfc] sm:$0xf]
  %v99 = vunpack.c.l.bf16 %v35
  %v100 = vunpack.c.l.bf16 %v36
  %v101 = vunpack.c.l.bf16 %v37
  %v102 = vunpack.c.l.bf16 %v38
  %v103 = vunpack.c.l.bf16 %v39
  %v104 = vunpack.c.l.bf16 %v40
  %v105 = vunpack.c.l.bf16 %v41
  %v106 = vunpack.c.l.bf16 %v42
  %v107 = vunpack.c.l.bf16 %v43
  %v108 = vunpack.c.l.bf16 %v44
  %v109 = vunpack.c.l.bf16 %v45
  %v110 = vunpack.c.l.bf16 %v46
  %v111 = vunpack.c.l.bf16 %v47
  %v112 = vunpack.c.l.bf16 %v48
  %v113 = vunpack.c.l.bf16 %v49
  %v114 = vunpack.c.l.bf16 %v50
  %v115 = vunpack.c.l.bf16 %v51
  %v116 = vunpack.c.l.bf16 %v52
  %v117 = vunpack.c.l.bf16 %v53
  %v118 = vunpack.c.l.bf16 %v54
  %v119 = vunpack.c.l.bf16 %v55
  %v120 = vunpack.c.l.bf16 %v56
  %v121 = vunpack.c.l.bf16 %v57
  %v122 = vunpack.c.l.bf16 %v58
  %v123 = vunpack.c.l.bf16 %v59
  %v124 = vunpack.c.l.bf16 %v60
  %v125 = vunpack.c.l.bf16 %v61
  %v126 = vunpack.c.l.bf16 %v62
  %v127 = vunpack.c.l.bf16 %v63
  %v128 = vunpack.c.l.bf16 %v64
  %v129 = vunpack.c.l.bf16 %v65
  %v130 = vunpack.c.l.bf16 %v66
  %v131 = vunpack.c.l.bf16 %v67
  %v132 = vunpack.c.l.bf16 %v68
  %v133 = vunpack.c.l.bf16 %v69
  %v134 = vunpack.c.l.bf16 %v70
  %v135 = vunpack.c.l.bf16 %v71
  %v136 = vunpack.c.l.bf16 %v72
  %v137 = vunpack.c.l.bf16 %v73
  %v138 = vunpack.c.l.bf16 %v74
  %v139 = vunpack.c.l.bf16 %v75
  %v140 = vunpack.c.l.bf16 %v76
  %v141 = vunpack.c.l.bf16 %v77
  %v142 = vunpack.c.l.bf16 %v78
  %v143 = vunpack.c.l.bf16 %v79
  %v144 = vunpack.c.l.bf16 %v80
  %v145 = vunpack.c.l.bf16 %v81
  %v146 = vunpack.c.l.bf16 %v82
  %v147 = vunpack.c.l.bf16 %v83
  %v148 = vunpack.c.l.bf16 %v84
  %v149 = vunpack.c.l.bf16 %v85
  %v150 = vunpack.c.l.bf16 %v86
  %v151 = vunpack.c.l.bf16 %v87
  %v152 = vunpack.c.l.bf16 %v88
  %v153 = vunpack.c.l.bf16 %v89
  %v154 = vunpack.c.l.bf16 %v90
  %v155 = vunpack.c.l.bf16 %v91
  %v156 = vunpack.c.l.bf16 %v92
  %v157 = vunpack.c.l.bf16 %v93
  %v158 = vunpack.c.l.bf16 %v94
  %v159 = vunpack.c.l.bf16 %v95
  %v160 = vunpack.c.l.bf16 %v96
  %v161 = vunpack.c.l.bf16 %v97
  %v162 = vunpack.c.l.bf16 %v98
  %v163 = vld [vmem:[%s1] sm:$0x1]
  %v164 = vmul.f32 %v163, 0.001953125
  %v165 = vld [vmem:[%s2] sm:$0x1]
  %v166 = vmul.f32 %v165, 0.001953125
  %v167 = vmul.f32 %v164, %v164
  %v168 = vsub.f32 %v166, %v167
  %v169 = vmax.f32 %v168, 0.0
  %v170 = vadd.f32 %v169, 1e-05
  %v171 = vrsqrt.pop %v170
  %v172 = vmul.f32 %v171, %v170
  %v173 = vmul.f32 %v172, %v171
  %v174 = vmul.f32 0.5, %v173
  %v175 = vsub.f32 1.5, %v174
  %v176 = vmul.f32 %v171, %v175
  %vm177 = vweird.f32 %v170
  %vm178 = vweird.f32 %v171
  %vm179 = vmor %vm177, %vm178
  %v180 = vsel %vm179, %v171, %v176
  %v181 = vld [vmem:[%s3] sm:$0x1]
  %v182 = vmul.f32 %v180, %v181
  %v184 = vperm.slane %v164, 0
  %v186 = vsub.f32 %v99, %v184
  %v187 = vsub.f32 %v100, %v184
  %v188 = vsub.f32 %v101, %v184
  %v189 = vsub.f32 %v102, %v184
  %v190 = vsub.f32 %v103, %v184
  %v191 = vsub.f32 %v104, %v184
  %v192 = vsub.f32 %v105, %v184
  %v193 = vsub.f32 %v106, %v184
  %v194 = vsub.f32 %v107, %v184
  %v195 = vsub.f32 %v108, %v184
  %v196 = vsub.f32 %v109, %v184
  %v197 = vsub.f32 %v110, %v184
  %v198 = vsub.f32 %v111, %v184
  %v199 = vsub.f32 %v112, %v184
  %v200 = vsub.f32 %v113, %v184
  %v201 = vsub.f32 %v114, %v184
  %v202 = vsub.f32 %v115, %v184
  %v203 = vsub.f32 %v116, %v184
  %v204 = vsub.f32 %v117, %v184
  %v205 = vsub.f32 %v118, %v184
  %v206 = vsub.f32 %v119, %v184
  %v207 = vsub.f32 %v120, %v184
  %v208 = vsub.f32 %v121, %v184
  %v209 = vsub.f32 %v122, %v184
  %v210 = vsub.f32 %v123, %v184
  %v211 = vsub.f32 %v124, %v184
  %v212 = vsub.f32 %v125, %v184
  %v213 = vsub.f32 %v126, %v184
  %v214 = vsub.f32 %v127, %v184
  %v215 = vsub.f32 %v128, %v184
  %v216 = vsub.f32 %v129, %v184
  %v217 = vsub.f32 %v130, %v184
  %v218 = vsub.f32 %v131, %v184
  %v219 = vsub.f32 %v132, %v184
  %v220 = vsub.f32 %v133, %v184
  %v221 = vsub.f32 %v134, %v184
  %v222 = vsub.f32 %v135, %v184
  %v223 = vsub.f32 %v136, %v184
  %v224 = vsub.f32 %v137, %v184
  %v225 = vsub.f32 %v138, %v184
  %v226 = vsub.f32 %v139, %v184
  %v227 = vsub.f32 %v140, %v184
  %v228 = vsub.f32 %v141, %v184
  %v229 = vsub.f32 %v142, %v184
  %v230 = vsub.f32 %v143, %v184
  %v231 = vsub.f32 %v144, %v184
  %v232 = vsub.f32 %v145, %v184
  %v233 = vsub.f32 %v146, %v184
  %v234 = vsub.f32 %v147, %v184
  %v235 = vsub.f32 %v148, %v184
  %v236 = vsub.f32 %v149, %v184
  %v237 = vsub.f32 %v150, %v184
  %v238 = vsub.f32 %v151, %v184
  %v239 = vsub.f32 %v152, %v184
  %v240 = vsub.f32 %v153, %v184
  %v241 = vsub.f32 %v154, %v184
  %v242 = vsub.f32 %v155, %v184
  %v243 = vsub.f32 %v156, %v184
  %v244 = vsub.f32 %v157, %v184
  %v245 = vsub.f32 %v158, %v184
  %v246 = vsub.f32 %v159, %v184
  %v247 = vsub.f32 %v160, %v184
  %v248 = vsub.f32 %v161, %v184
  %v249 = vsub.f32 %v162, %v184
  %v251 = vperm.slane %v182, 0
  %v253 = vmul.f32 %v186, %v251
  %v254 = vmul.f32 %v187, %v251
  %v255 = vmul.f32 %v188, %v251
  %v256 = vmul.f32 %v189, %v251
  %v257 = vmul.f32 %v190, %v251
  %v258 = vmul.f32 %v191, %v251
  %v259 = vmul.f32 %v192, %v251
  %v260 = vmul.f32 %v193, %v251
  %v261 = vmul.f32 %v194, %v251
  %v262 = vmul.f32 %v195, %v251
  %v263 = vmul.f32 %v196, %v251
  %v264 = vmul.f32 %v197, %v251
  %v265 = vmul.f32 %v198, %v251
  %v266 = vmul.f32 %v199, %v251
  %v267 = vmul.f32 %v200, %v251
  %v268 = vmul.f32 %v201, %v251
  %v269 = vmul.f32 %v202, %v251
  %v270 = vmul.f32 %v203, %v251
  %v271 = vmul.f32 %v204, %v251
  %v272 = vmul.f32 %v205, %v251
  %v273 = vmul.f32 %v206, %v251
  %v274 = vmul.f32 %v207, %v251
  %v275 = vmul.f32 %v208, %v251
  %v276 = vmul.f32 %v209, %v251
  %v277 = vmul.f32 %v210, %v251
  %v278 = vmul.f32 %v211, %v251
  %v279 = vmul.f32 %v212, %v251
  %v280 = vmul.f32 %v213, %v251
  %v281 = vmul.f32 %v214, %v251
  %v282 = vmul.f32 %v215, %v251
  %v283 = vmul.f32 %v216, %v251
  %v284 = vmul.f32 %v217, %v251
  %v285 = vmul.f32 %v218, %v251
  %v286 = vmul.f32 %v219, %v251
  %v287 = vmul.f32 %v220, %v251
  %v288 = vmul.f32 %v221, %v251
  %v289 = vmul.f32 %v222, %v251
  %v290 = vmul.f32 %v223, %v251
  %v291 = vmul.f32 %v224, %v251
  %v292 = vmul.f32 %v225, %v251
  %v293 = vmul.f32 %v226, %v251
  %v294 = vmul.f32 %v227, %v251
  %v295 = vmul.f32 %v228, %v251
  %v296 = vmul.f32 %v229, %v251
  %v297 = vmul.f32 %v230, %v251
  %v298 = vmul.f32 %v231, %v251
  %v299 = vmul.f32 %v232, %v251
  %v300 = vmul.f32 %v233, %v251
  %v301 = vmul.f32 %v234, %v251
  %v302 = vmul.f32 %v235, %v251
  %v303 = vmul.f32 %v236, %v251
  %v304 = vmul.f32 %v237, %v251
  %v305 = vmul.f32 %v238, %v251
  %v306 = vmul.f32 %v239, %v251
  %v307 = vmul.f32 %v240, %v251
  %v308 = vmul.f32 %v241, %v251
  %v309 = vmul.f32 %v242, %v251
  %v310 = vmul.f32 %v243, %v251
  %v311 = vmul.f32 %v244, %v251
  %v312 = vmul.f32 %v245, %v251
  %v313 = vmul.f32 %v246, %v251
  %v314 = vmul.f32 %v247, %v251
  %v315 = vmul.f32 %v248, %v251
  %v316 = vmul.f32 %v249, %v251
  %v317 = vld [vmem:[%s4] sm:$0x1]
  %v319 = vperm.slane %v317, 0
  %v321 = vadd.f32 %v253, %v319
  %v322 = vadd.f32 %v254, %v319
  %v323 = vadd.f32 %v255, %v319
  %v324 = vadd.f32 %v256, %v319
  %v325 = vadd.f32 %v257, %v319
  %v326 = vadd.f32 %v258, %v319
  %v327 = vadd.f32 %v259, %v319
  %v328 = vadd.f32 %v260, %v319
  %v329 = vadd.f32 %v261, %v319
  %v330 = vadd.f32 %v262, %v319
  %v331 = vadd.f32 %v263, %v319
  %v332 = vadd.f32 %v264, %v319
  %v333 = vadd.f32 %v265, %v319
  %v334 = vadd.f32 %v266, %v319
  %v335 = vadd.f32 %v267, %v319
  %v336 = vadd.f32 %v268, %v319
  %v337 = vadd.f32 %v269, %v319
  %v338 = vadd.f32 %v270, %v319
  %v339 = vadd.f32 %v271, %v319
  %v340 = vadd.f32 %v272, %v319
  %v341 = vadd.f32 %v273, %v319
  %v342 = vadd.f32 %v274, %v319
  %v343 = vadd.f32 %v275, %v319
  %v344 = vadd.f32 %v276, %v319
  %v345 = vadd.f32 %v277, %v319
  %v346 = vadd.f32 %v278, %v319
  %v347 = vadd.f32 %v279, %v319
  %v348 = vadd.f32 %v280, %v319
  %v349 = vadd.f32 %v281, %v319
  %v350 = vadd.f32 %v282, %v319
  %v351 = vadd.f32 %v283, %v319
  %v352 = vadd.f32 %v284, %v319
  %v353 = vadd.f32 %v285, %v319
  %v354 = vadd.f32 %v286, %v319
  %v355 = vadd.f32 %v287, %v319
  %v356 = vadd.f32 %v288, %v319
  %v357 = vadd.f32 %v289, %v319
  %v358 = vadd.f32 %v290, %v319
  %v359 = vadd.f32 %v291, %v319
  %v360 = vadd.f32 %v292, %v319
  %v361 = vadd.f32 %v293, %v319
  %v362 = vadd.f32 %v294, %v319
  %v363 = vadd.f32 %v295, %v319
  %v364 = vadd.f32 %v296, %v319
  %v365 = vadd.f32 %v297, %v319
  %v366 = vadd.f32 %v298, %v319
  %v367 = vadd.f32 %v299, %v319
  %v368 = vadd.f32 %v300, %v319
  %v369 = vadd.f32 %v301, %v319
  %v370 = vadd.f32 %v302, %v319
  %v371 = vadd.f32 %v303, %v319
  %v372 = vadd.f32 %v304, %v319
  %v373 = vadd.f32 %v305, %v319
  %v374 = vadd.f32 %v306, %v319
  %v375 = vadd.f32 %v307, %v319
  %v376 = vadd.f32 %v308, %v319
  %v377 = vadd.f32 %v309, %v319
  %v378 = vadd.f32 %v310, %v319
  %v379 = vadd.f32 %v311, %v319
  %v380 = vadd.f32 %v312, %v319
  %v381 = vadd.f32 %v313, %v319
  %v382 = vadd.f32 %v314, %v319
  %v383 = vadd.f32 %v315, %v319
  %v384 = vadd.f32 %v316, %v319
  %v385 = vld [vmem:[%s5] sm:$0xf]
  %v386 = vld [vmem:[%s5 + $0x4] sm:$0xf]
  %v387 = vld [vmem:[%s5 + $0x8] sm:$0xf]
  %v388 = vld [vmem:[%s5 + $0xc] sm:$0xf]
  %v389 = vld [vmem:[%s5 + $0x10] sm:$0xf]
  %v390 = vld [vmem:[%s5 + $0x14] sm:$0xf]
  %v391 = vld [vmem:[%s5 + $0x18] sm:$0xf]
  %v392 = vld [vmem:[%s5 + $0x1c] sm:$0xf]
  %v393 = vld [vmem:[%s5 + $0x20] sm:$0xf]
  %v394 = vld [vmem:[%s5 + $0x24] sm:$0xf]
  %v395 = vld [vmem:[%s5 + $0x28] sm:$0xf]
  %v396 = vld [vmem:[%s5 + $0x2c] sm:$0xf]
  %v397 = vld [vmem:[%s5 + $0x30] sm:$0xf]
  %v398 = vld [vmem:[%s5 + $0x34] sm:$0xf]
  %v399 = vld [vmem:[%s5 + $0x38] sm:$0xf]
  %v400 = vld [vmem:[%s5 + $0x3c] sm:$0xf]
  %v401 = vld [vmem:[%s5 + $0x40] sm:$0xf]
  %v402 = vld [vmem:[%s5 + $0x44] sm:$0xf]
  %v403 = vld [vmem:[%s5 + $0x48] sm:$0xf]
  %v404 = vld [vmem:[%s5 + $0x4c] sm:$0xf]
  %v405 = vld [vmem:[%s5 + $0x50] sm:$0xf]
  %v406 = vld [vmem:[%s5 + $0x54] sm:$0xf]
  %v407 = vld [vmem:[%s5 + $0x58] sm:$0xf]
  %v408 = vld [vmem:[%s5 + $0x5c] sm:$0xf]
  %v409 = vld [vmem:[%s5 + $0x60] sm:$0xf]
  %v410 = vld [vmem:[%s5 + $0x64] sm:$0xf]
  %v411 = vld [vmem:[%s5 + $0x68] sm:$0xf]
  %v412 = vld [vmem:[%s5 + $0x6c] sm:$0xf]
  %v413 = vld [vmem:[%s5 + $0x70] sm:$0xf]
  %v414 = vld [vmem:[%s5 + $0x74] sm:$0xf]
  %v415 = vld [vmem:[%s5 + $0x78] sm:$0xf]
  %v416 = vld [vmem:[%s5 + $0x7c] sm:$0xf]
  %v417 = vld [vmem:[%s5 + $0x80] sm:$0xf]
  %v418 = vld [vmem:[%s5 + $0x84] sm:$0xf]
  %v419 = vld [vmem:[%s5 + $0x88] sm:$0xf]
  %v420 = vld [vmem:[%s5 + $0x8c] sm:$0xf]
  %v421 = vld [vmem:[%s5 + $0x90] sm:$0xf]
  %v422 = vld [vmem:[%s5 + $0x94] sm:$0xf]
  %v423 = vld [vmem:[%s5 + $0x98] sm:$0xf]
  %v424 = vld [vmem:[%s5 + $0x9c] sm:$0xf]
  %v425 = vld [vmem:[%s5 + $0xa0] sm:$0xf]
  %v426 = vld [vmem:[%s5 + $0xa4] sm:$0xf]
  %v427 = vld [vmem:[%s5 + $0xa8] sm:$0xf]
  %v428 = vld [vmem:[%s5 + $0xac] sm:$0xf]
  %v429 = vld [vmem:[%s5 + $0xb0] sm:$0xf]
  %v430 = vld [vmem:[%s5 + $0xb4] sm:$0xf]
  %v431 = vld [vmem:[%s5 + $0xb8] sm:$0xf]
  %v432 = vld [vmem:[%s5 + $0xbc] sm:$0xf]
  %v433 = vld [vmem:[%s5 + $0xc0] sm:$0xf]
  %v434 = vld [vmem:[%s5 + $0xc4] sm:$0xf]
  %v435 = vld [vmem:[%s5 + $0xc8] sm:$0xf]
  %v436 = vld [vmem:[%s5 + $0xcc] sm:$0xf]
  %v437 = vld [vmem:[%s5 + $0xd0] sm:$0xf]
  %v438 = vld [vmem:[%s5 + $0xd4] sm:$0xf]
  %v439 = vld [vmem:[%s5 + $0xd8] sm:$0xf]
  %v440 = vld [vmem:[%s5 + $0xdc] sm:$0xf]
  %v441 = vld [vmem:[%s5 + $0xe0] sm:$0xf]
  %v442 = vld [vmem:[%s5 + $0xe4] sm:$0xf]
  %v443 = vld [vmem:[%s5 + $0xe8] sm:$0xf]
  %v444 = vld [vmem:[%s5 + $0xec] sm:$0xf]
  %v445 = vld [vmem:[%s5 + $0xf0] sm:$0xf]
  %v446 = vld [vmem:[%s5 + $0xf4] sm:$0xf]
  %v447 = vld [vmem:[%s5 + $0xf8] sm:$0xf]
  %v448 = vld [vmem:[%s5 + $0xfc] sm:$0xf]
  %v449 = vunpack.c.l.bf16 %v385
  %v450 = vunpack.c.l.bf16 %v386
  %v451 = vunpack.c.l.bf16 %v387
  %v452 = vunpack.c.l.bf16 %v388
  %v453 = vunpack.c.l.bf16 %v389
  %v454 = vunpack.c.l.bf16 %v390
  %v455 = vunpack.c.l.bf16 %v391
  %v456 = vunpack.c.l.bf16 %v392
  %v457 = vunpack.c.l.bf16 %v393
  %v458 = vunpack.c.l.bf16 %v394
  %v459 = vunpack.c.l.bf16 %v395
  %v460 = vunpack.c.l.bf16 %v396
  %v461 = vunpack.c.l.bf16 %v397
  %v462 = vunpack.c.l.bf16 %v398
  %v463 = vunpack.c.l.bf16 %v399
  %v464 = vunpack.c.l.bf16 %v400
  %v465 = vunpack.c.l.bf16 %v401
  %v466 = vunpack.c.l.bf16 %v402
  %v467 = vunpack.c.l.bf16 %v403
  %v468 = vunpack.c.l.bf16 %v404
  %v469 = vunpack.c.l.bf16 %v405
  %v470 = vunpack.c.l.bf16 %v406
  %v471 = vunpack.c.l.bf16 %v407
  %v472 = vunpack.c.l.bf16 %v408
  %v473 = vunpack.c.l.bf16 %v409
  %v474 = vunpack.c.l.bf16 %v410
  %v475 = vunpack.c.l.bf16 %v411
  %v476 = vunpack.c.l.bf16 %v412
  %v477 = vunpack.c.l.bf16 %v413
  %v478 = vunpack.c.l.bf16 %v414
  %v479 = vunpack.c.l.bf16 %v415
  %v480 = vunpack.c.l.bf16 %v416
  %v481 = vunpack.c.l.bf16 %v417
  %v482 = vunpack.c.l.bf16 %v418
  %v483 = vunpack.c.l.bf16 %v419
  %v484 = vunpack.c.l.bf16 %v420
  %v485 = vunpack.c.l.bf16 %v421
  %v486 = vunpack.c.l.bf16 %v422
  %v487 = vunpack.c.l.bf16 %v423
  %v488 = vunpack.c.l.bf16 %v424
  %v489 = vunpack.c.l.bf16 %v425
  %v490 = vunpack.c.l.bf16 %v426
  %v491 = vunpack.c.l.bf16 %v427
  %v492 = vunpack.c.l.bf16 %v428
  %v493 = vunpack.c.l.bf16 %v429
  %v494 = vunpack.c.l.bf16 %v430
  %v495 = vunpack.c.l.bf16 %v431
  %v496 = vunpack.c.l.bf16 %v432
  %v497 = vunpack.c.l.bf16 %v433
  %v498 = vunpack.c.l.bf16 %v434
  %v499 = vunpack.c.l.bf16 %v435
  %v500 = vunpack.c.l.bf16 %v436
  %v501 = vunpack.c.l.bf16 %v437
  %v502 = vunpack.c.l.bf16 %v438
  %v503 = vunpack.c.l.bf16 %v439
  %v504 = vunpack.c.l.bf16 %v440
  %v505 = vunpack.c.l.bf16 %v441
  %v506 = vunpack.c.l.bf16 %v442
  %v507 = vunpack.c.l.bf16 %v443
  %v508 = vunpack.c.l.bf16 %v444
  %v509 = vunpack.c.l.bf16 %v445
  %v510 = vunpack.c.l.bf16 %v446
  %v511 = vunpack.c.l.bf16 %v447
  %v512 = vunpack.c.l.bf16 %v448
  %v513 = vld [vmem:[%s6] sm:$0x1]
  %v514 = vmul.f32 %v513, 0.001953125
  %v515 = vld [vmem:[%s7] sm:$0x1]
  %v516 = vmul.f32 %v515, 0.001953125
  %v517 = vmul.f32 %v514, %v514
  %v518 = vsub.f32 %v516, %v517
  %v519 = vmax.f32 %v518, 0.0
  %v520 = vadd.f32 %v519, 1e-05
  %v521 = vrsqrt.pop %v520
  %v522 = vmul.f32 %v521, %v520
  %v523 = vmul.f32 %v522, %v521
  %v524 = vmul.f32 0.5, %v523
  %v525 = vsub.f32 1.5, %v524
  %v526 = vmul.f32 %v521, %v525
  %vm527 = vweird.f32 %v520
  %vm528 = vweird.f32 %v521
  %vm529 = vmor %vm527, %vm528
  %v530 = vsel %vm529, %v521, %v526
  %v531 = vld [vmem:[%s8] sm:$0x1]
  %v532 = vmul.f32 %v530, %v531
  %v534 = vperm.slane %v514, 0
  %v536 = vsub.f32 %v449, %v534
  %v537 = vsub.f32 %v450, %v534
  %v538 = vsub.f32 %v451, %v534
  %v539 = vsub.f32 %v452, %v534
  %v540 = vsub.f32 %v453, %v534
  %v541 = vsub.f32 %v454, %v534
  %v542 = vsub.f32 %v455, %v534
  %v543 = vsub.f32 %v456, %v534
  %v544 = vsub.f32 %v457, %v534
  %v545 = vsub.f32 %v458, %v534
  %v546 = vsub.f32 %v459, %v534
  %v547 = vsub.f32 %v460, %v534
  %v548 = vsub.f32 %v461, %v534
  %v549 = vsub.f32 %v462, %v534
  %v550 = vsub.f32 %v463, %v534
  %v551 = vsub.f32 %v464, %v534
  %v552 = vsub.f32 %v465, %v534
  %v553 = vsub.f32 %v466, %v534
  %v554 = vsub.f32 %v467, %v534
  %v555 = vsub.f32 %v468, %v534
  %v556 = vsub.f32 %v469, %v534
  %v557 = vsub.f32 %v470, %v534
  %v558 = vsub.f32 %v471, %v534
  %v559 = vsub.f32 %v472, %v534
  %v560 = vsub.f32 %v473, %v534
  %v561 = vsub.f32 %v474, %v534
  %v562 = vsub.f32 %v475, %v534
  %v563 = vsub.f32 %v476, %v534
  %v564 = vsub.f32 %v477, %v534
  %v565 = vsub.f32 %v478, %v534
  %v566 = vsub.f32 %v479, %v534
  %v567 = vsub.f32 %v480, %v534
  %v568 = vsub.f32 %v481, %v534
  %v569 = vsub.f32 %v482, %v534
  %v570 = vsub.f32 %v483, %v534
  %v571 = vsub.f32 %v484, %v534
  %v572 = vsub.f32 %v485, %v534
  %v573 = vsub.f32 %v486, %v534
  %v574 = vsub.f32 %v487, %v534
  %v575 = vsub.f32 %v488, %v534
  %v576 = vsub.f32 %v489, %v534
  %v577 = vsub.f32 %v490, %v534
  %v578 = vsub.f32 %v491, %v534
  %v579 = vsub.f32 %v492, %v534
  %v580 = vsub.f32 %v493, %v534
  %v581 = vsub.f32 %v494, %v534
  %v582 = vsub.f32 %v495, %v534
  %v583 = vsub.f32 %v496, %v534
  %v584 = vsub.f32 %v497, %v534
  %v585 = vsub.f32 %v498, %v534
  %v586 = vsub.f32 %v499, %v534
  %v587 = vsub.f32 %v500, %v534
  %v588 = vsub.f32 %v501, %v534
  %v589 = vsub.f32 %v502, %v534
  %v590 = vsub.f32 %v503, %v534
  %v591 = vsub.f32 %v504, %v534
  %v592 = vsub.f32 %v505, %v534
  %v593 = vsub.f32 %v506, %v534
  %v594 = vsub.f32 %v507, %v534
  %v595 = vsub.f32 %v508, %v534
  %v596 = vsub.f32 %v509, %v534
  %v597 = vsub.f32 %v510, %v534
  %v598 = vsub.f32 %v511, %v534
  %v599 = vsub.f32 %v512, %v534
  %v601 = vperm.slane %v532, 0
  %v603 = vmul.f32 %v536, %v601
  %v604 = vmul.f32 %v537, %v601
  %v605 = vmul.f32 %v538, %v601
  %v606 = vmul.f32 %v539, %v601
  %v607 = vmul.f32 %v540, %v601
  %v608 = vmul.f32 %v541, %v601
  %v609 = vmul.f32 %v542, %v601
  %v610 = vmul.f32 %v543, %v601
  %v611 = vmul.f32 %v544, %v601
  %v612 = vmul.f32 %v545, %v601
  %v613 = vmul.f32 %v546, %v601
  %v614 = vmul.f32 %v547, %v601
  %v615 = vmul.f32 %v548, %v601
  %v616 = vmul.f32 %v549, %v601
  %v617 = vmul.f32 %v550, %v601
  %v618 = vmul.f32 %v551, %v601
  %v619 = vmul.f32 %v552, %v601
  %v620 = vmul.f32 %v553, %v601
  %v621 = vmul.f32 %v554, %v601
  %v622 = vmul.f32 %v555, %v601
  %v623 = vmul.f32 %v556, %v601
  %v624 = vmul.f32 %v557, %v601
  %v625 = vmul.f32 %v558, %v601
  %v626 = vmul.f32 %v559, %v601
  %v627 = vmul.f32 %v560, %v601
  %v628 = vmul.f32 %v561, %v601
  %v629 = vmul.f32 %v562, %v601
  %v630 = vmul.f32 %v563, %v601
  %v631 = vmul.f32 %v564, %v601
  %v632 = vmul.f32 %v565, %v601
  %v633 = vmul.f32 %v566, %v601
  %v634 = vmul.f32 %v567, %v601
  %v635 = vmul.f32 %v568, %v601
  %v636 = vmul.f32 %v569, %v601
  %v637 = vmul.f32 %v570, %v601
  %v638 = vmul.f32 %v571, %v601
  %v639 = vmul.f32 %v572, %v601
  %v640 = vmul.f32 %v573, %v601
  %v641 = vmul.f32 %v574, %v601
  %v642 = vmul.f32 %v575, %v601
  %v643 = vmul.f32 %v576, %v601
  %v644 = vmul.f32 %v577, %v601
  %v645 = vmul.f32 %v578, %v601
  %v646 = vmul.f32 %v579, %v601
  %v647 = vmul.f32 %v580, %v601
  %v648 = vmul.f32 %v581, %v601
  %v649 = vmul.f32 %v582, %v601
  %v650 = vmul.f32 %v583, %v601
  %v651 = vmul.f32 %v584, %v601
  %v652 = vmul.f32 %v585, %v601
  %v653 = vmul.f32 %v586, %v601
  %v654 = vmul.f32 %v587, %v601
  %v655 = vmul.f32 %v588, %v601
  %v656 = vmul.f32 %v589, %v601
  %v657 = vmul.f32 %v590, %v601
  %v658 = vmul.f32 %v591, %v601
  %v659 = vmul.f32 %v592, %v601
  %v660 = vmul.f32 %v593, %v601
  %v661 = vmul.f32 %v594, %v601
  %v662 = vmul.f32 %v595, %v601
  %v663 = vmul.f32 %v596, %v601
  %v664 = vmul.f32 %v597, %v601
  %v665 = vmul.f32 %v598, %v601
  %v666 = vmul.f32 %v599, %v601
  %v667 = vld [vmem:[%s9] sm:$0x1]
  %v669 = vperm.slane %v667, 0
  %v671 = vadd.f32 %v603, %v669
  %v672 = vadd.f32 %v604, %v669
  %v673 = vadd.f32 %v605, %v669
  %v674 = vadd.f32 %v606, %v669
  %v675 = vadd.f32 %v607, %v669
  %v676 = vadd.f32 %v608, %v669
  %v677 = vadd.f32 %v609, %v669
  %v678 = vadd.f32 %v610, %v669
  %v679 = vadd.f32 %v611, %v669
  %v680 = vadd.f32 %v612, %v669
  %v681 = vadd.f32 %v613, %v669
  %v682 = vadd.f32 %v614, %v669
  %v683 = vadd.f32 %v615, %v669
  %v684 = vadd.f32 %v616, %v669
  %v685 = vadd.f32 %v617, %v669
  %v686 = vadd.f32 %v618, %v669
  %v687 = vadd.f32 %v619, %v669
  %v688 = vadd.f32 %v620, %v669
  %v689 = vadd.f32 %v621, %v669
  %v690 = vadd.f32 %v622, %v669
  %v691 = vadd.f32 %v623, %v669
  %v692 = vadd.f32 %v624, %v669
  %v693 = vadd.f32 %v625, %v669
  %v694 = vadd.f32 %v626, %v669
  %v695 = vadd.f32 %v627, %v669
  %v696 = vadd.f32 %v628, %v669
  %v697 = vadd.f32 %v629, %v669
  %v698 = vadd.f32 %v630, %v669
  %v699 = vadd.f32 %v631, %v669
  %v700 = vadd.f32 %v632, %v669
  %v701 = vadd.f32 %v633, %v669
  %v702 = vadd.f32 %v634, %v669
  %v703 = vadd.f32 %v635, %v669
  %v704 = vadd.f32 %v636, %v669
  %v705 = vadd.f32 %v637, %v669
  %v706 = vadd.f32 %v638, %v669
  %v707 = vadd.f32 %v639, %v669
  %v708 = vadd.f32 %v640, %v669
  %v709 = vadd.f32 %v641, %v669
  %v710 = vadd.f32 %v642, %v669
  %v711 = vadd.f32 %v643, %v669
  %v712 = vadd.f32 %v644, %v669
  %v713 = vadd.f32 %v645, %v669
  %v714 = vadd.f32 %v646, %v669
  %v715 = vadd.f32 %v647, %v669
  %v716 = vadd.f32 %v648, %v669
  %v717 = vadd.f32 %v649, %v669
  %v718 = vadd.f32 %v650, %v669
  %v719 = vadd.f32 %v651, %v669
  %v720 = vadd.f32 %v652, %v669
  %v721 = vadd.f32 %v653, %v669
  %v722 = vadd.f32 %v654, %v669
  %v723 = vadd.f32 %v655, %v669
  %v724 = vadd.f32 %v656, %v669
  %v725 = vadd.f32 %v657, %v669
  %v726 = vadd.f32 %v658, %v669
  %v727 = vadd.f32 %v659, %v669
  %v728 = vadd.f32 %v660, %v669
  %v729 = vadd.f32 %v661, %v669
  %v730 = vadd.f32 %v662, %v669
  %v731 = vadd.f32 %v663, %v669
  %v732 = vadd.f32 %v664, %v669
  %v733 = vadd.f32 %v665, %v669
  %v734 = vadd.f32 %v666, %v669
  %v735 = vadd.f32 %v321, %v671
  %v736 = vadd.f32 %v322, %v672
  %v737 = vadd.f32 %v323, %v673
  %v738 = vadd.f32 %v324, %v674
  %v739 = vadd.f32 %v325, %v675
  %v740 = vadd.f32 %v326, %v676
  %v741 = vadd.f32 %v327, %v677
  %v742 = vadd.f32 %v328, %v678
  %v743 = vadd.f32 %v329, %v679
  %v744 = vadd.f32 %v330, %v680
  %v745 = vadd.f32 %v331, %v681
  %v746 = vadd.f32 %v332, %v682
  %v747 = vadd.f32 %v333, %v683
  %v748 = vadd.f32 %v334, %v684
  %v749 = vadd.f32 %v335, %v685
  %v750 = vadd.f32 %v336, %v686
  %v751 = vadd.f32 %v337, %v687
  %v752 = vadd.f32 %v338, %v688
  %v753 = vadd.f32 %v339, %v689
  %v754 = vadd.f32 %v340, %v690
  %v755 = vadd.f32 %v341, %v691
  %v756 = vadd.f32 %v342, %v692
  %v757 = vadd.f32 %v343, %v693
  %v758 = vadd.f32 %v344, %v694
  %v759 = vadd.f32 %v345, %v695
  %v760 = vadd.f32 %v346, %v696
  %v761 = vadd.f32 %v347, %v697
  %v762 = vadd.f32 %v348, %v698
  %v763 = vadd.f32 %v349, %v699
  %v764 = vadd.f32 %v350, %v700
  %v765 = vadd.f32 %v351, %v701
  %v766 = vadd.f32 %v352, %v702
  %v767 = vadd.f32 %v353, %v703
  %v768 = vadd.f32 %v354, %v704
  %v769 = vadd.f32 %v355, %v705
  %v770 = vadd.f32 %v356, %v706
  %v771 = vadd.f32 %v357, %v707
  %v772 = vadd.f32 %v358, %v708
  %v773 = vadd.f32 %v359, %v709
  %v774 = vadd.f32 %v360, %v710
  %v775 = vadd.f32 %v361, %v711
  %v776 = vadd.f32 %v362, %v712
  %v777 = vadd.f32 %v363, %v713
  %v778 = vadd.f32 %v364, %v714
  %v779 = vadd.f32 %v365, %v715
  %v780 = vadd.f32 %v366, %v716
  %v781 = vadd.f32 %v367, %v717
  %v782 = vadd.f32 %v368, %v718
  %v783 = vadd.f32 %v369, %v719
  %v784 = vadd.f32 %v370, %v720
  %v785 = vadd.f32 %v371, %v721
  %v786 = vadd.f32 %v372, %v722
  %v787 = vadd.f32 %v373, %v723
  %v788 = vadd.f32 %v374, %v724
  %v789 = vadd.f32 %v375, %v725
  %v790 = vadd.f32 %v376, %v726
  %v791 = vadd.f32 %v377, %v727
  %v792 = vadd.f32 %v378, %v728
  %v793 = vadd.f32 %v379, %v729
  %v794 = vadd.f32 %v380, %v730
  %v795 = vadd.f32 %v381, %v731
  %v796 = vadd.f32 %v382, %v732
  %v797 = vadd.f32 %v383, %v733
  %v798 = vadd.f32 %v384, %v734
  %v799 = vmax.f32 %v735, 0.0
  %v800 = vmax.f32 %v736, 0.0
  %v801 = vmax.f32 %v737, 0.0
  %v802 = vmax.f32 %v738, 0.0
  %v803 = vmax.f32 %v739, 0.0
  %v804 = vmax.f32 %v740, 0.0
  %v805 = vmax.f32 %v741, 0.0
  %v806 = vmax.f32 %v742, 0.0
  %v807 = vmax.f32 %v743, 0.0
  %v808 = vmax.f32 %v744, 0.0
  %v809 = vmax.f32 %v745, 0.0
  %v810 = vmax.f32 %v746, 0.0
  %v811 = vmax.f32 %v747, 0.0
  %v812 = vmax.f32 %v748, 0.0
  %v813 = vmax.f32 %v749, 0.0
  %v814 = vmax.f32 %v750, 0.0
  %v815 = vmax.f32 %v751, 0.0
  %v816 = vmax.f32 %v752, 0.0
  %v817 = vmax.f32 %v753, 0.0
  %v818 = vmax.f32 %v754, 0.0
  %v819 = vmax.f32 %v755, 0.0
  %v820 = vmax.f32 %v756, 0.0
  %v821 = vmax.f32 %v757, 0.0
  %v822 = vmax.f32 %v758, 0.0
  %v823 = vmax.f32 %v759, 0.0
  %v824 = vmax.f32 %v760, 0.0
  %v825 = vmax.f32 %v761, 0.0
  %v826 = vmax.f32 %v762, 0.0
  %v827 = vmax.f32 %v763, 0.0
  %v828 = vmax.f32 %v764, 0.0
  %v829 = vmax.f32 %v765, 0.0
  %v830 = vmax.f32 %v766, 0.0
  %v831 = vmax.f32 %v767, 0.0
  %v832 = vmax.f32 %v768, 0.0
  %v833 = vmax.f32 %v769, 0.0
  %v834 = vmax.f32 %v770, 0.0
  %v835 = vmax.f32 %v771, 0.0
  %v836 = vmax.f32 %v772, 0.0
  %v837 = vmax.f32 %v773, 0.0
  %v838 = vmax.f32 %v774, 0.0
  %v839 = vmax.f32 %v775, 0.0
  %v840 = vmax.f32 %v776, 0.0
  %v841 = vmax.f32 %v777, 0.0
  %v842 = vmax.f32 %v778, 0.0
  %v843 = vmax.f32 %v779, 0.0
  %v844 = vmax.f32 %v780, 0.0
  %v845 = vmax.f32 %v781, 0.0
  %v846 = vmax.f32 %v782, 0.0
  %v847 = vmax.f32 %v783, 0.0
  %v848 = vmax.f32 %v784, 0.0
  %v849 = vmax.f32 %v785, 0.0
  %v850 = vmax.f32 %v786, 0.0
  %v851 = vmax.f32 %v787, 0.0
  %v852 = vmax.f32 %v788, 0.0
  %v853 = vmax.f32 %v789, 0.0
  %v854 = vmax.f32 %v790, 0.0
  %v855 = vmax.f32 %v791, 0.0
  %v856 = vmax.f32 %v792, 0.0
  %v857 = vmax.f32 %v793, 0.0
  %v858 = vmax.f32 %v794, 0.0
  %v859 = vmax.f32 %v795, 0.0
  %v860 = vmax.f32 %v796, 0.0
  %v861 = vmax.f32 %v797, 0.0
  %v862 = vmax.f32 %v798, 0.0
  %863 = vst [vmem:[%s10] sm:$0xff] %v799
  %864 = vst [vmem:[%s10 + $0x8] sm:$0xff] %v800
  %865 = vst [vmem:[%s10 + $0x10] sm:$0xff] %v801
  %866 = vst [vmem:[%s10 + $0x18] sm:$0xff] %v802
  %867 = vst [vmem:[%s10 + $0x20] sm:$0xff] %v803
  %868 = vst [vmem:[%s10 + $0x28] sm:$0xff] %v804
  %869 = vst [vmem:[%s10 + $0x30] sm:$0xff] %v805
  %870 = vst [vmem:[%s10 + $0x38] sm:$0xff] %v806
  %871 = vst [vmem:[%s10 + $0x40] sm:$0xff] %v807
  %872 = vst [vmem:[%s10 + $0x48] sm:$0xff] %v808
  %873 = vst [vmem:[%s10 + $0x50] sm:$0xff] %v809
  %874 = vst [vmem:[%s10 + $0x58] sm:$0xff] %v810
  %875 = vst [vmem:[%s10 + $0x60] sm:$0xff] %v811
  %876 = vst [vmem:[%s10 + $0x68] sm:$0xff] %v812
  %877 = vst [vmem:[%s10 + $0x70] sm:$0xff] %v813
  %878 = vst [vmem:[%s10 + $0x78] sm:$0xff] %v814
  %879 = vst [vmem:[%s10 + $0x80] sm:$0xff] %v815
  %880 = vst [vmem:[%s10 + $0x88] sm:$0xff] %v816
  %881 = vst [vmem:[%s10 + $0x90] sm:$0xff] %v817
  %882 = vst [vmem:[%s10 + $0x98] sm:$0xff] %v818
  %883 = vst [vmem:[%s10 + $0xa0] sm:$0xff] %v819
  %884 = vst [vmem:[%s10 + $0xa8] sm:$0xff] %v820
  %885 = vst [vmem:[%s10 + $0xb0] sm:$0xff] %v821
  %886 = vst [vmem:[%s10 + $0xb8] sm:$0xff] %v822
  %887 = vst [vmem:[%s10 + $0xc0] sm:$0xff] %v823
  %888 = vst [vmem:[%s10 + $0xc8] sm:$0xff] %v824
  %889 = vst [vmem:[%s10 + $0xd0] sm:$0xff] %v825
  %890 = vst [vmem:[%s10 + $0xd8] sm:$0xff] %v826
  %891 = vst [vmem:[%s10 + $0xe0] sm:$0xff] %v827
  %892 = vst [vmem:[%s10 + $0xe8] sm:$0xff] %v828
  %893 = vst [vmem:[%s10 + $0xf0] sm:$0xff] %v829
  %894 = vst [vmem:[%s10 + $0xf8] sm:$0xff] %v830
  %895 = vst [vmem:[%s10 + $0x100] sm:$0xff] %v831
  %896 = vst [vmem:[%s10 + $0x108] sm:$0xff] %v832
  %897 = vst [vmem:[%s10 + $0x110] sm:$0xff] %v833
  %898 = vst [vmem:[%s10 + $0x118] sm:$0xff] %v834
  %899 = vst [vmem:[%s10 + $0x120] sm:$0xff] %v835
  %900 = vst [vmem:[%s10 + $0x128] sm:$0xff] %v836
  %901 = vst [vmem:[%s10 + $0x130] sm:$0xff] %v837
  %902 = vst [vmem:[%s10 + $0x138] sm:$0xff] %v838
  %903 = vst [vmem:[%s10 + $0x140] sm:$0xff] %v839
  %904 = vst [vmem:[%s10 + $0x148] sm:$0xff] %v840
  %905 = vst [vmem:[%s10 + $0x150] sm:$0xff] %v841
  %906 = vst [vmem:[%s10 + $0x158] sm:$0xff] %v842
  %907 = vst [vmem:[%s10 + $0x160] sm:$0xff] %v843
  %908 = vst [vmem:[%s10 + $0x168] sm:$0xff] %v844
  %909 = vst [vmem:[%s10 + $0x170] sm:$0xff] %v845
  %910 = vst [vmem:[%s10 + $0x178] sm:$0xff] %v846
  %911 = vst [vmem:[%s10 + $0x180] sm:$0xff] %v847
  %912 = vst [vmem:[%s10 + $0x188] sm:$0xff] %v848
  %913 = vst [vmem:[%s10 + $0x190] sm:$0xff] %v849
  %914 = vst [vmem:[%s10 + $0x198] sm:$0xff] %v850
  %915 = vst [vmem:[%s10 + $0x1a0] sm:$0xff] %v851
  %916 = vst [vmem:[%s10 + $0x1a8] sm:$0xff] %v852
  %917 = vst [vmem:[%s10 + $0x1b0] sm:$0xff] %v853
  %918 = vst [vmem:[%s10 + $0x1b8] sm:$0xff] %v854
  %919 = vst [vmem:[%s10 + $0x1c0] sm:$0xff] %v855
  %920 = vst [vmem:[%s10 + $0x1c8] sm:$0xff] %v856
  %921 = vst [vmem:[%s10 + $0x1d0] sm:$0xff] %v857
  %922 = vst [vmem:[%s10 + $0x1d8] sm:$0xff] %v858
  %923 = vst [vmem:[%s10 + $0x1e0] sm:$0xff] %v859
  %924 = vst [vmem:[%s10 + $0x1e8] sm:$0xff] %v860
  %925 = vst [vmem:[%s10 + $0x1f0] sm:$0xff] %v861
  %926 = vst [vmem:[%s10 + $0x1f8] sm:$0xff] %v862
  // Predicated region
  $region42: #{bottleneck_forward.9} parent=0 // pred_check
    _
  $region43: #{bottleneck_forward.9} parent=0 // pred_check_branch
    %928 = sbr.rel (0) target = $region45
  $region44: #{bottleneck_forward.9} parent=0 // pred_region
    _
  $region45: #{bottleneck_forward.9} parent=0 // pred_fallthru
    _
  // Predicated region
  $region46: #{bottleneck_forward.9} parent=0 // pred_check
    _
  $region47: #{bottleneck_forward.9} parent=0 // pred_check_branch
    %930 = sbr.rel (0) target = $region49
  $region48: #{bottleneck_forward.9} parent=0 // pred_region
    _
  $region49: #{bottleneck_forward.9} parent=0 // pred_fallthru
    _

// kernel: bottleneck_forward.7
$region0: #{bottleneck_forward.7}
  #allocation0 [shape = 'u32[]', space=smem, size = 0x4, offset = 0x4, fixed_abs, tag = 'smem constant byte address 0x4 - core index']
  #allocation1 [shape = 'u32[72,128]{1,0:T(1,128)}', space=vmem, size = 0x9000, scoped, tag = 'internal scratch']
  %s0 = inlined_call_operand.vmem [shape: bf16[512,128], index: 0, kind: input, shape index: {}]
  %s1 = inlined_call_operand.vmem [shape: f32[1,128], index: 1, kind: input, shape index: {}]
  %s2 = inlined_call_operand.vmem [shape: f32[1,128], index: 2, kind: input, shape index: {}]
  %s3 = inlined_call_operand.vmem [shape: f32[1,128], index: 3, kind: input, shape index: {}]
  %s4 = inlined_call_operand.vmem [shape: f32[1,128], index: 4, kind: input, shape index: {}]
  %s5 = inlined_call_operand.vmem [shape: bf16[128,128], index: 5, kind: input, shape index: {}]
  %s6 = inlined_call_operand.vmem [shape: bf16[512,128], index: 6, kind: output, shape index: {0}]
  %s7 = inlined_call_operand.vmem [shape: f32[1,8,128], index: 7, kind: output, shape index: {1}]
  %8 = xla_tuple %s6, %s7
  %s9 = sld [smem:[#allocation0]]
  $region42: #{bottleneck_forward.7} parent=0
    _
  %s11 = ssub.s32 1, %s9
  %s12 = scalar_select 0, %s11, %s9
  // Predicated region
  $region2: #{bottleneck_forward.7} parent=0 // pred_check
    _
  $region3: #{bottleneck_forward.7} parent=0 // pred_check_branch
    %14 = sbr.rel (0) target = $region5
  $region4: #{bottleneck_forward.7} parent=0 // pred_region
    _
  $region5: #{bottleneck_forward.7} parent=0 // pred_fallthru
    _
  // Predicated region
  $region6: #{bottleneck_forward.7} parent=0 // pred_check
    _
  $region7: #{bottleneck_forward.7} parent=0 // pred_check_branch
    %16 = sbr.rel (0) target = $region9
  $region8: #{bottleneck_forward.7} parent=0 // pred_region
    _
  $region9: #{bottleneck_forward.7} parent=0 // pred_fallthru
    _
  // Predicated region
  $region10: #{bottleneck_forward.7} parent=0 // pred_check
    _
  $region11: #{bottleneck_forward.7} parent=0 // pred_check_branch
    %18 = sbr.rel (0) target = $region13
  $region12: #{bottleneck_forward.7} parent=0 // pred_region
    _
  $region13: #{bottleneck_forward.7} parent=0 // pred_fallthru
    _
  // Predicated region
  $region14: #{bottleneck_forward.7} parent=0 // pred_check
    _
  $region15: #{bottleneck_forward.7} parent=0 // pred_check_branch
    %20 = sbr.rel (0) target = $region17
  $region16: #{bottleneck_forward.7} parent=0 // pred_region
    _
  $region17: #{bottleneck_forward.7} parent=0 // pred_fallthru
    _
  // Predicated region
  $region18: #{bottleneck_forward.7} parent=0 // pred_check
    _
  $region19: #{bottleneck_forward.7} parent=0 // pred_check_branch
    %22 = sbr.rel (0) target = $region21
  $region20: #{bottleneck_forward.7} parent=0 // pred_region
    _
  $region21: #{bottleneck_forward.7} parent=0 // pred_fallthru
    _
  // Predicated region
  $region22: #{bottleneck_forward.7} parent=0 // pred_check
    _
  $region23: #{bottleneck_forward.7} parent=0 // pred_check_branch
    %24 = sbr.rel (0) target = $region25
  $region24: #{bottleneck_forward.7} parent=0 // pred_region
    _
  $region25: #{bottleneck_forward.7} parent=0 // pred_fallthru
    _
  %v25 = vld [vmem:[%s0] sm:$0xf]
  %v26 = vld [vmem:[%s0 + $0x4] sm:$0xf]
  %v27 = vld [vmem:[%s0 + $0x8] sm:$0xf]
  %v28 = vld [vmem:[%s0 + $0xc] sm:$0xf]
  %v29 = vld [vmem:[%s0 + $0x10] sm:$0xf]
  %v30 = vld [vmem:[%s0 + $0x14] sm:$0xf]
  %v31 = vld [vmem:[%s0 + $0x18] sm:$0xf]
  %v32 = vld [vmem:[%s0 + $0x1c] sm:$0xf]
  %v33 = vld [vmem:[%s0 + $0x20] sm:$0xf]
  %v34 = vld [vmem:[%s0 + $0x24] sm:$0xf]
  %v35 = vld [vmem:[%s0 + $0x28] sm:$0xf]
  %v36 = vld [vmem:[%s0 + $0x2c] sm:$0xf]
  %v37 = vld [vmem:[%s0 + $0x30] sm:$0xf]
  %v38 = vld [vmem:[%s0 + $0x34] sm:$0xf]
  %v39 = vld [vmem:[%s0 + $0x38] sm:$0xf]
  %v40 = vld [vmem:[%s0 + $0x3c] sm:$0xf]
  %v41 = vld [vmem:[%s0 + $0x40] sm:$0xf]
  %v42 = vld [vmem:[%s0 + $0x44] sm:$0xf]
  %v43 = vld [vmem:[%s0 + $0x48] sm:$0xf]
  %v44 = vld [vmem:[%s0 + $0x4c] sm:$0xf]
  %v45 = vld [vmem:[%s0 + $0x50] sm:$0xf]
  %v46 = vld [vmem:[%s0 + $0x54] sm:$0xf]
  %v47 = vld [vmem:[%s0 + $0x58] sm:$0xf]
  %v48 = vld [vmem:[%s0 + $0x5c] sm:$0xf]
  %v49 = vld [vmem:[%s0 + $0x60] sm:$0xf]
  %v50 = vld [vmem:[%s0 + $0x64] sm:$0xf]
  %v51 = vld [vmem:[%s0 + $0x68] sm:$0xf]
  %v52 = vld [vmem:[%s0 + $0x6c] sm:$0xf]
  %v53 = vld [vmem:[%s0 + $0x70] sm:$0xf]
  %v54 = vld [vmem:[%s0 + $0x74] sm:$0xf]
  %v55 = vld [vmem:[%s0 + $0x78] sm:$0xf]
  %v56 = vld [vmem:[%s0 + $0x7c] sm:$0xf]
  %v57 = vld [vmem:[%s0 + $0x80] sm:$0xf]
  %v58 = vld [vmem:[%s0 + $0x84] sm:$0xf]
  %v59 = vld [vmem:[%s0 + $0x88] sm:$0xf]
  %v60 = vld [vmem:[%s0 + $0x8c] sm:$0xf]
  %v61 = vld [vmem:[%s0 + $0x90] sm:$0xf]
  %v62 = vld [vmem:[%s0 + $0x94] sm:$0xf]
  %v63 = vld [vmem:[%s0 + $0x98] sm:$0xf]
  %v64 = vld [vmem:[%s0 + $0x9c] sm:$0xf]
  %v65 = vld [vmem:[%s0 + $0xa0] sm:$0xf]
  %v66 = vld [vmem:[%s0 + $0xa4] sm:$0xf]
  %v67 = vld [vmem:[%s0 + $0xa8] sm:$0xf]
  %v68 = vld [vmem:[%s0 + $0xac] sm:$0xf]
  %v69 = vld [vmem:[%s0 + $0xb0] sm:$0xf]
  %v70 = vld [vmem:[%s0 + $0xb4] sm:$0xf]
  %v71 = vld [vmem:[%s0 + $0xb8] sm:$0xf]
  %v72 = vld [vmem:[%s0 + $0xbc] sm:$0xf]
  %v73 = vld [vmem:[%s0 + $0xc0] sm:$0xf]
  %v74 = vld [vmem:[%s0 + $0xc4] sm:$0xf]
  %v75 = vld [vmem:[%s0 + $0xc8] sm:$0xf]
  %v76 = vld [vmem:[%s0 + $0xcc] sm:$0xf]
  %v77 = vld [vmem:[%s0 + $0xd0] sm:$0xf]
  %v78 = vld [vmem:[%s0 + $0xd4] sm:$0xf]
  %v79 = vld [vmem:[%s0 + $0xd8] sm:$0xf]
  %v80 = vld [vmem:[%s0 + $0xdc] sm:$0xf]
  %v81 = vld [vmem:[%s0 + $0xe0] sm:$0xf]
  %v82 = vld [vmem:[%s0 + $0xe4] sm:$0xf]
  %v83 = vld [vmem:[%s0 + $0xe8] sm:$0xf]
  %v84 = vld [vmem:[%s0 + $0xec] sm:$0xf]
  %v85 = vld [vmem:[%s0 + $0xf0] sm:$0xf]
  %v86 = vld [vmem:[%s0 + $0xf4] sm:$0xf]
  %v87 = vld [vmem:[%s0 + $0xf8] sm:$0xf]
  %v88 = vld [vmem:[%s0 + $0xfc] sm:$0xf]
  %v89 = vunpack.c.l.bf16 %v25
  %v90 = vunpack.c.l.bf16 %v26
  %v91 = vunpack.c.l.bf16 %v27
  %v92 = vunpack.c.l.bf16 %v28
  %v93 = vunpack.c.l.bf16 %v29
  %v94 = vunpack.c.l.bf16 %v30
  %v95 = vunpack.c.l.bf16 %v31
  %v96 = vunpack.c.l.bf16 %v32
  %v97 = vunpack.c.l.bf16 %v33
  %v98 = vunpack.c.l.bf16 %v34
  %v99 = vunpack.c.l.bf16 %v35
  %v100 = vunpack.c.l.bf16 %v36
  %v101 = vunpack.c.l.bf16 %v37
  %v102 = vunpack.c.l.bf16 %v38
  %v103 = vunpack.c.l.bf16 %v39
  %v104 = vunpack.c.l.bf16 %v40
  %v105 = vunpack.c.l.bf16 %v41
  %v106 = vunpack.c.l.bf16 %v42
  %v107 = vunpack.c.l.bf16 %v43
  %v108 = vunpack.c.l.bf16 %v44
  %v109 = vunpack.c.l.bf16 %v45
  %v110 = vunpack.c.l.bf16 %v46
  %v111 = vunpack.c.l.bf16 %v47
  %v112 = vunpack.c.l.bf16 %v48
  %v113 = vunpack.c.l.bf16 %v49
  %v114 = vunpack.c.l.bf16 %v50
  %v115 = vunpack.c.l.bf16 %v51
  %v116 = vunpack.c.l.bf16 %v52
  %v117 = vunpack.c.l.bf16 %v53
  %v118 = vunpack.c.l.bf16 %v54
  %v119 = vunpack.c.l.bf16 %v55
  %v120 = vunpack.c.l.bf16 %v56
  %v121 = vunpack.c.l.bf16 %v57
  %v122 = vunpack.c.l.bf16 %v58
  %v123 = vunpack.c.l.bf16 %v59
  %v124 = vunpack.c.l.bf16 %v60
  %v125 = vunpack.c.l.bf16 %v61
  %v126 = vunpack.c.l.bf16 %v62
  %v127 = vunpack.c.l.bf16 %v63
  %v128 = vunpack.c.l.bf16 %v64
  %v129 = vunpack.c.l.bf16 %v65
  %v130 = vunpack.c.l.bf16 %v66
  %v131 = vunpack.c.l.bf16 %v67
  %v132 = vunpack.c.l.bf16 %v68
  %v133 = vunpack.c.l.bf16 %v69
  %v134 = vunpack.c.l.bf16 %v70
  %v135 = vunpack.c.l.bf16 %v71
  %v136 = vunpack.c.l.bf16 %v72
  %v137 = vunpack.c.l.bf16 %v73
  %v138 = vunpack.c.l.bf16 %v74
  %v139 = vunpack.c.l.bf16 %v75
  %v140 = vunpack.c.l.bf16 %v76
  %v141 = vunpack.c.l.bf16 %v77
  %v142 = vunpack.c.l.bf16 %v78
  %v143 = vunpack.c.l.bf16 %v79
  %v144 = vunpack.c.l.bf16 %v80
  %v145 = vunpack.c.l.bf16 %v81
  %v146 = vunpack.c.l.bf16 %v82
  %v147 = vunpack.c.l.bf16 %v83
  %v148 = vunpack.c.l.bf16 %v84
  %v149 = vunpack.c.l.bf16 %v85
  %v150 = vunpack.c.l.bf16 %v86
  %v151 = vunpack.c.l.bf16 %v87
  %v152 = vunpack.c.l.bf16 %v88
  %v153 = vld [vmem:[%s1] sm:$0x1]
  %v154 = vmul.f32 %v153, 0.001953125
  %v155 = vld [vmem:[%s2] sm:$0x1]
  %v156 = vmul.f32 %v155, 0.001953125
  %v157 = vmul.f32 %v154, %v154
  %v158 = vsub.f32 %v156, %v157
  %v159 = vmax.f32 %v158, 0.0
  %v160 = vadd.f32 %v159, 1e-05
  %v161 = vrsqrt.pop %v160
  %v162 = vmul.f32 %v161, %v160
  %v163 = vmul.f32 %v162, %v161
  %v164 = vmul.f32 0.5, %v163
  %v165 = vsub.f32 1.5, %v164
  %v166 = vmul.f32 %v161, %v165
  %vm167 = vweird.f32 %v160
  %vm168 = vweird.f32 %v161
  %vm169 = vmor %vm167, %vm168
  %v170 = vsel %vm169, %v161, %v166
  %v171 = vld [vmem:[%s3] sm:$0x1]
  %v172 = vmul.f32 %v170, %v171
  %v174 = vperm.slane %v154, 0
  %v176 = vsub.f32 %v89, %v174
  %v177 = vsub.f32 %v90, %v174
  %v178 = vsub.f32 %v91, %v174
  %v179 = vsub.f32 %v92, %v174
  %v180 = vsub.f32 %v93, %v174
  %v181 = vsub.f32 %v94, %v174
  %v182 = vsub.f32 %v95, %v174
  %v183 = vsub.f32 %v96, %v174
  %v184 = vsub.f32 %v97, %v174
  %v185 = vsub.f32 %v98, %v174
  %v186 = vsub.f32 %v99, %v174
  %v187 = vsub.f32 %v100, %v174
  %v188 = vsub.f32 %v101, %v174
  %v189 = vsub.f32 %v102, %v174
  %v190 = vsub.f32 %v103, %v174
  %v191 = vsub.f32 %v104, %v174
  %v192 = vsub.f32 %v105, %v174
  %v193 = vsub.f32 %v106, %v174
  %v194 = vsub.f32 %v107, %v174
  %v195 = vsub.f32 %v108, %v174
  %v196 = vsub.f32 %v109, %v174
  %v197 = vsub.f32 %v110, %v174
  %v198 = vsub.f32 %v111, %v174
  %v199 = vsub.f32 %v112, %v174
  %v200 = vsub.f32 %v113, %v174
  %v201 = vsub.f32 %v114, %v174
  %v202 = vsub.f32 %v115, %v174
  %v203 = vsub.f32 %v116, %v174
  %v204 = vsub.f32 %v117, %v174
  %v205 = vsub.f32 %v118, %v174
  %v206 = vsub.f32 %v119, %v174
  %v207 = vsub.f32 %v120, %v174
  %v208 = vsub.f32 %v121, %v174
  %v209 = vsub.f32 %v122, %v174
  %v210 = vsub.f32 %v123, %v174
  %v211 = vsub.f32 %v124, %v174
  %v212 = vsub.f32 %v125, %v174
  %v213 = vsub.f32 %v126, %v174
  %v214 = vsub.f32 %v127, %v174
  %v215 = vsub.f32 %v128, %v174
  %v216 = vsub.f32 %v129, %v174
  %v217 = vsub.f32 %v130, %v174
  %v218 = vsub.f32 %v131, %v174
  %v219 = vsub.f32 %v132, %v174
  %v220 = vsub.f32 %v133, %v174
  %v221 = vsub.f32 %v134, %v174
  %v222 = vsub.f32 %v135, %v174
  %v223 = vsub.f32 %v136, %v174
  %v224 = vsub.f32 %v137, %v174
  %v225 = vsub.f32 %v138, %v174
  %v226 = vsub.f32 %v139, %v174
  %v227 = vsub.f32 %v140, %v174
  %v228 = vsub.f32 %v141, %v174
  %v229 = vsub.f32 %v142, %v174
  %v230 = vsub.f32 %v143, %v174
  %v231 = vsub.f32 %v144, %v174
  %v232 = vsub.f32 %v145, %v174
  %v233 = vsub.f32 %v146, %v174
  %v234 = vsub.f32 %v147, %v174
  %v235 = vsub.f32 %v148, %v174
  %v236 = vsub.f32 %v149, %v174
  %v237 = vsub.f32 %v150, %v174
  %v238 = vsub.f32 %v151, %v174
  %v239 = vsub.f32 %v152, %v174
  %v241 = vperm.slane %v172, 0
  %v243 = vmul.f32 %v176, %v241
  %v244 = vmul.f32 %v177, %v241
  %v245 = vmul.f32 %v178, %v241
  %v246 = vmul.f32 %v179, %v241
  %v247 = vmul.f32 %v180, %v241
  %v248 = vmul.f32 %v181, %v241
  %v249 = vmul.f32 %v182, %v241
  %v250 = vmul.f32 %v183, %v241
  %v251 = vmul.f32 %v184, %v241
  %v252 = vmul.f32 %v185, %v241
  %v253 = vmul.f32 %v186, %v241
  %v254 = vmul.f32 %v187, %v241
  %v255 = vmul.f32 %v188, %v241
  %v256 = vmul.f32 %v189, %v241
  %v257 = vmul.f32 %v190, %v241
  %v258 = vmul.f32 %v191, %v241
  %v259 = vmul.f32 %v192, %v241
  %v260 = vmul.f32 %v193, %v241
  %v261 = vmul.f32 %v194, %v241
  %v262 = vmul.f32 %v195, %v241
  %v263 = vmul.f32 %v196, %v241
  %v264 = vmul.f32 %v197, %v241
  %v265 = vmul.f32 %v198, %v241
  %v266 = vmul.f32 %v199, %v241
  %v267 = vmul.f32 %v200, %v241
  %v268 = vmul.f32 %v201, %v241
  %v269 = vmul.f32 %v202, %v241
  %v270 = vmul.f32 %v203, %v241
  %v271 = vmul.f32 %v204, %v241
  %v272 = vmul.f32 %v205, %v241
  %v273 = vmul.f32 %v206, %v241
  %v274 = vmul.f32 %v207, %v241
  %v275 = vmul.f32 %v208, %v241
  %v276 = vmul.f32 %v209, %v241
  %v277 = vmul.f32 %v210, %v241
  %v278 = vmul.f32 %v211, %v241
  %v279 = vmul.f32 %v212, %v241
  %v280 = vmul.f32 %v213, %v241
  %v281 = vmul.f32 %v214, %v241
  %v282 = vmul.f32 %v215, %v241
  %v283 = vmul.f32 %v216, %v241
  %v284 = vmul.f32 %v217, %v241
  %v285 = vmul.f32 %v218, %v241
  %v286 = vmul.f32 %v219, %v241
  %v287 = vmul.f32 %v220, %v241
  %v288 = vmul.f32 %v221, %v241
  %v289 = vmul.f32 %v222, %v241
  %v290 = vmul.f32 %v223, %v241
  %v291 = vmul.f32 %v224, %v241
  %v292 = vmul.f32 %v225, %v241
  %v293 = vmul.f32 %v226, %v241
  %v294 = vmul.f32 %v227, %v241
  %v295 = vmul.f32 %v228, %v241
  %v296 = vmul.f32 %v229, %v241
  %v297 = vmul.f32 %v230, %v241
  %v298 = vmul.f32 %v231, %v241
  %v299 = vmul.f32 %v232, %v241
  %v300 = vmul.f32 %v233, %v241
  %v301 = vmul.f32 %v234, %v241
  %v302 = vmul.f32 %v235, %v241
  %v303 = vmul.f32 %v236, %v241
  %v304 = vmul.f32 %v237, %v241
  %v305 = vmul.f32 %v238, %v241
  %v306 = vmul.f32 %v239, %v241
  %v307 = vld [vmem:[%s4] sm:$0x1]
  %v309 = vperm.slane %v307, 0
  %v311 = vadd.f32 %v243, %v309
  %v312 = vadd.f32 %v244, %v309
  %v313 = vadd.f32 %v245, %v309
  %v314 = vadd.f32 %v246, %v309
  %v315 = vadd.f32 %v247, %v309
  %v316 = vadd.f32 %v248, %v309
  %v317 = vadd.f32 %v249, %v309
  %v318 = vadd.f32 %v250, %v309
  %v319 = vadd.f32 %v251, %v309
  %v320 = vadd.f32 %v252, %v309
  %v321 = vadd.f32 %v253, %v309
  %v322 = vadd.f32 %v254, %v309
  %v323 = vadd.f32 %v255, %v309
  %v324 = vadd.f32 %v256, %v309
  %v325 = vadd.f32 %v257, %v309
  %v326 = vadd.f32 %v258, %v309
  %v327 = vadd.f32 %v259, %v309
  %v328 = vadd.f32 %v260, %v309
  %v329 = vadd.f32 %v261, %v309
  %v330 = vadd.f32 %v262, %v309
  %v331 = vadd.f32 %v263, %v309
  %v332 = vadd.f32 %v264, %v309
  %v333 = vadd.f32 %v265, %v309
  %v334 = vadd.f32 %v266, %v309
  %v335 = vadd.f32 %v267, %v309
  %v336 = vadd.f32 %v268, %v309
  %v337 = vadd.f32 %v269, %v309
  %v338 = vadd.f32 %v270, %v309
  %v339 = vadd.f32 %v271, %v309
  %v340 = vadd.f32 %v272, %v309
  %v341 = vadd.f32 %v273, %v309
  %v342 = vadd.f32 %v274, %v309
  %v343 = vadd.f32 %v275, %v309
  %v344 = vadd.f32 %v276, %v309
  %v345 = vadd.f32 %v277, %v309
  %v346 = vadd.f32 %v278, %v309
  %v347 = vadd.f32 %v279, %v309
  %v348 = vadd.f32 %v280, %v309
  %v349 = vadd.f32 %v281, %v309
  %v350 = vadd.f32 %v282, %v309
  %v351 = vadd.f32 %v283, %v309
  %v352 = vadd.f32 %v284, %v309
  %v353 = vadd.f32 %v285, %v309
  %v354 = vadd.f32 %v286, %v309
  %v355 = vadd.f32 %v287, %v309
  %v356 = vadd.f32 %v288, %v309
  %v357 = vadd.f32 %v289, %v309
  %v358 = vadd.f32 %v290, %v309
  %v359 = vadd.f32 %v291, %v309
  %v360 = vadd.f32 %v292, %v309
  %v361 = vadd.f32 %v293, %v309
  %v362 = vadd.f32 %v294, %v309
  %v363 = vadd.f32 %v295, %v309
  %v364 = vadd.f32 %v296, %v309
  %v365 = vadd.f32 %v297, %v309
  %v366 = vadd.f32 %v298, %v309
  %v367 = vadd.f32 %v299, %v309
  %v368 = vadd.f32 %v300, %v309
  %v369 = vadd.f32 %v301, %v309
  %v370 = vadd.f32 %v302, %v309
  %v371 = vadd.f32 %v303, %v309
  %v372 = vadd.f32 %v304, %v309
  %v373 = vadd.f32 %v305, %v309
  %v374 = vadd.f32 %v306, %v309
  %v375 = vmax.f32 %v311, 0.0
  %v376 = vmax.f32 %v312, 0.0
  %v377 = vmax.f32 %v313, 0.0
  %v378 = vmax.f32 %v314, 0.0
  %v379 = vmax.f32 %v315, 0.0
  %v380 = vmax.f32 %v316, 0.0
  %v381 = vmax.f32 %v317, 0.0
  %v382 = vmax.f32 %v318, 0.0
  %v383 = vmax.f32 %v319, 0.0
  %v384 = vmax.f32 %v320, 0.0
  %v385 = vmax.f32 %v321, 0.0
  %v386 = vmax.f32 %v322, 0.0
  %v387 = vmax.f32 %v323, 0.0
  %v388 = vmax.f32 %v324, 0.0
  %v389 = vmax.f32 %v325, 0.0
  %v390 = vmax.f32 %v326, 0.0
  %v391 = vmax.f32 %v327, 0.0
  %v392 = vmax.f32 %v328, 0.0
  %v393 = vmax.f32 %v329, 0.0
  %v394 = vmax.f32 %v330, 0.0
  %v395 = vmax.f32 %v331, 0.0
  %v396 = vmax.f32 %v332, 0.0
  %v397 = vmax.f32 %v333, 0.0
  %v398 = vmax.f32 %v334, 0.0
  %v399 = vmax.f32 %v335, 0.0
  %v400 = vmax.f32 %v336, 0.0
  %v401 = vmax.f32 %v337, 0.0
  %v402 = vmax.f32 %v338, 0.0
  %v403 = vmax.f32 %v339, 0.0
  %v404 = vmax.f32 %v340, 0.0
  %v405 = vmax.f32 %v341, 0.0
  %v406 = vmax.f32 %v342, 0.0
  %v407 = vmax.f32 %v343, 0.0
  %v408 = vmax.f32 %v344, 0.0
  %v409 = vmax.f32 %v345, 0.0
  %v410 = vmax.f32 %v346, 0.0
  %v411 = vmax.f32 %v347, 0.0
  %v412 = vmax.f32 %v348, 0.0
  %v413 = vmax.f32 %v349, 0.0
  %v414 = vmax.f32 %v350, 0.0
  %v415 = vmax.f32 %v351, 0.0
  %v416 = vmax.f32 %v352, 0.0
  %v417 = vmax.f32 %v353, 0.0
  %v418 = vmax.f32 %v354, 0.0
  %v419 = vmax.f32 %v355, 0.0
  %v420 = vmax.f32 %v356, 0.0
  %v421 = vmax.f32 %v357, 0.0
  %v422 = vmax.f32 %v358, 0.0
  %v423 = vmax.f32 %v359, 0.0
  %v424 = vmax.f32 %v360, 0.0
  %v425 = vmax.f32 %v361, 0.0
  %v426 = vmax.f32 %v362, 0.0
  %v427 = vmax.f32 %v363, 0.0
  %v428 = vmax.f32 %v364, 0.0
  %v429 = vmax.f32 %v365, 0.0
  %v430 = vmax.f32 %v366, 0.0
  %v431 = vmax.f32 %v367, 0.0
  %v432 = vmax.f32 %v368, 0.0
  %v433 = vmax.f32 %v369, 0.0
  %v434 = vmax.f32 %v370, 0.0
  %v435 = vmax.f32 %v371, 0.0
  %v436 = vmax.f32 %v372, 0.0
  %v437 = vmax.f32 %v373, 0.0
  %v438 = vmax.f32 %v374, 0.0
  %v439 = vpack.c.bf16 %v376, %v375
  %v440 = vpack.c.bf16 %v378, %v377
  %v441 = vpack.c.bf16 %v380, %v379
  %v442 = vpack.c.bf16 %v382, %v381
  %v443 = vpack.c.bf16 %v384, %v383
  %v444 = vpack.c.bf16 %v386, %v385
  %v445 = vpack.c.bf16 %v388, %v387
  %v446 = vpack.c.bf16 %v390, %v389
  %v447 = vpack.c.bf16 %v392, %v391
  %v448 = vpack.c.bf16 %v394, %v393
  %v449 = vpack.c.bf16 %v396, %v395
  %v450 = vpack.c.bf16 %v398, %v397
  %v451 = vpack.c.bf16 %v400, %v399
  %v452 = vpack.c.bf16 %v402, %v401
  %v453 = vpack.c.bf16 %v404, %v403
  %v454 = vpack.c.bf16 %v406, %v405
  %v455 = vpack.c.bf16 %v408, %v407
  %v456 = vpack.c.bf16 %v410, %v409
  %v457 = vpack.c.bf16 %v412, %v411
  %v458 = vpack.c.bf16 %v414, %v413
  %v459 = vpack.c.bf16 %v416, %v415
  %v460 = vpack.c.bf16 %v418, %v417
  %v461 = vpack.c.bf16 %v420, %v419
  %v462 = vpack.c.bf16 %v422, %v421
  %v463 = vpack.c.bf16 %v424, %v423
  %v464 = vpack.c.bf16 %v426, %v425
  %v465 = vpack.c.bf16 %v428, %v427
  %v466 = vpack.c.bf16 %v430, %v429
  %v467 = vpack.c.bf16 %v432, %v431
  %v468 = vpack.c.bf16 %v434, %v433
  %v469 = vpack.c.bf16 %v436, %v435
  %v470 = vpack.c.bf16 %v438, %v437
  %v471 = vld [vmem:[%s5] sm:$0xf]
  %v472 = vld [vmem:[%s5 + $0x4] sm:$0xf]
  %v473 = vld [vmem:[%s5 + $0x8] sm:$0xf]
  %v474 = vld [vmem:[%s5 + $0xc] sm:$0xf]
  %v475 = vld [vmem:[%s5 + $0x10] sm:$0xf]
  %v476 = vld [vmem:[%s5 + $0x14] sm:$0xf]
  %v477 = vld [vmem:[%s5 + $0x18] sm:$0xf]
  %v478 = vld [vmem:[%s5 + $0x1c] sm:$0xf]
  %v479 = vld [vmem:[%s5 + $0x20] sm:$0xf]
  %v480 = vld [vmem:[%s5 + $0x24] sm:$0xf]
  %v481 = vld [vmem:[%s5 + $0x28] sm:$0xf]
  %v482 = vld [vmem:[%s5 + $0x2c] sm:$0xf]
  %v483 = vld [vmem:[%s5 + $0x30] sm:$0xf]
  %v484 = vld [vmem:[%s5 + $0x34] sm:$0xf]
  %v485 = vld [vmem:[%s5 + $0x38] sm:$0xf]
  %v486 = vld [vmem:[%s5 + $0x3c] sm:$0xf]
  %v503 = vunpack.c.l.b16 %v471
  %v504 = vunpack.c.l.b16 %v472
  %v505 = vunpack.c.l.b16 %v473
  %v506 = vunpack.c.l.b16 %v474
  %v507 = vunpack.c.l.b16 %v475
  %v508 = vunpack.c.l.b16 %v476
  %v509 = vunpack.c.l.b16 %v477
  %v510 = vunpack.c.l.b16 %v478
  %v511 = vunpack.c.l.b16 %v479
  %v512 = vunpack.c.l.b16 %v480
  %v513 = vunpack.c.l.b16 %v481
  %v514 = vunpack.c.l.b16 %v482
  %v515 = vunpack.c.l.b16 %v483
  %v516 = vunpack.c.l.b16 %v484
  %v517 = vunpack.c.l.b16 %v485
  %v518 = vunpack.c.l.b16 %v486
  %v519 = vpack.c.b16 %v504, %v503
  %v520 = vpack.c.b16 %v506, %v505
  %v521 = vpack.c.b16 %v508, %v507
  %v522 = vpack.c.b16 %v510, %v509
  %v523 = vpack.c.b16 %v512, %v511
  %v524 = vpack.c.b16 %v514, %v513
  %v525 = vpack.c.b16 %v516, %v515
  %v526 = vpack.c.b16 %v518, %v517
  %535 = vmatpush.bf16.msra.mxu0 %v526
  %536 = vmatpush.bf16.msra.mxu0 %v525
  %537 = vmatpush.bf16.msra.mxu0 %v524
  %538 = vmatpush.bf16.msra.mxu0 %v523
  %539 = vmatpush.bf16.msra.mxu0 %v522
  %540 = vmatpush.bf16.msra.mxu0 %v521
  %541 = vmatpush.bf16.msra.mxu0 %v520
  %542 = vmatpush.bf16.msra.mxu0 %v519
  %543 = vmatmul.bf16.gmra.mxu0 %v439
  %v544 = vpop.f32.mrf.mxu0
  %v545 = vadd.f32 0.0, %v544
  %v546 = vpop.f32.mrf.mxu0
  %v547 = vadd.f32 0.0, %v546
  %548 = vmatmul.bf16.gmra.mxu0 %v440
  %v549 = vpop.f32.mrf.mxu0
  %v550 = vadd.f32 0.0, %v549
  %v551 = vpop.f32.mrf.mxu0
  %v552 = vadd.f32 0.0, %v551
  %553 = vmatmul.bf16.gmra.mxu0 %v441
  %v554 = vpop.f32.mrf.mxu0
  %v555 = vadd.f32 0.0, %v554
  %v556 = vpop.f32.mrf.mxu0
  %v557 = vadd.f32 0.0, %v556
  %558 = vmatmul.bf16.gmra.mxu0 %v442
  %v559 = vpop.f32.mrf.mxu0
  %v560 = vadd.f32 0.0, %v559
  %v561 = vpop.f32.mrf.mxu0
  %v562 = vadd.f32 0.0, %v561
  %563 = vmatmul.bf16.gmra.mxu0 %v443
  %v564 = vpop.f32.mrf.mxu0
  %v565 = vadd.f32 0.0, %v564
  %v566 = vpop.f32.mrf.mxu0
  %v567 = vadd.f32 0.0, %v566
  %568 = vmatmul.bf16.gmra.mxu0 %v444
  %v569 = vpop.f32.mrf.mxu0
  %v570 = vadd.f32 0.0, %v569
  %v571 = vpop.f32.mrf.mxu0
  %v572 = vadd.f32 0.0, %v571
  %573 = vmatmul.bf16.gmra.mxu0 %v445
  %v574 = vpop.f32.mrf.mxu0
  %v575 = vadd.f32 0.0, %v574
  %v576 = vpop.f32.mrf.mxu0
  %v577 = vadd.f32 0.0, %v576
  %578 = vmatmul.bf16.gmra.mxu0 %v446
  %v579 = vpop.f32.mrf.mxu0
  %v580 = vadd.f32 0.0, %v579
  %v581 = vpop.f32.mrf.mxu0
  %v582 = vadd.f32 0.0, %v581
  %583 = vmatmul.bf16.gmra.mxu0 %v447
  %v584 = vpop.f32.mrf.mxu0
  %v585 = vadd.f32 0.0, %v584
  %v586 = vpop.f32.mrf.mxu0
  %v587 = vadd.f32 0.0, %v586
  %588 = vmatmul.bf16.gmra.mxu0 %v448
  %v589 = vpop.f32.mrf.mxu0
  %v590 = vadd.f32 0.0, %v589
  %v591 = vpop.f32.mrf.mxu0
  %v592 = vadd.f32 0.0, %v591
  %593 = vmatmul.bf16.gmra.mxu0 %v449
  %v594 = vpop.f32.mrf.mxu0
  %v595 = vadd.f32 0.0, %v594
  %v596 = vpop.f32.mrf.mxu0
  %v597 = vadd.f32 0.0, %v596
  %598 = vmatmul.bf16.gmra.mxu0 %v450
  %v599 = vpop.f32.mrf.mxu0
  %v600 = vadd.f32 0.0, %v599
  %v601 = vpop.f32.mrf.mxu0
  %v602 = vadd.f32 0.0, %v601
  %603 = vmatmul.bf16.gmra.mxu0 %v451
  %v604 = vpop.f32.mrf.mxu0
  %v605 = vadd.f32 0.0, %v604
  %v606 = vpop.f32.mrf.mxu0
  %v607 = vadd.f32 0.0, %v606
  %608 = vmatmul.bf16.gmra.mxu0 %v452
  %v609 = vpop.f32.mrf.mxu0
  %v610 = vadd.f32 0.0, %v609
  %v611 = vpop.f32.mrf.mxu0
  %v612 = vadd.f32 0.0, %v611
  %613 = vmatmul.bf16.gmra.mxu0 %v453
  %v614 = vpop.f32.mrf.mxu0
  %v615 = vadd.f32 0.0, %v614
  %v616 = vpop.f32.mrf.mxu0
  %v617 = vadd.f32 0.0, %v616
  %618 = vmatmul.bf16.gmra.mxu0 %v454
  %v619 = vpop.f32.mrf.mxu0
  %v620 = vadd.f32 0.0, %v619
  %v621 = vpop.f32.mrf.mxu0
  %v622 = vadd.f32 0.0, %v621
  %623 = vmatmul.bf16.gmra.mxu0 %v455
  %v624 = vpop.f32.mrf.mxu0
  %v625 = vadd.f32 0.0, %v624
  %v626 = vpop.f32.mrf.mxu0
  %v627 = vadd.f32 0.0, %v626
  %628 = vmatmul.bf16.gmra.mxu0 %v456
  %v629 = vpop.f32.mrf.mxu0
  %v630 = vadd.f32 0.0, %v629
  %v631 = vpop.f32.mrf.mxu0
  %v632 = vadd.f32 0.0, %v631
  %633 = vmatmul.bf16.gmra.mxu0 %v457
  %v634 = vpop.f32.mrf.mxu0
  %v635 = vadd.f32 0.0, %v634
  %v636 = vpop.f32.mrf.mxu0
  %v637 = vadd.f32 0.0, %v636
  %638 = vmatmul.bf16.gmra.mxu0 %v458
  %v639 = vpop.f32.mrf.mxu0
  %v640 = vadd.f32 0.0, %v639
  %v641 = vpop.f32.mrf.mxu0
  %v642 = vadd.f32 0.0, %v641
  %643 = vmatmul.bf16.gmra.mxu0 %v459
  %v644 = vpop.f32.mrf.mxu0
  %v645 = vadd.f32 0.0, %v644
  %v646 = vpop.f32.mrf.mxu0
  %v647 = vadd.f32 0.0, %v646
  %648 = vmatmul.bf16.gmra.mxu0 %v460
  %v649 = vpop.f32.mrf.mxu0
  %v650 = vadd.f32 0.0, %v649
  %v651 = vpop.f32.mrf.mxu0
  %v652 = vadd.f32 0.0, %v651
  %653 = vmatmul.bf16.gmra.mxu0 %v461
  %v654 = vpop.f32.mrf.mxu0
  %v655 = vadd.f32 0.0, %v654
  %v656 = vpop.f32.mrf.mxu0
  %v657 = vadd.f32 0.0, %v656
  %658 = vmatmul.bf16.gmra.mxu0 %v462
  %v659 = vpop.f32.mrf.mxu0
  %v660 = vadd.f32 0.0, %v659
  %v661 = vpop.f32.mrf.mxu0
  %v662 = vadd.f32 0.0, %v661
  %663 = vmatmul.bf16.gmra.mxu0 %v463
  %v664 = vpop.f32.mrf.mxu0
  %v665 = vadd.f32 0.0, %v664
  %v666 = vpop.f32.mrf.mxu0
  %v667 = vadd.f32 0.0, %v666
  %668 = vmatmul.bf16.gmra.mxu0 %v464
  %v669 = vpop.f32.mrf.mxu0
  %v670 = vadd.f32 0.0, %v669
  %v671 = vpop.f32.mrf.mxu0
  %v672 = vadd.f32 0.0, %v671
  %673 = vmatmul.bf16.gmra.mxu0 %v465
  %v674 = vpop.f32.mrf.mxu0
  %v675 = vadd.f32 0.0, %v674
  %v676 = vpop.f32.mrf.mxu0
  %v677 = vadd.f32 0.0, %v676
  %678 = vmatmul.bf16.gmra.mxu0 %v466
  %v679 = vpop.f32.mrf.mxu0
  %v680 = vadd.f32 0.0, %v679
  %v681 = vpop.f32.mrf.mxu0
  %v682 = vadd.f32 0.0, %v681
  %683 = vmatmul.bf16.gmra.mxu0 %v467
  %v684 = vpop.f32.mrf.mxu0
  %v685 = vadd.f32 0.0, %v684
  %v686 = vpop.f32.mrf.mxu0
  %v687 = vadd.f32 0.0, %v686
  %688 = vmatmul.bf16.gmra.mxu0 %v468
  %v689 = vpop.f32.mrf.mxu0
  %v690 = vadd.f32 0.0, %v689
  %v691 = vpop.f32.mrf.mxu0
  %v692 = vadd.f32 0.0, %v691
  %693 = vmatmul.bf16.gmra.mxu0 %v469
  %v694 = vpop.f32.mrf.mxu0
  %v695 = vadd.f32 0.0, %v694
  %v696 = vpop.f32.mrf.mxu0
  %v697 = vadd.f32 0.0, %v696
  %698 = vmatmul.bf16.gmra.mxu0 %v470
  %v699 = vpop.f32.mrf.mxu0
  %v700 = vadd.f32 0.0, %v699
  %v701 = vpop.f32.mrf.mxu0
  %v702 = vadd.f32 0.0, %v701
  %703 = vdwg.mxu0
  %v704 = vpack.c.bf16 %v545, %v545
  %v705 = vpack.c.bf16 %v547, %v547
  %v706 = vpack.c.bf16 %v550, %v550
  %v707 = vpack.c.bf16 %v552, %v552
  %v708 = vpack.c.bf16 %v555, %v555
  %v709 = vpack.c.bf16 %v557, %v557
  %v710 = vpack.c.bf16 %v560, %v560
  %v711 = vpack.c.bf16 %v562, %v562
  %v712 = vpack.c.bf16 %v565, %v565
  %v713 = vpack.c.bf16 %v567, %v567
  %v714 = vpack.c.bf16 %v570, %v570
  %v715 = vpack.c.bf16 %v572, %v572
  %v716 = vpack.c.bf16 %v575, %v575
  %v717 = vpack.c.bf16 %v577, %v577
  %v718 = vpack.c.bf16 %v580, %v580
  %v719 = vpack.c.bf16 %v582, %v582
  %v720 = vpack.c.bf16 %v585, %v585
  %v721 = vpack.c.bf16 %v587, %v587
  %v722 = vpack.c.bf16 %v590, %v590
  %v723 = vpack.c.bf16 %v592, %v592
  %v724 = vpack.c.bf16 %v595, %v595
  %v725 = vpack.c.bf16 %v597, %v597
  %v726 = vpack.c.bf16 %v600, %v600
  %v727 = vpack.c.bf16 %v602, %v602
  %v728 = vpack.c.bf16 %v605, %v605
  %v729 = vpack.c.bf16 %v607, %v607
  %v730 = vpack.c.bf16 %v610, %v610
  %v731 = vpack.c.bf16 %v612, %v612
  %v732 = vpack.c.bf16 %v615, %v615
  %v733 = vpack.c.bf16 %v617, %v617
  %v734 = vpack.c.bf16 %v620, %v620
  %v735 = vpack.c.bf16 %v622, %v622
  %v736 = vpack.c.bf16 %v625, %v625
  %v737 = vpack.c.bf16 %v627, %v627
  %v738 = vpack.c.bf16 %v630, %v630
  %v739 = vpack.c.bf16 %v632, %v632
  %v740 = vpack.c.bf16 %v635, %v635
  %v741 = vpack.c.bf16 %v637, %v637
  %v742 = vpack.c.bf16 %v640, %v640
  %v743 = vpack.c.bf16 %v642, %v642
  %v744 = vpack.c.bf16 %v645, %v645
  %v745 = vpack.c.bf16 %v647, %v647
  %v746 = vpack.c.bf16 %v650, %v650
  %v747 = vpack.c.bf16 %v652, %v652
  %v748 = vpack.c.bf16 %v655, %v655
  %v749 = vpack.c.bf16 %v657, %v657
  %v750 = vpack.c.bf16 %v660, %v660
  %v751 = vpack.c.bf16 %v662, %v662
  %v752 = vpack.c.bf16 %v665, %v665
  %v753 = vpack.c.bf16 %v667, %v667
  %v754 = vpack.c.bf16 %v670, %v670
  %v755 = vpack.c.bf16 %v672, %v672
  %v756 = vpack.c.bf16 %v675, %v675
  %v757 = vpack.c.bf16 %v677, %v677
  %v758 = vpack.c.bf16 %v680, %v680
  %v759 = vpack.c.bf16 %v682, %v682
  %v760 = vpack.c.bf16 %v685, %v685
  %v761 = vpack.c.bf16 %v687, %v687
  %v762 = vpack.c.bf16 %v690, %v690
  %v763 = vpack.c.bf16 %v692, %v692
  %v764 = vpack.c.bf16 %v695, %v695
  %v765 = vpack.c.bf16 %v697, %v697
  %v766 = vpack.c.bf16 %v700, %v700
  %v767 = vpack.c.bf16 %v702, %v702
  %768 = vst [vmem:[%s6] sm:$0xf] %v704
  %769 = vst [vmem:[%s6 + $0x4] sm:$0xf] %v705
  %770 = vst [vmem:[%s6 + $0x8] sm:$0xf] %v706
  %771 = vst [vmem:[%s6 + $0xc] sm:$0xf] %v707
  %772 = vst [vmem:[%s6 + $0x10] sm:$0xf] %v708
  %773 = vst [vmem:[%s6 + $0x14] sm:$0xf] %v709
  %774 = vst [vmem:[%s6 + $0x18] sm:$0xf] %v710
  %775 = vst [vmem:[%s6 + $0x1c] sm:$0xf] %v711
  %776 = vst [vmem:[%s6 + $0x20] sm:$0xf] %v712
  %777 = vst [vmem:[%s6 + $0x24] sm:$0xf] %v713
  %778 = vst [vmem:[%s6 + $0x28] sm:$0xf] %v714
  %779 = vst [vmem:[%s6 + $0x2c] sm:$0xf] %v715
  %780 = vst [vmem:[%s6 + $0x30] sm:$0xf] %v716
  %781 = vst [vmem:[%s6 + $0x34] sm:$0xf] %v717
  %782 = vst [vmem:[%s6 + $0x38] sm:$0xf] %v718
  %783 = vst [vmem:[%s6 + $0x3c] sm:$0xf] %v719
  %784 = vst [vmem:[%s6 + $0x40] sm:$0xf] %v720
  %785 = vst [vmem:[%s6 + $0x44] sm:$0xf] %v721
  %786 = vst [vmem:[%s6 + $0x48] sm:$0xf] %v722
  %787 = vst [vmem:[%s6 + $0x4c] sm:$0xf] %v723
  %788 = vst [vmem:[%s6 + $0x50] sm:$0xf] %v724
  %789 = vst [vmem:[%s6 + $0x54] sm:$0xf] %v725
  %790 = vst [vmem:[%s6 + $0x58] sm:$0xf] %v726
  %791 = vst [vmem:[%s6 + $0x5c] sm:$0xf] %v727
  %792 = vst [vmem:[%s6 + $0x60] sm:$0xf] %v728
  %793 = vst [vmem:[%s6 + $0x64] sm:$0xf] %v729
  %794 = vst [vmem:[%s6 + $0x68] sm:$0xf] %v730
  %795 = vst [vmem:[%s6 + $0x6c] sm:$0xf] %v731
  %796 = vst [vmem:[%s6 + $0x70] sm:$0xf] %v732
  %797 = vst [vmem:[%s6 + $0x74] sm:$0xf] %v733
  %798 = vst [vmem:[%s6 + $0x78] sm:$0xf] %v734
  %799 = vst [vmem:[%s6 + $0x7c] sm:$0xf] %v735
  %800 = vst [vmem:[%s6 + $0x80] sm:$0xf] %v736
  %801 = vst [vmem:[%s6 + $0x84] sm:$0xf] %v737
  %802 = vst [vmem:[%s6 + $0x88] sm:$0xf] %v738
  %803 = vst [vmem:[%s6 + $0x8c] sm:$0xf] %v739
  %804 = vst [vmem:[%s6 + $0x90] sm:$0xf] %v740
  %805 = vst [vmem:[%s6 + $0x94] sm:$0xf] %v741
  %806 = vst [vmem:[%s6 + $0x98] sm:$0xf] %v742
  %807 = vst [vmem:[%s6 + $0x9c] sm:$0xf] %v743
  %808 = vst [vmem:[%s6 + $0xa0] sm:$0xf] %v744
  %809 = vst [vmem:[%s6 + $0xa4] sm:$0xf] %v745
  %810 = vst [vmem:[%s6 + $0xa8] sm:$0xf] %v746
  %811 = vst [vmem:[%s6 + $0xac] sm:$0xf] %v747
  %812 = vst [vmem:[%s6 + $0xb0] sm:$0xf] %v748
  %813 = vst [vmem:[%s6 + $0xb4] sm:$0xf] %v749
  %814 = vst [vmem:[%s6 + $0xb8] sm:$0xf] %v750
  %815 = vst [vmem:[%s6 + $0xbc] sm:$0xf] %v751
  %816 = vst [vmem:[%s6 + $0xc0] sm:$0xf] %v752
  %817 = vst [vmem:[%s6 + $0xc4] sm:$0xf] %v753
  %818 = vst [vmem:[%s6 + $0xc8] sm:$0xf] %v754
  %819 = vst [vmem:[%s6 + $0xcc] sm:$0xf] %v755
  %820 = vst [vmem:[%s6 + $0xd0] sm:$0xf] %v756
  %821 = vst [vmem:[%s6 + $0xd4] sm:$0xf] %v757
  %822 = vst [vmem:[%s6 + $0xd8] sm:$0xf] %v758
  %823 = vst [vmem:[%s6 + $0xdc] sm:$0xf] %v759
  %824 = vst [vmem:[%s6 + $0xe0] sm:$0xf] %v760
  %825 = vst [vmem:[%s6 + $0xe4] sm:$0xf] %v761
  %826 = vst [vmem:[%s6 + $0xe8] sm:$0xf] %v762
  %827 = vst [vmem:[%s6 + $0xec] sm:$0xf] %v763
  %828 = vst [vmem:[%s6 + $0xf0] sm:$0xf] %v764
  %829 = vst [vmem:[%s6 + $0xf4] sm:$0xf] %v765
  %830 = vst [vmem:[%s6 + $0xf8] sm:$0xf] %v766
  %831 = vst [vmem:[%s6 + $0xfc] sm:$0xf] %v767
  %s832 = smul.u32 0, 512
  %v833 = vlaneseq
  %v834 = vshrl.u32 %v833, 7
  %v835 = vadd.s32 %v834, 8
  %v836 = vadd.s32 %v834, 16
  %v837 = vadd.s32 %v834, 24
  %v838 = vadd.s32 %v834, 32
  %v839 = vadd.s32 %v834, 40
  %v840 = vadd.s32 %v834, 48
  %v841 = vadd.s32 %v834, 56
  %v842 = vadd.s32 %v834, 64
  %v843 = vadd.s32 %v834, 72
  %v844 = vadd.s32 %v834, 80
  %v845 = vadd.s32 %v834, 88
  %v846 = vadd.s32 %v834, 96
  %v847 = vadd.s32 %v834, 104
  %v848 = vadd.s32 %v834, 112
  %v849 = vadd.s32 %v834, 120
  %v850 = vadd.s32 %v834, 128
  %v851 = vadd.s32 %v834, 136
  %v852 = vadd.s32 %v834, 144
  %v853 = vadd.s32 %v834, 152
  %v854 = vadd.s32 %v834, 160
  %v855 = vadd.s32 %v834, 168
  %v856 = vadd.s32 %v834, 176
  %v857 = vadd.s32 %v834, 184
  %v858 = vadd.s32 %v834, 192
  %v859 = vadd.s32 %v834, 200
  %v860 = vadd.s32 %v834, 208
  %v861 = vadd.s32 %v834, 216
  %v862 = vadd.s32 %v834, 224
  %v863 = vadd.s32 %v834, 232
  %v864 = vadd.s32 %v834, 240
  %v865 = vadd.s32 %v834, 248
  %v866 = vadd.s32 %v834, 256
  %v867 = vadd.s32 %v834, 264
  %v868 = vadd.s32 %v834, 272
  %v869 = vadd.s32 %v834, 280
  %v870 = vadd.s32 %v834, 288
  %v871 = vadd.s32 %v834, 296
  %v872 = vadd.s32 %v834, 304
  %v873 = vadd.s32 %v834, 312
  %v874 = vadd.s32 %v834, 320
  %v875 = vadd.s32 %v834, 328
  %v876 = vadd.s32 %v834, 336
  %v877 = vadd.s32 %v834, 344
  %v878 = vadd.s32 %v834, 352
  %v879 = vadd.s32 %v834, 360
  %v880 = vadd.s32 %v834, 368
  %v881 = vadd.s32 %v834, 376
  %v882 = vadd.s32 %v834, 384
  %v883 = vadd.s32 %v834, 392
  %v884 = vadd.s32 %v834, 400
  %v885 = vadd.s32 %v834, 408
  %v886 = vadd.s32 %v834, 416
  %v887 = vadd.s32 %v834, 424
  %v888 = vadd.s32 %v834, 432
  %v889 = vadd.s32 %v834, 440
  %v890 = vadd.s32 %v834, 448
  %v891 = vadd.s32 %v834, 456
  %v892 = vadd.s32 %v834, 464
  %v893 = vadd.s32 %v834, 472
  %v894 = vadd.s32 %v834, 480
  %v895 = vadd.s32 %v834, 488
  %v896 = vadd.s32 %v834, 496
  %v897 = vadd.s32 %v834, 504
  %v898 = vstv %s832
  %v899 = vadd.s32 %v898, %v834
  %v900 = vadd.s32 %v898, %v835
  %v901 = vadd.s32 %v898, %v836
  %v902 = vadd.s32 %v898, %v837
  %v903 = vadd.s32 %v898, %v838
  %v904 = vadd.s32 %v898, %v839
  %v905 = vadd.s32 %v898, %v840
  %v906 = vadd.s32 %v898, %v841
  %v907 = vadd.s32 %v898, %v842
  %v908 = vadd.s32 %v898, %v843
  %v909 = vadd.s32 %v898, %v844
  %v910 = vadd.s32 %v898, %v845
  %v911 = vadd.s32 %v898, %v846
  %v912 = vadd.s32 %v898, %v847
  %v913 = vadd.s32 %v898, %v848
  %v914 = vadd.s32 %v898, %v849
  %v915 = vadd.s32 %v898, %v850
  %v916 = vadd.s32 %v898, %v851
  %v917 = vadd.s32 %v898, %v852
  %v918 = vadd.s32 %v898, %v853
  %v919 = vadd.s32 %v898, %v854
  %v920 = vadd.s32 %v898, %v855
  %v921 = vadd.s32 %v898, %v856
  %v922 = vadd.s32 %v898, %v857
  %v923 = vadd.s32 %v898, %v858
  %v924 = vadd.s32 %v898, %v859
  %v925 = vadd.s32 %v898, %v860
  %v926 = vadd.s32 %v898, %v861
  %v927 = vadd.s32 %v898, %v862
  %v928 = vadd.s32 %v898, %v863
  %v929 = vadd.s32 %v898, %v864
  %v930 = vadd.s32 %v898, %v865
  %v931 = vadd.s32 %v898, %v866
  %v932 = vadd.s32 %v898, %v867
  %v933 = vadd.s32 %v898, %v868
  %v934 = vadd.s32 %v898, %v869
  %v935 = vadd.s32 %v898, %v870
  %v936 = vadd.s32 %v898, %v871
  %v937 = vadd.s32 %v898, %v872
  %v938 = vadd.s32 %v898, %v873
  %v939 = vadd.s32 %v898, %v874
  %v940 = vadd.s32 %v898, %v875
  %v941 = vadd.s32 %v898, %v876
  %v942 = vadd.s32 %v898, %v877
  %v943 = vadd.s32 %v898, %v878
  %v944 = vadd.s32 %v898, %v879
  %v945 = vadd.s32 %v898, %v880
  %v946 = vadd.s32 %v898, %v881
  %v947 = vadd.s32 %v898, %v882
  %v948 = vadd.s32 %v898, %v883
  %v949 = vadd.s32 %v898, %v884
  %v950 = vadd.s32 %v898, %v885
  %v951 = vadd.s32 %v898, %v886
  %v952 = vadd.s32 %v898, %v887
  %v953 = vadd.s32 %v898, %v888
  %v954 = vadd.s32 %v898, %v889
  %v955 = vadd.s32 %v898, %v890
  %v956 = vadd.s32 %v898, %v891
  %v957 = vadd.s32 %v898, %v892
  %v958 = vadd.s32 %v898, %v893
  %v959 = vadd.s32 %v898, %v894
  %v960 = vadd.s32 %v898, %v895
  %v961 = vadd.s32 %v898, %v896
  %v962 = vadd.s32 %v898, %v897
  %vm963 = vcmp.lt.s32.totalorder %v899, 512
  %vm964 = vcmp.lt.s32.totalorder %v900, 512
  %vm965 = vcmp.lt.s32.totalorder %v901, 512
  %vm966 = vcmp.lt.s32.totalorder %v902, 512
  %vm967 = vcmp.lt.s32.totalorder %v903, 512
  %vm968 = vcmp.lt.s32.totalorder %v904, 512
  %vm969 = vcmp.lt.s32.totalorder %v905, 512
  %vm970 = vcmp.lt.s32.totalorder %v906, 512
  %vm971 = vcmp.lt.s32.totalorder %v907, 512
  %vm972 = vcmp.lt.s32.totalorder %v908, 512
  %vm973 = vcmp.lt.s32.totalorder %v909, 512
  %vm974 = vcmp.lt.s32.totalorder %v910, 512
  %vm975 = vcmp.lt.s32.totalorder %v911, 512
  %vm976 = vcmp.lt.s32.totalorder %v912, 512
  %vm977 = vcmp.lt.s32.totalorder %v913, 512
  %vm978 = vcmp.lt.s32.totalorder %v914, 512
  %vm979 = vcmp.lt.s32.totalorder %v915, 512
  %vm980 = vcmp.lt.s32.totalorder %v916, 512
  %vm981 = vcmp.lt.s32.totalorder %v917, 512
  %vm982 = vcmp.lt.s32.totalorder %v918, 512
  %vm983 = vcmp.lt.s32.totalorder %v919, 512
  %vm984 = vcmp.lt.s32.totalorder %v920, 512
  %vm985 = vcmp.lt.s32.totalorder %v921, 512
  %vm986 = vcmp.lt.s32.totalorder %v922, 512
  %vm987 = vcmp.lt.s32.totalorder %v923, 512
  %vm988 = vcmp.lt.s32.totalorder %v924, 512
  %vm989 = vcmp.lt.s32.totalorder %v925, 512
  %vm990 = vcmp.lt.s32.totalorder %v926, 512
  %vm991 = vcmp.lt.s32.totalorder %v927, 512
  %vm992 = vcmp.lt.s32.totalorder %v928, 512
  %vm993 = vcmp.lt.s32.totalorder %v929, 512
  %vm994 = vcmp.lt.s32.totalorder %v930, 512
  %vm995 = vcmp.lt.s32.totalorder %v931, 512
  %vm996 = vcmp.lt.s32.totalorder %v932, 512
  %vm997 = vcmp.lt.s32.totalorder %v933, 512
  %vm998 = vcmp.lt.s32.totalorder %v934, 512
  %vm999 = vcmp.lt.s32.totalorder %v935, 512
  %vm1000 = vcmp.lt.s32.totalorder %v936, 512
  %vm1001 = vcmp.lt.s32.totalorder %v937, 512
  %vm1002 = vcmp.lt.s32.totalorder %v938, 512
  %vm1003 = vcmp.lt.s32.totalorder %v939, 512
  %vm1004 = vcmp.lt.s32.totalorder %v940, 512
  %vm1005 = vcmp.lt.s32.totalorder %v941, 512
  %vm1006 = vcmp.lt.s32.totalorder %v942, 512
  %vm1007 = vcmp.lt.s32.totalorder %v943, 512
  %vm1008 = vcmp.lt.s32.totalorder %v944, 512
  %vm1009 = vcmp.lt.s32.totalorder %v945, 512
  %vm1010 = vcmp.lt.s32.totalorder %v946, 512
  %vm1011 = vcmp.lt.s32.totalorder %v947, 512
  %vm1012 = vcmp.lt.s32.totalorder %v948, 512
  %vm1013 = vcmp.lt.s32.totalorder %v949, 512
  %vm1014 = vcmp.lt.s32.totalorder %v950, 512
  %vm1015 = vcmp.lt.s32.totalorder %v951, 512
  %vm1016 = vcmp.lt.s32.totalorder %v952, 512
  %vm1017 = vcmp.lt.s32.totalorder %v953, 512
  %vm1018 = vcmp.lt.s32.totalorder %v954, 512
  %vm1019 = vcmp.lt.s32.totalorder %v955, 512
  %vm1020 = vcmp.lt.s32.totalorder %v956, 512
  %vm1021 = vcmp.lt.s32.totalorder %v957, 512
  %vm1022 = vcmp.lt.s32.totalorder %v958, 512
  %vm1023 = vcmp.lt.s32.totalorder %v959, 512
  %vm1024 = vcmp.lt.s32.totalorder %v960, 512
  %vm1025 = vcmp.lt.s32.totalorder %v961, 512
  %vm1026 = vcmp.lt.s32.totalorder %v962, 512
  %v1027 = vsel %vm963, 1, 0
  %v1028 = vsel %vm964, 1, 0
  %v1029 = vsel %vm965, 1, 0
  %v1030 = vsel %vm966, 1, 0
  %v1031 = vsel %vm967, 1, 0
  %v1032 = vsel %vm968, 1, 0
  %v1033 = vsel %vm969, 1, 0
  %v1034 = vsel %vm970, 1, 0
  %v1035 = vsel %vm971, 1, 0
  %v1036 = vsel %vm972, 1, 0
  %v1037 = vsel %vm973, 1, 0
  %v1038 = vsel %vm974, 1, 0
  %v1039 = vsel %vm975, 1, 0
  %v1040 = vsel %vm976, 1, 0
  %v1041 = vsel %vm977, 1, 0
  %v1042 = vsel %vm978, 1, 0
  %v1043 = vsel %vm979, 1, 0
  %v1044 = vsel %vm980, 1, 0
  %v1045 = vsel %vm981, 1, 0
  %v1046 = vsel %vm982, 1, 0
  %v1047 = vsel %vm983, 1, 0
  %v1048 = vsel %vm984, 1, 0
  %v1049 = vsel %vm985, 1, 0
  %v1050 = vsel %vm986, 1, 0
  %v1051 = vsel %vm987, 1, 0
  %v1052 = vsel %vm988, 1, 0
  %v1053 = vsel %vm989, 1, 0
  %v1054 = vsel %vm990, 1, 0
  %v1055 = vsel %vm991, 1, 0
  %v1056 = vsel %vm992, 1, 0
  %v1057 = vsel %vm993, 1, 0
  %v1058 = vsel %vm994, 1, 0
  %v1059 = vsel %vm995, 1, 0
  %v1060 = vsel %vm996, 1, 0
  %v1061 = vsel %vm997, 1, 0
  %v1062 = vsel %vm998, 1, 0
  %v1063 = vsel %vm999, 1, 0
  %v1064 = vsel %vm1000, 1, 0
  %v1065 = vsel %vm1001, 1, 0
  %v1066 = vsel %vm1002, 1, 0
  %v1067 = vsel %vm1003, 1, 0
  %v1068 = vsel %vm1004, 1, 0
  %v1069 = vsel %vm1005, 1, 0
  %v1070 = vsel %vm1006, 1, 0
  %v1071 = vsel %vm1007, 1, 0
  %v1072 = vsel %vm1008, 1, 0
  %v1073 = vsel %vm1009, 1, 0
  %v1074 = vsel %vm1010, 1, 0
  %v1075 = vsel %vm1011, 1, 0
  %v1076 = vsel %vm1012, 1, 0
  %v1077 = vsel %vm1013, 1, 0
  %v1078 = vsel %vm1014, 1, 0
  %v1079 = vsel %vm1015, 1, 0
  %v1080 = vsel %vm1016, 1, 0
  %v1081 = vsel %vm1017, 1, 0
  %v1082 = vsel %vm1018, 1, 0
  %v1083 = vsel %vm1019, 1, 0
  %v1084 = vsel %vm1020, 1, 0
  %v1085 = vsel %vm1021, 1, 0
  %v1086 = vsel %vm1022, 1, 0
  %v1087 = vsel %vm1023, 1, 0
  %v1088 = vsel %vm1024, 1, 0
  %v1089 = vsel %vm1025, 1, 0
  %v1090 = vsel %vm1026, 1, 0
  %v1091 = vcvt.s32.f32 %v1027
  %v1092 = vcvt.s32.f32 %v1028
  %v1093 = vcvt.s32.f32 %v1029
  %v1094 = vcvt.s32.f32 %v1030
  %v1095 = vcvt.s32.f32 %v1031
  %v1096 = vcvt.s32.f32 %v1032
  %v1097 = vcvt.s32.f32 %v1033
  %v1098 = vcvt.s32.f32 %v1034
  %v1099 = vcvt.s32.f32 %v1035
  %v1100 = vcvt.s32.f32 %v1036
  %v1101 = vcvt.s32.f32 %v1037
  %v1102 = vcvt.s32.f32 %v1038
  %v1103 = vcvt.s32.f32 %v1039
  %v1104 = vcvt.s32.f32 %v1040
  %v1105 = vcvt.s32.f32 %v1041
  %v1106 = vcvt.s32.f32 %v1042
  %v1107 = vcvt.s32.f32 %v1043
  %v1108 = vcvt.s32.f32 %v1044
  %v1109 = vcvt.s32.f32 %v1045
  %v1110 = vcvt.s32.f32 %v1046
  %v1111 = vcvt.s32.f32 %v1047
  %v1112 = vcvt.s32.f32 %v1048
  %v1113 = vcvt.s32.f32 %v1049
  %v1114 = vcvt.s32.f32 %v1050
  %v1115 = vcvt.s32.f32 %v1051
  %v1116 = vcvt.s32.f32 %v1052
  %v1117 = vcvt.s32.f32 %v1053
  %v1118 = vcvt.s32.f32 %v1054
  %v1119 = vcvt.s32.f32 %v1055
  %v1120 = vcvt.s32.f32 %v1056
  %v1121 = vcvt.s32.f32 %v1057
  %v1122 = vcvt.s32.f32 %v1058
  %v1123 = vcvt.s32.f32 %v1059
  %v1124 = vcvt.s32.f32 %v1060
  %v1125 = vcvt.s32.f32 %v1061
  %v1126 = vcvt.s32.f32 %v1062
  %v1127 = vcvt.s32.f32 %v1063
  %v1128 = vcvt.s32.f32 %v1064
  %v1129 = vcvt.s32.f32 %v1065
  %v1130 = vcvt.s32.f32 %v1066
  %v1131 = vcvt.s32.f32 %v1067
  %v1132 = vcvt.s32.f32 %v1068
  %v1133 = vcvt.s32.f32 %v1069
  %v1134 = vcvt.s32.f32 %v1070
  %v1135 = vcvt.s32.f32 %v1071
  %v1136 = vcvt.s32.f32 %v1072
  %v1137 = vcvt.s32.f32 %v1073
  %v1138 = vcvt.s32.f32 %v1074
  %v1139 = vcvt.s32.f32 %v1075
  %v1140 = vcvt.s32.f32 %v1076
  %v1141 = vcvt.s32.f32 %v1077
  %v1142 = vcvt.s32.f32 %v1078
  %v1143 = vcvt.s32.f32 %v1079
  %v1144 = vcvt.s32.f32 %v1080
  %v1145 = vcvt.s32.f32 %v1081
  %v1146 = vcvt.s32.f32 %v1082
  %v1147 = vcvt.s32.f32 %v1083
  %v1148 = vcvt.s32.f32 %v1084
  %v1149 = vcvt.s32.f32 %v1085
  %v1150 = vcvt.s32.f32 %v1086
  %v1151 = vcvt.s32.f32 %v1087
  %v1152 = vcvt.s32.f32 %v1088
  %v1153 = vcvt.s32.f32 %v1089
  %v1154 = vcvt.s32.f32 %v1090
  %v1155 = vmul.f32 %v545, %v1091
  %v1156 = vmul.f32 %v547, %v1092
  %v1157 = vmul.f32 %v550, %v1093
  %v1158 = vmul.f32 %v552, %v1094
  %v1159 = vmul.f32 %v555, %v1095
  %v1160 = vmul.f32 %v557, %v1096
  %v1161 = vmul.f32 %v560, %v1097
  %v1162 = vmul.f32 %v562, %v1098
  %v1163 = vmul.f32 %v565, %v1099
  %v1164 = vmul.f32 %v567, %v1100
  %v1165 = vmul.f32 %v570, %v1101
  %v1166 = vmul.f32 %v572, %v1102
  %v1167 = vmul.f32 %v575, %v1103
  %v1168 = vmul.f32 %v577, %v1104
  %v1169 = vmul.f32 %v580, %v1105
  %v1170 = vmul.f32 %v582, %v1106
  %v1171 = vmul.f32 %v585, %v1107
  %v1172 = vmul.f32 %v587, %v1108
  %v1173 = vmul.f32 %v590, %v1109
  %v1174 = vmul.f32 %v592, %v1110
  %v1175 = vmul.f32 %v595, %v1111
  %v1176 = vmul.f32 %v597, %v1112
  %v1177 = vmul.f32 %v600, %v1113
  %v1178 = vmul.f32 %v602, %v1114
  %v1179 = vmul.f32 %v605, %v1115
  %v1180 = vmul.f32 %v607, %v1116
  %v1181 = vmul.f32 %v610, %v1117
  %v1182 = vmul.f32 %v612, %v1118
  %v1183 = vmul.f32 %v615, %v1119
  %v1184 = vmul.f32 %v617, %v1120
  %v1185 = vmul.f32 %v620, %v1121
  %v1186 = vmul.f32 %v622, %v1122
  %v1187 = vmul.f32 %v625, %v1123
  %v1188 = vmul.f32 %v627, %v1124
  %v1189 = vmul.f32 %v630, %v1125
  %v1190 = vmul.f32 %v632, %v1126
  %v1191 = vmul.f32 %v635, %v1127
  %v1192 = vmul.f32 %v637, %v1128
  %v1193 = vmul.f32 %v640, %v1129
  %v1194 = vmul.f32 %v642, %v1130
  %v1195 = vmul.f32 %v645, %v1131
  %v1196 = vmul.f32 %v647, %v1132
  %v1197 = vmul.f32 %v650, %v1133
  %v1198 = vmul.f32 %v652, %v1134
  %v1199 = vmul.f32 %v655, %v1135
  %v1200 = vmul.f32 %v657, %v1136
  %v1201 = vmul.f32 %v660, %v1137
  %v1202 = vmul.f32 %v662, %v1138
  %v1203 = vmul.f32 %v665, %v1139
  %v1204 = vmul.f32 %v667, %v1140
  %v1205 = vmul.f32 %v670, %v1141
  %v1206 = vmul.f32 %v672, %v1142
  %v1207 = vmul.f32 %v675, %v1143
  %v1208 = vmul.f32 %v677, %v1144
  %v1209 = vmul.f32 %v680, %v1145
  %v1210 = vmul.f32 %v682, %v1146
  %v1211 = vmul.f32 %v685, %v1147
  %v1212 = vmul.f32 %v687, %v1148
  %v1213 = vmul.f32 %v690, %v1149
  %v1214 = vmul.f32 %v692, %v1150
  %v1215 = vmul.f32 %v695, %v1151
  %v1216 = vmul.f32 %v697, %v1152
  %v1217 = vmul.f32 %v700, %v1153
  %v1218 = vmul.f32 %v702, %v1154
  %v1219 = vadd.f32 %v1155, %v1156
  %v1220 = vadd.f32 %v1219, %v1157
  %v1221 = vadd.f32 %v1220, %v1158
  %v1222 = vadd.f32 %v1221, %v1159
  %v1223 = vadd.f32 %v1222, %v1160
  %v1224 = vadd.f32 %v1223, %v1161
  %v1225 = vadd.f32 %v1224, %v1162
  %v1226 = vadd.f32 %v1225, %v1163
  %v1227 = vadd.f32 %v1226, %v1164
  %v1228 = vadd.f32 %v1227, %v1165
  %v1229 = vadd.f32 %v1228, %v1166
  %v1230 = vadd.f32 %v1229, %v1167
  %v1231 = vadd.f32 %v1230, %v1168
  %v1232 = vadd.f32 %v1231, %v1169
  %v1233 = vadd.f32 %v1232, %v1170
  %v1234 = vadd.f32 %v1233, %v1171
  %v1235 = vadd.f32 %v1234, %v1172
  %v1236 = vadd.f32 %v1235, %v1173
  %v1237 = vadd.f32 %v1236, %v1174
  %v1238 = vadd.f32 %v1237, %v1175
  %v1239 = vadd.f32 %v1238, %v1176
  %v1240 = vadd.f32 %v1239, %v1177
  %v1241 = vadd.f32 %v1240, %v1178
  %v1242 = vadd.f32 %v1241, %v1179
  %v1243 = vadd.f32 %v1242, %v1180
  %v1244 = vadd.f32 %v1243, %v1181
  %v1245 = vadd.f32 %v1244, %v1182
  %v1246 = vadd.f32 %v1245, %v1183
  %v1247 = vadd.f32 %v1246, %v1184
  %v1248 = vadd.f32 %v1247, %v1185
  %v1249 = vadd.f32 %v1248, %v1186
  %v1250 = vadd.f32 %v1249, %v1187
  %v1251 = vadd.f32 %v1250, %v1188
  %v1252 = vadd.f32 %v1251, %v1189
  %v1253 = vadd.f32 %v1252, %v1190
  %v1254 = vadd.f32 %v1253, %v1191
  %v1255 = vadd.f32 %v1254, %v1192
  %v1256 = vadd.f32 %v1255, %v1193
  %v1257 = vadd.f32 %v1256, %v1194
  %v1258 = vadd.f32 %v1257, %v1195
  %v1259 = vadd.f32 %v1258, %v1196
  %v1260 = vadd.f32 %v1259, %v1197
  %v1261 = vadd.f32 %v1260, %v1198
  %v1262 = vadd.f32 %v1261, %v1199
  %v1263 = vadd.f32 %v1262, %v1200
  %v1264 = vadd.f32 %v1263, %v1201
  %v1265 = vadd.f32 %v1264, %v1202
  %v1266 = vadd.f32 %v1265, %v1203
  %v1267 = vadd.f32 %v1266, %v1204
  %v1268 = vadd.f32 %v1267, %v1205
  %v1269 = vadd.f32 %v1268, %v1206
  %v1270 = vadd.f32 %v1269, %v1207
  %v1271 = vadd.f32 %v1270, %v1208
  %v1272 = vadd.f32 %v1271, %v1209
  %v1273 = vadd.f32 %v1272, %v1210
  %v1274 = vadd.f32 %v1273, %v1211
  %v1275 = vadd.f32 %v1274, %v1212
  %v1276 = vadd.f32 %v1275, %v1213
  %v1277 = vadd.f32 %v1276, %v1214
  %v1278 = vadd.f32 %v1277, %v1215
  %v1279 = vadd.f32 %v1278, %v1216
  %v1280 = vadd.f32 %v1279, %v1217
  %v1281 = vadd.f32 %v1280, %v1218
  %v1282 = vrot.slane %v1281, 4
  %v1283 = vadd.f32 %v1281, %v1282
  %v1284 = vrot.slane %v1283, 2
  %v1285 = vadd.f32 %v1283, %v1284
  %v1286 = vrot.slane %v1285, 1
  %v1287 = vadd.f32 %v1285, %v1286
  %v1288 = vmul.f32 %v1155, %v1155
  %v1289 = vmul.f32 %v1156, %v1156
  %v1290 = vmul.f32 %v1157, %v1157
  %v1291 = vmul.f32 %v1158, %v1158
  %v1292 = vmul.f32 %v1159, %v1159
  %v1293 = vmul.f32 %v1160, %v1160
  %v1294 = vmul.f32 %v1161, %v1161
  %v1295 = vmul.f32 %v1162, %v1162
  %v1296 = vmul.f32 %v1163, %v1163
  %v1297 = vmul.f32 %v1164, %v1164
  %v1298 = vmul.f32 %v1165, %v1165
  %v1299 = vmul.f32 %v1166, %v1166
  %v1300 = vmul.f32 %v1167, %v1167
  %v1301 = vmul.f32 %v1168, %v1168
  %v1302 = vmul.f32 %v1169, %v1169
  %v1303 = vmul.f32 %v1170, %v1170
  %v1304 = vmul.f32 %v1171, %v1171
  %v1305 = vmul.f32 %v1172, %v1172
  %v1306 = vmul.f32 %v1173, %v1173
  %v1307 = vmul.f32 %v1174, %v1174
  %v1308 = vmul.f32 %v1175, %v1175
  %v1309 = vmul.f32 %v1176, %v1176
  %v1310 = vmul.f32 %v1177, %v1177
  %v1311 = vmul.f32 %v1178, %v1178
  %v1312 = vmul.f32 %v1179, %v1179
  %v1313 = vmul.f32 %v1180, %v1180
  %v1314 = vmul.f32 %v1181, %v1181
  %v1315 = vmul.f32 %v1182, %v1182
  %v1316 = vmul.f32 %v1183, %v1183
  %v1317 = vmul.f32 %v1184, %v1184
  %v1318 = vmul.f32 %v1185, %v1185
  %v1319 = vmul.f32 %v1186, %v1186
  %v1320 = vmul.f32 %v1187, %v1187
  %v1321 = vmul.f32 %v1188, %v1188
  %v1322 = vmul.f32 %v1189, %v1189
  %v1323 = vmul.f32 %v1190, %v1190
  %v1324 = vmul.f32 %v1191, %v1191
  %v1325 = vmul.f32 %v1192, %v1192
  %v1326 = vmul.f32 %v1193, %v1193
  %v1327 = vmul.f32 %v1194, %v1194
  %v1328 = vmul.f32 %v1195, %v1195
  %v1329 = vmul.f32 %v1196, %v1196
  %v1330 = vmul.f32 %v1197, %v1197
  %v1331 = vmul.f32 %v1198, %v1198
  %v1332 = vmul.f32 %v1199, %v1199
  %v1333 = vmul.f32 %v1200, %v1200
  %v1334 = vmul.f32 %v1201, %v1201
  %v1335 = vmul.f32 %v1202, %v1202
  %v1336 = vmul.f32 %v1203, %v1203
  %v1337 = vmul.f32 %v1204, %v1204
  %v1338 = vmul.f32 %v1205, %v1205
  %v1339 = vmul.f32 %v1206, %v1206
  %v1340 = vmul.f32 %v1207, %v1207
  %v1341 = vmul.f32 %v1208, %v1208
  %v1342 = vmul.f32 %v1209, %v1209
  %v1343 = vmul.f32 %v1210, %v1210
  %v1344 = vmul.f32 %v1211, %v1211
  %v1345 = vmul.f32 %v1212, %v1212
  %v1346 = vmul.f32 %v1213, %v1213
  %v1347 = vmul.f32 %v1214, %v1214
  %v1348 = vmul.f32 %v1215, %v1215
  %v1349 = vmul.f32 %v1216, %v1216
  %v1350 = vmul.f32 %v1217, %v1217
  %v1351 = vmul.f32 %v1218, %v1218
  %v1352 = vadd.f32 %v1288, %v1289
  %v1353 = vadd.f32 %v1352, %v1290
  %v1354 = vadd.f32 %v1353, %v1291
  %v1355 = vadd.f32 %v1354, %v1292
  %v1356 = vadd.f32 %v1355, %v1293
  %v1357 = vadd.f32 %v1356, %v1294
  %v1358 = vadd.f32 %v1357, %v1295
  %v1359 = vadd.f32 %v1358, %v1296
  %v1360 = vadd.f32 %v1359, %v1297
  %v1361 = vadd.f32 %v1360, %v1298
  %v1362 = vadd.f32 %v1361, %v1299
  %v1363 = vadd.f32 %v1362, %v1300
  %v1364 = vadd.f32 %v1363, %v1301
  %v1365 = vadd.f32 %v1364, %v1302
  %v1366 = vadd.f32 %v1365, %v1303
  %v1367 = vadd.f32 %v1366, %v1304
  %v1368 = vadd.f32 %v1367, %v1305
  %v1369 = vadd.f32 %v1368, %v1306
  %v1370 = vadd.f32 %v1369, %v1307
  %v1371 = vadd.f32 %v1370, %v1308
  %v1372 = vadd.f32 %v1371, %v1309
  %v1373 = vadd.f32 %v1372, %v1310
  %v1374 = vadd.f32 %v1373, %v1311
  %v1375 = vadd.f32 %v1374, %v1312
  %v1376 = vadd.f32 %v1375, %v1313
  %v1377 = vadd.f32 %v1376, %v1314
  %v1378 = vadd.f32 %v1377, %v1315
  %v1379 = vadd.f32 %v1378, %v1316
  %v1380 = vadd.f32 %v1379, %v1317
  %v1381 = vadd.f32 %v1380, %v1318
  %v1382 = vadd.f32 %v1381, %v1319
  %v1383 = vadd.f32 %v1382, %v1320
  %v1384 = vadd.f32 %v1383, %v1321
  %v1385 = vadd.f32 %v1384, %v1322
  %v1386 = vadd.f32 %v1385, %v1323
  %v1387 = vadd.f32 %v1386, %v1324
  %v1388 = vadd.f32 %v1387, %v1325
  %v1389 = vadd.f32 %v1388, %v1326
  %v1390 = vadd.f32 %v1389, %v1327
  %v1391 = vadd.f32 %v1390, %v1328
  %v1392 = vadd.f32 %v1391, %v1329
  %v1393 = vadd.f32 %v1392, %v1330
  %v1394 = vadd.f32 %v1393, %v1331
  %v1395 = vadd.f32 %v1394, %v1332
  %v1396 = vadd.f32 %v1395, %v1333
  %v1397 = vadd.f32 %v1396, %v1334
  %v1398 = vadd.f32 %v1397, %v1335
  %v1399 = vadd.f32 %v1398, %v1336
  %v1400 = vadd.f32 %v1399, %v1337
  %v1401 = vadd.f32 %v1400, %v1338
  %v1402 = vadd.f32 %v1401, %v1339
  %v1403 = vadd.f32 %v1402, %v1340
  %v1404 = vadd.f32 %v1403, %v1341
  %v1405 = vadd.f32 %v1404, %v1342
  %v1406 = vadd.f32 %v1405, %v1343
  %v1407 = vadd.f32 %v1406, %v1344
  %v1408 = vadd.f32 %v1407, %v1345
  %v1409 = vadd.f32 %v1408, %v1346
  %v1410 = vadd.f32 %v1409, %v1347
  %v1411 = vadd.f32 %v1410, %v1348
  %v1412 = vadd.f32 %v1411, %v1349
  %v1413 = vadd.f32 %v1412, %v1350
  %v1414 = vadd.f32 %v1413, %v1351
  %v1415 = vrot.slane %v1414, 4
  %v1416 = vadd.f32 %v1414, %v1415
  %v1417 = vrot.slane %v1416, 2
  %v1418 = vadd.f32 %v1416, %v1417
  %v1419 = vrot.slane %v1418, 1
  %v1420 = vadd.f32 %v1418, %v1419
  %vm1421 = vcmask 1040384
  %v1422 = vsel %vm1421, %v1287, %v1420
  %vm1423 = vcmask 1041408
  %v1424 = vsel %vm1423, %v1422, 0.0
  %1425 = vst [vmem:[%s7] sm:$0xff] %v1424
  // Predicated region
  $region26: #{bottleneck_forward.7} parent=0 // pred_check
    _
  $region27: #{bottleneck_forward.7} parent=0 // pred_check_branch
    %1427 = sbr.rel (0) target = $region29
  $region28: #{bottleneck_forward.7} parent=0 // pred_region
    _
  $region29: #{bottleneck_forward.7} parent=0 // pred_fallthru
    _
  // Predicated region
  $region30: #{bottleneck_forward.7} parent=0 // pred_check
    _
  $region31: #{bottleneck_forward.7} parent=0 // pred_check_branch
    %1429 = sbr.rel (0) target = $region33
  $region32: #{bottleneck_forward.7} parent=0 // pred_region
    _
  $region33: #{bottleneck_forward.7} parent=0 // pred_fallthru
    _
  // Predicated region
  $region34: #{bottleneck_forward.7} parent=0 // pred_check
    _
  $region35: #{bottleneck_forward.7} parent=0 // pred_check_branch
    %1431 = sbr.rel (0) target = $region37
  $region36: #{bottleneck_forward.7} parent=0 // pred_region
    _
  $region37: #{bottleneck_forward.7} parent=0 // pred_fallthru
    _
  // Predicated region
  $region38: #{bottleneck_forward.7} parent=0 // pred_check
    _
  $region39: #{bottleneck_forward.7} parent=0 // pred_check_branch
    %1433 = sbr.rel (0) target = $region41
  $region40: #{bottleneck_forward.7} parent=0 // pred_region
    _
  $region41: #{bottleneck_forward.7} parent=0 // pred_fallthru
    _

// kernel: bottleneck_forward.6
$region0: #{bottleneck_forward.6}
  #allocation0 [shape = 'u32[]', space=smem, size = 0x4, offset = 0x4, fixed_abs, tag = 'smem constant byte address 0x4 - core index']
  #allocation1 [shape = 'u32[72,128]{1,0:T(1,128)}', space=vmem, size = 0x9000, scoped, tag = 'internal scratch']
  #allocation2 [shape = 'f32[256,128]{1,0:T(8,128)}', space=vmem, size = 0x20000, scoped, tag = 'scratch operand']
  %s0 = inlined_call_operand.vmem [shape: bf16[2,16,16,128], index: 0, kind: input, shape index: {}]
  %s1 = inlined_call_operand.vmem [shape: f32[1,128], index: 1, kind: input, shape index: {}]
  %s2 = inlined_call_operand.vmem [shape: f32[1,128], index: 2, kind: input, shape index: {}]
  %s3 = inlined_call_operand.vmem [shape: f32[1,128], index: 3, kind: input, shape index: {}]
  %s4 = inlined_call_operand.vmem [shape: f32[1,128], index: 4, kind: input, shape index: {}]
  %s5 = inlined_call_operand.vmem [shape: bf16[3,3,128,128], index: 5, kind: input, shape index: {}]
  %s6 = inlined_call_operand.vmem [shape: bf16[2,16,16,128], index: 6, kind: output, shape index: {0}]
  %s7 = inlined_call_operand.vmem [shape: f32[2,8,128], index: 7, kind: output, shape index: {1}]
  %8 = xla_tuple %s6, %s7
  %s9 = sld [smem:[#allocation0]]
  $region65: #{bottleneck_forward.6} parent=0
    _
  %s11 = ssub.s32 1, %s9
  %s12 = scalar_select 0, %s11, %s9
  loop: start=0, step=1, limit=4
  $region2: #{bottleneck_forward.6} parent=0 // loop_pre_header
    _
  $region3: #{bottleneck_forward.6} parent=0 // loop_header
    %s14 = sphi 0, %s18
    %p15 = scmp.ge.s32.totalorder %s14, 4
    %s24 = sphi 0, %s26
    %s27 = sphi 0, %s24
    %s28 = sphi 0, %s27
    %s44 = sphi 0, %s28
    %s48 = sphi 0, %s48
    %s50 = sphi 0, %s48
    %s51 = sphi 0, %s50
    %s65 = sphi 0, %s51
    %s69 = sphi 0, %s69
    %s71 = sphi 0, %s69
    %s72 = sphi 0, %s71
    %s86 = sphi 0, %s72
    %s90 = sphi 0, %s90
    %s92 = sphi 0, %s90
    %s93 = sphi 0, %s92
    %s107 = sphi 0, %s93
    %s111 = sphi 0, %s111
    %s113 = sphi 0, %s111
    %s114 = sphi 0, %s113
    %s128 = sphi 0, %s114
    %s132 = sphi 0, %s132
    %s134 = sphi 0, %s132
    %s135 = sphi 0, %s134
    %s149 = sphi 0, %s135
    %s155 = sphi 0, %s157
    %s158 = sphi 0, %s155
    %s159 = sphi 0, %s158
    %s175 = sphi 0, %s159
    %s181 = sphi 0, %s183
    %s184 = sphi 0, %s181
    %s185 = sphi 0, %s184
    %s201 = sphi 0, %s185
  $region4: #{bottleneck_forward.6} parent=0 // loop_header_branch
    %17 = sbr.rel (%p15) target = $region8
  $region5: #{bottleneck_forward.6} parent=0 // loop_body
    %s19 = ssub.s32 %s14, 1
    %s20 = ssub.s32 %s14, 2
    %s21 = sadd.s32 %s14, 1
    %s22 = ssub.s32 %s14, %s21
    %p23 = scmp.eq.s32.totalorder %s22, 0
    %s25 = sadd.s32 %s24, 1
    %s26 = scalar_select %p23, %s24, %s25
    %p29 = pneg %p23
    %p30 = scmp.eq.s32.totalorder %s14, 1
    %p31 = por %p29, %p30
    %p32 = scmp.ne.s32.totalorder %s24, %s27
    %p33 = scmp.eq.s32.totalorder %s14, 0
    %p34 = por %p32, %p33
    %p35 = scmp.ne.s32.totalorder %s24, %s27
    %p36 = scmp.eq.s32.totalorder %s19, 1
    %p37 = por %p35, %p36
    %p38 = scmp.ne.s32.totalorder %s27, %s28
    %p39 = scmp.eq.s32.totalorder %s19, 0
    %p40 = por %p38, %p39
    %p41 = scmp.ne.s32.totalorder %s27, %s28
    %p42 = scmp.eq.s32.totalorder %s20, 1
    %p43 = por %p41, %p42
    %p45 = scmp.ne.s32.totalorder %s28, %s44
    %p46 = scmp.eq.s32.totalorder %s20, 0
    %p47 = por %p45, %p46
    %s49 = sadd.s32 %s48, 1
    %p52 = scmp.eq.s32.totalorder %s14, 1
    %p53 = scmp.ne.s32.totalorder %s48, %s50
    %p54 = scmp.eq.s32.totalorder %s14, 0
    %p55 = por %p53, %p54
    %p56 = scmp.ne.s32.totalorder %s48, %s50
    %p57 = scmp.eq.s32.totalorder %s19, 1
    %p58 = por %p56, %p57
    %p59 = scmp.ne.s32.totalorder %s50, %s51
    %p60 = scmp.eq.s32.totalorder %s19, 0
    %p61 = por %p59, %p60
    %p62 = scmp.ne.s32.totalorder %s50, %s51
    %p63 = scmp.eq.s32.totalorder %s20, 1
    %p64 = por %p62, %p63
    %p66 = scmp.ne.s32.totalorder %s51, %s65
    %p67 = scmp.eq.s32.totalorder %s20, 0
    %p68 = por %p66, %p67
    %s70 = sadd.s32 %s69, 1
    %p73 = scmp.eq.s32.totalorder %s14, 1
    %p74 = scmp.ne.s32.totalorder %s69, %s71
    %p75 = scmp.eq.s32.totalorder %s14, 0
    %p76 = por %p74, %p75
    %p77 = scmp.ne.s32.totalorder %s69, %s71
    %p78 = scmp.eq.s32.totalorder %s19, 1
    %p79 = por %p77, %p78
    %p80 = scmp.ne.s32.totalorder %s71, %s72
    %p81 = scmp.eq.s32.totalorder %s19, 0
    %p82 = por %p80, %p81
    %p83 = scmp.ne.s32.totalorder %s71, %s72
    %p84 = scmp.eq.s32.totalorder %s20, 1
    %p85 = por %p83, %p84
    %p87 = scmp.ne.s32.totalorder %s72, %s86
    %p88 = scmp.eq.s32.totalorder %s20, 0
    %p89 = por %p87, %p88
    %s91 = sadd.s32 %s90, 1
    %p94 = scmp.eq.s32.totalorder %s14, 1
    %p95 = scmp.ne.s32.totalorder %s90, %s92
    %p96 = scmp.eq.s32.totalorder %s14, 0
    %p97 = por %p95, %p96
    %p98 = scmp.ne.s32.totalorder %s90, %s92
    %p99 = scmp.eq.s32.totalorder %s19, 1
    %p100 = por %p98, %p99
    %p101 = scmp.ne.s32.totalorder %s92, %s93
    %p102 = scmp.eq.s32.totalorder %s19, 0
    %p103 = por %p101, %p102
    %p104 = scmp.ne.s32.totalorder %s92, %s93
    %p105 = scmp.eq.s32.totalorder %s20, 1
    %p106 = por %p104, %p105
    %p108 = scmp.ne.s32.totalorder %s93, %s107
    %p109 = scmp.eq.s32.totalorder %s20, 0
    %p110 = por %p108, %p109
    %s112 = sadd.s32 %s111, 1
    %p115 = scmp.eq.s32.totalorder %s14, 1
    %p116 = scmp.ne.s32.totalorder %s111, %s113
    %p117 = scmp.eq.s32.totalorder %s14, 0
    %p118 = por %p116, %p117
    %p119 = scmp.ne.s32.totalorder %s111, %s113
    %p120 = scmp.eq.s32.totalorder %s19, 1
    %p121 = por %p119, %p120
    %p122 = scmp.ne.s32.totalorder %s113, %s114
    %p123 = scmp.eq.s32.totalorder %s19, 0
    %p124 = por %p122, %p123
    %p125 = scmp.ne.s32.totalorder %s113, %s114
    %p126 = scmp.eq.s32.totalorder %s20, 1
    %p127 = por %p125, %p126
    %p129 = scmp.ne.s32.totalorder %s114, %s128
    %p130 = scmp.eq.s32.totalorder %s20, 0
    %p131 = por %p129, %p130
    %s133 = sadd.s32 %s132, 1
    %p136 = scmp.eq.s32.totalorder %s14, 1
    %p137 = scmp.ne.s32.totalorder %s132, %s134
    %p138 = scmp.eq.s32.totalorder %s14, 0
    %p139 = por %p137, %p138
    %p140 = scmp.ne.s32.totalorder %s132, %s134
    %p141 = scmp.eq.s32.totalorder %s19, 1
    %p142 = por %p140, %p141
    %p143 = scmp.ne.s32.totalorder %s134, %s135
    %p144 = scmp.eq.s32.totalorder %s19, 0
    %p145 = por %p143, %p144
    %p146 = scmp.ne.s32.totalorder %s134, %s135
    %p147 = scmp.eq.s32.totalorder %s20, 1
    %p148 = por %p146, %p147
    %p150 = scmp.ne.s32.totalorder %s135, %s149
    %p151 = scmp.eq.s32.totalorder %s20, 0
    %p152 = por %p150, %p151
    %s153 = ssub.s32 %s14, %s21
    %p154 = scmp.eq.s32.totalorder %s153, 0
    %s156 = sadd.s32 %s155, 1
    %s157 = scalar_select %p154, %s155, %s156
    %p160 = pneg %p154
    %p161 = scmp.eq.s32.totalorder %s14, 1
    %p162 = por %p160, %p161
    %p163 = scmp.ne.s32.totalorder %s155, %s158
    %p164 = scmp.eq.s32.totalorder %s14, 0
    %p165 = por %p163, %p164
    %p166 = scmp.ne.s32.totalorder %s155, %s158
    %p167 = scmp.eq.s32.totalorder %s19, 1
    %p168 = por %p166, %p167
    %p169 = scmp.ne.s32.totalorder %s158, %s159
    %p170 = scmp.eq.s32.totalorder %s19, 0
    %p171 = por %p169, %p170
    %p172 = scmp.ne.s32.totalorder %s158, %s159
    %p173 = scmp.eq.s32.totalorder %s20, 1
    %p174 = por %p172, %p173
    %p176 = scmp.ne.s32.totalorder %s159, %s175
    %p177 = scmp.eq.s32.totalorder %s20, 0
    %p178 = por %p176, %p177
    %s179 = ssub.s32 %s14, %s21
    %p180 = scmp.eq.s32.totalorder %s179, 0
    %s182 = sadd.s32 %s181, 1
    %s183 = scalar_select %p180, %s181, %s182
    %p186 = pneg %p180
    %p187 = scmp.eq.s32.totalorder %s14, 1
    %p188 = por %p186, %p187
    %p189 = scmp.ne.s32.totalorder %s181, %s184
    %p190 = scmp.eq.s32.totalorder %s14, 0
    %p191 = por %p189, %p190
    %p192 = scmp.ne.s32.totalorder %s181, %s184
    %p193 = scmp.eq.s32.totalorder %s19, 1
    %p194 = por %p192, %p193
    %p195 = scmp.ne.s32.totalorder %s184, %s185
    %p196 = scmp.eq.s32.totalorder %s19, 0
    %p197 = por %p195, %p196
    %p198 = scmp.ne.s32.totalorder %s184, %s185
    %p199 = scmp.eq.s32.totalorder %s20, 1
    %p200 = por %p198, %p199
    %p202 = scmp.ne.s32.totalorder %s185, %s201
    %p203 = scmp.eq.s32.totalorder %s20, 0
    %p204 = por %p202, %p203
    %p205 = scmp.le.s32.totalorder 1, %s14
    %p206 = scmp.lt.s32.totalorder %s14, 3
    %p207 = pnand %p205, %p206
    %p208 = pneg %p207
    // Predicated region
    $region9: #{bottleneck_forward.6} parent=5 // pred_check
      _
    $region10: #{bottleneck_forward.6} parent=5 // pred_check_branch
      %210 = sbr.rel (%p207) target = $region12
    $region11: #{bottleneck_forward.6} parent=5 // pred_region
      %s211 = ssub.s32 %s14, 1
      // Predicated region
      $region13: #{bottleneck_forward.6} parent=11 // pred_check
        %p212 = pneg %p61
      $region14: #{bottleneck_forward.6} parent=11 // pred_check_branch
        %214 = sbr.rel (%p212) target = $region16
      $region15: #{bottleneck_forward.6} parent=11 // pred_region
        _
      $region16: #{bottleneck_forward.6} parent=11 // pred_fallthru
        _
      // Predicated region
      $region17: #{bottleneck_forward.6} parent=11 // pred_check
        %p215 = pneg %p82
      $region18: #{bottleneck_forward.6} parent=11 // pred_check_branch
        %217 = sbr.rel (%p215) target = $region20
      $region19: #{bottleneck_forward.6} parent=11 // pred_region
        _
      $region20: #{bottleneck_forward.6} parent=11 // pred_fallthru
        _
      // Predicated region
      $region21: #{bottleneck_forward.6} parent=11 // pred_check
        %p218 = pneg %p103
      $region22: #{bottleneck_forward.6} parent=11 // pred_check_branch
        %220 = sbr.rel (%p218) target = $region24
      $region23: #{bottleneck_forward.6} parent=11 // pred_region
        _
      $region24: #{bottleneck_forward.6} parent=11 // pred_fallthru
        _
      // Predicated region
      $region25: #{bottleneck_forward.6} parent=11 // pred_check
        %p221 = pneg %p124
      $region26: #{bottleneck_forward.6} parent=11 // pred_check_branch
        %223 = sbr.rel (%p221) target = $region28
      $region27: #{bottleneck_forward.6} parent=11 // pred_region
        _
      $region28: #{bottleneck_forward.6} parent=11 // pred_fallthru
        _
      // Predicated region
      $region29: #{bottleneck_forward.6} parent=11 // pred_check
        %p224 = pneg %p145
      $region30: #{bottleneck_forward.6} parent=11 // pred_check_branch
        %226 = sbr.rel (%p224) target = $region32
      $region31: #{bottleneck_forward.6} parent=11 // pred_region
        _
      $region32: #{bottleneck_forward.6} parent=11 // pred_fallthru
        _
    $region12: #{bottleneck_forward.6} parent=5 // pred_fallthru
      _
    %p227 = scmp.lt.s32.totalorder %s14, 2
    // Predicated region
    $region33: #{bottleneck_forward.6} parent=5 // pred_check
      %p228 = pneg %p227
    $region34: #{bottleneck_forward.6} parent=5 // pred_check_branch
      %230 = sbr.rel (%p228) target = $region36
    $region35: #{bottleneck_forward.6} parent=5 // pred_region
      // Predicated region
      $region37: #{bottleneck_forward.6} parent=35 // pred_check
        %p231 = pneg %p34
      $region38: #{bottleneck_forward.6} parent=35 // pred_check_branch
        %233 = sbr.rel (%p231) target = $region40
      $region39: #{bottleneck_forward.6} parent=35 // pred_region
        %p234 = scmp.lt.s32.totalorder %s14, 1
        %s235 = scalar_select %p234, %s14, 1
        %s236 = smul.addr %s235, 32
        %s237 = smul.addr %s236, 4
        %s238 = scalar_lea.vmem %s0, %s237
      $region40: #{bottleneck_forward.6} parent=35 // pred_fallthru
        _
    $region36: #{bottleneck_forward.6} parent=5 // pred_fallthru
      _
    %p239 = scmp.le.s32.totalorder 1, %s14
    %p240 = scmp.lt.s32.totalorder %s14, 3
    %p241 = pnand %p239, %p240
    %p242 = pneg %p241
    // Predicated region
    $region41: #{bottleneck_forward.6} parent=5 // pred_check
      _
    $region42: #{bottleneck_forward.6} parent=5 // pred_check_branch
      %244 = sbr.rel (%p241) target = $region44
    $region43: #{bottleneck_forward.6} parent=5 // pred_region
      %s245 = ssub.s32 %s14, 1
      %p246 = scmp.lt.s32.totalorder %s19, 1
      %s247 = scalar_select %p246, %s19, 1
      %s248 = smul.addr %s247, 32
      %s249 = smul.addr %s248, 4
      %s250 = scalar_lea.vmem %s0, %s249
      %p251 = pneg %p40
      %p252 = pneg %p37
      %p253 = pneg %p61
      %p254 = pneg %p58
      %p255 = pneg %p82
      %p256 = pneg %p79
      %p257 = pneg %p103
      %p258 = pneg %p100
      %p259 = pneg %p124
      %p260 = pneg %p121
      %p261 = pneg %p145
      %p262 = pneg %p142
      %p263 = pneg %p171
      %p264 = pneg %p168
      %p265 = scmp.lt.s32.totalorder %s19, 1
      %s266 = scalar_select %p265, %s19, 1
      %s267 = smul.addr %s266, 32
      %s268 = smul.addr %s267, 4
      %s269 = scalar_lea.vmem %s6, %s268
      %p270 = pneg %p197
      %p271 = pneg %p194
      %p272 = scmp.lt.s32.totalorder %s19, 1
      %s273 = scalar_select %p272, %s19, 1
      %s274 = smul.addr %s273, 8
      %s275 = scalar_lea.vmem %s7, %s274
      %p276 = scmp.lt.s32.totalorder %s19, 1
      %s277 = scalar_select %p276, %s19, 1
      %s278 = smul.addr %s277, 32
      %s279 = smul.addr %s278, 4
      %s280 = scalar_lea.vmem %s0, %s279
      %p281 = scmp.lt.s32.totalorder %s19, 1
      %s282 = scalar_select %p281, %s19, 1
      %s283 = smul.addr %s282, 32
      %s284 = smul.addr %s283, 4
      %s285 = scalar_lea.vmem %s6, %s284
      %p286 = scmp.lt.s32.totalorder %s19, 1
      %s287 = scalar_select %p286, %s19, 1
      %s288 = smul.addr %s287, 8
      %s289 = scalar_lea.vmem %s7, %s288
      %v291 = vld [vmem:[%s280] sm:$0xf]
      %v292 = vld [vmem:[%s280 + $0x4] sm:$0xf]
      %v293 = vld [vmem:[%s280 + $0x8] sm:$0xf]
      %v294 = vld [vmem:[%s280 + $0xc] sm:$0xf]
      %v295 = vld [vmem:[%s280 + $0x10] sm:$0xf]
      %v296 = vld [vmem:[%s280 + $0x14] sm:$0xf]
      %v297 = vld [vmem:[%s280 + $0x18] sm:$0xf]
      %v298 = vld [vmem:[%s280 + $0x1c] sm:$0xf]
      %v299 = vld [vmem:[%s280 + $0x20] sm:$0xf]
      %v300 = vld [vmem:[%s280 + $0x24] sm:$0xf]
      %v301 = vld [vmem:[%s280 + $0x28] sm:$0xf]
      %v302 = vld [vmem:[%s280 + $0x2c] sm:$0xf]
      %v303 = vld [vmem:[%s280 + $0x30] sm:$0xf]
      %v304 = vld [vmem:[%s280 + $0x34] sm:$0xf]
      %v305 = vld [vmem:[%s280 + $0x38] sm:$0xf]
      %v306 = vld [vmem:[%s280 + $0x3c] sm:$0xf]
      %v307 = vld [vmem:[%s280 + $0x40] sm:$0xf]
      %v308 = vld [vmem:[%s280 + $0x44] sm:$0xf]
      %v309 = vld [vmem:[%s280 + $0x48] sm:$0xf]
      %v310 = vld [vmem:[%s280 + $0x4c] sm:$0xf]
      %v311 = vld [vmem:[%s280 + $0x50] sm:$0xf]
      %v312 = vld [vmem:[%s280 + $0x54] sm:$0xf]
      %v313 = vld [vmem:[%s280 + $0x58] sm:$0xf]
      %v314 = vld [vmem:[%s280 + $0x5c] sm:$0xf]
      %v315 = vld [vmem:[%s280 + $0x60] sm:$0xf]
      %v316 = vld [vmem:[%s280 + $0x64] sm:$0xf]
      %v317 = vld [vmem:[%s280 + $0x68] sm:$0xf]
      %v318 = vld [vmem:[%s280 + $0x6c] sm:$0xf]
      %v319 = vld [vmem:[%s280 + $0x70] sm:$0xf]
      %v320 = vld [vmem:[%s280 + $0x74] sm:$0xf]
      %v321 = vld [vmem:[%s280 + $0x78] sm:$0xf]
      %v322 = vld [vmem:[%s280 + $0x7c] sm:$0xf]
      %v323 = vunpack.c.l.bf16 %v291
      %v324 = vunpack.c.l.bf16 %v292
      %v325 = vunpack.c.l.bf16 %v293
      %v326 = vunpack.c.l.bf16 %v294
      %v327 = vunpack.c.l.bf16 %v295
      %v328 = vunpack.c.l.bf16 %v296
      %v329 = vunpack.c.l.bf16 %v297
      %v330 = vunpack.c.l.bf16 %v298
      %v331 = vunpack.c.l.bf16 %v299
      %v332 = vunpack.c.l.bf16 %v300
      %v333 = vunpack.c.l.bf16 %v301
      %v334 = vunpack.c.l.bf16 %v302
      %v335 = vunpack.c.l.bf16 %v303
      %v336 = vunpack.c.l.bf16 %v304
      %v337 = vunpack.c.l.bf16 %v305
      %v338 = vunpack.c.l.bf16 %v306
      %v339 = vunpack.c.l.bf16 %v307
      %v340 = vunpack.c.l.bf16 %v308
      %v341 = vunpack.c.l.bf16 %v309
      %v342 = vunpack.c.l.bf16 %v310
      %v343 = vunpack.c.l.bf16 %v311
      %v344 = vunpack.c.l.bf16 %v312
      %v345 = vunpack.c.l.bf16 %v313
      %v346 = vunpack.c.l.bf16 %v314
      %v347 = vunpack.c.l.bf16 %v315
      %v348 = vunpack.c.l.bf16 %v316
      %v349 = vunpack.c.l.bf16 %v317
      %v350 = vunpack.c.l.bf16 %v318
      %v351 = vunpack.c.l.bf16 %v319
      %v352 = vunpack.c.l.bf16 %v320
      %v353 = vunpack.c.l.bf16 %v321
      %v354 = vunpack.c.l.bf16 %v322
      %v355 = vld [vmem:[%s1] sm:$0x1]
      %v356 = vmul.f32 %v355, 0.001953125
      %v357 = vld [vmem:[%s2] sm:$0x1]
      %v358 = vmul.f32 %v357, 0.001953125
      %v359 = vmul.f32 %v356, %v356
      %v360 = vsub.f32 %v358, %v359
      %v361 = vmax.f32 %v360, 0.0
      %v362 = vadd.f32 %v361, 1e-05
      %v363 = vrsqrt.pop %v362
      %v364 = vmul.f32 %v363, %v362
      %v365 = vmul.f32 %v364, %v363
      %v366 = vmul.f32 0.5, %v365
      %v367 = vsub.f32 1.5, %v366
      %v368 = vmul.f32 %v363, %v367
      %vm369 = vweird.f32 %v362
      %vm370 = vweird.f32 %v363
      %vm371 = vmor %vm369, %vm370
      %v372 = vsel %vm371, %v363, %v368
      %v373 = vld [vmem:[%s3] sm:$0x1]
      %v374 = vmul.f32 %v372, %v373
      %v376 = vperm.slane %v356, 0
      %v378 = vsub.f32 %v323, %v376
      %v379 = vsub.f32 %v324, %v376
      %v380 = vsub.f32 %v325, %v376
      %v381 = vsub.f32 %v326, %v376
      %v382 = vsub.f32 %v327, %v376
      %v383 = vsub.f32 %v328, %v376
      %v384 = vsub.f32 %v329, %v376
      %v385 = vsub.f32 %v330, %v376
      %v386 = vsub.f32 %v331, %v376
      %v387 = vsub.f32 %v332, %v376
      %v388 = vsub.f32 %v333, %v376
      %v389 = vsub.f32 %v334, %v376
      %v390 = vsub.f32 %v335, %v376
      %v391 = vsub.f32 %v336, %v376
      %v392 = vsub.f32 %v337, %v376
      %v393 = vsub.f32 %v338, %v376
      %v394 = vsub.f32 %v339, %v376
      %v395 = vsub.f32 %v340, %v376
      %v396 = vsub.f32 %v341, %v376
      %v397 = vsub.f32 %v342, %v376
      %v398 = vsub.f32 %v343, %v376
      %v399 = vsub.f32 %v344, %v376
      %v400 = vsub.f32 %v345, %v376
      %v401 = vsub.f32 %v346, %v376
      %v402 = vsub.f32 %v347, %v376
      %v403 = vsub.f32 %v348, %v376
      %v404 = vsub.f32 %v349, %v376
      %v405 = vsub.f32 %v350, %v376
      %v406 = vsub.f32 %v351, %v376
      %v407 = vsub.f32 %v352, %v376
      %v408 = vsub.f32 %v353, %v376
      %v409 = vsub.f32 %v354, %v376
      %v411 = vperm.slane %v374, 0
      %v413 = vmul.f32 %v378, %v411
      %v414 = vmul.f32 %v379, %v411
      %v415 = vmul.f32 %v380, %v411
      %v416 = vmul.f32 %v381, %v411
      %v417 = vmul.f32 %v382, %v411
      %v418 = vmul.f32 %v383, %v411
      %v419 = vmul.f32 %v384, %v411
      %v420 = vmul.f32 %v385, %v411
      %v421 = vmul.f32 %v386, %v411
      %v422 = vmul.f32 %v387, %v411
      %v423 = vmul.f32 %v388, %v411
      %v424 = vmul.f32 %v389, %v411
      %v425 = vmul.f32 %v390, %v411
      %v426 = vmul.f32 %v391, %v411
      %v427 = vmul.f32 %v392, %v411
      %v428 = vmul.f32 %v393, %v411
      %v429 = vmul.f32 %v394, %v411
      %v430 = vmul.f32 %v395, %v411
      %v431 = vmul.f32 %v396, %v411
      %v432 = vmul.f32 %v397, %v411
      %v433 = vmul.f32 %v398, %v411
      %v434 = vmul.f32 %v399, %v411
      %v435 = vmul.f32 %v400, %v411
      %v436 = vmul.f32 %v401, %v411
      %v437 = vmul.f32 %v402, %v411
      %v438 = vmul.f32 %v403, %v411
      %v439 = vmul.f32 %v404, %v411
      %v440 = vmul.f32 %v405, %v411
      %v441 = vmul.f32 %v406, %v411
      %v442 = vmul.f32 %v407, %v411
      %v443 = vmul.f32 %v408, %v411
      %v444 = vmul.f32 %v409, %v411
      %v445 = vld [vmem:[%s4] sm:$0x1]
      %v447 = vperm.slane %v445, 0
      %v449 = vadd.f32 %v413, %v447
      %v450 = vadd.f32 %v414, %v447
      %v451 = vadd.f32 %v415, %v447
      %v452 = vadd.f32 %v416, %v447
      %v453 = vadd.f32 %v417, %v447
      %v454 = vadd.f32 %v418, %v447
      %v455 = vadd.f32 %v419, %v447
      %v456 = vadd.f32 %v420, %v447
      %v457 = vadd.f32 %v421, %v447
      %v458 = vadd.f32 %v422, %v447
      %v459 = vadd.f32 %v423, %v447
      %v460 = vadd.f32 %v424, %v447
      %v461 = vadd.f32 %v425, %v447
      %v462 = vadd.f32 %v426, %v447
      %v463 = vadd.f32 %v427, %v447
      %v464 = vadd.f32 %v428, %v447
      %v465 = vadd.f32 %v429, %v447
      %v466 = vadd.f32 %v430, %v447
      %v467 = vadd.f32 %v431, %v447
      %v468 = vadd.f32 %v432, %v447
      %v469 = vadd.f32 %v433, %v447
      %v470 = vadd.f32 %v434, %v447
      %v471 = vadd.f32 %v435, %v447
      %v472 = vadd.f32 %v436, %v447
      %v473 = vadd.f32 %v437, %v447
      %v474 = vadd.f32 %v438, %v447
      %v475 = vadd.f32 %v439, %v447
      %v476 = vadd.f32 %v440, %v447
      %v477 = vadd.f32 %v441, %v447
      %v478 = vadd.f32 %v442, %v447
      %v479 = vadd.f32 %v443, %v447
      %v480 = vadd.f32 %v444, %v447
      %v481 = vmax.f32 %v449, 0.0
      %v482 = vmax.f32 %v450, 0.0
      %v483 = vmax.f32 %v451, 0.0
      %v484 = vmax.f32 %v452, 0.0
      %v485 = vmax.f32 %v453, 0.0
      %v486 = vmax.f32 %v454, 0.0
      %v487 = vmax.f32 %v455, 0.0
      %v488 = vmax.f32 %v456, 0.0
      %v489 = vmax.f32 %v457, 0.0
      %v490 = vmax.f32 %v458, 0.0
      %v491 = vmax.f32 %v459, 0.0
      %v492 = vmax.f32 %v460, 0.0
      %v493 = vmax.f32 %v461, 0.0
      %v494 = vmax.f32 %v462, 0.0
      %v495 = vmax.f32 %v463, 0.0
      %v496 = vmax.f32 %v464, 0.0
      %v497 = vmax.f32 %v465, 0.0
      %v498 = vmax.f32 %v466, 0.0
      %v499 = vmax.f32 %v467, 0.0
      %v500 = vmax.f32 %v468, 0.0
      %v501 = vmax.f32 %v469, 0.0
      %v502 = vmax.f32 %v470, 0.0
      %v503 = vmax.f32 %v471, 0.0
      %v504 = vmax.f32 %v472, 0.0
      %v505 = vmax.f32 %v473, 0.0
      %v506 = vmax.f32 %v474, 0.0
      %v507 = vmax.f32 %v475, 0.0
      %v508 = vmax.f32 %v476, 0.0
      %v509 = vmax.f32 %v477, 0.0
      %v510 = vmax.f32 %v478, 0.0
      %v511 = vmax.f32 %v479, 0.0
      %v512 = vmax.f32 %v480, 0.0
      %v513 = vpack.c.bf16 %v481, %v481
      %v514 = vpack.c.bf16 %v482, %v482
      %v515 = vpack.c.bf16 %v483, %v483
      %v516 = vpack.c.bf16 %v484, %v484
      %v517 = vpack.c.bf16 %v485, %v485
      %v518 = vpack.c.bf16 %v486, %v486
      %v519 = vpack.c.bf16 %v487, %v487
      %v520 = vpack.c.bf16 %v488, %v488
      %v521 = vpack.c.bf16 %v489, %v489
      %v522 = vpack.c.bf16 %v490, %v490
      %v523 = vpack.c.bf16 %v491, %v491
      %v524 = vpack.c.bf16 %v492, %v492
      %v525 = vpack.c.bf16 %v493, %v493
      %v526 = vpack.c.bf16 %v494, %v494
      %v527 = vpack.c.bf16 %v495, %v495
      %v528 = vpack.c.bf16 %v496, %v496
      %v529 = vpack.c.bf16 %v497, %v497
      %v530 = vpack.c.bf16 %v498, %v498
      %v531 = vpack.c.bf16 %v499, %v499
      %v532 = vpack.c.bf16 %v500, %v500
      %v533 = vpack.c.bf16 %v501, %v501
      %v534 = vpack.c.bf16 %v502, %v502
      %v535 = vpack.c.bf16 %v503, %v503
      %v536 = vpack.c.bf16 %v504, %v504
      %v537 = vpack.c.bf16 %v505, %v505
      %v538 = vpack.c.bf16 %v506, %v506
      %v539 = vpack.c.bf16 %v507, %v507
      %v540 = vpack.c.bf16 %v508, %v508
      %v541 = vpack.c.bf16 %v509, %v509
      %v542 = vpack.c.bf16 %v510, %v510
      %v543 = vpack.c.bf16 %v511, %v511
      %v544 = vpack.c.bf16 %v512, %v512
      %v577 = vunpack.c.l.b16 %v513
      %v578 = vunpack.c.l.b16 %v514
      %v579 = vunpack.c.l.b16 %v515
      %v580 = vunpack.c.l.b16 %v516
      %v581 = vunpack.c.l.b16 %v517
      %v582 = vunpack.c.l.b16 %v518
      %v583 = vunpack.c.l.b16 %v519
      %v584 = vunpack.c.l.b16 %v520
      %v585 = vunpack.c.l.b16 %v521
      %v586 = vunpack.c.l.b16 %v522
      %v587 = vunpack.c.l.b16 %v523
      %v588 = vunpack.c.l.b16 %v524
      %v589 = vunpack.c.l.b16 %v525
      %v590 = vunpack.c.l.b16 %v526
      %v591 = vunpack.c.l.b16 %v527
      %v592 = vunpack.c.l.b16 %v528
      %v593 = vunpack.c.l.b16 %v529
      %v594 = vunpack.c.l.b16 %v530
      %v595 = vunpack.c.l.b16 %v531
      %v596 = vunpack.c.l.b16 %v532
      %v597 = vunpack.c.l.b16 %v533
      %v598 = vunpack.c.l.b16 %v534
      %v599 = vunpack.c.l.b16 %v535
      %v600 = vunpack.c.l.b16 %v536
      %v601 = vunpack.c.l.b16 %v537
      %v602 = vunpack.c.l.b16 %v538
      %v603 = vunpack.c.l.b16 %v539
      %v604 = vunpack.c.l.b16 %v540
      %v605 = vunpack.c.l.b16 %v541
      %v606 = vunpack.c.l.b16 %v542
      %v607 = vunpack.c.l.b16 %v543
      %v608 = vunpack.c.l.b16 %v544
      %v609 = vpack.c.b16 %v578, %v577
      %v610 = vpack.c.b16 %v580, %v579
      %v611 = vpack.c.b16 %v582, %v581
      %v612 = vpack.c.b16 %v584, %v583
      %v613 = vpack.c.b16 %v586, %v585
      %v614 = vpack.c.b16 %v588, %v587
      %v615 = vpack.c.b16 %v590, %v589
      %v616 = vpack.c.b16 %v592, %v591
      %v617 = vpack.c.b16 %v594, %v593
      %v618 = vpack.c.b16 %v596, %v595
      %v619 = vpack.c.b16 %v598, %v597
      %v620 = vpack.c.b16 %v600, %v599
      %v621 = vpack.c.b16 %v602, %v601
      %v622 = vpack.c.b16 %v604, %v603
      %v623 = vpack.c.b16 %v606, %v605
      %v624 = vpack.c.b16 %v608, %v607
      %v626 = vshrl.u32 %v609, 16
      %v628 = vrot.slane %v626, 7
      %v629 = vshll.u32 %v609, 16
      %v631 = vor.u32 %v628, %v629
      %v633 = vshrl.u32 %v610, 16
      %v635 = vrot.slane %v633, 7
      %v636 = vshll.u32 %v610, 16
      %v638 = vor.u32 %v635, %v636
      %v640 = vshrl.u32 %v611, 16
      %v642 = vrot.slane %v640, 7
      %v643 = vshll.u32 %v611, 16
      %v645 = vor.u32 %v642, %v643
      %v647 = vshrl.u32 %v612, 16
      %v649 = vrot.slane %v647, 7
      %v650 = vshll.u32 %v612, 16
      %v652 = vor.u32 %v649, %v650
      %v654 = vshrl.u32 %v613, 16
      %v656 = vrot.slane %v654, 7
      %v657 = vshll.u32 %v613, 16
      %v659 = vor.u32 %v656, %v657
      %v661 = vshrl.u32 %v614, 16
      %v663 = vrot.slane %v661, 7
      %v664 = vshll.u32 %v614, 16
      %v666 = vor.u32 %v663, %v664
      %v668 = vshrl.u32 %v615, 16
      %v670 = vrot.slane %v668, 7
      %v671 = vshll.u32 %v615, 16
      %v673 = vor.u32 %v670, %v671
      %v675 = vshrl.u32 %v616, 16
      %v677 = vrot.slane %v675, 7
      %v678 = vshll.u32 %v616, 16
      %v680 = vor.u32 %v677, %v678
      %v682 = vshrl.u32 %v617, 16
      %v684 = vrot.slane %v682, 7
      %v685 = vshll.u32 %v617, 16
      %v687 = vor.u32 %v684, %v685
      %v689 = vshrl.u32 %v618, 16
      %v691 = vrot.slane %v689, 7
      %v692 = vshll.u32 %v618, 16
      %v694 = vor.u32 %v691, %v692
      %v696 = vshrl.u32 %v619, 16
      %v698 = vrot.slane %v696, 7
      %v699 = vshll.u32 %v619, 16
      %v701 = vor.u32 %v698, %v699
      %v703 = vshrl.u32 %v620, 16
      %v705 = vrot.slane %v703, 7
      %v706 = vshll.u32 %v620, 16
      %v708 = vor.u32 %v705, %v706
      %v710 = vshrl.u32 %v621, 16
      %v712 = vrot.slane %v710, 7
      %v713 = vshll.u32 %v621, 16
      %v715 = vor.u32 %v712, %v713
      %v717 = vshrl.u32 %v622, 16
      %v719 = vrot.slane %v717, 7
      %v720 = vshll.u32 %v622, 16
      %v722 = vor.u32 %v719, %v720
      %v724 = vshrl.u32 %v623, 16
      %v726 = vrot.slane %v724, 7
      %v727 = vshll.u32 %v623, 16
      %v729 = vor.u32 %v726, %v727
      %v731 = vshrl.u32 %v624, 16
      %v733 = vrot.slane %v731, 7
      %v734 = vshll.u32 %v624, 16
      %v736 = vor.u32 %v733, %v734
      %vm769 = vcmask 1040384
      %vm770 = vsmask.f32 256
      %vm771 = vmand %vm769, %vm770
      %v772 = vsel %vm771, 0, %v631
      %v773 = vsel %vm771, 0, %v638
      %v774 = vsel %vm771, 0, %v645
      %v775 = vsel %vm771, 0, %v652
      %v776 = vsel %vm771, 0, %v659
      %v777 = vsel %vm771, 0, %v666
      %v778 = vsel %vm771, 0, %v673
      %v779 = vsel %vm771, 0, %v680
      %v780 = vsel %vm771, 0, %v687
      %v781 = vsel %vm771, 0, %v694
      %v782 = vsel %vm771, 0, %v701
      %v783 = vsel %vm771, 0, %v708
      %v784 = vsel %vm771, 0, %v715
      %v785 = vsel %vm771, 0, %v722
      %v786 = vsel %vm771, 0, %v729
      %v787 = vsel %vm771, 0, %v736
      %v788 = vsel %vm771, %v628, 0
      %v789 = vsel %vm771, %v635, 0
      %v790 = vsel %vm771, %v642, 0
      %v791 = vsel %vm771, %v649, 0
      %v792 = vsel %vm771, %v656, 0
      %v793 = vsel %vm771, %v663, 0
      %v794 = vsel %vm771, %v670, 0
      %v795 = vsel %vm771, %v677, 0
      %v796 = vsel %vm771, %v684, 0
      %v797 = vsel %vm771, %v691, 0
      %v798 = vsel %vm771, %v698, 0
      %v799 = vsel %vm771, %v705, 0
      %v800 = vsel %vm771, %v712, 0
      %v801 = vsel %vm771, %v719, 0
      %v802 = vsel %vm771, %v726, 0
      %v803 = vsel %vm771, %v733, 0
      %804 = vst [vmem:[#allocation2] sm:$0xff] 0.0
      %805 = vst [vmem:[#allocation2 + $0x8] sm:$0xff] 0.0
      %806 = vst [vmem:[#allocation2 + $0x10] sm:$0xff] 0.0
      %807 = vst [vmem:[#allocation2 + $0x18] sm:$0xff] 0.0
      %808 = vst [vmem:[#allocation2 + $0x20] sm:$0xff] 0.0
      %809 = vst [vmem:[#allocation2 + $0x28] sm:$0xff] 0.0
      %810 = vst [vmem:[#allocation2 + $0x30] sm:$0xff] 0.0
      %811 = vst [vmem:[#allocation2 + $0x38] sm:$0xff] 0.0
      %812 = vst [vmem:[#allocation2 + $0x40] sm:$0xff] 0.0
      %813 = vst [vmem:[#allocation2 + $0x48] sm:$0xff] 0.0
      %814 = vst [vmem:[#allocation2 + $0x50] sm:$0xff] 0.0
      %815 = vst [vmem:[#allocation2 + $0x58] sm:$0xff] 0.0
      %816 = vst [vmem:[#allocation2 + $0x60] sm:$0xff] 0.0
      %817 = vst [vmem:[#allocation2 + $0x68] sm:$0xff] 0.0
      %818 = vst [vmem:[#allocation2 + $0x70] sm:$0xff] 0.0
      %819 = vst [vmem:[#allocation2 + $0x78] sm:$0xff] 0.0
      %820 = vst [vmem:[#allocation2 + $0x80] sm:$0xff] 0.0
      %821 = vst [vmem:[#allocation2 + $0x88] sm:$0xff] 0.0
      %822 = vst [vmem:[#allocation2 + $0x90] sm:$0xff] 0.0
      %823 = vst [vmem:[#allocation2 + $0x98] sm:$0xff] 0.0
      %824 = vst [vmem:[#allocation2 + $0xa0] sm:$0xff] 0.0
      %825 = vst [vmem:[#allocation2 + $0xa8] sm:$0xff] 0.0
      %826 = vst [vmem:[#allocation2 + $0xb0] sm:$0xff] 0.0
      %827 = vst [vmem:[#allocation2 + $0xb8] sm:$0xff] 0.0
      %828 = vst [vmem:[#allocation2 + $0xc0] sm:$0xff] 0.0
      %829 = vst [vmem:[#allocation2 + $0xc8] sm:$0xff] 0.0
      %830 = vst [vmem:[#allocation2 + $0xd0] sm:$0xff] 0.0
      %831 = vst [vmem:[#allocation2 + $0xd8] sm:$0xff] 0.0
      %832 = vst [vmem:[#allocation2 + $0xe0] sm:$0xff] 0.0
      %833 = vst [vmem:[#allocation2 + $0xe8] sm:$0xff] 0.0
      %834 = vst [vmem:[#allocation2 + $0xf0] sm:$0xff] 0.0
      %835 = vst [vmem:[#allocation2 + $0xf8] sm:$0xff] 0.0
      %v836 = vld [vmem:[#allocation2] sm:$0xff]
      %v837 = vld [vmem:[#allocation2 + $0x8] sm:$0xff]
      %v838 = vld [vmem:[#allocation2 + $0x10] sm:$0xff]
      %v839 = vld [vmem:[#allocation2 + $0x18] sm:$0xff]
      %v840 = vld [vmem:[#allocation2 + $0x20] sm:$0xff]
      %v841 = vld [vmem:[#allocation2 + $0x28] sm:$0xff]
      %v842 = vld [vmem:[#allocation2 + $0x30] sm:$0xff]
      %v843 = vld [vmem:[#allocation2 + $0x38] sm:$0xff]
      %v844 = vld [vmem:[#allocation2 + $0x40] sm:$0xff]
      %v845 = vld [vmem:[#allocation2 + $0x48] sm:$0xff]
      %v846 = vld [vmem:[#allocation2 + $0x50] sm:$0xff]
      %v847 = vld [vmem:[#allocation2 + $0x58] sm:$0xff]
      %v848 = vld [vmem:[#allocation2 + $0x60] sm:$0xff]
      %v849 = vld [vmem:[#allocation2 + $0x68] sm:$0xff]
      %v850 = vld [vmem:[#allocation2 + $0x70] sm:$0xff]
      %v851 = vld [vmem:[#allocation2 + $0x78] sm:$0xff]
      %v852 = vld [vmem:[#allocation2 + $0x80] sm:$0xff]
      %v853 = vld [vmem:[#allocation2 + $0x88] sm:$0xff]
      %v854 = vld [vmem:[#allocation2 + $0x90] sm:$0xff]
      %v855 = vld [vmem:[#allocation2 + $0x98] sm:$0xff]
      %v856 = vld [vmem:[#allocation2 + $0xa0] sm:$0xff]
      %v857 = vld [vmem:[#allocation2 + $0xa8] sm:$0xff]
      %v858 = vld [vmem:[#allocation2 + $0xb0] sm:$0xff]
      %v859 = vld [vmem:[#allocation2 + $0xb8] sm:$0xff]
      %v860 = vld [vmem:[#allocation2 + $0xc0] sm:$0xff]
      %v861 = vld [vmem:[#allocation2 + $0xc8] sm:$0xff]
      %v862 = vld [vmem:[#allocation2 + $0xd0] sm:$0xff]
      %v863 = vld [vmem:[#allocation2 + $0xd8] sm:$0xff]
      %v864 = vld [vmem:[#allocation2 + $0xe0] sm:$0xff]
      %v865 = vld [vmem:[#allocation2 + $0xe8] sm:$0xff]
      %v866 = vld [vmem:[#allocation2 + $0xf0] sm:$0xff]
      %v867 = vld [vmem:[#allocation2 + $0xf8] sm:$0xff]
      %v868 = vld [vmem:[%s5] sm:$0xf]
      %v869 = vld [vmem:[%s5 + $0x4] sm:$0xf]
      %v870 = vld [vmem:[%s5 + $0x8] sm:$0xf]
      %v871 = vld [vmem:[%s5 + $0xc] sm:$0xf]
      %v872 = vld [vmem:[%s5 + $0x10] sm:$0xf]
      %v873 = vld [vmem:[%s5 + $0x14] sm:$0xf]
      %v874 = vld [vmem:[%s5 + $0x18] sm:$0xf]
      %v875 = vld [vmem:[%s5 + $0x1c] sm:$0xf]
      %v876 = vld [vmem:[%s5 + $0x20] sm:$0xf]
      %v877 = vld [vmem:[%s5 + $0x24] sm:$0xf]
      %v878 = vld [vmem:[%s5 + $0x28] sm:$0xf]
      %v879 = vld [vmem:[%s5 + $0x2c] sm:$0xf]
      %v880 = vld [vmem:[%s5 + $0x30] sm:$0xf]
      %v881 = vld [vmem:[%s5 + $0x34] sm:$0xf]
      %v882 = vld [vmem:[%s5 + $0x38] sm:$0xf]
      %v883 = vld [vmem:[%s5 + $0x3c] sm:$0xf]
      %v900 = vunpack.c.l.b16 %v868
      %v901 = vunpack.c.l.b16 %v869
      %v902 = vunpack.c.l.b16 %v870
      %v903 = vunpack.c.l.b16 %v871
      %v904 = vunpack.c.l.b16 %v872
      %v905 = vunpack.c.l.b16 %v873
      %v906 = vunpack.c.l.b16 %v874
      %v907 = vunpack.c.l.b16 %v875
      %v908 = vunpack.c.l.b16 %v876
      %v909 = vunpack.c.l.b16 %v877
      %v910 = vunpack.c.l.b16 %v878
      %v911 = vunpack.c.l.b16 %v879
      %v912 = vunpack.c.l.b16 %v880
      %v913 = vunpack.c.l.b16 %v881
      %v914 = vunpack.c.l.b16 %v882
      %v915 = vunpack.c.l.b16 %v883
      %v916 = vpack.c.b16 %v901, %v900
      %v917 = vpack.c.b16 %v903, %v902
      %v918 = vpack.c.b16 %v905, %v904
      %v919 = vpack.c.b16 %v907, %v906
      %v920 = vpack.c.b16 %v909, %v908
      %v921 = vpack.c.b16 %v911, %v910
      %v922 = vpack.c.b16 %v913, %v912
      %v923 = vpack.c.b16 %v915, %v914
      %932 = vmatpush.bf16.msra.mxu0 %v923
      %933 = vmatpush.bf16.msra.mxu0 %v922
      %934 = vmatpush.bf16.msra.mxu0 %v921
      %935 = vmatpush.bf16.msra.mxu0 %v920
      %936 = vmatpush.bf16.msra.mxu0 %v919
      %937 = vmatpush.bf16.msra.mxu0 %v918
      %938 = vmatpush.bf16.msra.mxu0 %v917
      %939 = vmatpush.bf16.msra.mxu0 %v916
      %940 = vmatmul.bf16.gmra.mxu0 0
      %v941 = vpop.f32.mrf.mxu0
      %v942 = vadd.f32 0.0, %v941
      %v943 = vpop.f32.mrf.mxu0
      %v944 = vadd.f32 0.0, %v943
      %945 = vmatmul.bf16.gmra.mxu0 %v772
      %v946 = vpop.f32.mrf.mxu0
      %v947 = vadd.f32 0.0, %v946
      %v948 = vpop.f32.mrf.mxu0
      %v949 = vadd.f32 0.0, %v948
      %950 = vmatmul.bf16.gmra.mxu0 %v773
      %v951 = vpop.f32.mrf.mxu0
      %v952 = vadd.f32 0.0, %v951
      %v953 = vpop.f32.mrf.mxu0
      %v954 = vadd.f32 0.0, %v953
      %955 = vmatmul.bf16.gmra.mxu0 %v774
      %v956 = vpop.f32.mrf.mxu0
      %v957 = vadd.f32 0.0, %v956
      %v958 = vpop.f32.mrf.mxu0
      %v959 = vadd.f32 0.0, %v958
      %960 = vmatmul.bf16.gmra.mxu0 %v775
      %v961 = vpop.f32.mrf.mxu0
      %v962 = vadd.f32 0.0, %v961
      %v963 = vpop.f32.mrf.mxu0
      %v964 = vadd.f32 0.0, %v963
      %965 = vmatmul.bf16.gmra.mxu0 %v776
      %v966 = vpop.f32.mrf.mxu0
      %v967 = vadd.f32 0.0, %v966
      %v968 = vpop.f32.mrf.mxu0
      %v969 = vadd.f32 0.0, %v968
      %970 = vmatmul.bf16.gmra.mxu0 %v777
      %v971 = vpop.f32.mrf.mxu0
      %v972 = vadd.f32 0.0, %v971
      %v973 = vpop.f32.mrf.mxu0
      %v974 = vadd.f32 0.0, %v973
      %975 = vmatmul.bf16.gmra.mxu0 %v778
      %v976 = vpop.f32.mrf.mxu0
      %v977 = vadd.f32 0.0, %v976
      %v978 = vpop.f32.mrf.mxu0
      %v979 = vadd.f32 0.0, %v978
      %980 = vmatmul.bf16.gmra.mxu0 %v779
      %v981 = vpop.f32.mrf.mxu0
      %v982 = vadd.f32 0.0, %v981
      %v983 = vpop.f32.mrf.mxu0
      %v984 = vadd.f32 0.0, %v983
      %985 = vmatmul.bf16.gmra.mxu0 %v780
      %v986 = vpop.f32.mrf.mxu0
      %v987 = vadd.f32 0.0, %v986
      %v988 = vpop.f32.mrf.mxu0
      %v989 = vadd.f32 0.0, %v988
      %990 = vmatmul.bf16.gmra.mxu0 %v781
      %v991 = vpop.f32.mrf.mxu0
      %v992 = vadd.f32 0.0, %v991
      %v993 = vpop.f32.mrf.mxu0
      %v994 = vadd.f32 0.0, %v993
      %995 = vmatmul.bf16.gmra.mxu0 %v782
      %v996 = vpop.f32.mrf.mxu0
      %v997 = vadd.f32 0.0, %v996
      %v998 = vpop.f32.mrf.mxu0
      %v999 = vadd.f32 0.0, %v998
      %1000 = vmatmul.bf16.gmra.mxu0 %v783
      %v1001 = vpop.f32.mrf.mxu0
      %v1002 = vadd.f32 0.0, %v1001
      %v1003 = vpop.f32.mrf.mxu0
      %v1004 = vadd.f32 0.0, %v1003
      %1005 = vmatmul.bf16.gmra.mxu0 %v784
      %v1006 = vpop.f32.mrf.mxu0
      %v1007 = vadd.f32 0.0, %v1006
      %v1008 = vpop.f32.mrf.mxu0
      %v1009 = vadd.f32 0.0, %v1008
      %1010 = vmatmul.bf16.gmra.mxu0 %v785
      %v1011 = vpop.f32.mrf.mxu0
      %v1012 = vadd.f32 0.0, %v1011
      %v1013 = vpop.f32.mrf.mxu0
      %v1014 = vadd.f32 0.0, %v1013
      %1015 = vmatmul.bf16.gmra.mxu0 %v786
      %v1016 = vpop.f32.mrf.mxu0
      %v1017 = vadd.f32 0.0, %v1016
      %v1018 = vpop.f32.mrf.mxu0
      %v1019 = vadd.f32 0.0, %v1018
      %1020 = vdwg.mxu0
      %v1021 = vadd.f32 %v836, %v942
      %v1022 = vadd.f32 %v837, %v944
      %v1023 = vadd.f32 %v838, %v947
      %v1024 = vadd.f32 %v839, %v949
      %v1025 = vadd.f32 %v840, %v952
      %v1026 = vadd.f32 %v841, %v954
      %v1027 = vadd.f32 %v842, %v957
      %v1028 = vadd.f32 %v843, %v959
      %v1029 = vadd.f32 %v844, %v962
      %v1030 = vadd.f32 %v845, %v964
      %v1031 = vadd.f32 %v846, %v967
      %v1032 = vadd.f32 %v847, %v969
      %v1033 = vadd.f32 %v848, %v972
      %v1034 = vadd.f32 %v849, %v974
      %v1035 = vadd.f32 %v850, %v977
      %v1036 = vadd.f32 %v851, %v979
      %v1037 = vadd.f32 %v852, %v982
      %v1038 = vadd.f32 %v853, %v984
      %v1039 = vadd.f32 %v854, %v987
      %v1040 = vadd.f32 %v855, %v989
      %v1041 = vadd.f32 %v856, %v992
      %v1042 = vadd.f32 %v857, %v994
      %v1043 = vadd.f32 %v858, %v997
      %v1044 = vadd.f32 %v859, %v999
      %v1045 = vadd.f32 %v860, %v1002
      %v1046 = vadd.f32 %v861, %v1004
      %v1047 = vadd.f32 %v862, %v1007
      %v1048 = vadd.f32 %v863, %v1009
      %v1049 = vadd.f32 %v864, %v1012
      %v1050 = vadd.f32 %v865, %v1014
      %v1051 = vadd.f32 %v866, %v1017
      %v1052 = vadd.f32 %v867, %v1019
      %1053 = vst [vmem:[#allocation2] sm:$0xff] %v1021
      %1054 = vst [vmem:[#allocation2 + $0x8] sm:$0xff] %v1022
      %1055 = vst [vmem:[#allocation2 + $0x10] sm:$0xff] %v1023
      %1056 = vst [vmem:[#allocation2 + $0x18] sm:$0xff] %v1024
      %1057 = vst [vmem:[#allocation2 + $0x20] sm:$0xff] %v1025
      %1058 = vst [vmem:[#allocation2 + $0x28] sm:$0xff] %v1026
      %1059 = vst [vmem:[#allocation2 + $0x30] sm:$0xff] %v1027
      %1060 = vst [vmem:[#allocation2 + $0x38] sm:$0xff] %v1028
      %1061 = vst [vmem:[#allocation2 + $0x40] sm:$0xff] %v1029
      %1062 = vst [vmem:[#allocation2 + $0x48] sm:$0xff] %v1030
      %1063 = vst [vmem:[#allocation2 + $0x50] sm:$0xff] %v1031
      %1064 = vst [vmem:[#allocation2 + $0x58] sm:$0xff] %v1032
      %1065 = vst [vmem:[#allocation2 + $0x60] sm:$0xff] %v1033
      %1066 = vst [vmem:[#allocation2 + $0x68] sm:$0xff] %v1034
      %1067 = vst [vmem:[#allocation2 + $0x70] sm:$0xff] %v1035
      %1068 = vst [vmem:[#allocation2 + $0x78] sm:$0xff] %v1036
      %1069 = vst [vmem:[#allocation2 + $0x80] sm:$0xff] %v1037
      %1070 = vst [vmem:[#allocation2 + $0x88] sm:$0xff] %v1038
      %1071 = vst [vmem:[#allocation2 + $0x90] sm:$0xff] %v1039
      %1072 = vst [vmem:[#allocation2 + $0x98] sm:$0xff] %v1040
      %1073 = vst [vmem:[#allocation2 + $0xa0] sm:$0xff] %v1041
      %1074 = vst [vmem:[#allocation2 + $0xa8] sm:$0xff] %v1042
      %1075 = vst [vmem:[#allocation2 + $0xb0] sm:$0xff] %v1043
      %1076 = vst [vmem:[#allocation2 + $0xb8] sm:$0xff] %v1044
      %1077 = vst [vmem:[#allocation2 + $0xc0] sm:$0xff] %v1045
      %1078 = vst [vmem:[#allocation2 + $0xc8] sm:$0xff] %v1046
      %1079 = vst [vmem:[#allocation2 + $0xd0] sm:$0xff] %v1047
      %1080 = vst [vmem:[#allocation2 + $0xd8] sm:$0xff] %v1048
      %1081 = vst [vmem:[#allocation2 + $0xe0] sm:$0xff] %v1049
      %1082 = vst [vmem:[#allocation2 + $0xe8] sm:$0xff] %v1050
      %1083 = vst [vmem:[#allocation2 + $0xf0] sm:$0xff] %v1051
      %1084 = vst [vmem:[#allocation2 + $0xf8] sm:$0xff] %v1052
      %v1085 = vld [vmem:[#allocation2] sm:$0xff]
      %v1086 = vld [vmem:[#allocation2 + $0x8] sm:$0xff]
      %v1087 = vld [vmem:[#allocation2 + $0x10] sm:$0xff]
      %v1088 = vld [vmem:[#allocation2 + $0x18] sm:$0xff]
      %v1089 = vld [vmem:[#allocation2 + $0x20] sm:$0xff]
      %v1090 = vld [vmem:[#allocation2 + $0x28] sm:$0xff]
      %v1091 = vld [vmem:[#allocation2 + $0x30] sm:$0xff]
      %v1092 = vld [vmem:[#allocation2 + $0x38] sm:$0xff]
      %v1093 = vld [vmem:[#allocation2 + $0x40] sm:$0xff]
      %v1094 = vld [vmem:[#allocation2 + $0x48] sm:$0xff]
      %v1095 = vld [vmem:[#allocation2 + $0x50] sm:$0xff]
      %v1096 = vld [vmem:[#allocation2 + $0x58] sm:$0xff]
      %v1097 = vld [vmem:[#allocation2 + $0x60] sm:$0xff]
      %v1098 = vld [vmem:[#allocation2 + $0x68] sm:$0xff]
      %v1099 = vld [vmem:[#allocation2 + $0x70] sm:$0xff]
      %v1100 = vld [vmem:[#allocation2 + $0x78] sm:$0xff]
      %v1101 = vld [vmem:[#allocation2 + $0x80] sm:$0xff]
      %v1102 = vld [vmem:[#allocation2 + $0x88] sm:$0xff]
      %v1103 = vld [vmem:[#allocation2 + $0x90] sm:$0xff]
      %v1104 = vld [vmem:[#allocation2 + $0x98] sm:$0xff]
      %v1105 = vld [vmem:[#allocation2 + $0xa0] sm:$0xff]
      %v1106 = vld [vmem:[#allocation2 + $0xa8] sm:$0xff]
      %v1107 = vld [vmem:[#allocation2 + $0xb0] sm:$0xff]
      %v1108 = vld [vmem:[#allocation2 + $0xb8] sm:$0xff]
      %v1109 = vld [vmem:[#allocation2 + $0xc0] sm:$0xff]
      %v1110 = vld [vmem:[#allocation2 + $0xc8] sm:$0xff]
      %v1111 = vld [vmem:[#allocation2 + $0xd0] sm:$0xff]
      %v1112 = vld [vmem:[#allocation2 + $0xd8] sm:$0xff]
      %v1113 = vld [vmem:[#allocation2 + $0xe0] sm:$0xff]
      %v1114 = vld [vmem:[#allocation2 + $0xe8] sm:$0xff]
      %v1115 = vld [vmem:[#allocation2 + $0xf0] sm:$0xff]
      %v1116 = vld [vmem:[#allocation2 + $0xf8] sm:$0xff]
      %vm1117 = vsmask.f32 7424
      %v1119 = vshrl.u32 0, 16
      %v1121 = vshll.u32 0, 16
      %v1123 = vrot.slane %v1121, 1
      %v1124 = vor.u32 %v1119, %v1123
      %v1125 = vsel %vm1117, %v1124, %v1123
      %v1127 = vshrl.u32 %v772, 16
      %v1129 = vshll.u32 %v772, 16
      %v1131 = vrot.slane %v1129, 1
      %v1132 = vor.u32 %v1127, %v1131
      %v1134 = vshll.u32 %v788, 16
      %v1136 = vrot.slane %v1134, 1
      %v1137 = vsel %vm1117, %v1132, %v1136
      %v1139 = vshrl.u32 %v773, 16
      %v1141 = vshll.u32 %v773, 16
      %v1143 = vrot.slane %v1141, 1
      %v1144 = vor.u32 %v1139, %v1143
      %v1146 = vshll.u32 %v789, 16
      %v1148 = vrot.slane %v1146, 1
      %v1149 = vsel %vm1117, %v1144, %v1148
      %v1151 = vshrl.u32 %v774, 16
      %v1153 = vshll.u32 %v774, 16
      %v1155 = vrot.slane %v1153, 1
      %v1156 = vor.u32 %v1151, %v1155
      %v1158 = vshll.u32 %v790, 16
      %v1160 = vrot.slane %v1158, 1
      %v1161 = vsel %vm1117, %v1156, %v1160
      %v1163 = vshrl.u32 %v775, 16
      %v1165 = vshll.u32 %v775, 16
      %v1167 = vrot.slane %v1165, 1
      %v1168 = vor.u32 %v1163, %v1167
      %v1170 = vshll.u32 %v791, 16
      %v1172 = vrot.slane %v1170, 1
      %v1173 = vsel %vm1117, %v1168, %v1172
      %v1175 = vshrl.u32 %v776, 16
      %v1177 = vshll.u32 %v776, 16
      %v1179 = vrot.slane %v1177, 1
      %v1180 = vor.u32 %v1175, %v1179
      %v1182 = vshll.u32 %v792, 16
      %v1184 = vrot.slane %v1182, 1
      %v1185 = vsel %vm1117, %v1180, %v1184
      %v1187 = vshrl.u32 %v777, 16
      %v1189 = vshll.u32 %v777, 16
      %v1191 = vrot.slane %v1189, 1
      %v1192 = vor.u32 %v1187, %v1191
      %v1194 = vshll.u32 %v793, 16
      %v1196 = vrot.slane %v1194, 1
      %v1197 = vsel %vm1117, %v1192, %v1196
      %v1199 = vshrl.u32 %v778, 16
      %v1201 = vshll.u32 %v778, 16
      %v1203 = vrot.slane %v1201, 1
      %v1204 = vor.u32 %v1199, %v1203
      %v1206 = vshll.u32 %v794, 16
      %v1208 = vrot.slane %v1206, 1
      %v1209 = vsel %vm1117, %v1204, %v1208
      %v1211 = vshrl.u32 %v779, 16
      %v1213 = vshll.u32 %v779, 16
      %v1215 = vrot.slane %v1213, 1
      %v1216 = vor.u32 %v1211, %v1215
      %v1218 = vshll.u32 %v795, 16
      %v1220 = vrot.slane %v1218, 1
      %v1221 = vsel %vm1117, %v1216, %v1220
      %v1223 = vshrl.u32 %v780, 16
      %v1225 = vshll.u32 %v780, 16
      %v1227 = vrot.slane %v1225, 1
      %v1228 = vor.u32 %v1223, %v1227
      %v1230 = vshll.u32 %v796, 16
      %v1232 = vrot.slane %v1230, 1
      %v1233 = vsel %vm1117, %v1228, %v1232
      %v1235 = vshrl.u32 %v781, 16
      %v1237 = vshll.u32 %v781, 16
      %v1239 = vrot.slane %v1237, 1
      %v1240 = vor.u32 %v1235, %v1239
      %v1242 = vshll.u32 %v797, 16
      %v1244 = vrot.slane %v1242, 1
      %v1245 = vsel %vm1117, %v1240, %v1244
      %v1247 = vshrl.u32 %v782, 16
      %v1249 = vshll.u32 %v782, 16
      %v1251 = vrot.slane %v1249, 1
      %v1252 = vor.u32 %v1247, %v1251
      %v1254 = vshll.u32 %v798, 16
      %v1256 = vrot.slane %v1254, 1
      %v1257 = vsel %vm1117, %v1252, %v1256
      %v1259 = vshrl.u32 %v783, 16
      %v1261 = vshll.u32 %v783, 16
      %v1263 = vrot.slane %v1261, 1
      %v1264 = vor.u32 %v1259, %v1263
      %v1266 = vshll.u32 %v799, 16
      %v1268 = vrot.slane %v1266, 1
      %v1269 = vsel %vm1117, %v1264, %v1268
      %v1271 = vshrl.u32 %v784, 16
      %v1273 = vshll.u32 %v784, 16
      %v1275 = vrot.slane %v1273, 1
      %v1276 = vor.u32 %v1271, %v1275
      %v1278 = vshll.u32 %v800, 16
      %v1280 = vrot.slane %v1278, 1
      %v1281 = vsel %vm1117, %v1276, %v1280
      %v1283 = vshrl.u32 %v785, 16
      %v1285 = vshll.u32 %v785, 16
      %v1287 = vrot.slane %v1285, 1
      %v1288 = vor.u32 %v1283, %v1287
      %v1290 = vshll.u32 %v801, 16
      %v1292 = vrot.slane %v1290, 1
      %v1293 = vsel %vm1117, %v1288, %v1292
      %v1295 = vshrl.u32 %v786, 16
      %v1297 = vshll.u32 %v786, 16
      %v1299 = vrot.slane %v1297, 1
      %v1300 = vor.u32 %v1295, %v1299
      %v1302 = vshll.u32 %v802, 16
      %v1304 = vrot.slane %v1302, 1
      %v1305 = vsel %vm1117, %v1300, %v1304
      %s1322 = scalar_lea.vmem %s5, 64
      %v1323 = vld [vmem:[%s1322] sm:$0xf]
      %v1324 = vld [vmem:[%s1322 + $0x4] sm:$0xf]
      %v1325 = vld [vmem:[%s1322 + $0x8] sm:$0xf]
      %v1326 = vld [vmem:[%s1322 + $0xc] sm:$0xf]
      %v1327 = vld [vmem:[%s1322 + $0x10] sm:$0xf]
      %v1328 = vld [vmem:[%s1322 + $0x14] sm:$0xf]
      %v1329 = vld [vmem:[%s1322 + $0x18] sm:$0xf]
      %v1330 = vld [vmem:[%s1322 + $0x1c] sm:$0xf]
      %v1331 = vld [vmem:[%s1322 + $0x20] sm:$0xf]
      %v1332 = vld [vmem:[%s1322 + $0x24] sm:$0xf]
      %v1333 = vld [vmem:[%s1322 + $0x28] sm:$0xf]
      %v1334 = vld [vmem:[%s1322 + $0x2c] sm:$0xf]
      %v1335 = vld [vmem:[%s1322 + $0x30] sm:$0xf]
      %v1336 = vld [vmem:[%s1322 + $0x34] sm:$0xf]
      %v1337 = vld [vmem:[%s1322 + $0x38] sm:$0xf]
      %v1338 = vld [vmem:[%s1322 + $0x3c] sm:$0xf]
      %v1355 = vunpack.c.l.b16 %v1323
      %v1356 = vunpack.c.l.b16 %v1324
      %v1357 = vunpack.c.l.b16 %v1325
      %v1358 = vunpack.c.l.b16 %v1326
      %v1359 = vunpack.c.l.b16 %v1327
      %v1360 = vunpack.c.l.b16 %v1328
      %v1361 = vunpack.c.l.b16 %v1329
      %v1362 = vunpack.c.l.b16 %v1330
      %v1363 = vunpack.c.l.b16 %v1331
      %v1364 = vunpack.c.l.b16 %v1332
      %v1365 = vunpack.c.l.b16 %v1333
      %v1366 = vunpack.c.l.b16 %v1334
      %v1367 = vunpack.c.l.b16 %v1335
      %v1368 = vunpack.c.l.b16 %v1336
      %v1369 = vunpack.c.l.b16 %v1337
      %v1370 = vunpack.c.l.b16 %v1338
      %v1371 = vpack.c.b16 %v1356, %v1355
      %v1372 = vpack.c.b16 %v1358, %v1357
      %v1373 = vpack.c.b16 %v1360, %v1359
      %v1374 = vpack.c.b16 %v1362, %v1361
      %v1375 = vpack.c.b16 %v1364, %v1363
      %v1376 = vpack.c.b16 %v1366, %v1365
      %v1377 = vpack.c.b16 %v1368, %v1367
      %v1378 = vpack.c.b16 %v1370, %v1369
      %1387 = vmatpush.bf16.msra.mxu0 %v1378
      %1388 = vmatpush.bf16.msra.mxu0 %v1377
      %1389 = vmatpush.bf16.msra.mxu0 %v1376
      %1390 = vmatpush.bf16.msra.mxu0 %v1375
      %1391 = vmatpush.bf16.msra.mxu0 %v1374
      %1392 = vmatpush.bf16.msra.mxu0 %v1373
      %1393 = vmatpush.bf16.msra.mxu0 %v1372
      %1394 = vmatpush.bf16.msra.mxu0 %v1371
      %1395 = vmatmul.bf16.gmra.mxu0 %v1125
      %v1396 = vpop.f32.mrf.mxu0
      %v1397 = vadd.f32 0.0, %v1396
      %v1398 = vpop.f32.mrf.mxu0
      %v1399 = vadd.f32 0.0, %v1398
      %1400 = vmatmul.bf16.gmra.mxu0 %v1137
      %v1401 = vpop.f32.mrf.mxu0
      %v1402 = vadd.f32 0.0, %v1401
      %v1403 = vpop.f32.mrf.mxu0
      %v1404 = vadd.f32 0.0, %v1403
      %1405 = vmatmul.bf16.gmra.mxu0 %v1149
      %v1406 = vpop.f32.mrf.mxu0
      %v1407 = vadd.f32 0.0, %v1406
      %v1408 = vpop.f32.mrf.mxu0
      %v1409 = vadd.f32 0.0, %v1408
      %1410 = vmatmul.bf16.gmra.mxu0 %v1161
      %v1411 = vpop.f32.mrf.mxu0
      %v1412 = vadd.f32 0.0, %v1411
      %v1413 = vpop.f32.mrf.mxu0
      %v1414 = vadd.f32 0.0, %v1413
      %1415 = vmatmul.bf16.gmra.mxu0 %v1173
      %v1416 = vpop.f32.mrf.mxu0
      %v1417 = vadd.f32 0.0, %v1416
      %v1418 = vpop.f32.mrf.mxu0
      %v1419 = vadd.f32 0.0, %v1418
      %1420 = vmatmul.bf16.gmra.mxu0 %v1185
      %v1421 = vpop.f32.mrf.mxu0
      %v1422 = vadd.f32 0.0, %v1421
      %v1423 = vpop.f32.mrf.mxu0
      %v1424 = vadd.f32 0.0, %v1423
      %1425 = vmatmul.bf16.gmra.mxu0 %v1197
      %v1426 = vpop.f32.mrf.mxu0
      %v1427 = vadd.f32 0.0, %v1426
      %v1428 = vpop.f32.mrf.mxu0
      %v1429 = vadd.f32 0.0, %v1428
      %1430 = vmatmul.bf16.gmra.mxu0 %v1209
      %v1431 = vpop.f32.mrf.mxu0
      %v1432 = vadd.f32 0.0, %v1431
      %v1433 = vpop.f32.mrf.mxu0
      %v1434 = vadd.f32 0.0, %v1433
      %1435 = vmatmul.bf16.gmra.mxu0 %v1221
      %v1436 = vpop.f32.mrf.mxu0
      %v1437 = vadd.f32 0.0, %v1436
      %v1438 = vpop.f32.mrf.mxu0
      %v1439 = vadd.f32 0.0, %v1438
      %1440 = vmatmul.bf16.gmra.mxu0 %v1233
      %v1441 = vpop.f32.mrf.mxu0
      %v1442 = vadd.f32 0.0, %v1441
      %v1443 = vpop.f32.mrf.mxu0
      %v1444 = vadd.f32 0.0, %v1443
      %1445 = vmatmul.bf16.gmra.mxu0 %v1245
      %v1446 = vpop.f32.mrf.mxu0
      %v1447 = vadd.f32 0.0, %v1446
      %v1448 = vpop.f32.mrf.mxu0
      %v1449 = vadd.f32 0.0, %v1448
      %1450 = vmatmul.bf16.gmra.mxu0 %v1257
      %v1451 = vpop.f32.mrf.mxu0
      %v1452 = vadd.f32 0.0, %v1451
      %v1453 = vpop.f32.mrf.mxu0
      %v1454 = vadd.f32 0.0, %v1453
      %1455 = vmatmul.bf16.gmra.mxu0 %v1269
      %v1456 = vpop.f32.mrf.mxu0
      %v1457 = vadd.f32 0.0, %v1456
      %v1458 = vpop.f32.mrf.mxu0
      %v1459 = vadd.f32 0.0, %v1458
      %1460 = vmatmul.bf16.gmra.mxu0 %v1281
      %v1461 = vpop.f32.mrf.mxu0
      %v1462 = vadd.f32 0.0, %v1461
      %v1463 = vpop.f32.mrf.mxu0
      %v1464 = vadd.f32 0.0, %v1463
      %1465 = vmatmul.bf16.gmra.mxu0 %v1293
      %v1466 = vpop.f32.mrf.mxu0
      %v1467 = vadd.f32 0.0, %v1466
      %v1468 = vpop.f32.mrf.mxu0
      %v1469 = vadd.f32 0.0, %v1468
      %1470 = vmatmul.bf16.gmra.mxu0 %v1305
      %v1471 = vpop.f32.mrf.mxu0
      %v1472 = vadd.f32 0.0, %v1471
      %v1473 = vpop.f32.mrf.mxu0
      %v1474 = vadd.f32 0.0, %v1473
      %1475 = vdwg.mxu0
      %v1476 = vadd.f32 %v1085, %v1397
      %v1477 = vadd.f32 %v1086, %v1399
      %v1478 = vadd.f32 %v1087, %v1402
      %v1479 = vadd.f32 %v1088, %v1404
      %v1480 = vadd.f32 %v1089, %v1407
      %v1481 = vadd.f32 %v1090, %v1409
      %v1482 = vadd.f32 %v1091, %v1412
      %v1483 = vadd.f32 %v1092, %v1414
      %v1484 = vadd.f32 %v1093, %v1417
      %v1485 = vadd.f32 %v1094, %v1419
      %v1486 = vadd.f32 %v1095, %v1422
      %v1487 = vadd.f32 %v1096, %v1424
      %v1488 = vadd.f32 %v1097, %v1427
      %v1489 = vadd.f32 %v1098, %v1429
      %v1490 = vadd.f32 %v1099, %v1432
      %v1491 = vadd.f32 %v1100, %v1434
      %v1492 = vadd.f32 %v1101, %v1437
      %v1493 = vadd.f32 %v1102, %v1439
      %v1494 = vadd.f32 %v1103, %v1442
      %v1495 = vadd.f32 %v1104, %v1444
      %v1496 = vadd.f32 %v1105, %v1447
      %v1497 = vadd.f32 %v1106, %v1449
      %v1498 = vadd.f32 %v1107, %v1452
      %v1499 = vadd.f32 %v1108, %v1454
      %v1500 = vadd.f32 %v1109, %v1457
      %v1501 = vadd.f32 %v1110, %v1459
      %v1502 = vadd.f32 %v1111, %v1462
      %v1503 = vadd.f32 %v1112, %v1464
      %v1504 = vadd.f32 %v1113, %v1467
      %v1505 = vadd.f32 %v1114, %v1469
      %v1506 = vadd.f32 %v1115, %v1472
      %v1507 = vadd.f32 %v1116, %v1474
      %1508 = vst [vmem:[#allocation2] sm:$0xff] %v1476
      %1509 = vst [vmem:[#allocation2 + $0x8] sm:$0xff] %v1477
      %1510 = vst [vmem:[#allocation2 + $0x10] sm:$0xff] %v1478
      %1511 = vst [vmem:[#allocation2 + $0x18] sm:$0xff] %v1479
      %1512 = vst [vmem:[#allocation2 + $0x20] sm:$0xff] %v1480
      %1513 = vst [vmem:[#allocation2 + $0x28] sm:$0xff] %v1481
      %1514 = vst [vmem:[#allocation2 + $0x30] sm:$0xff] %v1482
      %1515 = vst [vmem:[#allocation2 + $0x38] sm:$0xff] %v1483
      %1516 = vst [vmem:[#allocation2 + $0x40] sm:$0xff] %v1484
      %1517 = vst [vmem:[#allocation2 + $0x48] sm:$0xff] %v1485
      %1518 = vst [vmem:[#allocation2 + $0x50] sm:$0xff] %v1486
      %1519 = vst [vmem:[#allocation2 + $0x58] sm:$0xff] %v1487
      %1520 = vst [vmem:[#allocation2 + $0x60] sm:$0xff] %v1488
      %1521 = vst [vmem:[#allocation2 + $0x68] sm:$0xff] %v1489
      %1522 = vst [vmem:[#allocation2 + $0x70] sm:$0xff] %v1490
      %1523 = vst [vmem:[#allocation2 + $0x78] sm:$0xff] %v1491
      %1524 = vst [vmem:[#allocation2 + $0x80] sm:$0xff] %v1492
      %1525 = vst [vmem:[#allocation2 + $0x88] sm:$0xff] %v1493
      %1526 = vst [vmem:[#allocation2 + $0x90] sm:$0xff] %v1494
      %1527 = vst [vmem:[#allocation2 + $0x98] sm:$0xff] %v1495
      %1528 = vst [vmem:[#allocation2 + $0xa0] sm:$0xff] %v1496
      %1529 = vst [vmem:[#allocation2 + $0xa8] sm:$0xff] %v1497
      %1530 = vst [vmem:[#allocation2 + $0xb0] sm:$0xff] %v1498
      %1531 = vst [vmem:[#allocation2 + $0xb8] sm:$0xff] %v1499
      %1532 = vst [vmem:[#allocation2 + $0xc0] sm:$0xff] %v1500
      %1533 = vst [vmem:[#allocation2 + $0xc8] sm:$0xff] %v1501
      %1534 = vst [vmem:[#allocation2 + $0xd0] sm:$0xff] %v1502
      %1535 = vst [vmem:[#allocation2 + $0xd8] sm:$0xff] %v1503
      %1536 = vst [vmem:[#allocation2 + $0xe0] sm:$0xff] %v1504
      %1537 = vst [vmem:[#allocation2 + $0xe8] sm:$0xff] %v1505
      %1538 = vst [vmem:[#allocation2 + $0xf0] sm:$0xff] %v1506
      %1539 = vst [vmem:[#allocation2 + $0xf8] sm:$0xff] %v1507
      %v1540 = vld [vmem:[#allocation2] sm:$0xff]
      %v1541 = vld [vmem:[#allocation2 + $0x8] sm:$0xff]
      %v1542 = vld [vmem:[#allocation2 + $0x10] sm:$0xff]
      %v1543 = vld [vmem:[#allocation2 + $0x18] sm:$0xff]
      %v1544 = vld [vmem:[#allocation2 + $0x20] sm:$0xff]
      %v1545 = vld [vmem:[#allocation2 + $0x28] sm:$0xff]
      %v1546 = vld [vmem:[#allocation2 + $0x30] sm:$0xff]
      %v1547 = vld [vmem:[#allocation2 + $0x38] sm:$0xff]
      %v1548 = vld [vmem:[#allocation2 + $0x40] sm:$0xff]
      %v1549 = vld [vmem:[#allocation2 + $0x48] sm:$0xff]
      %v1550 = vld [vmem:[#allocation2 + $0x50] sm:$0xff]
      %v1551 = vld [vmem:[#allocation2 + $0x58] sm:$0xff]
      %v1552 = vld [vmem:[#allocation2 + $0x60] sm:$0xff]
      %v1553 = vld [vmem:[#allocation2 + $0x68] sm:$0xff]
      %v1554 = vld [vmem:[#allocation2 + $0x70] sm:$0xff]
      %v1555 = vld [vmem:[#allocation2 + $0x78] sm:$0xff]
      %v1556 = vld [vmem:[#allocation2 + $0x80] sm:$0xff]
      %v1557 = vld [vmem:[#allocation2 + $0x88] sm:$0xff]
      %v1558 = vld [vmem:[#allocation2 + $0x90] sm:$0xff]
      %v1559 = vld [vmem:[#allocation2 + $0x98] sm:$0xff]
      %v1560 = vld [vmem:[#allocation2 + $0xa0] sm:$0xff]
      %v1561 = vld [vmem:[#allocation2 + $0xa8] sm:$0xff]
      %v1562 = vld [vmem:[#allocation2 + $0xb0] sm:$0xff]
      %v1563 = vld [vmem:[#allocation2 + $0xb8] sm:$0xff]
      %v1564 = vld [vmem:[#allocation2 + $0xc0] sm:$0xff]
      %v1565 = vld [vmem:[#allocation2 + $0xc8] sm:$0xff]
      %v1566 = vld [vmem:[#allocation2 + $0xd0] sm:$0xff]
      %v1567 = vld [vmem:[#allocation2 + $0xd8] sm:$0xff]
      %v1568 = vld [vmem:[#allocation2 + $0xe0] sm:$0xff]
      %v1569 = vld [vmem:[#allocation2 + $0xe8] sm:$0xff]
      %v1570 = vld [vmem:[#allocation2 + $0xf0] sm:$0xff]
      %v1571 = vld [vmem:[#allocation2 + $0xf8] sm:$0xff]
      %vm1603 = vcmask 1046528
      %v1604 = vrot.slane 0, 1
      %v1605 = vsel %vm1603, %v1604, %v1604
      %v1606 = vrot.slane %v772, 1
      %v1607 = vrot.slane %v788, 1
      %v1608 = vsel %vm1603, %v1606, %v1607
      %v1609 = vrot.slane %v773, 1
      %v1610 = vrot.slane %v789, 1
      %v1611 = vsel %vm1603, %v1609, %v1610
      %v1612 = vrot.slane %v774, 1
      %v1613 = vrot.slane %v790, 1
      %v1614 = vsel %vm1603, %v1612, %v1613
      %v1615 = vrot.slane %v775, 1
      %v1616 = vrot.slane %v791, 1
      %v1617 = vsel %vm1603, %v1615, %v1616
      %v1618 = vrot.slane %v776, 1
      %v1619 = vrot.slane %v792, 1
      %v1620 = vsel %vm1603, %v1618, %v1619
      %v1621 = vrot.slane %v777, 1
      %v1622 = vrot.slane %v793, 1
      %v1623 = vsel %vm1603, %v1621, %v1622
      %v1624 = vrot.slane %v778, 1
      %v1625 = vrot.slane %v794, 1
      %v1626 = vsel %vm1603, %v1624, %v1625
      %v1627 = vrot.slane %v779, 1
      %v1628 = vrot.slane %v795, 1
      %v1629 = vsel %vm1603, %v1627, %v1628
      %v1630 = vrot.slane %v780, 1
      %v1631 = vrot.slane %v796, 1
      %v1632 = vsel %vm1603, %v1630, %v1631
      %v1633 = vrot.slane %v781, 1
      %v1634 = vrot.slane %v797, 1
      %v1635 = vsel %vm1603, %v1633, %v1634
      %v1636 = vrot.slane %v782, 1
      %v1637 = vrot.slane %v798, 1
      %v1638 = vsel %vm1603, %v1636, %v1637
      %v1639 = vrot.slane %v783, 1
      %v1640 = vrot.slane %v799, 1
      %v1641 = vsel %vm1603, %v1639, %v1640
      %v1642 = vrot.slane %v784, 1
      %v1643 = vrot.slane %v800, 1
      %v1644 = vsel %vm1603, %v1642, %v1643
      %v1645 = vrot.slane %v785, 1
      %v1646 = vrot.slane %v801, 1
      %v1647 = vsel %vm1603, %v1645, %v1646
      %v1648 = vrot.slane %v786, 1
      %v1649 = vrot.slane %v802, 1
      %v1650 = vsel %vm1603, %v1648, %v1649
      %s1667 = scalar_lea.vmem %s5, 128
      %v1668 = vld [vmem:[%s1667] sm:$0xf]
      %v1669 = vld [vmem:[%s1667 + $0x4] sm:$0xf]
      %v1670 = vld [vmem:[%s1667 + $0x8] sm:$0xf]
      %v1671 = vld [vmem:[%s1667 + $0xc] sm:$0xf]
      %v1672 = vld [vmem:[%s1667 + $0x10] sm:$0xf]
      %v1673 = vld [vmem:[%s1667 + $0x14] sm:$0xf]
      %v1674 = vld [vmem:[%s1667 + $0x18] sm:$0xf]
      %v1675 = vld [vmem:[%s1667 + $0x1c] sm:$0xf]
      %v1676 = vld [vmem:[%s1667 + $0x20] sm:$0xf]
      %v1677 = vld [vmem:[%s1667 + $0x24] sm:$0xf]
      %v1678 = vld [vmem:[%s1667 + $0x28] sm:$0xf]
      %v1679 = vld [vmem:[%s1667 + $0x2c] sm:$0xf]
      %v1680 = vld [vmem:[%s1667 + $0x30] sm:$0xf]
      %v1681 = vld [vmem:[%s1667 + $0x34] sm:$0xf]
      %v1682 = vld [vmem:[%s1667 + $0x38] sm:$0xf]
      %v1683 = vld [vmem:[%s1667 + $0x3c] sm:$0xf]
      %v1700 = vunpack.c.l.b16 %v1668
      %v1701 = vunpack.c.l.b16 %v1669
      %v1702 = vunpack.c.l.b16 %v1670
      %v1703 = vunpack.c.l.b16 %v1671
      %v1704 = vunpack.c.l.b16 %v1672
      %v1705 = vunpack.c.l.b16 %v1673
      %v1706 = vunpack.c.l.b16 %v1674
      %v1707 = vunpack.c.l.b16 %v1675
      %v1708 = vunpack.c.l.b16 %v1676
      %v1709 = vunpack.c.l.b16 %v1677
      %v1710 = vunpack.c.l.b16 %v1678
      %v1711 = vunpack.c.l.b16 %v1679
      %v1712 = vunpack.c.l.b16 %v1680
      %v1713 = vunpack.c.l.b16 %v1681
      %v1714 = vunpack.c.l.b16 %v1682
      %v1715 = vunpack.c.l.b16 %v1683
      %v1716 = vpack.c.b16 %v1701, %v1700
      %v1717 = vpack.c.b16 %v1703, %v1702
      %v1718 = vpack.c.b16 %v1705, %v1704
      %v1719 = vpack.c.b16 %v1707, %v1706
      %v1720 = vpack.c.b16 %v1709, %v1708
      %v1721 = vpack.c.b16 %v1711, %v1710
      %v1722 = vpack.c.b16 %v1713, %v1712
      %v1723 = vpack.c.b16 %v1715, %v1714
      %1732 = vmatpush.bf16.msra.mxu0 %v1723
      %1733 = vmatpush.bf16.msra.mxu0 %v1722
      %1734 = vmatpush.bf16.msra.mxu0 %v1721
      %1735 = vmatpush.bf16.msra.mxu0 %v1720
      %1736 = vmatpush.bf16.msra.mxu0 %v1719
      %1737 = vmatpush.bf16.msra.mxu0 %v1718
      %1738 = vmatpush.bf16.msra.mxu0 %v1717
      %1739 = vmatpush.bf16.msra.mxu0 %v1716
      %1740 = vmatmul.bf16.gmra.mxu0 %v1605
      %v1741 = vpop.f32.mrf.mxu0
      %v1742 = vadd.f32 0.0, %v1741
      %v1743 = vpop.f32.mrf.mxu0
      %v1744 = vadd.f32 0.0, %v1743
      %1745 = vmatmul.bf16.gmra.mxu0 %v1608
      %v1746 = vpop.f32.mrf.mxu0
      %v1747 = vadd.f32 0.0, %v1746
      %v1748 = vpop.f32.mrf.mxu0
      %v1749 = vadd.f32 0.0, %v1748
      %1750 = vmatmul.bf16.gmra.mxu0 %v1611
      %v1751 = vpop.f32.mrf.mxu0
      %v1752 = vadd.f32 0.0, %v1751
      %v1753 = vpop.f32.mrf.mxu0
      %v1754 = vadd.f32 0.0, %v1753
      %1755 = vmatmul.bf16.gmra.mxu0 %v1614
      %v1756 = vpop.f32.mrf.mxu0
      %v1757 = vadd.f32 0.0, %v1756
      %v1758 = vpop.f32.mrf.mxu0
      %v1759 = vadd.f32 0.0, %v1758
      %1760 = vmatmul.bf16.gmra.mxu0 %v1617
      %v1761 = vpop.f32.mrf.mxu0
      %v1762 = vadd.f32 0.0, %v1761
      %v1763 = vpop.f32.mrf.mxu0
      %v1764 = vadd.f32 0.0, %v1763
      %1765 = vmatmul.bf16.gmra.mxu0 %v1620
      %v1766 = vpop.f32.mrf.mxu0
      %v1767 = vadd.f32 0.0, %v1766
      %v1768 = vpop.f32.mrf.mxu0
      %v1769 = vadd.f32 0.0, %v1768
      %1770 = vmatmul.bf16.gmra.mxu0 %v1623
      %v1771 = vpop.f32.mrf.mxu0
      %v1772 = vadd.f32 0.0, %v1771
      %v1773 = vpop.f32.mrf.mxu0
      %v1774 = vadd.f32 0.0, %v1773
      %1775 = vmatmul.bf16.gmra.mxu0 %v1626
      %v1776 = vpop.f32.mrf.mxu0
      %v1777 = vadd.f32 0.0, %v1776
      %v1778 = vpop.f32.mrf.mxu0
      %v1779 = vadd.f32 0.0, %v1778
      %1780 = vmatmul.bf16.gmra.mxu0 %v1629
      %v1781 = vpop.f32.mrf.mxu0
      %v1782 = vadd.f32 0.0, %v1781
      %v1783 = vpop.f32.mrf.mxu0
      %v1784 = vadd.f32 0.0, %v1783
      %1785 = vmatmul.bf16.gmra.mxu0 %v1632
      %v1786 = vpop.f32.mrf.mxu0
      %v1787 = vadd.f32 0.0, %v1786
      %v1788 = vpop.f32.mrf.mxu0
      %v1789 = vadd.f32 0.0, %v1788
      %1790 = vmatmul.bf16.gmra.mxu0 %v1635
      %v1791 = vpop.f32.mrf.mxu0
      %v1792 = vadd.f32 0.0, %v1791
      %v1793 = vpop.f32.mrf.mxu0
      %v1794 = vadd.f32 0.0, %v1793
      %1795 = vmatmul.bf16.gmra.mxu0 %v1638
      %v1796 = vpop.f32.mrf.mxu0
      %v1797 = vadd.f32 0.0, %v1796
      %v1798 = vpop.f32.mrf.mxu0
      %v1799 = vadd.f32 0.0, %v1798
      %1800 = vmatmul.bf16.gmra.mxu0 %v1641
      %v1801 = vpop.f32.mrf.mxu0
      %v1802 = vadd.f32 0.0, %v1801
      %v1803 = vpop.f32.mrf.mxu0
      %v1804 = vadd.f32 0.0, %v1803
      %1805 = vmatmul.bf16.gmra.mxu0 %v1644
      %v1806 = vpop.f32.mrf.mxu0
      %v1807 = vadd.f32 0.0, %v1806
      %v1808 = vpop.f32.mrf.mxu0
      %v1809 = vadd.f32 0.0, %v1808
      %1810 = vmatmul.bf16.gmra.mxu0 %v1647
      %v1811 = vpop.f32.mrf.mxu0
      %v1812 = vadd.f32 0.0, %v1811
      %v1813 = vpop.f32.mrf.mxu0
      %v1814 = vadd.f32 0.0, %v1813
      %1815 = vmatmul.bf16.gmra.mxu0 %v1650
      %v1816 = vpop.f32.mrf.mxu0
      %v1817 = vadd.f32 0.0, %v1816
      %v1818 = vpop.f32.mrf.mxu0
      %v1819 = vadd.f32 0.0, %v1818
      %1820 = vdwg.mxu0
      %v1821 = vadd.f32 %v1540, %v1742
      %v1822 = vadd.f32 %v1541, %v1744
      %v1823 = vadd.f32 %v1542, %v1747
      %v1824 = vadd.f32 %v1543, %v1749
      %v1825 = vadd.f32 %v1544, %v1752
      %v1826 = vadd.f32 %v1545, %v1754
      %v1827 = vadd.f32 %v1546, %v1757
      %v1828 = vadd.f32 %v1547, %v1759
      %v1829 = vadd.f32 %v1548, %v1762
      %v1830 = vadd.f32 %v1549, %v1764
      %v1831 = vadd.f32 %v1550, %v1767
      %v1832 = vadd.f32 %v1551, %v1769
      %v1833 = vadd.f32 %v1552, %v1772
      %v1834 = vadd.f32 %v1553, %v1774
      %v1835 = vadd.f32 %v1554, %v1777
      %v1836 = vadd.f32 %v1555, %v1779
      %v1837 = vadd.f32 %v1556, %v1782
      %v1838 = vadd.f32 %v1557, %v1784
      %v1839 = vadd.f32 %v1558, %v1787
      %v1840 = vadd.f32 %v1559, %v1789
      %v1841 = vadd.f32 %v1560, %v1792
      %v1842 = vadd.f32 %v1561, %v1794
      %v1843 = vadd.f32 %v1562, %v1797
      %v1844 = vadd.f32 %v1563, %v1799
      %v1845 = vadd.f32 %v1564, %v1802
      %v1846 = vadd.f32 %v1565, %v1804
      %v1847 = vadd.f32 %v1566, %v1807
      %v1848 = vadd.f32 %v1567, %v1809
      %v1849 = vadd.f32 %v1568, %v1812
      %v1850 = vadd.f32 %v1569, %v1814
      %v1851 = vadd.f32 %v1570, %v1817
      %v1852 = vadd.f32 %v1571, %v1819
      %1853 = vst [vmem:[#allocation2] sm:$0xff] %v1821
      %1854 = vst [vmem:[#allocation2 + $0x8] sm:$0xff] %v1822
      %1855 = vst [vmem:[#allocation2 + $0x10] sm:$0xff] %v1823
      %1856 = vst [vmem:[#allocation2 + $0x18] sm:$0xff] %v1824
      %1857 = vst [vmem:[#allocation2 + $0x20] sm:$0xff] %v1825
      %1858 = vst [vmem:[#allocation2 + $0x28] sm:$0xff] %v1826
      %1859 = vst [vmem:[#allocation2 + $0x30] sm:$0xff] %v1827
      %1860 = vst [vmem:[#allocation2 + $0x38] sm:$0xff] %v1828
      %1861 = vst [vmem:[#allocation2 + $0x40] sm:$0xff] %v1829
      %1862 = vst [vmem:[#allocation2 + $0x48] sm:$0xff] %v1830
      %1863 = vst [vmem:[#allocation2 + $0x50] sm:$0xff] %v1831
      %1864 = vst [vmem:[#allocation2 + $0x58] sm:$0xff] %v1832
      %1865 = vst [vmem:[#allocation2 + $0x60] sm:$0xff] %v1833
      %1866 = vst [vmem:[#allocation2 + $0x68] sm:$0xff] %v1834
      %1867 = vst [vmem:[#allocation2 + $0x70] sm:$0xff] %v1835
      %1868 = vst [vmem:[#allocation2 + $0x78] sm:$0xff] %v1836
      %1869 = vst [vmem:[#allocation2 + $0x80] sm:$0xff] %v1837
      %1870 = vst [vmem:[#allocation2 + $0x88] sm:$0xff] %v1838
      %1871 = vst [vmem:[#allocation2 + $0x90] sm:$0xff] %v1839
      %1872 = vst [vmem:[#allocation2 + $0x98] sm:$0xff] %v1840
      %1873 = vst [vmem:[#allocation2 + $0xa0] sm:$0xff] %v1841
      %1874 = vst [vmem:[#allocation2 + $0xa8] sm:$0xff] %v1842
      %1875 = vst [vmem:[#allocation2 + $0xb0] sm:$0xff] %v1843
      %1876 = vst [vmem:[#allocation2 + $0xb8] sm:$0xff] %v1844
      %1877 = vst [vmem:[#allocation2 + $0xc0] sm:$0xff] %v1845
      %1878 = vst [vmem:[#allocation2 + $0xc8] sm:$0xff] %v1846
      %1879 = vst [vmem:[#allocation2 + $0xd0] sm:$0xff] %v1847
      %1880 = vst [vmem:[#allocation2 + $0xd8] sm:$0xff] %v1848
      %1881 = vst [vmem:[#allocation2 + $0xe0] sm:$0xff] %v1849
      %1882 = vst [vmem:[#allocation2 + $0xe8] sm:$0xff] %v1850
      %1883 = vst [vmem:[#allocation2 + $0xf0] sm:$0xff] %v1851
      %1884 = vst [vmem:[#allocation2 + $0xf8] sm:$0xff] %v1852
      %v1885 = vld [vmem:[#allocation2] sm:$0xff]
      %v1886 = vld [vmem:[#allocation2 + $0x8] sm:$0xff]
      %v1887 = vld [vmem:[#allocation2 + $0x10] sm:$0xff]
      %v1888 = vld [vmem:[#allocation2 + $0x18] sm:$0xff]
      %v1889 = vld [vmem:[#allocation2 + $0x20] sm:$0xff]
      %v1890 = vld [vmem:[#allocation2 + $0x28] sm:$0xff]
      %v1891 = vld [vmem:[#allocation2 + $0x30] sm:$0xff]
      %v1892 = vld [vmem:[#allocation2 + $0x38] sm:$0xff]
      %v1893 = vld [vmem:[#allocation2 + $0x40] sm:$0xff]
      %v1894 = vld [vmem:[#allocation2 + $0x48] sm:$0xff]
      %v1895 = vld [vmem:[#allocation2 + $0x50] sm:$0xff]
      %v1896 = vld [vmem:[#allocation2 + $0x58] sm:$0xff]
      %v1897 = vld [vmem:[#allocation2 + $0x60] sm:$0xff]
      %v1898 = vld [vmem:[#allocation2 + $0x68] sm:$0xff]
      %v1899 = vld [vmem:[#allocation2 + $0x70] sm:$0xff]
      %v1900 = vld [vmem:[#allocation2 + $0x78] sm:$0xff]
      %v1901 = vld [vmem:[#allocation2 + $0x80] sm:$0xff]
      %v1902 = vld [vmem:[#allocation2 + $0x88] sm:$0xff]
      %v1903 = vld [vmem:[#allocation2 + $0x90] sm:$0xff]
      %v1904 = vld [vmem:[#allocation2 + $0x98] sm:$0xff]
      %v1905 = vld [vmem:[#allocation2 + $0xa0] sm:$0xff]
      %v1906 = vld [vmem:[#allocation2 + $0xa8] sm:$0xff]
      %v1907 = vld [vmem:[#allocation2 + $0xb0] sm:$0xff]
      %v1908 = vld [vmem:[#allocation2 + $0xb8] sm:$0xff]
      %v1909 = vld [vmem:[#allocation2 + $0xc0] sm:$0xff]
      %v1910 = vld [vmem:[#allocation2 + $0xc8] sm:$0xff]
      %v1911 = vld [vmem:[#allocation2 + $0xd0] sm:$0xff]
      %v1912 = vld [vmem:[#allocation2 + $0xd8] sm:$0xff]
      %v1913 = vld [vmem:[#allocation2 + $0xe0] sm:$0xff]
      %v1914 = vld [vmem:[#allocation2 + $0xe8] sm:$0xff]
      %v1915 = vld [vmem:[#allocation2 + $0xf0] sm:$0xff]
      %v1916 = vld [vmem:[#allocation2 + $0xf8] sm:$0xff]
      %s1917 = scalar_lea.vmem %s5, 192
      %v1918 = vld [vmem:[%s1917] sm:$0xf]
      %v1919 = vld [vmem:[%s1917 + $0x4] sm:$0xf]
      %v1920 = vld [vmem:[%s1917 + $0x8] sm:$0xf]
      %v1921 = vld [vmem:[%s1917 + $0xc] sm:$0xf]
      %v1922 = vld [vmem:[%s1917 + $0x10] sm:$0xf]
      %v1923 = vld [vmem:[%s1917 + $0x14] sm:$0xf]
      %v1924 = vld [vmem:[%s1917 + $0x18] sm:$0xf]
      %v1925 = vld [vmem:[%s1917 + $0x1c] sm:$0xf]
      %v1926 = vld [vmem:[%s1917 + $0x20] sm:$0xf]
      %v1927 = vld [vmem:[%s1917 + $0x24] sm:$0xf]
      %v1928 = vld [vmem:[%s1917 + $0x28] sm:$0xf]
      %v1929 = vld [vmem:[%s1917 + $0x2c] sm:$0xf]
      %v1930 = vld [vmem:[%s1917 + $0x30] sm:$0xf]
      %v1931 = vld [vmem:[%s1917 + $0x34] sm:$0xf]
      %v1932 = vld [vmem:[%s1917 + $0x38] sm:$0xf]
      %v1933 = vld [vmem:[%s1917 + $0x3c] sm:$0xf]
      %v1950 = vunpack.c.l.b16 %v1918
      %v1951 = vunpack.c.l.b16 %v1919
      %v1952 = vunpack.c.l.b16 %v1920
      %v1953 = vunpack.c.l.b16 %v1921
      %v1954 = vunpack.c.l.b16 %v1922
      %v1955 = vunpack.c.l.b16 %v1923
      %v1956 = vunpack.c.l.b16 %v1924
      %v1957 = vunpack.c.l.b16 %v1925
      %v1958 = vunpack.c.l.b16 %v1926
      %v1959 = vunpack.c.l.b16 %v1927
      %v1960 = vunpack.c.l.b16 %v1928
      %v1961 = vunpack.c.l.b16 %v1929
      %v1962 = vunpack.c.l.b16 %v1930
      %v1963 = vunpack.c.l.b16 %v1931
      %v1964 = vunpack.c.l.b16 %v1932
      %v1965 = vunpack.c.l.b16 %v1933
      %v1966 = vpack.c.b16 %v1951, %v1950
      %v1967 = vpack.c.b16 %v1953, %v1952
      %v1968 = vpack.c.b16 %v1955, %v1954
      %v1969 = vpack.c.b16 %v1957, %v1956
      %v1970 = vpack.c.b16 %v1959, %v1958
      %v1971 = vpack.c.b16 %v1961, %v1960
      %v1972 = vpack.c.b16 %v1963, %v1962
      %v1973 = vpack.c.b16 %v1965, %v1964
      %1982 = vmatpush.bf16.msra.mxu0 %v1973
      %1983 = vmatpush.bf16.msra.mxu0 %v1972
      %1984 = vmatpush.bf16.msra.mxu0 %v1971
      %1985 = vmatpush.bf16.msra.mxu0 %v1970
      %1986 = vmatpush.bf16.msra.mxu0 %v1969
      %1987 = vmatpush.bf16.msra.mxu0 %v1968
      %1988 = vmatpush.bf16.msra.mxu0 %v1967
      %1989 = vmatpush.bf16.msra.mxu0 %v1966
      %1990 = vmatmul.bf16.gmra.mxu0 %v772
      %v1991 = vpop.f32.mrf.mxu0
      %v1992 = vadd.f32 0.0, %v1991
      %v1993 = vpop.f32.mrf.mxu0
      %v1994 = vadd.f32 0.0, %v1993
      %1995 = vmatmul.bf16.gmra.mxu0 %v773
      %v1996 = vpop.f32.mrf.mxu0
      %v1997 = vadd.f32 0.0, %v1996
      %v1998 = vpop.f32.mrf.mxu0
      %v1999 = vadd.f32 0.0, %v1998
      %2000 = vmatmul.bf16.gmra.mxu0 %v774
      %v2001 = vpop.f32.mrf.mxu0
      %v2002 = vadd.f32 0.0, %v2001
      %v2003 = vpop.f32.mrf.mxu0
      %v2004 = vadd.f32 0.0, %v2003
      %2005 = vmatmul.bf16.gmra.mxu0 %v775
      %v2006 = vpop.f32.mrf.mxu0
      %v2007 = vadd.f32 0.0, %v2006
      %v2008 = vpop.f32.mrf.mxu0
      %v2009 = vadd.f32 0.0, %v2008
      %2010 = vmatmul.bf16.gmra.mxu0 %v776
      %v2011 = vpop.f32.mrf.mxu0
      %v2012 = vadd.f32 0.0, %v2011
      %v2013 = vpop.f32.mrf.mxu0
      %v2014 = vadd.f32 0.0, %v2013
      %2015 = vmatmul.bf16.gmra.mxu0 %v777
      %v2016 = vpop.f32.mrf.mxu0
      %v2017 = vadd.f32 0.0, %v2016
      %v2018 = vpop.f32.mrf.mxu0
      %v2019 = vadd.f32 0.0, %v2018
      %2020 = vmatmul.bf16.gmra.mxu0 %v778
      %v2021 = vpop.f32.mrf.mxu0
      %v2022 = vadd.f32 0.0, %v2021
      %v2023 = vpop.f32.mrf.mxu0
      %v2024 = vadd.f32 0.0, %v2023
      %2025 = vmatmul.bf16.gmra.mxu0 %v779
      %v2026 = vpop.f32.mrf.mxu0
      %v2027 = vadd.f32 0.0, %v2026
      %v2028 = vpop.f32.mrf.mxu0
      %v2029 = vadd.f32 0.0, %v2028
      %2030 = vmatmul.bf16.gmra.mxu0 %v780
      %v2031 = vpop.f32.mrf.mxu0
      %v2032 = vadd.f32 0.0, %v2031
      %v2033 = vpop.f32.mrf.mxu0
      %v2034 = vadd.f32 0.0, %v2033
      %2035 = vmatmul.bf16.gmra.mxu0 %v781
      %v2036 = vpop.f32.mrf.mxu0
      %v2037 = vadd.f32 0.0, %v2036
      %v2038 = vpop.f32.mrf.mxu0
      %v2039 = vadd.f32 0.0, %v2038
      %2040 = vmatmul.bf16.gmra.mxu0 %v782
      %v2041 = vpop.f32.mrf.mxu0
      %v2042 = vadd.f32 0.0, %v2041
      %v2043 = vpop.f32.mrf.mxu0
      %v2044 = vadd.f32 0.0, %v2043
      %2045 = vmatmul.bf16.gmra.mxu0 %v783
      %v2046 = vpop.f32.mrf.mxu0
      %v2047 = vadd.f32 0.0, %v2046
      %v2048 = vpop.f32.mrf.mxu0
      %v2049 = vadd.f32 0.0, %v2048
      %2050 = vmatmul.bf16.gmra.mxu0 %v784
      %v2051 = vpop.f32.mrf.mxu0
      %v2052 = vadd.f32 0.0, %v2051
      %v2053 = vpop.f32.mrf.mxu0
      %v2054 = vadd.f32 0.0, %v2053
      %2055 = vmatmul.bf16.gmra.mxu0 %v785
      %v2056 = vpop.f32.mrf.mxu0
      %v2057 = vadd.f32 0.0, %v2056
      %v2058 = vpop.f32.mrf.mxu0
      %v2059 = vadd.f32 0.0, %v2058
      %2060 = vmatmul.bf16.gmra.mxu0 %v786
      %v2061 = vpop.f32.mrf.mxu0
      %v2062 = vadd.f32 0.0, %v2061
      %v2063 = vpop.f32.mrf.mxu0
      %v2064 = vadd.f32 0.0, %v2063
      %2065 = vmatmul.bf16.gmra.mxu0 %v787
      %v2066 = vpop.f32.mrf.mxu0
      %v2067 = vadd.f32 0.0, %v2066
      %v2068 = vpop.f32.mrf.mxu0
      %v2069 = vadd.f32 0.0, %v2068
      %2070 = vdwg.mxu0
      %v2071 = vadd.f32 %v1885, %v1992
      %v2072 = vadd.f32 %v1886, %v1994
      %v2073 = vadd.f32 %v1887, %v1997
      %v2074 = vadd.f32 %v1888, %v1999
      %v2075 = vadd.f32 %v1889, %v2002
      %v2076 = vadd.f32 %v1890, %v2004
      %v2077 = vadd.f32 %v1891, %v2007
      %v2078 = vadd.f32 %v1892, %v2009
      %v2079 = vadd.f32 %v1893, %v2012
      %v2080 = vadd.f32 %v1894, %v2014
      %v2081 = vadd.f32 %v1895, %v2017
      %v2082 = vadd.f32 %v1896, %v2019
      %v2083 = vadd.f32 %v1897, %v2022
      %v2084 = vadd.f32 %v1898, %v2024
      %v2085 = vadd.f32 %v1899, %v2027
      %v2086 = vadd.f32 %v1900, %v2029
      %v2087 = vadd.f32 %v1901, %v2032
      %v2088 = vadd.f32 %v1902, %v2034
      %v2089 = vadd.f32 %v1903, %v2037
      %v2090 = vadd.f32 %v1904, %v2039
      %v2091 = vadd.f32 %v1905, %v2042
      %v2092 = vadd.f32 %v1906, %v2044
      %v2093 = vadd.f32 %v1907, %v2047
      %v2094 = vadd.f32 %v1908, %v2049
      %v2095 = vadd.f32 %v1909, %v2052
      %v2096 = vadd.f32 %v1910, %v2054
      %v2097 = vadd.f32 %v1911, %v2057
      %v2098 = vadd.f32 %v1912, %v2059
      %v2099 = vadd.f32 %v1913, %v2062
      %v2100 = vadd.f32 %v1914, %v2064
      %v2101 = vadd.f32 %v1915, %v2067
      %v2102 = vadd.f32 %v1916, %v2069
      %2103 = vst [vmem:[#allocation2] sm:$0xff] %v2071
      %2104 = vst [vmem:[#allocation2 + $0x8] sm:$0xff] %v2072
      %2105 = vst [vmem:[#allocation2 + $0x10] sm:$0xff] %v2073
      %2106 = vst [vmem:[#allocation2 + $0x18] sm:$0xff] %v2074
      %2107 = vst [vmem:[#allocation2 + $0x20] sm:$0xff] %v2075
      %2108 = vst [vmem:[#allocation2 + $0x28] sm:$0xff] %v2076
      %2109 = vst [vmem:[#allocation2 + $0x30] sm:$0xff] %v2077
      %2110 = vst [vmem:[#allocation2 + $0x38] sm:$0xff] %v2078
      %2111 = vst [vmem:[#allocation2 + $0x40] sm:$0xff] %v2079
      %2112 = vst [vmem:[#allocation2 + $0x48] sm:$0xff] %v2080
      %2113 = vst [vmem:[#allocation2 + $0x50] sm:$0xff] %v2081
      %2114 = vst [vmem:[#allocation2 + $0x58] sm:$0xff] %v2082
      %2115 = vst [vmem:[#allocation2 + $0x60] sm:$0xff] %v2083
      %2116 = vst [vmem:[#allocation2 + $0x68] sm:$0xff] %v2084
      %2117 = vst [vmem:[#allocation2 + $0x70] sm:$0xff] %v2085
      %2118 = vst [vmem:[#allocation2 + $0x78] sm:$0xff] %v2086
      %2119 = vst [vmem:[#allocation2 + $0x80] sm:$0xff] %v2087
      %2120 = vst [vmem:[#allocation2 + $0x88] sm:$0xff] %v2088
      %2121 = vst [vmem:[#allocation2 + $0x90] sm:$0xff] %v2089
      %2122 = vst [vmem:[#allocation2 + $0x98] sm:$0xff] %v2090
      %2123 = vst [vmem:[#allocation2 + $0xa0] sm:$0xff] %v2091
      %2124 = vst [vmem:[#allocation2 + $0xa8] sm:$0xff] %v2092
      %2125 = vst [vmem:[#allocation2 + $0xb0] sm:$0xff] %v2093
      %2126 = vst [vmem:[#allocation2 + $0xb8] sm:$0xff] %v2094
      %2127 = vst [vmem:[#allocation2 + $0xc0] sm:$0xff] %v2095
      %2128 = vst [vmem:[#allocation2 + $0xc8] sm:$0xff] %v2096
      %2129 = vst [vmem:[#allocation2 + $0xd0] sm:$0xff] %v2097
      %2130 = vst [vmem:[#allocation2 + $0xd8] sm:$0xff] %v2098
      %2131 = vst [vmem:[#allocation2 + $0xe0] sm:$0xff] %v2099
      %2132 = vst [vmem:[#allocation2 + $0xe8] sm:$0xff] %v2100
      %2133 = vst [vmem:[#allocation2 + $0xf0] sm:$0xff] %v2101
      %2134 = vst [vmem:[#allocation2 + $0xf8] sm:$0xff] %v2102
      %v2135 = vld [vmem:[#allocation2] sm:$0xff]
      %v2136 = vld [vmem:[#allocation2 + $0x8] sm:$0xff]
      %v2137 = vld [vmem:[#allocation2 + $0x10] sm:$0xff]
      %v2138 = vld [vmem:[#allocation2 + $0x18] sm:$0xff]
      %v2139 = vld [vmem:[#allocation2 + $0x20] sm:$0xff]
      %v2140 = vld [vmem:[#allocation2 + $0x28] sm:$0xff]
      %v2141 = vld [vmem:[#allocation2 + $0x30] sm:$0xff]
      %v2142 = vld [vmem:[#allocation2 + $0x38] sm:$0xff]
      %v2143 = vld [vmem:[#allocation2 + $0x40] sm:$0xff]
      %v2144 = vld [vmem:[#allocation2 + $0x48] sm:$0xff]
      %v2145 = vld [vmem:[#allocation2 + $0x50] sm:$0xff]
      %v2146 = vld [vmem:[#allocation2 + $0x58] sm:$0xff]
      %v2147 = vld [vmem:[#allocation2 + $0x60] sm:$0xff]
      %v2148 = vld [vmem:[#allocation2 + $0x68] sm:$0xff]
      %v2149 = vld [vmem:[#allocation2 + $0x70] sm:$0xff]
      %v2150 = vld [vmem:[#allocation2 + $0x78] sm:$0xff]
      %v2151 = vld [vmem:[#allocation2 + $0x80] sm:$0xff]
      %v2152 = vld [vmem:[#allocation2 + $0x88] sm:$0xff]
      %v2153 = vld [vmem:[#allocation2 + $0x90] sm:$0xff]
      %v2154 = vld [vmem:[#allocation2 + $0x98] sm:$0xff]
      %v2155 = vld [vmem:[#allocation2 + $0xa0] sm:$0xff]
      %v2156 = vld [vmem:[#allocation2 + $0xa8] sm:$0xff]
      %v2157 = vld [vmem:[#allocation2 + $0xb0] sm:$0xff]
      %v2158 = vld [vmem:[#allocation2 + $0xb8] sm:$0xff]
      %v2159 = vld [vmem:[#allocation2 + $0xc0] sm:$0xff]
      %v2160 = vld [vmem:[#allocation2 + $0xc8] sm:$0xff]
      %v2161 = vld [vmem:[#allocation2 + $0xd0] sm:$0xff]
      %v2162 = vld [vmem:[#allocation2 + $0xd8] sm:$0xff]
      %v2163 = vld [vmem:[#allocation2 + $0xe0] sm:$0xff]
      %v2164 = vld [vmem:[#allocation2 + $0xe8] sm:$0xff]
      %v2165 = vld [vmem:[#allocation2 + $0xf0] sm:$0xff]
      %v2166 = vld [vmem:[#allocation2 + $0xf8] sm:$0xff]
      %v2168 = vshrl.u32 %v787, 16
      %v2170 = vshll.u32 %v787, 16
      %v2172 = vrot.slane %v2170, 1
      %v2173 = vor.u32 %v2168, %v2172
      %v2175 = vshll.u32 %v803, 16
      %v2177 = vrot.slane %v2175, 1
      %v2178 = vsel %vm1117, %v2173, %v2177
      %s2180 = scalar_lea.vmem %s5, 256
      %v2181 = vld [vmem:[%s2180] sm:$0xf]
      %v2182 = vld [vmem:[%s2180 + $0x4] sm:$0xf]
      %v2183 = vld [vmem:[%s2180 + $0x8] sm:$0xf]
      %v2184 = vld [vmem:[%s2180 + $0xc] sm:$0xf]
      %v2185 = vld [vmem:[%s2180 + $0x10] sm:$0xf]
      %v2186 = vld [vmem:[%s2180 + $0x14] sm:$0xf]
      %v2187 = vld [vmem:[%s2180 + $0x18] sm:$0xf]
      %v2188 = vld [vmem:[%s2180 + $0x1c] sm:$0xf]
      %v2189 = vld [vmem:[%s2180 + $0x20] sm:$0xf]
      %v2190 = vld [vmem:[%s2180 + $0x24] sm:$0xf]
      %v2191 = vld [vmem:[%s2180 + $0x28] sm:$0xf]
      %v2192 = vld [vmem:[%s2180 + $0x2c] sm:$0xf]
      %v2193 = vld [vmem:[%s2180 + $0x30] sm:$0xf]
      %v2194 = vld [vmem:[%s2180 + $0x34] sm:$0xf]
      %v2195 = vld [vmem:[%s2180 + $0x38] sm:$0xf]
      %v2196 = vld [vmem:[%s2180 + $0x3c] sm:$0xf]
      %v2213 = vunpack.c.l.b16 %v2181
      %v2214 = vunpack.c.l.b16 %v2182
      %v2215 = vunpack.c.l.b16 %v2183
      %v2216 = vunpack.c.l.b16 %v2184
      %v2217 = vunpack.c.l.b16 %v2185
      %v2218 = vunpack.c.l.b16 %v2186
      %v2219 = vunpack.c.l.b16 %v2187
      %v2220 = vunpack.c.l.b16 %v2188
      %v2221 = vunpack.c.l.b16 %v2189
      %v2222 = vunpack.c.l.b16 %v2190
      %v2223 = vunpack.c.l.b16 %v2191
      %v2224 = vunpack.c.l.b16 %v2192
      %v2225 = vunpack.c.l.b16 %v2193
      %v2226 = vunpack.c.l.b16 %v2194
      %v2227 = vunpack.c.l.b16 %v2195
      %v2228 = vunpack.c.l.b16 %v2196
      %v2229 = vpack.c.b16 %v2214, %v2213
      %v2230 = vpack.c.b16 %v2216, %v2215
      %v2231 = vpack.c.b16 %v2218, %v2217
      %v2232 = vpack.c.b16 %v2220, %v2219
      %v2233 = vpack.c.b16 %v2222, %v2221
      %v2234 = vpack.c.b16 %v2224, %v2223
      %v2235 = vpack.c.b16 %v2226, %v2225
      %v2236 = vpack.c.b16 %v2228, %v2227
      %2245 = vmatpush.bf16.msra.mxu0 %v2236
      %2246 = vmatpush.bf16.msra.mxu0 %v2235
      %2247 = vmatpush.bf16.msra.mxu0 %v2234
      %2248 = vmatpush.bf16.msra.mxu0 %v2233
      %2249 = vmatpush.bf16.msra.mxu0 %v2232
      %2250 = vmatpush.bf16.msra.mxu0 %v2231
      %2251 = vmatpush.bf16.msra.mxu0 %v2230
      %2252 = vmatpush.bf16.msra.mxu0 %v2229
      %2253 = vmatmul.bf16.gmra.mxu0 %v1137
      %v2254 = vpop.f32.mrf.mxu0
      %v2255 = vadd.f32 0.0, %v2254
      %v2256 = vpop.f32.mrf.mxu0
      %v2257 = vadd.f32 0.0, %v2256
      %2258 = vmatmul.bf16.gmra.mxu0 %v1149
      %v2259 = vpop.f32.mrf.mxu0
      %v2260 = vadd.f32 0.0, %v2259
      %v2261 = vpop.f32.mrf.mxu0
      %v2262 = vadd.f32 0.0, %v2261
      %2263 = vmatmul.bf16.gmra.mxu0 %v1161
      %v2264 = vpop.f32.mrf.mxu0
      %v2265 = vadd.f32 0.0, %v2264
      %v2266 = vpop.f32.mrf.mxu0
      %v2267 = vadd.f32 0.0, %v2266
      %2268 = vmatmul.bf16.gmra.mxu0 %v1173
      %v2269 = vpop.f32.mrf.mxu0
      %v2270 = vadd.f32 0.0, %v2269
      %v2271 = vpop.f32.mrf.mxu0
      %v2272 = vadd.f32 0.0, %v2271
      %2273 = vmatmul.bf16.gmra.mxu0 %v1185
      %v2274 = vpop.f32.mrf.mxu0
      %v2275 = vadd.f32 0.0, %v2274
      %v2276 = vpop.f32.mrf.mxu0
      %v2277 = vadd.f32 0.0, %v2276
      %2278 = vmatmul.bf16.gmra.mxu0 %v1197
      %v2279 = vpop.f32.mrf.mxu0
      %v2280 = vadd.f32 0.0, %v2279
      %v2281 = vpop.f32.mrf.mxu0
      %v2282 = vadd.f32 0.0, %v2281
      %2283 = vmatmul.bf16.gmra.mxu0 %v1209
      %v2284 = vpop.f32.mrf.mxu0
      %v2285 = vadd.f32 0.0, %v2284
      %v2286 = vpop.f32.mrf.mxu0
      %v2287 = vadd.f32 0.0, %v2286
      %2288 = vmatmul.bf16.gmra.mxu0 %v1221
      %v2289 = vpop.f32.mrf.mxu0
      %v2290 = vadd.f32 0.0, %v2289
      %v2291 = vpop.f32.mrf.mxu0
      %v2292 = vadd.f32 0.0, %v2291
      %2293 = vmatmul.bf16.gmra.mxu0 %v1233
      %v2294 = vpop.f32.mrf.mxu0
      %v2295 = vadd.f32 0.0, %v2294
      %v2296 = vpop.f32.mrf.mxu0
      %v2297 = vadd.f32 0.0, %v2296
      %2298 = vmatmul.bf16.gmra.mxu0 %v1245
      %v2299 = vpop.f32.mrf.mxu0
      %v2300 = vadd.f32 0.0, %v2299
      %v2301 = vpop.f32.mrf.mxu0
      %v2302 = vadd.f32 0.0, %v2301
      %2303 = vmatmul.bf16.gmra.mxu0 %v1257
      %v2304 = vpop.f32.mrf.mxu0
      %v2305 = vadd.f32 0.0, %v2304
      %v2306 = vpop.f32.mrf.mxu0
      %v2307 = vadd.f32 0.0, %v2306
      %2308 = vmatmul.bf16.gmra.mxu0 %v1269
      %v2309 = vpop.f32.mrf.mxu0
      %v2310 = vadd.f32 0.0, %v2309
      %v2311 = vpop.f32.mrf.mxu0
      %v2312 = vadd.f32 0.0, %v2311
      %2313 = vmatmul.bf16.gmra.mxu0 %v1281
      %v2314 = vpop.f32.mrf.mxu0
      %v2315 = vadd.f32 0.0, %v2314
      %v2316 = vpop.f32.mrf.mxu0
      %v2317 = vadd.f32 0.0, %v2316
      %2318 = vmatmul.bf16.gmra.mxu0 %v1293
      %v2319 = vpop.f32.mrf.mxu0
      %v2320 = vadd.f32 0.0, %v2319
      %v2321 = vpop.f32.mrf.mxu0
      %v2322 = vadd.f32 0.0, %v2321
      %2323 = vmatmul.bf16.gmra.mxu0 %v1305
      %v2324 = vpop.f32.mrf.mxu0
      %v2325 = vadd.f32 0.0, %v2324
      %v2326 = vpop.f32.mrf.mxu0
      %v2327 = vadd.f32 0.0, %v2326
      %2328 = vmatmul.bf16.gmra.mxu0 %v2178
      %v2329 = vpop.f32.mrf.mxu0
      %v2330 = vadd.f32 0.0, %v2329
      %v2331 = vpop.f32.mrf.mxu0
      %v2332 = vadd.f32 0.0, %v2331
      %2333 = vdwg.mxu0
      %v2334 = vadd.f32 %v2135, %v2255
      %v2335 = vadd.f32 %v2136, %v2257
      %v2336 = vadd.f32 %v2137, %v2260
      %v2337 = vadd.f32 %v2138, %v2262
      %v2338 = vadd.f32 %v2139, %v2265
      %v2339 = vadd.f32 %v2140, %v2267
      %v2340 = vadd.f32 %v2141, %v2270
      %v2341 = vadd.f32 %v2142, %v2272
      %v2342 = vadd.f32 %v2143, %v2275
      %v2343 = vadd.f32 %v2144, %v2277
      %v2344 = vadd.f32 %v2145, %v2280
      %v2345 = vadd.f32 %v2146, %v2282
      %v2346 = vadd.f32 %v2147, %v2285
      %v2347 = vadd.f32 %v2148, %v2287
      %v2348 = vadd.f32 %v2149, %v2290
      %v2349 = vadd.f32 %v2150, %v2292
      %v2350 = vadd.f32 %v2151, %v2295
      %v2351 = vadd.f32 %v2152, %v2297
      %v2352 = vadd.f32 %v2153, %v2300
      %v2353 = vadd.f32 %v2154, %v2302
      %v2354 = vadd.f32 %v2155, %v2305
      %v2355 = vadd.f32 %v2156, %v2307
      %v2356 = vadd.f32 %v2157, %v2310
      %v2357 = vadd.f32 %v2158, %v2312
      %v2358 = vadd.f32 %v2159, %v2315
      %v2359 = vadd.f32 %v2160, %v2317
      %v2360 = vadd.f32 %v2161, %v2320
      %v2361 = vadd.f32 %v2162, %v2322
      %v2362 = vadd.f32 %v2163, %v2325
      %v2363 = vadd.f32 %v2164, %v2327
      %v2364 = vadd.f32 %v2165, %v2330
      %v2365 = vadd.f32 %v2166, %v2332
      %2366 = vst [vmem:[#allocation2] sm:$0xff] %v2334
      %2367 = vst [vmem:[#allocation2 + $0x8] sm:$0xff] %v2335
      %2368 = vst [vmem:[#allocation2 + $0x10] sm:$0xff] %v2336
      %2369 = vst [vmem:[#allocation2 + $0x18] sm:$0xff] %v2337
      %2370 = vst [vmem:[#allocation2 + $0x20] sm:$0xff] %v2338
      %2371 = vst [vmem:[#allocation2 + $0x28] sm:$0xff] %v2339
      %2372 = vst [vmem:[#allocation2 + $0x30] sm:$0xff] %v2340
      %2373 = vst [vmem:[#allocation2 + $0x38] sm:$0xff] %v2341
      %2374 = vst [vmem:[#allocation2 + $0x40] sm:$0xff] %v2342
      %2375 = vst [vmem:[#allocation2 + $0x48] sm:$0xff] %v2343
      %2376 = vst [vmem:[#allocation2 + $0x50] sm:$0xff] %v2344
      %2377 = vst [vmem:[#allocation2 + $0x58] sm:$0xff] %v2345
      %2378 = vst [vmem:[#allocation2 + $0x60] sm:$0xff] %v2346
      %2379 = vst [vmem:[#allocation2 + $0x68] sm:$0xff] %v2347
      %2380 = vst [vmem:[#allocation2 + $0x70] sm:$0xff] %v2348
      %2381 = vst [vmem:[#allocation2 + $0x78] sm:$0xff] %v2349
      %2382 = vst [vmem:[#allocation2 + $0x80] sm:$0xff] %v2350
      %2383 = vst [vmem:[#allocation2 + $0x88] sm:$0xff] %v2351
      %2384 = vst [vmem:[#allocation2 + $0x90] sm:$0xff] %v2352
      %2385 = vst [vmem:[#allocation2 + $0x98] sm:$0xff] %v2353
      %2386 = vst [vmem:[#allocation2 + $0xa0] sm:$0xff] %v2354
      %2387 = vst [vmem:[#allocation2 + $0xa8] sm:$0xff] %v2355
      %2388 = vst [vmem:[#allocation2 + $0xb0] sm:$0xff] %v2356
      %2389 = vst [vmem:[#allocation2 + $0xb8] sm:$0xff] %v2357
      %2390 = vst [vmem:[#allocation2 + $0xc0] sm:$0xff] %v2358
      %2391 = vst [vmem:[#allocation2 + $0xc8] sm:$0xff] %v2359
      %2392 = vst [vmem:[#allocation2 + $0xd0] sm:$0xff] %v2360
      %2393 = vst [vmem:[#allocation2 + $0xd8] sm:$0xff] %v2361
      %2394 = vst [vmem:[#allocation2 + $0xe0] sm:$0xff] %v2362
      %2395 = vst [vmem:[#allocation2 + $0xe8] sm:$0xff] %v2363
      %2396 = vst [vmem:[#allocation2 + $0xf0] sm:$0xff] %v2364
      %2397 = vst [vmem:[#allocation2 + $0xf8] sm:$0xff] %v2365
      %v2398 = vld [vmem:[#allocation2] sm:$0xff]
      %v2399 = vld [vmem:[#allocation2 + $0x8] sm:$0xff]
      %v2400 = vld [vmem:[#allocation2 + $0x10] sm:$0xff]
      %v2401 = vld [vmem:[#allocation2 + $0x18] sm:$0xff]
      %v2402 = vld [vmem:[#allocation2 + $0x20] sm:$0xff]
      %v2403 = vld [vmem:[#allocation2 + $0x28] sm:$0xff]
      %v2404 = vld [vmem:[#allocation2 + $0x30] sm:$0xff]
      %v2405 = vld [vmem:[#allocation2 + $0x38] sm:$0xff]
      %v2406 = vld [vmem:[#allocation2 + $0x40] sm:$0xff]
      %v2407 = vld [vmem:[#allocation2 + $0x48] sm:$0xff]
      %v2408 = vld [vmem:[#allocation2 + $0x50] sm:$0xff]
      %v2409 = vld [vmem:[#allocation2 + $0x58] sm:$0xff]
      %v2410 = vld [vmem:[#allocation2 + $0x60] sm:$0xff]
      %v2411 = vld [vmem:[#allocation2 + $0x68] sm:$0xff]
      %v2412 = vld [vmem:[#allocation2 + $0x70] sm:$0xff]
      %v2413 = vld [vmem:[#allocation2 + $0x78] sm:$0xff]
      %v2414 = vld [vmem:[#allocation2 + $0x80] sm:$0xff]
      %v2415 = vld [vmem:[#allocation2 + $0x88] sm:$0xff]
      %v2416 = vld [vmem:[#allocation2 + $0x90] sm:$0xff]
      %v2417 = vld [vmem:[#allocation2 + $0x98] sm:$0xff]
      %v2418 = vld [vmem:[#allocation2 + $0xa0] sm:$0xff]
      %v2419 = vld [vmem:[#allocation2 + $0xa8] sm:$0xff]
      %v2420 = vld [vmem:[#allocation2 + $0xb0] sm:$0xff]
      %v2421 = vld [vmem:[#allocation2 + $0xb8] sm:$0xff]
      %v2422 = vld [vmem:[#allocation2 + $0xc0] sm:$0xff]
      %v2423 = vld [vmem:[#allocation2 + $0xc8] sm:$0xff]
      %v2424 = vld [vmem:[#allocation2 + $0xd0] sm:$0xff]
      %v2425 = vld [vmem:[#allocation2 + $0xd8] sm:$0xff]
      %v2426 = vld [vmem:[#allocation2 + $0xe0] sm:$0xff]
      %v2427 = vld [vmem:[#allocation2 + $0xe8] sm:$0xff]
      %v2428 = vld [vmem:[#allocation2 + $0xf0] sm:$0xff]
      %v2429 = vld [vmem:[#allocation2 + $0xf8] sm:$0xff]
      %v2432 = vrot.slane %v787, 1
      %v2433 = vrot.slane %v803, 1
      %v2434 = vsel %vm1603, %v2432, %v2433
      %s2436 = scalar_lea.vmem %s5, 320
      %v2437 = vld [vmem:[%s2436] sm:$0xf]
      %v2438 = vld [vmem:[%s2436 + $0x4] sm:$0xf]
      %v2439 = vld [vmem:[%s2436 + $0x8] sm:$0xf]
      %v2440 = vld [vmem:[%s2436 + $0xc] sm:$0xf]
      %v2441 = vld [vmem:[%s2436 + $0x10] sm:$0xf]
      %v2442 = vld [vmem:[%s2436 + $0x14] sm:$0xf]
      %v2443 = vld [vmem:[%s2436 + $0x18] sm:$0xf]
      %v2444 = vld [vmem:[%s2436 + $0x1c] sm:$0xf]
      %v2445 = vld [vmem:[%s2436 + $0x20] sm:$0xf]
      %v2446 = vld [vmem:[%s2436 + $0x24] sm:$0xf]
      %v2447 = vld [vmem:[%s2436 + $0x28] sm:$0xf]
      %v2448 = vld [vmem:[%s2436 + $0x2c] sm:$0xf]
      %v2449 = vld [vmem:[%s2436 + $0x30] sm:$0xf]
      %v2450 = vld [vmem:[%s2436 + $0x34] sm:$0xf]
      %v2451 = vld [vmem:[%s2436 + $0x38] sm:$0xf]
      %v2452 = vld [vmem:[%s2436 + $0x3c] sm:$0xf]
      %v2469 = vunpack.c.l.b16 %v2437
      %v2470 = vunpack.c.l.b16 %v2438
      %v2471 = vunpack.c.l.b16 %v2439
      %v2472 = vunpack.c.l.b16 %v2440
      %v2473 = vunpack.c.l.b16 %v2441
      %v2474 = vunpack.c.l.b16 %v2442
      %v2475 = vunpack.c.l.b16 %v2443
      %v2476 = vunpack.c.l.b16 %v2444
      %v2477 = vunpack.c.l.b16 %v2445
      %v2478 = vunpack.c.l.b16 %v2446
      %v2479 = vunpack.c.l.b16 %v2447
      %v2480 = vunpack.c.l.b16 %v2448
      %v2481 = vunpack.c.l.b16 %v2449
      %v2482 = vunpack.c.l.b16 %v2450
      %v2483 = vunpack.c.l.b16 %v2451
      %v2484 = vunpack.c.l.b16 %v2452
      %v2485 = vpack.c.b16 %v2470, %v2469
      %v2486 = vpack.c.b16 %v2472, %v2471
      %v2487 = vpack.c.b16 %v2474, %v2473
      %v2488 = vpack.c.b16 %v2476, %v2475
      %v2489 = vpack.c.b16 %v2478, %v2477
      %v2490 = vpack.c.b16 %v2480, %v2479
      %v2491 = vpack.c.b16 %v2482, %v2481
      %v2492 = vpack.c.b16 %v2484, %v2483
      %2501 = vmatpush.bf16.msra.mxu0 %v2492
      %2502 = vmatpush.bf16.msra.mxu0 %v2491
      %2503 = vmatpush.bf16.msra.mxu0 %v2490
      %2504 = vmatpush.bf16.msra.mxu0 %v2489
      %2505 = vmatpush.bf16.msra.mxu0 %v2488
      %2506 = vmatpush.bf16.msra.mxu0 %v2487
      %2507 = vmatpush.bf16.msra.mxu0 %v2486
      %2508 = vmatpush.bf16.msra.mxu0 %v2485
      %2509 = vmatmul.bf16.gmra.mxu0 %v1608
      %v2510 = vpop.f32.mrf.mxu0
      %v2511 = vadd.f32 0.0, %v2510
      %v2512 = vpop.f32.mrf.mxu0
      %v2513 = vadd.f32 0.0, %v2512
      %2514 = vmatmul.bf16.gmra.mxu0 %v1611
      %v2515 = vpop.f32.mrf.mxu0
      %v2516 = vadd.f32 0.0, %v2515
      %v2517 = vpop.f32.mrf.mxu0
      %v2518 = vadd.f32 0.0, %v2517
      %2519 = vmatmul.bf16.gmra.mxu0 %v1614
      %v2520 = vpop.f32.mrf.mxu0
      %v2521 = vadd.f32 0.0, %v2520
      %v2522 = vpop.f32.mrf.mxu0
      %v2523 = vadd.f32 0.0, %v2522
      %2524 = vmatmul.bf16.gmra.mxu0 %v1617
      %v2525 = vpop.f32.mrf.mxu0
      %v2526 = vadd.f32 0.0, %v2525
      %v2527 = vpop.f32.mrf.mxu0
      %v2528 = vadd.f32 0.0, %v2527
      %2529 = vmatmul.bf16.gmra.mxu0 %v1620
      %v2530 = vpop.f32.mrf.mxu0
      %v2531 = vadd.f32 0.0, %v2530
      %v2532 = vpop.f32.mrf.mxu0
      %v2533 = vadd.f32 0.0, %v2532
      %2534 = vmatmul.bf16.gmra.mxu0 %v1623
      %v2535 = vpop.f32.mrf.mxu0
      %v2536 = vadd.f32 0.0, %v2535
      %v2537 = vpop.f32.mrf.mxu0
      %v2538 = vadd.f32 0.0, %v2537
      %2539 = vmatmul.bf16.gmra.mxu0 %v1626
      %v2540 = vpop.f32.mrf.mxu0
      %v2541 = vadd.f32 0.0, %v2540
      %v2542 = vpop.f32.mrf.mxu0
      %v2543 = vadd.f32 0.0, %v2542
      %2544 = vmatmul.bf16.gmra.mxu0 %v1629
      %v2545 = vpop.f32.mrf.mxu0
      %v2546 = vadd.f32 0.0, %v2545
      %v2547 = vpop.f32.mrf.mxu0
      %v2548 = vadd.f32 0.0, %v2547
      %2549 = vmatmul.bf16.gmra.mxu0 %v1632
      %v2550 = vpop.f32.mrf.mxu0
      %v2551 = vadd.f32 0.0, %v2550
      %v2552 = vpop.f32.mrf.mxu0
      %v2553 = vadd.f32 0.0, %v2552
      %2554 = vmatmul.bf16.gmra.mxu0 %v1635
      %v2555 = vpop.f32.mrf.mxu0
      %v2556 = vadd.f32 0.0, %v2555
      %v2557 = vpop.f32.mrf.mxu0
      %v2558 = vadd.f32 0.0, %v2557
      %2559 = vmatmul.bf16.gmra.mxu0 %v1638
      %v2560 = vpop.f32.mrf.mxu0
      %v2561 = vadd.f32 0.0, %v2560
      %v2562 = vpop.f32.mrf.mxu0
      %v2563 = vadd.f32 0.0, %v2562
      %2564 = vmatmul.bf16.gmra.mxu0 %v1641
      %v2565 = vpop.f32.mrf.mxu0
      %v2566 = vadd.f32 0.0, %v2565
      %v2567 = vpop.f32.mrf.mxu0
      %v2568 = vadd.f32 0.0, %v2567
      %2569 = vmatmul.bf16.gmra.mxu0 %v1644
      %v2570 = vpop.f32.mrf.mxu0
      %v2571 = vadd.f32 0.0, %v2570
      %v2572 = vpop.f32.mrf.mxu0
      %v2573 = vadd.f32 0.0, %v2572
      %2574 = vmatmul.bf16.gmra.mxu0 %v1647
      %v2575 = vpop.f32.mrf.mxu0
      %v2576 = vadd.f32 0.0, %v2575
      %v2577 = vpop.f32.mrf.mxu0
      %v2578 = vadd.f32 0.0, %v2577
      %2579 = vmatmul.bf16.gmra.mxu0 %v1650
      %v2580 = vpop.f32.mrf.mxu0
      %v2581 = vadd.f32 0.0, %v2580
      %v2582 = vpop.f32.mrf.mxu0
      %v2583 = vadd.f32 0.0, %v2582
      %2584 = vmatmul.bf16.gmra.mxu0 %v2434
      %v2585 = vpop.f32.mrf.mxu0
      %v2586 = vadd.f32 0.0, %v2585
      %v2587 = vpop.f32.mrf.mxu0
      %v2588 = vadd.f32 0.0, %v2587
      %2589 = vdwg.mxu0
      %v2590 = vadd.f32 %v2398, %v2511
      %v2591 = vadd.f32 %v2399, %v2513
      %v2592 = vadd.f32 %v2400, %v2516
      %v2593 = vadd.f32 %v2401, %v2518
      %v2594 = vadd.f32 %v2402, %v2521
      %v2595 = vadd.f32 %v2403, %v2523
      %v2596 = vadd.f32 %v2404, %v2526
      %v2597 = vadd.f32 %v2405, %v2528
      %v2598 = vadd.f32 %v2406, %v2531
      %v2599 = vadd.f32 %v2407, %v2533
      %v2600 = vadd.f32 %v2408, %v2536
      %v2601 = vadd.f32 %v2409, %v2538
      %v2602 = vadd.f32 %v2410, %v2541
      %v2603 = vadd.f32 %v2411, %v2543
      %v2604 = vadd.f32 %v2412, %v2546
      %v2605 = vadd.f32 %v2413, %v2548
      %v2606 = vadd.f32 %v2414, %v2551
      %v2607 = vadd.f32 %v2415, %v2553
      %v2608 = vadd.f32 %v2416, %v2556
      %v2609 = vadd.f32 %v2417, %v2558
      %v2610 = vadd.f32 %v2418, %v2561
      %v2611 = vadd.f32 %v2419, %v2563
      %v2612 = vadd.f32 %v2420, %v2566
      %v2613 = vadd.f32 %v2421, %v2568
      %v2614 = vadd.f32 %v2422, %v2571
      %v2615 = vadd.f32 %v2423, %v2573
      %v2616 = vadd.f32 %v2424, %v2576
      %v2617 = vadd.f32 %v2425, %v2578
      %v2618 = vadd.f32 %v2426, %v2581
      %v2619 = vadd.f32 %v2427, %v2583
      %v2620 = vadd.f32 %v2428, %v2586
      %v2621 = vadd.f32 %v2429, %v2588
      %2622 = vst [vmem:[#allocation2] sm:$0xff] %v2590
      %2623 = vst [vmem:[#allocation2 + $0x8] sm:$0xff] %v2591
      %2624 = vst [vmem:[#allocation2 + $0x10] sm:$0xff] %v2592
      %2625 = vst [vmem:[#allocation2 + $0x18] sm:$0xff] %v2593
      %2626 = vst [vmem:[#allocation2 + $0x20] sm:$0xff] %v2594
      %2627 = vst [vmem:[#allocation2 + $0x28] sm:$0xff] %v2595
      %2628 = vst [vmem:[#allocation2 + $0x30] sm:$0xff] %v2596
      %2629 = vst [vmem:[#allocation2 + $0x38] sm:$0xff] %v2597
      %2630 = vst [vmem:[#allocation2 + $0x40] sm:$0xff] %v2598
      %2631 = vst [vmem:[#allocation2 + $0x48] sm:$0xff] %v2599
      %2632 = vst [vmem:[#allocation2 + $0x50] sm:$0xff] %v2600
      %2633 = vst [vmem:[#allocation2 + $0x58] sm:$0xff] %v2601
      %2634 = vst [vmem:[#allocation2 + $0x60] sm:$0xff] %v2602
      %2635 = vst [vmem:[#allocation2 + $0x68] sm:$0xff] %v2603
      %2636 = vst [vmem:[#allocation2 + $0x70] sm:$0xff] %v2604
      %2637 = vst [vmem:[#allocation2 + $0x78] sm:$0xff] %v2605
      %2638 = vst [vmem:[#allocation2 + $0x80] sm:$0xff] %v2606
      %2639 = vst [vmem:[#allocation2 + $0x88] sm:$0xff] %v2607
      %2640 = vst [vmem:[#allocation2 + $0x90] sm:$0xff] %v2608
      %2641 = vst [vmem:[#allocation2 + $0x98] sm:$0xff] %v2609
      %2642 = vst [vmem:[#allocation2 + $0xa0] sm:$0xff] %v2610
      %2643 = vst [vmem:[#allocation2 + $0xa8] sm:$0xff] %v2611
      %2644 = vst [vmem:[#allocation2 + $0xb0] sm:$0xff] %v2612
      %2645 = vst [vmem:[#allocation2 + $0xb8] sm:$0xff] %v2613
      %2646 = vst [vmem:[#allocation2 + $0xc0] sm:$0xff] %v2614
      %2647 = vst [vmem:[#allocation2 + $0xc8] sm:$0xff] %v2615
      %2648 = vst [vmem:[#allocation2 + $0xd0] sm:$0xff] %v2616
      %2649 = vst [vmem:[#allocation2 + $0xd8] sm:$0xff] %v2617
      %2650 = vst [vmem:[#allocation2 + $0xe0] sm:$0xff] %v2618
      %2651 = vst [vmem:[#allocation2 + $0xe8] sm:$0xff] %v2619
      %2652 = vst [vmem:[#allocation2 + $0xf0] sm:$0xff] %v2620
      %2653 = vst [vmem:[#allocation2 + $0xf8] sm:$0xff] %v2621
      %v2654 = vld [vmem:[#allocation2] sm:$0xff]
      %v2655 = vld [vmem:[#allocation2 + $0x8] sm:$0xff]
      %v2656 = vld [vmem:[#allocation2 + $0x10] sm:$0xff]
      %v2657 = vld [vmem:[#allocation2 + $0x18] sm:$0xff]
      %v2658 = vld [vmem:[#allocation2 + $0x20] sm:$0xff]
      %v2659 = vld [vmem:[#allocation2 + $0x28] sm:$0xff]
      %v2660 = vld [vmem:[#allocation2 + $0x30] sm:$0xff]
      %v2661 = vld [vmem:[#allocation2 + $0x38] sm:$0xff]
      %v2662 = vld [vmem:[#allocation2 + $0x40] sm:$0xff]
      %v2663 = vld [vmem:[#allocation2 + $0x48] sm:$0xff]
      %v2664 = vld [vmem:[#allocation2 + $0x50] sm:$0xff]
      %v2665 = vld [vmem:[#allocation2 + $0x58] sm:$0xff]
      %v2666 = vld [vmem:[#allocation2 + $0x60] sm:$0xff]
      %v2667 = vld [vmem:[#allocation2 + $0x68] sm:$0xff]
      %v2668 = vld [vmem:[#allocation2 + $0x70] sm:$0xff]
      %v2669 = vld [vmem:[#allocation2 + $0x78] sm:$0xff]
      %v2670 = vld [vmem:[#allocation2 + $0x80] sm:$0xff]
      %v2671 = vld [vmem:[#allocation2 + $0x88] sm:$0xff]
      %v2672 = vld [vmem:[#allocation2 + $0x90] sm:$0xff]
      %v2673 = vld [vmem:[#allocation2 + $0x98] sm:$0xff]
      %v2674 = vld [vmem:[#allocation2 + $0xa0] sm:$0xff]
      %v2675 = vld [vmem:[#allocation2 + $0xa8] sm:$0xff]
      %v2676 = vld [vmem:[#allocation2 + $0xb0] sm:$0xff]
      %v2677 = vld [vmem:[#allocation2 + $0xb8] sm:$0xff]
      %v2678 = vld [vmem:[#allocation2 + $0xc0] sm:$0xff]
      %v2679 = vld [vmem:[#allocation2 + $0xc8] sm:$0xff]
      %v2680 = vld [vmem:[#allocation2 + $0xd0] sm:$0xff]
      %v2681 = vld [vmem:[#allocation2 + $0xd8] sm:$0xff]
      %v2682 = vld [vmem:[#allocation2 + $0xe0] sm:$0xff]
      %v2683 = vld [vmem:[#allocation2 + $0xe8] sm:$0xff]
      %v2684 = vld [vmem:[#allocation2 + $0xf0] sm:$0xff]
      %v2685 = vld [vmem:[#allocation2 + $0xf8] sm:$0xff]
      %s2686 = scalar_lea.vmem %s5, 384
      %v2687 = vld [vmem:[%s2686] sm:$0xf]
      %v2688 = vld [vmem:[%s2686 + $0x4] sm:$0xf]
      %v2689 = vld [vmem:[%s2686 + $0x8] sm:$0xf]
      %v2690 = vld [vmem:[%s2686 + $0xc] sm:$0xf]
      %v2691 = vld [vmem:[%s2686 + $0x10] sm:$0xf]
      %v2692 = vld [vmem:[%s2686 + $0x14] sm:$0xf]
      %v2693 = vld [vmem:[%s2686 + $0x18] sm:$0xf]
      %v2694 = vld [vmem:[%s2686 + $0x1c] sm:$0xf]
      %v2695 = vld [vmem:[%s2686 + $0x20] sm:$0xf]
      %v2696 = vld [vmem:[%s2686 + $0x24] sm:$0xf]
      %v2697 = vld [vmem:[%s2686 + $0x28] sm:$0xf]
      %v2698 = vld [vmem:[%s2686 + $0x2c] sm:$0xf]
      %v2699 = vld [vmem:[%s2686 + $0x30] sm:$0xf]
      %v2700 = vld [vmem:[%s2686 + $0x34] sm:$0xf]
      %v2701 = vld [vmem:[%s2686 + $0x38] sm:$0xf]
      %v2702 = vld [vmem:[%s2686 + $0x3c] sm:$0xf]
      %v2719 = vunpack.c.l.b16 %v2687
      %v2720 = vunpack.c.l.b16 %v2688
      %v2721 = vunpack.c.l.b16 %v2689
      %v2722 = vunpack.c.l.b16 %v2690
      %v2723 = vunpack.c.l.b16 %v2691
      %v2724 = vunpack.c.l.b16 %v2692
      %v2725 = vunpack.c.l.b16 %v2693
      %v2726 = vunpack.c.l.b16 %v2694
      %v2727 = vunpack.c.l.b16 %v2695
      %v2728 = vunpack.c.l.b16 %v2696
      %v2729 = vunpack.c.l.b16 %v2697
      %v2730 = vunpack.c.l.b16 %v2698
      %v2731 = vunpack.c.l.b16 %v2699
      %v2732 = vunpack.c.l.b16 %v2700
      %v2733 = vunpack.c.l.b16 %v2701
      %v2734 = vunpack.c.l.b16 %v2702
      %v2735 = vpack.c.b16 %v2720, %v2719
      %v2736 = vpack.c.b16 %v2722, %v2721
      %v2737 = vpack.c.b16 %v2724, %v2723
      %v2738 = vpack.c.b16 %v2726, %v2725
      %v2739 = vpack.c.b16 %v2728, %v2727
      %v2740 = vpack.c.b16 %v2730, %v2729
      %v2741 = vpack.c.b16 %v2732, %v2731
      %v2742 = vpack.c.b16 %v2734, %v2733
      %2751 = vmatpush.bf16.msra.mxu0 %v2742
      %2752 = vmatpush.bf16.msra.mxu0 %v2741
      %2753 = vmatpush.bf16.msra.mxu0 %v2740
      %2754 = vmatpush.bf16.msra.mxu0 %v2739
      %2755 = vmatpush.bf16.msra.mxu0 %v2738
      %2756 = vmatpush.bf16.msra.mxu0 %v2737
      %2757 = vmatpush.bf16.msra.mxu0 %v2736
      %2758 = vmatpush.bf16.msra.mxu0 %v2735
      %2759 = vmatmul.bf16.gmra.mxu0 %v773
      %v2760 = vpop.f32.mrf.mxu0
      %v2761 = vadd.f32 0.0, %v2760
      %v2762 = vpop.f32.mrf.mxu0
      %v2763 = vadd.f32 0.0, %v2762
      %2764 = vmatmul.bf16.gmra.mxu0 %v774
      %v2765 = vpop.f32.mrf.mxu0
      %v2766 = vadd.f32 0.0, %v2765
      %v2767 = vpop.f32.mrf.mxu0
      %v2768 = vadd.f32 0.0, %v2767
      %2769 = vmatmul.bf16.gmra.mxu0 %v775
      %v2770 = vpop.f32.mrf.mxu0
      %v2771 = vadd.f32 0.0, %v2770
      %v2772 = vpop.f32.mrf.mxu0
      %v2773 = vadd.f32 0.0, %v2772
      %2774 = vmatmul.bf16.gmra.mxu0 %v776
      %v2775 = vpop.f32.mrf.mxu0
      %v2776 = vadd.f32 0.0, %v2775
      %v2777 = vpop.f32.mrf.mxu0
      %v2778 = vadd.f32 0.0, %v2777
      %2779 = vmatmul.bf16.gmra.mxu0 %v777
      %v2780 = vpop.f32.mrf.mxu0
      %v2781 = vadd.f32 0.0, %v2780
      %v2782 = vpop.f32.mrf.mxu0
      %v2783 = vadd.f32 0.0, %v2782
      %2784 = vmatmul.bf16.gmra.mxu0 %v778
      %v2785 = vpop.f32.mrf.mxu0
      %v2786 = vadd.f32 0.0, %v2785
      %v2787 = vpop.f32.mrf.mxu0
      %v2788 = vadd.f32 0.0, %v2787
      %2789 = vmatmul.bf16.gmra.mxu0 %v779
      %v2790 = vpop.f32.mrf.mxu0
      %v2791 = vadd.f32 0.0, %v2790
      %v2792 = vpop.f32.mrf.mxu0
      %v2793 = vadd.f32 0.0, %v2792
      %2794 = vmatmul.bf16.gmra.mxu0 %v780
      %v2795 = vpop.f32.mrf.mxu0
      %v2796 = vadd.f32 0.0, %v2795
      %v2797 = vpop.f32.mrf.mxu0
      %v2798 = vadd.f32 0.0, %v2797
      %2799 = vmatmul.bf16.gmra.mxu0 %v781
      %v2800 = vpop.f32.mrf.mxu0
      %v2801 = vadd.f32 0.0, %v2800
      %v2802 = vpop.f32.mrf.mxu0
      %v2803 = vadd.f32 0.0, %v2802
      %2804 = vmatmul.bf16.gmra.mxu0 %v782
      %v2805 = vpop.f32.mrf.mxu0
      %v2806 = vadd.f32 0.0, %v2805
      %v2807 = vpop.f32.mrf.mxu0
      %v2808 = vadd.f32 0.0, %v2807
      %2809 = vmatmul.bf16.gmra.mxu0 %v783
      %v2810 = vpop.f32.mrf.mxu0
      %v2811 = vadd.f32 0.0, %v2810
      %v2812 = vpop.f32.mrf.mxu0
      %v2813 = vadd.f32 0.0, %v2812
      %2814 = vmatmul.bf16.gmra.mxu0 %v784
      %v2815 = vpop.f32.mrf.mxu0
      %v2816 = vadd.f32 0.0, %v2815
      %v2817 = vpop.f32.mrf.mxu0
      %v2818 = vadd.f32 0.0, %v2817
      %2819 = vmatmul.bf16.gmra.mxu0 %v785
      %v2820 = vpop.f32.mrf.mxu0
      %v2821 = vadd.f32 0.0, %v2820
      %v2822 = vpop.f32.mrf.mxu0
      %v2823 = vadd.f32 0.0, %v2822
      %2824 = vmatmul.bf16.gmra.mxu0 %v786
      %v2825 = vpop.f32.mrf.mxu0
      %v2826 = vadd.f32 0.0, %v2825
      %v2827 = vpop.f32.mrf.mxu0
      %v2828 = vadd.f32 0.0, %v2827
      %2829 = vmatmul.bf16.gmra.mxu0 %v787
      %v2830 = vpop.f32.mrf.mxu0
      %v2831 = vadd.f32 0.0, %v2830
      %v2832 = vpop.f32.mrf.mxu0
      %v2833 = vadd.f32 0.0, %v2832
      %2834 = vmatmul.bf16.gmra.mxu0 0
      %v2835 = vpop.f32.mrf.mxu0
      %v2836 = vadd.f32 0.0, %v2835
      %v2837 = vpop.f32.mrf.mxu0
      %v2838 = vadd.f32 0.0, %v2837
      %2839 = vdwg.mxu0
      %v2840 = vadd.f32 %v2654, %v2761
      %v2841 = vadd.f32 %v2655, %v2763
      %v2842 = vadd.f32 %v2656, %v2766
      %v2843 = vadd.f32 %v2657, %v2768
      %v2844 = vadd.f32 %v2658, %v2771
      %v2845 = vadd.f32 %v2659, %v2773
      %v2846 = vadd.f32 %v2660, %v2776
      %v2847 = vadd.f32 %v2661, %v2778
      %v2848 = vadd.f32 %v2662, %v2781
      %v2849 = vadd.f32 %v2663, %v2783
      %v2850 = vadd.f32 %v2664, %v2786
      %v2851 = vadd.f32 %v2665, %v2788
      %v2852 = vadd.f32 %v2666, %v2791
      %v2853 = vadd.f32 %v2667, %v2793
      %v2854 = vadd.f32 %v2668, %v2796
      %v2855 = vadd.f32 %v2669, %v2798
      %v2856 = vadd.f32 %v2670, %v2801
      %v2857 = vadd.f32 %v2671, %v2803
      %v2858 = vadd.f32 %v2672, %v2806
      %v2859 = vadd.f32 %v2673, %v2808
      %v2860 = vadd.f32 %v2674, %v2811
      %v2861 = vadd.f32 %v2675, %v2813
      %v2862 = vadd.f32 %v2676, %v2816
      %v2863 = vadd.f32 %v2677, %v2818
      %v2864 = vadd.f32 %v2678, %v2821
      %v2865 = vadd.f32 %v2679, %v2823
      %v2866 = vadd.f32 %v2680, %v2826
      %v2867 = vadd.f32 %v2681, %v2828
      %v2868 = vadd.f32 %v2682, %v2831
      %v2869 = vadd.f32 %v2683, %v2833
      %v2870 = vadd.f32 %v2684, %v2836
      %v2871 = vadd.f32 %v2685, %v2838
      %2872 = vst [vmem:[#allocation2] sm:$0xff] %v2840
      %2873 = vst [vmem:[#allocation2 + $0x8] sm:$0xff] %v2841
      %2874 = vst [vmem:[#allocation2 + $0x10] sm:$0xff] %v2842
      %2875 = vst [vmem:[#allocation2 + $0x18] sm:$0xff] %v2843
      %2876 = vst [vmem:[#allocation2 + $0x20] sm:$0xff] %v2844
      %2877 = vst [vmem:[#allocation2 + $0x28] sm:$0xff] %v2845
      %2878 = vst [vmem:[#allocation2 + $0x30] sm:$0xff] %v2846
      %2879 = vst [vmem:[#allocation2 + $0x38] sm:$0xff] %v2847
      %2880 = vst [vmem:[#allocation2 + $0x40] sm:$0xff] %v2848
      %2881 = vst [vmem:[#allocation2 + $0x48] sm:$0xff] %v2849
      %2882 = vst [vmem:[#allocation2 + $0x50] sm:$0xff] %v2850
      %2883 = vst [vmem:[#allocation2 + $0x58] sm:$0xff] %v2851
      %2884 = vst [vmem:[#allocation2 + $0x60] sm:$0xff] %v2852
      %2885 = vst [vmem:[#allocation2 + $0x68] sm:$0xff] %v2853
      %2886 = vst [vmem:[#allocation2 + $0x70] sm:$0xff] %v2854
      %2887 = vst [vmem:[#allocation2 + $0x78] sm:$0xff] %v2855
      %2888 = vst [vmem:[#allocation2 + $0x80] sm:$0xff] %v2856
      %2889 = vst [vmem:[#allocation2 + $0x88] sm:$0xff] %v2857
      %2890 = vst [vmem:[#allocation2 + $0x90] sm:$0xff] %v2858
      %2891 = vst [vmem:[#allocation2 + $0x98] sm:$0xff] %v2859
      %2892 = vst [vmem:[#allocation2 + $0xa0] sm:$0xff] %v2860
      %2893 = vst [vmem:[#allocation2 + $0xa8] sm:$0xff] %v2861
      %2894 = vst [vmem:[#allocation2 + $0xb0] sm:$0xff] %v2862
      %2895 = vst [vmem:[#allocation2 + $0xb8] sm:$0xff] %v2863
      %2896 = vst [vmem:[#allocation2 + $0xc0] sm:$0xff] %v2864
      %2897 = vst [vmem:[#allocation2 + $0xc8] sm:$0xff] %v2865
      %2898 = vst [vmem:[#allocation2 + $0xd0] sm:$0xff] %v2866
      %2899 = vst [vmem:[#allocation2 + $0xd8] sm:$0xff] %v2867
      %2900 = vst [vmem:[#allocation2 + $0xe0] sm:$0xff] %v2868
      %2901 = vst [vmem:[#allocation2 + $0xe8] sm:$0xff] %v2869
      %2902 = vst [vmem:[#allocation2 + $0xf0] sm:$0xff] %v2870
      %2903 = vst [vmem:[#allocation2 + $0xf8] sm:$0xff] %v2871
      %v2904 = vld [vmem:[#allocation2] sm:$0xff]
      %v2905 = vld [vmem:[#allocation2 + $0x8] sm:$0xff]
      %v2906 = vld [vmem:[#allocation2 + $0x10] sm:$0xff]
      %v2907 = vld [vmem:[#allocation2 + $0x18] sm:$0xff]
      %v2908 = vld [vmem:[#allocation2 + $0x20] sm:$0xff]
      %v2909 = vld [vmem:[#allocation2 + $0x28] sm:$0xff]
      %v2910 = vld [vmem:[#allocation2 + $0x30] sm:$0xff]
      %v2911 = vld [vmem:[#allocation2 + $0x38] sm:$0xff]
      %v2912 = vld [vmem:[#allocation2 + $0x40] sm:$0xff]
      %v2913 = vld [vmem:[#allocation2 + $0x48] sm:$0xff]
      %v2914 = vld [vmem:[#allocation2 + $0x50] sm:$0xff]
      %v2915 = vld [vmem:[#allocation2 + $0x58] sm:$0xff]
      %v2916 = vld [vmem:[#allocation2 + $0x60] sm:$0xff]
      %v2917 = vld [vmem:[#allocation2 + $0x68] sm:$0xff]
      %v2918 = vld [vmem:[#allocation2 + $0x70] sm:$0xff]
      %v2919 = vld [vmem:[#allocation2 + $0x78] sm:$0xff]
      %v2920 = vld [vmem:[#allocation2 + $0x80] sm:$0xff]
      %v2921 = vld [vmem:[#allocation2 + $0x88] sm:$0xff]
      %v2922 = vld [vmem:[#allocation2 + $0x90] sm:$0xff]
      %v2923 = vld [vmem:[#allocation2 + $0x98] sm:$0xff]
      %v2924 = vld [vmem:[#allocation2 + $0xa0] sm:$0xff]
      %v2925 = vld [vmem:[#allocation2 + $0xa8] sm:$0xff]
      %v2926 = vld [vmem:[#allocation2 + $0xb0] sm:$0xff]
      %v2927 = vld [vmem:[#allocation2 + $0xb8] sm:$0xff]
      %v2928 = vld [vmem:[#allocation2 + $0xc0] sm:$0xff]
      %v2929 = vld [vmem:[#allocation2 + $0xc8] sm:$0xff]
      %v2930 = vld [vmem:[#allocation2 + $0xd0] sm:$0xff]
      %v2931 = vld [vmem:[#allocation2 + $0xd8] sm:$0xff]
      %v2932 = vld [vmem:[#allocation2 + $0xe0] sm:$0xff]
      %v2933 = vld [vmem:[#allocation2 + $0xe8] sm:$0xff]
      %v2934 = vld [vmem:[#allocation2 + $0xf0] sm:$0xff]
      %v2935 = vld [vmem:[#allocation2 + $0xf8] sm:$0xff]
      %s2936 = scalar_lea.vmem %s5, 448
      %v2937 = vld [vmem:[%s2936] sm:$0xf]
      %v2938 = vld [vmem:[%s2936 + $0x4] sm:$0xf]
      %v2939 = vld [vmem:[%s2936 + $0x8] sm:$0xf]
      %v2940 = vld [vmem:[%s2936 + $0xc] sm:$0xf]
      %v2941 = vld [vmem:[%s2936 + $0x10] sm:$0xf]
      %v2942 = vld [vmem:[%s2936 + $0x14] sm:$0xf]
      %v2943 = vld [vmem:[%s2936 + $0x18] sm:$0xf]
      %v2944 = vld [vmem:[%s2936 + $0x1c] sm:$0xf]
      %v2945 = vld [vmem:[%s2936 + $0x20] sm:$0xf]
      %v2946 = vld [vmem:[%s2936 + $0x24] sm:$0xf]
      %v2947 = vld [vmem:[%s2936 + $0x28] sm:$0xf]
      %v2948 = vld [vmem:[%s2936 + $0x2c] sm:$0xf]
      %v2949 = vld [vmem:[%s2936 + $0x30] sm:$0xf]
      %v2950 = vld [vmem:[%s2936 + $0x34] sm:$0xf]
      %v2951 = vld [vmem:[%s2936 + $0x38] sm:$0xf]
      %v2952 = vld [vmem:[%s2936 + $0x3c] sm:$0xf]
      %v2969 = vunpack.c.l.b16 %v2937
      %v2970 = vunpack.c.l.b16 %v2938
      %v2971 = vunpack.c.l.b16 %v2939
      %v2972 = vunpack.c.l.b16 %v2940
      %v2973 = vunpack.c.l.b16 %v2941
      %v2974 = vunpack.c.l.b16 %v2942
      %v2975 = vunpack.c.l.b16 %v2943
      %v2976 = vunpack.c.l.b16 %v2944
      %v2977 = vunpack.c.l.b16 %v2945
      %v2978 = vunpack.c.l.b16 %v2946
      %v2979 = vunpack.c.l.b16 %v2947
      %v2980 = vunpack.c.l.b16 %v2948
      %v2981 = vunpack.c.l.b16 %v2949
      %v2982 = vunpack.c.l.b16 %v2950
      %v2983 = vunpack.c.l.b16 %v2951
      %v2984 = vunpack.c.l.b16 %v2952
      %v2985 = vpack.c.b16 %v2970, %v2969
      %v2986 = vpack.c.b16 %v2972, %v2971
      %v2987 = vpack.c.b16 %v2974, %v2973
      %v2988 = vpack.c.b16 %v2976, %v2975
      %v2989 = vpack.c.b16 %v2978, %v2977
      %v2990 = vpack.c.b16 %v2980, %v2979
      %v2991 = vpack.c.b16 %v2982, %v2981
      %v2992 = vpack.c.b16 %v2984, %v2983
      %3001 = vmatpush.bf16.msra.mxu0 %v2992
      %3002 = vmatpush.bf16.msra.mxu0 %v2991
      %3003 = vmatpush.bf16.msra.mxu0 %v2990
      %3004 = vmatpush.bf16.msra.mxu0 %v2989
      %3005 = vmatpush.bf16.msra.mxu0 %v2988
      %3006 = vmatpush.bf16.msra.mxu0 %v2987
      %3007 = vmatpush.bf16.msra.mxu0 %v2986
      %3008 = vmatpush.bf16.msra.mxu0 %v2985
      %3009 = vmatmul.bf16.gmra.mxu0 %v1149
      %v3010 = vpop.f32.mrf.mxu0
      %v3011 = vadd.f32 0.0, %v3010
      %v3012 = vpop.f32.mrf.mxu0
      %v3013 = vadd.f32 0.0, %v3012
      %3014 = vmatmul.bf16.gmra.mxu0 %v1161
      %v3015 = vpop.f32.mrf.mxu0
      %v3016 = vadd.f32 0.0, %v3015
      %v3017 = vpop.f32.mrf.mxu0
      %v3018 = vadd.f32 0.0, %v3017
      %3019 = vmatmul.bf16.gmra.mxu0 %v1173
      %v3020 = vpop.f32.mrf.mxu0
      %v3021 = vadd.f32 0.0, %v3020
      %v3022 = vpop.f32.mrf.mxu0
      %v3023 = vadd.f32 0.0, %v3022
      %3024 = vmatmul.bf16.gmra.mxu0 %v1185
      %v3025 = vpop.f32.mrf.mxu0
      %v3026 = vadd.f32 0.0, %v3025
      %v3027 = vpop.f32.mrf.mxu0
      %v3028 = vadd.f32 0.0, %v3027
      %3029 = vmatmul.bf16.gmra.mxu0 %v1197
      %v3030 = vpop.f32.mrf.mxu0
      %v3031 = vadd.f32 0.0, %v3030
      %v3032 = vpop.f32.mrf.mxu0
      %v3033 = vadd.f32 0.0, %v3032
      %3034 = vmatmul.bf16.gmra.mxu0 %v1209
      %v3035 = vpop.f32.mrf.mxu0
      %v3036 = vadd.f32 0.0, %v3035
      %v3037 = vpop.f32.mrf.mxu0
      %v3038 = vadd.f32 0.0, %v3037
      %3039 = vmatmul.bf16.gmra.mxu0 %v1221
      %v3040 = vpop.f32.mrf.mxu0
      %v3041 = vadd.f32 0.0, %v3040
      %v3042 = vpop.f32.mrf.mxu0
      %v3043 = vadd.f32 0.0, %v3042
      %3044 = vmatmul.bf16.gmra.mxu0 %v1233
      %v3045 = vpop.f32.mrf.mxu0
      %v3046 = vadd.f32 0.0, %v3045
      %v3047 = vpop.f32.mrf.mxu0
      %v3048 = vadd.f32 0.0, %v3047
      %3049 = vmatmul.bf16.gmra.mxu0 %v1245
      %v3050 = vpop.f32.mrf.mxu0
      %v3051 = vadd.f32 0.0, %v3050
      %v3052 = vpop.f32.mrf.mxu0
      %v3053 = vadd.f32 0.0, %v3052
      %3054 = vmatmul.bf16.gmra.mxu0 %v1257
      %v3055 = vpop.f32.mrf.mxu0
      %v3056 = vadd.f32 0.0, %v3055
      %v3057 = vpop.f32.mrf.mxu0
      %v3058 = vadd.f32 0.0, %v3057
      %3059 = vmatmul.bf16.gmra.mxu0 %v1269
      %v3060 = vpop.f32.mrf.mxu0
      %v3061 = vadd.f32 0.0, %v3060
      %v3062 = vpop.f32.mrf.mxu0
      %v3063 = vadd.f32 0.0, %v3062
      %3064 = vmatmul.bf16.gmra.mxu0 %v1281
      %v3065 = vpop.f32.mrf.mxu0
      %v3066 = vadd.f32 0.0, %v3065
      %v3067 = vpop.f32.mrf.mxu0
      %v3068 = vadd.f32 0.0, %v3067
      %3069 = vmatmul.bf16.gmra.mxu0 %v1293
      %v3070 = vpop.f32.mrf.mxu0
      %v3071 = vadd.f32 0.0, %v3070
      %v3072 = vpop.f32.mrf.mxu0
      %v3073 = vadd.f32 0.0, %v3072
      %3074 = vmatmul.bf16.gmra.mxu0 %v1305
      %v3075 = vpop.f32.mrf.mxu0
      %v3076 = vadd.f32 0.0, %v3075
      %v3077 = vpop.f32.mrf.mxu0
      %v3078 = vadd.f32 0.0, %v3077
      %3079 = vmatmul.bf16.gmra.mxu0 %v2178
      %v3080 = vpop.f32.mrf.mxu0
      %v3081 = vadd.f32 0.0, %v3080
      %v3082 = vpop.f32.mrf.mxu0
      %v3083 = vadd.f32 0.0, %v3082
      %3084 = vmatmul.bf16.gmra.mxu0 %v1125
      %v3085 = vpop.f32.mrf.mxu0
      %v3086 = vadd.f32 0.0, %v3085
      %v3087 = vpop.f32.mrf.mxu0
      %v3088 = vadd.f32 0.0, %v3087
      %3089 = vdwg.mxu0
      %v3090 = vadd.f32 %v2904, %v3011
      %v3091 = vadd.f32 %v2905, %v3013
      %v3092 = vadd.f32 %v2906, %v3016
      %v3093 = vadd.f32 %v2907, %v3018
      %v3094 = vadd.f32 %v2908, %v3021
      %v3095 = vadd.f32 %v2909, %v3023
      %v3096 = vadd.f32 %v2910, %v3026
      %v3097 = vadd.f32 %v2911, %v3028
      %v3098 = vadd.f32 %v2912, %v3031
      %v3099 = vadd.f32 %v2913, %v3033
      %v3100 = vadd.f32 %v2914, %v3036
      %v3101 = vadd.f32 %v2915, %v3038
      %v3102 = vadd.f32 %v2916, %v3041
      %v3103 = vadd.f32 %v2917, %v3043
      %v3104 = vadd.f32 %v2918, %v3046
      %v3105 = vadd.f32 %v2919, %v3048
      %v3106 = vadd.f32 %v2920, %v3051
      %v3107 = vadd.f32 %v2921, %v3053
      %v3108 = vadd.f32 %v2922, %v3056
      %v3109 = vadd.f32 %v2923, %v3058
      %v3110 = vadd.f32 %v2924, %v3061
      %v3111 = vadd.f32 %v2925, %v3063
      %v3112 = vadd.f32 %v2926, %v3066
      %v3113 = vadd.f32 %v2927, %v3068
      %v3114 = vadd.f32 %v2928, %v3071
      %v3115 = vadd.f32 %v2929, %v3073
      %v3116 = vadd.f32 %v2930, %v3076
      %v3117 = vadd.f32 %v2931, %v3078
      %v3118 = vadd.f32 %v2932, %v3081
      %v3119 = vadd.f32 %v2933, %v3083
      %v3120 = vadd.f32 %v2934, %v3086
      %v3121 = vadd.f32 %v2935, %v3088
      %3122 = vst [vmem:[#allocation2] sm:$0xff] %v3090
      %3123 = vst [vmem:[#allocation2 + $0x8] sm:$0xff] %v3091
      %3124 = vst [vmem:[#allocation2 + $0x10] sm:$0xff] %v3092
      %3125 = vst [vmem:[#allocation2 + $0x18] sm:$0xff] %v3093
      %3126 = vst [vmem:[#allocation2 + $0x20] sm:$0xff] %v3094
      %3127 = vst [vmem:[#allocation2 + $0x28] sm:$0xff] %v3095
      %3128 = vst [vmem:[#allocation2 + $0x30] sm:$0xff] %v3096
      %3129 = vst [vmem:[#allocation2 + $0x38] sm:$0xff] %v3097
      %3130 = vst [vmem:[#allocation2 + $0x40] sm:$0xff] %v3098
      %3131 = vst [vmem:[#allocation2 + $0x48] sm:$0xff] %v3099
      %3132 = vst [vmem:[#allocation2 + $0x50] sm:$0xff] %v3100
      %3133 = vst [vmem:[#allocation2 + $0x58] sm:$0xff] %v3101
      %3134 = vst [vmem:[#allocation2 + $0x60] sm:$0xff] %v3102
      %3135 = vst [vmem:[#allocation2 + $0x68] sm:$0xff] %v3103
      %3136 = vst [vmem:[#allocation2 + $0x70] sm:$0xff] %v3104
      %3137 = vst [vmem:[#allocation2 + $0x78] sm:$0xff] %v3105
      %3138 = vst [vmem:[#allocation2 + $0x80] sm:$0xff] %v3106
      %3139 = vst [vmem:[#allocation2 + $0x88] sm:$0xff] %v3107
      %3140 = vst [vmem:[#allocation2 + $0x90] sm:$0xff] %v3108
      %3141 = vst [vmem:[#allocation2 + $0x98] sm:$0xff] %v3109
      %3142 = vst [vmem:[#allocation2 + $0xa0] sm:$0xff] %v3110
      %3143 = vst [vmem:[#allocation2 + $0xa8] sm:$0xff] %v3111
      %3144 = vst [vmem:[#allocation2 + $0xb0] sm:$0xff] %v3112
      %3145 = vst [vmem:[#allocation2 + $0xb8] sm:$0xff] %v3113
      %3146 = vst [vmem:[#allocation2 + $0xc0] sm:$0xff] %v3114
      %3147 = vst [vmem:[#allocation2 + $0xc8] sm:$0xff] %v3115
      %3148 = vst [vmem:[#allocation2 + $0xd0] sm:$0xff] %v3116
      %3149 = vst [vmem:[#allocation2 + $0xd8] sm:$0xff] %v3117
      %3150 = vst [vmem:[#allocation2 + $0xe0] sm:$0xff] %v3118
      %3151 = vst [vmem:[#allocation2 + $0xe8] sm:$0xff] %v3119
      %3152 = vst [vmem:[#allocation2 + $0xf0] sm:$0xff] %v3120
      %3153 = vst [vmem:[#allocation2 + $0xf8] sm:$0xff] %v3121
      %v3154 = vld [vmem:[#allocation2] sm:$0xff]
      %v3155 = vld [vmem:[#allocation2 + $0x8] sm:$0xff]
      %v3156 = vld [vmem:[#allocation2 + $0x10] sm:$0xff]
      %v3157 = vld [vmem:[#allocation2 + $0x18] sm:$0xff]
      %v3158 = vld [vmem:[#allocation2 + $0x20] sm:$0xff]
      %v3159 = vld [vmem:[#allocation2 + $0x28] sm:$0xff]
      %v3160 = vld [vmem:[#allocation2 + $0x30] sm:$0xff]
      %v3161 = vld [vmem:[#allocation2 + $0x38] sm:$0xff]
      %v3162 = vld [vmem:[#allocation2 + $0x40] sm:$0xff]
      %v3163 = vld [vmem:[#allocation2 + $0x48] sm:$0xff]
      %v3164 = vld [vmem:[#allocation2 + $0x50] sm:$0xff]
      %v3165 = vld [vmem:[#allocation2 + $0x58] sm:$0xff]
      %v3166 = vld [vmem:[#allocation2 + $0x60] sm:$0xff]
      %v3167 = vld [vmem:[#allocation2 + $0x68] sm:$0xff]
      %v3168 = vld [vmem:[#allocation2 + $0x70] sm:$0xff]
      %v3169 = vld [vmem:[#allocation2 + $0x78] sm:$0xff]
      %v3170 = vld [vmem:[#allocation2 + $0x80] sm:$0xff]
      %v3171 = vld [vmem:[#allocation2 + $0x88] sm:$0xff]
      %v3172 = vld [vmem:[#allocation2 + $0x90] sm:$0xff]
      %v3173 = vld [vmem:[#allocation2 + $0x98] sm:$0xff]
      %v3174 = vld [vmem:[#allocation2 + $0xa0] sm:$0xff]
      %v3175 = vld [vmem:[#allocation2 + $0xa8] sm:$0xff]
      %v3176 = vld [vmem:[#allocation2 + $0xb0] sm:$0xff]
      %v3177 = vld [vmem:[#allocation2 + $0xb8] sm:$0xff]
      %v3178 = vld [vmem:[#allocation2 + $0xc0] sm:$0xff]
      %v3179 = vld [vmem:[#allocation2 + $0xc8] sm:$0xff]
      %v3180 = vld [vmem:[#allocation2 + $0xd0] sm:$0xff]
      %v3181 = vld [vmem:[#allocation2 + $0xd8] sm:$0xff]
      %v3182 = vld [vmem:[#allocation2 + $0xe0] sm:$0xff]
      %v3183 = vld [vmem:[#allocation2 + $0xe8] sm:$0xff]
      %v3184 = vld [vmem:[#allocation2 + $0xf0] sm:$0xff]
      %v3185 = vld [vmem:[#allocation2 + $0xf8] sm:$0xff]
      %s3186 = scalar_lea.vmem %s5, 512
      %v3187 = vld [vmem:[%s3186] sm:$0xf]
      %v3188 = vld [vmem:[%s3186 + $0x4] sm:$0xf]
      %v3189 = vld [vmem:[%s3186 + $0x8] sm:$0xf]
      %v3190 = vld [vmem:[%s3186 + $0xc] sm:$0xf]
      %v3191 = vld [vmem:[%s3186 + $0x10] sm:$0xf]
      %v3192 = vld [vmem:[%s3186 + $0x14] sm:$0xf]
      %v3193 = vld [vmem:[%s3186 + $0x18] sm:$0xf]
      %v3194 = vld [vmem:[%s3186 + $0x1c] sm:$0xf]
      %v3195 = vld [vmem:[%s3186 + $0x20] sm:$0xf]
      %v3196 = vld [vmem:[%s3186 + $0x24] sm:$0xf]
      %v3197 = vld [vmem:[%s3186 + $0x28] sm:$0xf]
      %v3198 = vld [vmem:[%s3186 + $0x2c] sm:$0xf]
      %v3199 = vld [vmem:[%s3186 + $0x30] sm:$0xf]
      %v3200 = vld [vmem:[%s3186 + $0x34] sm:$0xf]
      %v3201 = vld [vmem:[%s3186 + $0x38] sm:$0xf]
      %v3202 = vld [vmem:[%s3186 + $0x3c] sm:$0xf]
      %v3219 = vunpack.c.l.b16 %v3187
      %v3220 = vunpack.c.l.b16 %v3188
      %v3221 = vunpack.c.l.b16 %v3189
      %v3222 = vunpack.c.l.b16 %v3190
      %v3223 = vunpack.c.l.b16 %v3191
      %v3224 = vunpack.c.l.b16 %v3192
      %v3225 = vunpack.c.l.b16 %v3193
      %v3226 = vunpack.c.l.b16 %v3194
      %v3227 = vunpack.c.l.b16 %v3195
      %v3228 = vunpack.c.l.b16 %v3196
      %v3229 = vunpack.c.l.b16 %v3197
      %v3230 = vunpack.c.l.b16 %v3198
      %v3231 = vunpack.c.l.b16 %v3199
      %v3232 = vunpack.c.l.b16 %v3200
      %v3233 = vunpack.c.l.b16 %v3201
      %v3234 = vunpack.c.l.b16 %v3202
      %v3235 = vpack.c.b16 %v3220, %v3219
      %v3236 = vpack.c.b16 %v3222, %v3221
      %v3237 = vpack.c.b16 %v3224, %v3223
      %v3238 = vpack.c.b16 %v3226, %v3225
      %v3239 = vpack.c.b16 %v3228, %v3227
      %v3240 = vpack.c.b16 %v3230, %v3229
      %v3241 = vpack.c.b16 %v3232, %v3231
      %v3242 = vpack.c.b16 %v3234, %v3233
      %3251 = vmatpush.bf16.msra.mxu0 %v3242
      %3252 = vmatpush.bf16.msra.mxu0 %v3241
      %3253 = vmatpush.bf16.msra.mxu0 %v3240
      %3254 = vmatpush.bf16.msra.mxu0 %v3239
      %3255 = vmatpush.bf16.msra.mxu0 %v3238
      %3256 = vmatpush.bf16.msra.mxu0 %v3237
      %3257 = vmatpush.bf16.msra.mxu0 %v3236
      %3258 = vmatpush.bf16.msra.mxu0 %v3235
      %3259 = vmatmul.bf16.gmra.mxu0 %v1611
      %v3260 = vpop.f32.mrf.mxu0
      %v3261 = vadd.f32 0.0, %v3260
      %v3262 = vpop.f32.mrf.mxu0
      %v3263 = vadd.f32 0.0, %v3262
      %3264 = vmatmul.bf16.gmra.mxu0 %v1614
      %v3265 = vpop.f32.mrf.mxu0
      %v3266 = vadd.f32 0.0, %v3265
      %v3267 = vpop.f32.mrf.mxu0
      %v3268 = vadd.f32 0.0, %v3267
      %3269 = vmatmul.bf16.gmra.mxu0 %v1617
      %v3270 = vpop.f32.mrf.mxu0
      %v3271 = vadd.f32 0.0, %v3270
      %v3272 = vpop.f32.mrf.mxu0
      %v3273 = vadd.f32 0.0, %v3272
      %3274 = vmatmul.bf16.gmra.mxu0 %v1620
      %v3275 = vpop.f32.mrf.mxu0
      %v3276 = vadd.f32 0.0, %v3275
      %v3277 = vpop.f32.mrf.mxu0
      %v3278 = vadd.f32 0.0, %v3277
      %3279 = vmatmul.bf16.gmra.mxu0 %v1623
      %v3280 = vpop.f32.mrf.mxu0
      %v3281 = vadd.f32 0.0, %v3280
      %v3282 = vpop.f32.mrf.mxu0
      %v3283 = vadd.f32 0.0, %v3282
      %3284 = vmatmul.bf16.gmra.mxu0 %v1626
      %v3285 = vpop.f32.mrf.mxu0
      %v3286 = vadd.f32 0.0, %v3285
      %v3287 = vpop.f32.mrf.mxu0
      %v3288 = vadd.f32 0.0, %v3287
      %3289 = vmatmul.bf16.gmra.mxu0 %v1629
      %v3290 = vpop.f32.mrf.mxu0
      %v3291 = vadd.f32 0.0, %v3290
      %v3292 = vpop.f32.mrf.mxu0
      %v3293 = vadd.f32 0.0, %v3292
      %3294 = vmatmul.bf16.gmra.mxu0 %v1632
      %v3295 = vpop.f32.mrf.mxu0
      %v3296 = vadd.f32 0.0, %v3295
      %v3297 = vpop.f32.mrf.mxu0
      %v3298 = vadd.f32 0.0, %v3297
      %3299 = vmatmul.bf16.gmra.mxu0 %v1635
      %v3300 = vpop.f32.mrf.mxu0
      %v3301 = vadd.f32 0.0, %v3300
      %v3302 = vpop.f32.mrf.mxu0
      %v3303 = vadd.f32 0.0, %v3302
      %3304 = vmatmul.bf16.gmra.mxu0 %v1638
      %v3305 = vpop.f32.mrf.mxu0
      %v3306 = vadd.f32 0.0, %v3305
      %v3307 = vpop.f32.mrf.mxu0
      %v3308 = vadd.f32 0.0, %v3307
      %3309 = vmatmul.bf16.gmra.mxu0 %v1641
      %v3310 = vpop.f32.mrf.mxu0
      %v3311 = vadd.f32 0.0, %v3310
      %v3312 = vpop.f32.mrf.mxu0
      %v3313 = vadd.f32 0.0, %v3312
      %3314 = vmatmul.bf16.gmra.mxu0 %v1644
      %v3315 = vpop.f32.mrf.mxu0
      %v3316 = vadd.f32 0.0, %v3315
      %v3317 = vpop.f32.mrf.mxu0
      %v3318 = vadd.f32 0.0, %v3317
      %3319 = vmatmul.bf16.gmra.mxu0 %v1647
      %v3320 = vpop.f32.mrf.mxu0
      %v3321 = vadd.f32 0.0, %v3320
      %v3322 = vpop.f32.mrf.mxu0
      %v3323 = vadd.f32 0.0, %v3322
      %3324 = vmatmul.bf16.gmra.mxu0 %v1650
      %v3325 = vpop.f32.mrf.mxu0
      %v3326 = vadd.f32 0.0, %v3325
      %v3327 = vpop.f32.mrf.mxu0
      %v3328 = vadd.f32 0.0, %v3327
      %3329 = vmatmul.bf16.gmra.mxu0 %v2434
      %v3330 = vpop.f32.mrf.mxu0
      %v3331 = vadd.f32 0.0, %v3330
      %v3332 = vpop.f32.mrf.mxu0
      %v3333 = vadd.f32 0.0, %v3332
      %3334 = vmatmul.bf16.gmra.mxu0 %v1605
      %v3335 = vpop.f32.mrf.mxu0
      %v3336 = vadd.f32 0.0, %v3335
      %v3337 = vpop.f32.mrf.mxu0
      %v3338 = vadd.f32 0.0, %v3337
      %3339 = vdwg.mxu0
      %v3340 = vadd.f32 %v3154, %v3261
      %v3341 = vadd.f32 %v3155, %v3263
      %v3342 = vadd.f32 %v3156, %v3266
      %v3343 = vadd.f32 %v3157, %v3268
      %v3344 = vadd.f32 %v3158, %v3271
      %v3345 = vadd.f32 %v3159, %v3273
      %v3346 = vadd.f32 %v3160, %v3276
      %v3347 = vadd.f32 %v3161, %v3278
      %v3348 = vadd.f32 %v3162, %v3281
      %v3349 = vadd.f32 %v3163, %v3283
      %v3350 = vadd.f32 %v3164, %v3286
      %v3351 = vadd.f32 %v3165, %v3288
      %v3352 = vadd.f32 %v3166, %v3291
      %v3353 = vadd.f32 %v3167, %v3293
      %v3354 = vadd.f32 %v3168, %v3296
      %v3355 = vadd.f32 %v3169, %v3298
      %v3356 = vadd.f32 %v3170, %v3301
      %v3357 = vadd.f32 %v3171, %v3303
      %v3358 = vadd.f32 %v3172, %v3306
      %v3359 = vadd.f32 %v3173, %v3308
      %v3360 = vadd.f32 %v3174, %v3311
      %v3361 = vadd.f32 %v3175, %v3313
      %v3362 = vadd.f32 %v3176, %v3316
      %v3363 = vadd.f32 %v3177, %v3318
      %v3364 = vadd.f32 %v3178, %v3321
      %v3365 = vadd.f32 %v3179, %v3323
      %v3366 = vadd.f32 %v3180, %v3326
      %v3367 = vadd.f32 %v3181, %v3328
      %v3368 = vadd.f32 %v3182, %v3331
      %v3369 = vadd.f32 %v3183, %v3333
      %v3370 = vadd.f32 %v3184, %v3336
      %v3371 = vadd.f32 %v3185, %v3338
      %3372 = vst [vmem:[#allocation2] sm:$0xff] %v3340
      %3373 = vst [vmem:[#allocation2 + $0x8] sm:$0xff] %v3341
      %3374 = vst [vmem:[#allocation2 + $0x10] sm:$0xff] %v3342
      %3375 = vst [vmem:[#allocation2 + $0x18] sm:$0xff] %v3343
      %3376 = vst [vmem:[#allocation2 + $0x20] sm:$0xff] %v3344
      %3377 = vst [vmem:[#allocation2 + $0x28] sm:$0xff] %v3345
      %3378 = vst [vmem:[#allocation2 + $0x30] sm:$0xff] %v3346
      %3379 = vst [vmem:[#allocation2 + $0x38] sm:$0xff] %v3347
      %3380 = vst [vmem:[#allocation2 + $0x40] sm:$0xff] %v3348
      %3381 = vst [vmem:[#allocation2 + $0x48] sm:$0xff] %v3349
      %3382 = vst [vmem:[#allocation2 + $0x50] sm:$0xff] %v3350
      %3383 = vst [vmem:[#allocation2 + $0x58] sm:$0xff] %v3351
      %3384 = vst [vmem:[#allocation2 + $0x60] sm:$0xff] %v3352
      %3385 = vst [vmem:[#allocation2 + $0x68] sm:$0xff] %v3353
      %3386 = vst [vmem:[#allocation2 + $0x70] sm:$0xff] %v3354
      %3387 = vst [vmem:[#allocation2 + $0x78] sm:$0xff] %v3355
      %3388 = vst [vmem:[#allocation2 + $0x80] sm:$0xff] %v3356
      %3389 = vst [vmem:[#allocation2 + $0x88] sm:$0xff] %v3357
      %3390 = vst [vmem:[#allocation2 + $0x90] sm:$0xff] %v3358
      %3391 = vst [vmem:[#allocation2 + $0x98] sm:$0xff] %v3359
      %3392 = vst [vmem:[#allocation2 + $0xa0] sm:$0xff] %v3360
      %3393 = vst [vmem:[#allocation2 + $0xa8] sm:$0xff] %v3361
      %3394 = vst [vmem:[#allocation2 + $0xb0] sm:$0xff] %v3362
      %3395 = vst [vmem:[#allocation2 + $0xb8] sm:$0xff] %v3363
      %3396 = vst [vmem:[#allocation2 + $0xc0] sm:$0xff] %v3364
      %3397 = vst [vmem:[#allocation2 + $0xc8] sm:$0xff] %v3365
      %3398 = vst [vmem:[#allocation2 + $0xd0] sm:$0xff] %v3366
      %3399 = vst [vmem:[#allocation2 + $0xd8] sm:$0xff] %v3367
      %3400 = vst [vmem:[#allocation2 + $0xe0] sm:$0xff] %v3368
      %3401 = vst [vmem:[#allocation2 + $0xe8] sm:$0xff] %v3369
      %3402 = vst [vmem:[#allocation2 + $0xf0] sm:$0xff] %v3370
      %3403 = vst [vmem:[#allocation2 + $0xf8] sm:$0xff] %v3371
      %v3404 = vld [vmem:[#allocation2] sm:$0xff]
      %v3405 = vld [vmem:[#allocation2 + $0x8] sm:$0xff]
      %v3406 = vld [vmem:[#allocation2 + $0x10] sm:$0xff]
      %v3407 = vld [vmem:[#allocation2 + $0x18] sm:$0xff]
      %v3408 = vld [vmem:[#allocation2 + $0x20] sm:$0xff]
      %v3409 = vld [vmem:[#allocation2 + $0x28] sm:$0xff]
      %v3410 = vld [vmem:[#allocation2 + $0x30] sm:$0xff]
      %v3411 = vld [vmem:[#allocation2 + $0x38] sm:$0xff]
      %v3412 = vld [vmem:[#allocation2 + $0x40] sm:$0xff]
      %v3413 = vld [vmem:[#allocation2 + $0x48] sm:$0xff]
      %v3414 = vld [vmem:[#allocation2 + $0x50] sm:$0xff]
      %v3415 = vld [vmem:[#allocation2 + $0x58] sm:$0xff]
      %v3416 = vld [vmem:[#allocation2 + $0x60] sm:$0xff]
      %v3417 = vld [vmem:[#allocation2 + $0x68] sm:$0xff]
      %v3418 = vld [vmem:[#allocation2 + $0x70] sm:$0xff]
      %v3419 = vld [vmem:[#allocation2 + $0x78] sm:$0xff]
      %v3420 = vld [vmem:[#allocation2 + $0x80] sm:$0xff]
      %v3421 = vld [vmem:[#allocation2 + $0x88] sm:$0xff]
      %v3422 = vld [vmem:[#allocation2 + $0x90] sm:$0xff]
      %v3423 = vld [vmem:[#allocation2 + $0x98] sm:$0xff]
      %v3424 = vld [vmem:[#allocation2 + $0xa0] sm:$0xff]
      %v3425 = vld [vmem:[#allocation2 + $0xa8] sm:$0xff]
      %v3426 = vld [vmem:[#allocation2 + $0xb0] sm:$0xff]
      %v3427 = vld [vmem:[#allocation2 + $0xb8] sm:$0xff]
      %v3428 = vld [vmem:[#allocation2 + $0xc0] sm:$0xff]
      %v3429 = vld [vmem:[#allocation2 + $0xc8] sm:$0xff]
      %v3430 = vld [vmem:[#allocation2 + $0xd0] sm:$0xff]
      %v3431 = vld [vmem:[#allocation2 + $0xd8] sm:$0xff]
      %v3432 = vld [vmem:[#allocation2 + $0xe0] sm:$0xff]
      %v3433 = vld [vmem:[#allocation2 + $0xe8] sm:$0xff]
      %v3434 = vld [vmem:[#allocation2 + $0xf0] sm:$0xff]
      %v3435 = vld [vmem:[#allocation2 + $0xf8] sm:$0xff]
      %v3436 = vpack.c.bf16 %v3404, %v3404
      %v3437 = vpack.c.bf16 %v3405, %v3405
      %v3438 = vpack.c.bf16 %v3406, %v3406
      %v3439 = vpack.c.bf16 %v3407, %v3407
      %v3440 = vpack.c.bf16 %v3408, %v3408
      %v3441 = vpack.c.bf16 %v3409, %v3409
      %v3442 = vpack.c.bf16 %v3410, %v3410
      %v3443 = vpack.c.bf16 %v3411, %v3411
      %v3444 = vpack.c.bf16 %v3412, %v3412
      %v3445 = vpack.c.bf16 %v3413, %v3413
      %v3446 = vpack.c.bf16 %v3414, %v3414
      %v3447 = vpack.c.bf16 %v3415, %v3415
      %v3448 = vpack.c.bf16 %v3416, %v3416
      %v3449 = vpack.c.bf16 %v3417, %v3417
      %v3450 = vpack.c.bf16 %v3418, %v3418
      %v3451 = vpack.c.bf16 %v3419, %v3419
      %v3452 = vpack.c.bf16 %v3420, %v3420
      %v3453 = vpack.c.bf16 %v3421, %v3421
      %v3454 = vpack.c.bf16 %v3422, %v3422
      %v3455 = vpack.c.bf16 %v3423, %v3423
      %v3456 = vpack.c.bf16 %v3424, %v3424
      %v3457 = vpack.c.bf16 %v3425, %v3425
      %v3458 = vpack.c.bf16 %v3426, %v3426
      %v3459 = vpack.c.bf16 %v3427, %v3427
      %v3460 = vpack.c.bf16 %v3428, %v3428
      %v3461 = vpack.c.bf16 %v3429, %v3429
      %v3462 = vpack.c.bf16 %v3430, %v3430
      %v3463 = vpack.c.bf16 %v3431, %v3431
      %v3464 = vpack.c.bf16 %v3432, %v3432
      %v3465 = vpack.c.bf16 %v3433, %v3433
      %v3466 = vpack.c.bf16 %v3434, %v3434
      %v3467 = vpack.c.bf16 %v3435, %v3435
      %3468 = vst [vmem:[%s285] sm:$0xf] %v3436
      %3469 = vst [vmem:[%s285 + $0x4] sm:$0xf] %v3437
      %3470 = vst [vmem:[%s285 + $0x8] sm:$0xf] %v3438
      %3471 = vst [vmem:[%s285 + $0xc] sm:$0xf] %v3439
      %3472 = vst [vmem:[%s285 + $0x10] sm:$0xf] %v3440
      %3473 = vst [vmem:[%s285 + $0x14] sm:$0xf] %v3441
      %3474 = vst [vmem:[%s285 + $0x18] sm:$0xf] %v3442
      %3475 = vst [vmem:[%s285 + $0x1c] sm:$0xf] %v3443
      %3476 = vst [vmem:[%s285 + $0x20] sm:$0xf] %v3444
      %3477 = vst [vmem:[%s285 + $0x24] sm:$0xf] %v3445
      %3478 = vst [vmem:[%s285 + $0x28] sm:$0xf] %v3446
      %3479 = vst [vmem:[%s285 + $0x2c] sm:$0xf] %v3447
      %3480 = vst [vmem:[%s285 + $0x30] sm:$0xf] %v3448
      %3481 = vst [vmem:[%s285 + $0x34] sm:$0xf] %v3449
      %3482 = vst [vmem:[%s285 + $0x38] sm:$0xf] %v3450
      %3483 = vst [vmem:[%s285 + $0x3c] sm:$0xf] %v3451
      %3484 = vst [vmem:[%s285 + $0x40] sm:$0xf] %v3452
      %3485 = vst [vmem:[%s285 + $0x44] sm:$0xf] %v3453
      %3486 = vst [vmem:[%s285 + $0x48] sm:$0xf] %v3454
      %3487 = vst [vmem:[%s285 + $0x4c] sm:$0xf] %v3455
      %3488 = vst [vmem:[%s285 + $0x50] sm:$0xf] %v3456
      %3489 = vst [vmem:[%s285 + $0x54] sm:$0xf] %v3457
      %3490 = vst [vmem:[%s285 + $0x58] sm:$0xf] %v3458
      %3491 = vst [vmem:[%s285 + $0x5c] sm:$0xf] %v3459
      %3492 = vst [vmem:[%s285 + $0x60] sm:$0xf] %v3460
      %3493 = vst [vmem:[%s285 + $0x64] sm:$0xf] %v3461
      %3494 = vst [vmem:[%s285 + $0x68] sm:$0xf] %v3462
      %3495 = vst [vmem:[%s285 + $0x6c] sm:$0xf] %v3463
      %3496 = vst [vmem:[%s285 + $0x70] sm:$0xf] %v3464
      %3497 = vst [vmem:[%s285 + $0x74] sm:$0xf] %v3465
      %3498 = vst [vmem:[%s285 + $0x78] sm:$0xf] %v3466
      %3499 = vst [vmem:[%s285 + $0x7c] sm:$0xf] %v3467
      %v3500 = vadd.f32 %v3404, %v3405
      %v3501 = vadd.f32 %v3500, %v3406
      %v3502 = vadd.f32 %v3501, %v3407
      %v3503 = vadd.f32 %v3502, %v3408
      %v3504 = vadd.f32 %v3503, %v3409
      %v3505 = vadd.f32 %v3504, %v3410
      %v3506 = vadd.f32 %v3505, %v3411
      %v3507 = vadd.f32 %v3506, %v3412
      %v3508 = vadd.f32 %v3507, %v3413
      %v3509 = vadd.f32 %v3508, %v3414
      %v3510 = vadd.f32 %v3509, %v3415
      %v3511 = vadd.f32 %v3510, %v3416
      %v3512 = vadd.f32 %v3511, %v3417
      %v3513 = vadd.f32 %v3512, %v3418
      %v3514 = vadd.f32 %v3513, %v3419
      %v3515 = vadd.f32 %v3514, %v3420
      %v3516 = vadd.f32 %v3515, %v3421
      %v3517 = vadd.f32 %v3516, %v3422
      %v3518 = vadd.f32 %v3517, %v3423
      %v3519 = vadd.f32 %v3518, %v3424
      %v3520 = vadd.f32 %v3519, %v3425
      %v3521 = vadd.f32 %v3520, %v3426
      %v3522 = vadd.f32 %v3521, %v3427
      %v3523 = vadd.f32 %v3522, %v3428
      %v3524 = vadd.f32 %v3523, %v3429
      %v3525 = vadd.f32 %v3524, %v3430
      %v3526 = vadd.f32 %v3525, %v3431
      %v3527 = vadd.f32 %v3526, %v3432
      %v3528 = vadd.f32 %v3527, %v3433
      %v3529 = vadd.f32 %v3528, %v3434
      %v3530 = vadd.f32 %v3529, %v3435
      %v3531 = vrot.slane %v3530, 4
      %v3532 = vadd.f32 %v3530, %v3531
      %v3533 = vrot.slane %v3532, 2
      %v3534 = vadd.f32 %v3532, %v3533
      %v3535 = vrot.slane %v3534, 1
      %v3536 = vadd.f32 %v3534, %v3535
      %v3537 = vmul.f32 %v3404, %v3404
      %v3538 = vmul.f32 %v3405, %v3405
      %v3539 = vmul.f32 %v3406, %v3406
      %v3540 = vmul.f32 %v3407, %v3407
      %v3541 = vmul.f32 %v3408, %v3408
      %v3542 = vmul.f32 %v3409, %v3409
      %v3543 = vmul.f32 %v3410, %v3410
      %v3544 = vmul.f32 %v3411, %v3411
      %v3545 = vmul.f32 %v3412, %v3412
      %v3546 = vmul.f32 %v3413, %v3413
      %v3547 = vmul.f32 %v3414, %v3414
      %v3548 = vmul.f32 %v3415, %v3415
      %v3549 = vmul.f32 %v3416, %v3416
      %v3550 = vmul.f32 %v3417, %v3417
      %v3551 = vmul.f32 %v3418, %v3418
      %v3552 = vmul.f32 %v3419, %v3419
      %v3553 = vmul.f32 %v3420, %v3420
      %v3554 = vmul.f32 %v3421, %v3421
      %v3555 = vmul.f32 %v3422, %v3422
      %v3556 = vmul.f32 %v3423, %v3423
      %v3557 = vmul.f32 %v3424, %v3424
      %v3558 = vmul.f32 %v3425, %v3425
      %v3559 = vmul.f32 %v3426, %v3426
      %v3560 = vmul.f32 %v3427, %v3427
      %v3561 = vmul.f32 %v3428, %v3428
      %v3562 = vmul.f32 %v3429, %v3429
      %v3563 = vmul.f32 %v3430, %v3430
      %v3564 = vmul.f32 %v3431, %v3431
      %v3565 = vmul.f32 %v3432, %v3432
      %v3566 = vmul.f32 %v3433, %v3433
      %v3567 = vmul.f32 %v3434, %v3434
      %v3568 = vmul.f32 %v3435, %v3435
      %v3569 = vadd.f32 %v3537, %v3538
      %v3570 = vadd.f32 %v3569, %v3539
      %v3571 = vadd.f32 %v3570, %v3540
      %v3572 = vadd.f32 %v3571, %v3541
      %v3573 = vadd.f32 %v3572, %v3542
      %v3574 = vadd.f32 %v3573, %v3543
      %v3575 = vadd.f32 %v3574, %v3544
      %v3576 = vadd.f32 %v3575, %v3545
      %v3577 = vadd.f32 %v3576, %v3546
      %v3578 = vadd.f32 %v3577, %v3547
      %v3579 = vadd.f32 %v3578, %v3548
      %v3580 = vadd.f32 %v3579, %v3549
      %v3581 = vadd.f32 %v3580, %v3550
      %v3582 = vadd.f32 %v3581, %v3551
      %v3583 = vadd.f32 %v3582, %v3552
      %v3584 = vadd.f32 %v3583, %v3553
      %v3585 = vadd.f32 %v3584, %v3554
      %v3586 = vadd.f32 %v3585, %v3555
      %v3587 = vadd.f32 %v3586, %v3556
      %v3588 = vadd.f32 %v3587, %v3557
      %v3589 = vadd.f32 %v3588, %v3558
      %v3590 = vadd.f32 %v3589, %v3559
      %v3591 = vadd.f32 %v3590, %v3560
      %v3592 = vadd.f32 %v3591, %v3561
      %v3593 = vadd.f32 %v3592, %v3562
      %v3594 = vadd.f32 %v3593, %v3563
      %v3595 = vadd.f32 %v3594, %v3564
      %v3596 = vadd.f32 %v3595, %v3565
      %v3597 = vadd.f32 %v3596, %v3566
      %v3598 = vadd.f32 %v3597, %v3567
      %v3599 = vadd.f32 %v3598, %v3568
      %v3600 = vrot.slane %v3599, 4
      %v3601 = vadd.f32 %v3599, %v3600
      %v3602 = vrot.slane %v3601, 2
      %v3603 = vadd.f32 %v3601, %v3602
      %v3604 = vrot.slane %v3603, 1
      %v3605 = vadd.f32 %v3603, %v3604
      %vm3606 = vcmask 1040384
      %v3607 = vsel %vm3606, %v3536, %v3605
      %vm3608 = vcmask 1041408
      %v3609 = vsel %vm3608, %v3607, 0.0
      %3610 = vst [vmem:[%s289] sm:$0xff] %v3609
      %p3611 = scmp.lt.s32.totalorder %s19, 1
      %s3612 = scalar_select %p3611, %s19, 1
      %s3613 = smul.addr %s3612, 32
      %s3614 = smul.addr %s3613, 4
      %s3615 = scalar_lea.vmem %s6, %s3614
      %p3616 = scmp.lt.s32.totalorder %s19, 1
      %s3617 = scalar_select %p3616, %s19, 1
      %s3618 = smul.addr %s3617, 8
      %s3619 = scalar_lea.vmem %s7, %s3618
      // Predicated region
      $region45: #{bottleneck_forward.6} parent=43 // pred_check
        %p3620 = pneg %p168
      $region46: #{bottleneck_forward.6} parent=43 // pred_check_branch
        %3622 = sbr.rel (%p3620) target = $region48
      $region47: #{bottleneck_forward.6} parent=43 // pred_region
        _
      $region48: #{bottleneck_forward.6} parent=43 // pred_fallthru
        _
      // Predicated region
      $region49: #{bottleneck_forward.6} parent=43 // pred_check
        %p3623 = pneg %p194
      $region50: #{bottleneck_forward.6} parent=43 // pred_check_branch
        %3625 = sbr.rel (%p3623) target = $region52
      $region51: #{bottleneck_forward.6} parent=43 // pred_region
        _
      $region52: #{bottleneck_forward.6} parent=43 // pred_fallthru
        _
    $region44: #{bottleneck_forward.6} parent=5 // pred_fallthru
      _
    %p3626 = scmp.le.s32.totalorder 2, %s14
    // Predicated region
    $region53: #{bottleneck_forward.6} parent=5 // pred_check
      %p3627 = pneg %p3626
    $region54: #{bottleneck_forward.6} parent=5 // pred_check_branch
      %3629 = sbr.rel (%p3627) target = $region56
    $region55: #{bottleneck_forward.6} parent=5 // pred_region
      %s3630 = ssub.s32 %s14, 2
      // Predicated region
      $region57: #{bottleneck_forward.6} parent=55 // pred_check
        %p3631 = pneg %p174
      $region58: #{bottleneck_forward.6} parent=55 // pred_check_branch
        %3633 = sbr.rel (%p3631) target = $region60
      $region59: #{bottleneck_forward.6} parent=55 // pred_region
        %p3634 = scmp.lt.s32.totalorder %s20, 1
        %s3635 = scalar_select %p3634, %s20, 1
        %s3636 = smul.addr %s3635, 32
        %s3637 = smul.addr %s3636, 4
        %s3638 = scalar_lea.vmem %s6, %s3637
      $region60: #{bottleneck_forward.6} parent=55 // pred_fallthru
        _
      // Predicated region
      $region61: #{bottleneck_forward.6} parent=55 // pred_check
        %p3639 = pneg %p200
      $region62: #{bottleneck_forward.6} parent=55 // pred_check_branch
        %3641 = sbr.rel (%p3639) target = $region64
      $region63: #{bottleneck_forward.6} parent=55 // pred_region
        %p3642 = scmp.lt.s32.totalorder %s20, 1
        %s3643 = scalar_select %p3642, %s20, 1
        %s3644 = smul.addr %s3643, 8
        %s3645 = scalar_lea.vmem %s7, %s3644
      $region64: #{bottleneck_forward.6} parent=55 // pred_fallthru
        _
    $region56: #{bottleneck_forward.6} parent=5 // pred_fallthru
      _
  $region6: #{bottleneck_forward.6} parent=0 // loop_footer
    %s18 = sadd.s32 1, %s14
  $region7: #{bottleneck_forward.6} parent=0 // loop_footer_branch
    %13 = sbr.rel target = $region3
  $region8: #{bottleneck_forward.6} parent=0 // loop_exit
    _

</llo_original>
